<compile_context>
chip_gen: v5e
topology: v5e:2x2
jax: 0.10.0
libtpu: 0.0.40
codegen_flags: <defaults>
</compile_context>

<pallas_src>
import jax
import jax.numpy as jnp
from jax.experimental import pallas as pl
from jax.experimental.pallas import tpu as pltpu


# --------------------------------------------------------------------------
# Host-side, one-time parameter packing (14 tensors -> 5 bf16 weights + 1 f32
# vector slab).  Weights are kept in (in, out) layout and transposed here so
# the kernel computes W^T @ X (lane-major activations).
# --------------------------------------------------------------------------
def pack_params(params, node_dim, edge_dim, hidden, num_nodes):
    assert edge_dim == 1, "kernel exploits edge_dim == 1 (broadcast edge MLP)"
    p = [jnp.asarray(t, dtype=jnp.float32) for t in params]
    (w1a, b1a, w1b, b1b, lin1, bias1,
     w2a, b2a, w2b, b2b, lin2, bias2, wout, bout) = p

    d0 = node_dim + num_nodes
    h = hidden
    k1 = d0 * h
    hh = h * h
    bf = jnp.bfloat16

    wb1_t = w1b.T.astype(bf)      # (d0*h, k1)   nn1 second Linear, transposed
    wb2_t = w2b.T.astype(bf)      # (h*h, h)     nn2 second Linear, transposed
    lin1_t = lin1.T.astype(bf)    # (h, d0)      conv1 root weight, transposed
    lin2_t = lin2.T.astype(bf)    # (h, h)
    wout_t = wout.T.astype(bf)    # (num_nodes, h)

    # f32 vector slab: one parameter per column (kept f32 for VPU adds).
    length = max(k1, hh)
    pvec = jnp.zeros((length, 16), jnp.float32)
    cols = [
        (0, w1a.reshape(-1)),     # nn1 first Linear weight  (k1,)
        (1, b1a.reshape(-1)),     # nn1 first Linear bias    (k1,)
        (2, b1b.reshape(-1)),     # nn1 second Linear bias   (d0*h,)
        (3, b2b.reshape(-1)),     # nn2 second Linear bias   (h*h,)
        (4, w2a.reshape(-1)),     # nn2 first Linear weight  (h,)
        (5, b2a.reshape(-1)),     # nn2 first Linear bias    (h,)
        (6, bias1.reshape(-1)),   # conv1 bias               (h,)
        (7, bias2.reshape(-1)),   # conv2 bias               (h,)
        (8, bout.reshape(-1)),    # output bias              (num_nodes,)
    ]
    for c, v in cols:
        pvec = pvec.at[: v.shape[0], c].set(v)

    dims = dict(d0=d0, h=h, k1=k1, hh=hh, n=num_nodes)
    return dict(wb1_t=wb1_t, wb2_t=wb2_t, lin1_t=lin1_t, lin2_t=lin2_t,
                wout_t=wout_t, pvec=pvec, dims=dims)


# --------------------------------------------------------------------------
# Host-side, one-time graph-structure packing (shared by every batch element):
# block-local edge-index rows/cols and the diagonal mask.  Edge count is
# padded so B_BLK * E_pad is a lane multiple; dummy edges get id -1 (they
# match no node -> contribute nothing).
# --------------------------------------------------------------------------
def prepare_graph_static(src, tgt, num_nodes, b_blk):
    src = jnp.asarray(src, dtype=jnp.int32)
    tgt = jnp.asarray(tgt, dtype=jnp.int32)
    e = int(src.shape[0])
    e_pad = e
    while (b_blk * e_pad) % 128 != 0:
        e_pad += 1
    pad = e_pad - e
    src_p = jnp.concatenate([src, -jnp.ones((pad,), jnp.int32)])
    tgt_p = jnp.concatenate([tgt, -jnp.ones((pad,), jnp.int32)])
    off = jnp.arange(b_blk, dtype=jnp.int32)[:, None] * num_nodes
    src_blk = jnp.where(src_p[None, :] >= 0, off + src_p[None, :], -1)
    tgt_blk = jnp.where(tgt_p[None, :] >= 0, off + tgt_p[None, :], -1)
    eb = b_blk * e_pad
    src_row = src_blk.reshape(1, eb)                      # (1, EB) int32
    tgt_col = tgt_blk.reshape(eb, 1)                      # (EB, 1) int32
    diag_t = jnp.tile(jnp.eye(num_nodes, dtype=jnp.float32), (1, b_blk))
    return dict(src_row=src_row, tgt_col=tgt_col, diag_t=diag_t,
                e=e, e_pad=e_pad, b_blk=b_blk)


# --------------------------------------------------------------------------
# Kernel (one grid step = B_BLK graphs, all arrays lane-major over nodes/edges)
# --------------------------------------------------------------------------
def _make_kernel(N, D0, H, K1, HH, NB, EB):
    bf16 = jnp.bfloat16
    f32 = jnp.float32

    def kernel(xt_ref, adjt_ref, ea_ref, src_ref, tgt_ref, diag_ref,
               wb1_ref, wb2_ref, lin1_ref, lin2_ref, wout_ref, pvec_ref,
               out_ref):
        xt = xt_ref[...]                       # (D0, NB) f32  node feats^T
        adjt = adjt_ref[...]                   # (N, NB)       adjacency^T
        ea_row = ea_ref[...]                   # (1, EB)       edge attrs
        src_row = src_ref[...]                 # (1, EB) int32 source node id
        tgt_col = tgt_ref[...]                 # (EB, 1) int32 target node id
        diag_t = diag_ref[...]                 # (N, NB)       1 where j==local(i)

        # One-hot gather/scatter matrices via integer compares against iota.
        src_oh_t = (jax.lax.broadcasted_iota(jnp.int32, (NB, EB), 0)
                    == src_row).astype(bf16)                     # (NB, EB)
        tgt_oh_f = (jax.lax.broadcasted_iota(jnp.int32, (EB, NB), 1)
                    == tgt_col).astype(f32)                      # (EB, NB)
        deg_row = jnp.sum(tgt_oh_f, axis=0, keepdims=True)       # (1, NB)
        tgt_oh = tgt_oh_f.astype(bf16)
        inv_deg = pl.reciprocal(jnp.maximum(deg_row, 1.0))       # (1, NB)

        def col(c, length):
            return pvec_ref[0:length, c:c + 1]                   # (length, 1) f32

        def nnconv(x_in_t, d_in, wa_col, ba_col, wb_t_ref, bb_col,
                   lin_t_ref, bias_col):
            # Edge-MLP first Linear (edge_dim == 1): f32 VPU broadcast.
            hm = jnp.maximum(wa_col * ea_row + ba_col, 0.0)      # (K, EB)
            # Per-edge weights, one MXU matmul; bias folded as broadcast add.
            # we[d*H + o, e] == nn(e)[d*H + o]  (PyG row-major reshape order).
            we = jnp.dot(wb_t_ref[...], hm.astype(bf16),
                         preferred_element_type=f32) + bb_col    # (d_in*H, EB)
            # Gather source-node features (one-hot matmul on the MXU).
            x_j = jnp.dot(x_in_t.astype(bf16), src_oh_t,
                          preferred_element_type=f32)            # (d_in, EB)
            # msg[o, e] = sum_d x_j[d, e] * we[d*H + o, e]
            #   -> d_in broadcast FMAs over aligned (H, EB) sublane slices.
            msg = x_j[0:1, :] * we[0:H, :]
            for d in range(1, d_in):
                msg = msg + x_j[d:d + 1, :] * we[d * H:(d + 1) * H, :]
            # Mean aggregation at target nodes (scatter via one-hot matmul).
            agg = jnp.dot(msg.astype(bf16), tgt_oh,
                          preferred_element_type=f32) * inv_deg  # (H, NB)
            root = jnp.dot(lin_t_ref[...], x_in_t.astype(bf16),
                           preferred_element_type=f32)           # (H, NB)
            return agg + root + bias_col

        h1 = jnp.maximum(
            nnconv(xt, D0, col(0, K1), col(1, K1), wb1_ref, col(2, K1),
                   lin1_ref, col(6, H)), 0.0)                    # (H, NB)
        h2 = jnp.maximum(
            nnconv(h1, H, col(4, H), col(5, H), wb2_ref, col(3, HH),
                   lin2_ref, col(7, H)), 0.0)                    # (H, NB)

        logits = jnp.dot(wout_ref[...], h2.astype(bf16),
                         preferred_element_type=f32) + col(8, N)  # (N, NB)

        # Masked softmax over destinations (rows).  Finite sentinel instead of
        # -inf so a created node with a fully-masked row gives a uniform row
        # rather than NaNs (masked entries still underflow to exactly 0).
        masked = jnp.where(adjt == 0.0, -1e30, logits)
        m = jnp.max(masked, axis=0, keepdims=True)
        ex = jnp.exp(masked - m)
        probs = ex * pl.reciprocal(jnp.sum(ex, axis=0, keepdims=True))

        # return_probs[~created, :] = 0 ; return_probs[~created, ~created] = 1
        npk_row = xt[D0 - 1:D0, :]                               # (1, NB)
        created = npk_row != -1.0
        probs = jnp.where(created, probs, 0.0)
        probs = jnp.where(jnp.logical_and(diag_t > 0.0,
                                          jnp.logical_not(created)),
                          1.0, probs)

        out_ref[...] = probs                                     # (N, NB) lane-dense

    return kernel


# --------------------------------------------------------------------------
# Wrapper
# --------------------------------------------------------------------------
def _nbytes(a):
    return int(a.size) * a.dtype.itemsize


def gnn_policy_forward(x_b, adj_b, edge_attr_b, static, packed):
    """x_b: (B, N, D0), adj_b: (B, N, N), edge_attr_b: (B, E) -> (B, N, N)."""
    B, N, D0 = x_b.shape
    dims = packed["dims"]
    H, K1, HH = dims["h"], dims["k1"], dims["hh"]
    assert dims["d0"] == D0 and dims["n"] == N
    b_blk = static["b_blk"]
    assert B % b_blk == 0, "batch must be a multiple of the block size"
    e, e_pad = static["e"], static["e_pad"]
    NB, EB = b_blk * N, b_blk * e_pad
    assert NB % 128 == 0, "choose B_BLK so that B_BLK * num_nodes % 128 == 0"

    # Wrapper-side layout plumbing only (no per-timestep concatenation): node
    # and edge data go in transposed, lane-major form.
    xt = x_b.astype(jnp.float32).transpose(2, 0, 1).reshape(D0, B * N)
    adjt = adj_b.astype(jnp.float32).transpose(2, 0, 1).reshape(N, B * N)
    ea = jnp.pad(edge_attr_b.astype(jnp.float32), ((0, 0), (0, e_pad - e)))
    ea_row = ea.reshape(1, B * e_pad)

    kernel = _make_kernel(N=N, D0=D0, H=H, K1=K1, HH=HH, NB=NB, EB=EB)
    nsteps = B // b_blk

    batched = lambda idx: pl.BlockSpec(idx[0], idx[1])
    in_specs = [
        pl.BlockSpec((D0, NB), lambda b: (0, b)),          # xt
        pl.BlockSpec((N, NB), lambda b: (0, b)),           # adjt
        pl.BlockSpec((1, EB), lambda b: (0, b)),           # edge attrs
        pl.BlockSpec((1, EB), lambda b: (0, 0)),           # src ids   (resident)
        pl.BlockSpec((EB, 1), lambda b: (0, 0)),           # tgt ids   (resident)
        pl.BlockSpec((N, NB), lambda b: (0, 0)),           # diag mask (resident)
        pl.BlockSpec(packed["wb1_t"].shape, lambda b: (0, 0)),
        pl.BlockSpec(packed["wb2_t"].shape, lambda b: (0, 0)),
        pl.BlockSpec(packed["lin1_t"].shape, lambda b: (0, 0)),
        pl.BlockSpec(packed["lin2_t"].shape, lambda b: (0, 0)),
        pl.BlockSpec(packed["wout_t"].shape, lambda b: (0, 0)),
        pl.BlockSpec(packed["pvec"].shape, lambda b: (0, 0)),
    ]
    out_specs = pl.BlockSpec((N, NB), lambda b: (0, b))
    del batched

    flops_blk = 2 * (
        (D0 * H) * K1 * EB + D0 * NB * EB + D0 * H * EB + H * EB * NB
        + H * D0 * NB
        + HH * H * EB + H * NB * EB + H * H * EB + H * EB * NB + H * H * NB
        + N * H * NB)
    const_bytes = sum(_nbytes(a) for a in (
        static["src_row"], static["tgt_col"], static["diag_t"],
        packed["wb1_t"], packed["wb2_t"], packed["lin1_t"],
        packed["lin2_t"], packed["wout_t"], packed["pvec"]))
    cost = pl.CostEstimate(
        flops=int(flops_blk * nsteps),
        transcendentals=int((N + 2) * NB * nsteps),
        bytes_accessed=int(_nbytes(xt) + _nbytes(adjt) + _nbytes(ea_row)
                           + const_bytes + 4 * N * B * N))

    # VMEM footprint per step is ~4 MiB -> comfortably inside the default
    # scoped VMEM on v5e/v6e/v7x; re-derive B_BLK before growing blocks on
    # v7x (64 MiB physical VMEM).
    out = pl.pallas_call(
        kernel,
        out_shape=jax.ShapeDtypeStruct((N, B * N), jnp.float32),
        grid=(nsteps,),
        in_specs=in_specs,
        out_specs=out_specs,
        compiler_params=pltpu.CompilerParams(
            dimension_semantics=("parallel",)),
        cost_estimate=cost,
    )(xt, adjt, ea_row, static["src_row"], static["tgt_col"],
      static["diag_t"], packed["wb1_t"], packed["wb2_t"], packed["lin1_t"],
      packed["lin2_t"], packed["wout_t"], packed["pvec"])

    # out[j, b*N + i] == probs[b, i, j]
    return out.reshape(N, B, N).transpose(1, 2, 0)


# --------------------------------------------------------------------------
# Parameter init (mirrors the PyTorch __init__ shapes; weights stored (in,out))
# --------------------------------------------------------------------------
def init_params(key, node_dim, edge_dim, hidden, num_nodes):
    d0 = node_dim + num_nodes
    ks = jax.random.split(key, 14)

    def w(k, i, o):
        s = (1.0 / i) ** 0.5
        return jax.random.uniform(k, (i, o), jnp.float32, -s, s)

    def b(k, i, o):
        s = (1.0 / i) ** 0.5
        return jax.random.uniform(k, (1, o), jnp.float32, -s, s)

    return [
        # nn1: Linear(edge_dim, d0*hidden), ReLU, Linear(d0*hidden, d0*hidden)
        w(ks[0], edge_dim, d0 * hidden), b(ks[1], edge_dim, d0 * hidden),
        w(ks[2], d0 * hidden, d0 * hidden), b(ks[3], d0 * hidden, d0 * hidden),
        # conv1 root weight + conv1 bias
        w(ks[4], d0, hidden), b(ks[5], d0, hidden),
        # nn2: Linear(edge_dim, hidden), ReLU, Linear(hidden, hidden**2)
        w(ks[6], edge_dim, hidden), b(ks[7], edge_dim, hidden),
        w(ks[8], hidden, hidden * hidden), b(ks[9], hidden, hidden * hidden),
        # conv2 root weight + bias
        w(ks[10], hidden, hidden), b(ks[11], hidden, hidden),
        # output Linear(hidden, num_nodes)
        w(ks[12], hidden, num_nodes), b(ks[13], hidden, num_nodes),
    ]


# --------------------------------------------------------------------------
# Pure-JAX reference (same bf16 operand rounding as the kernel) for checking
# --------------------------------------------------------------------------
def _reference_forward(params, x, edge_attr, src, tgt, adjacency):
    (w1a, b1a, w1b, b1b, lin1, bias1,
     w2a, b2a, w2b, b2b, lin2, bias2, wout, bout) = [
        jnp.asarray(t, dtype=jnp.float32) for t in params]
    bf, f32 = jnp.bfloat16, jnp.float32
    n = x.shape[0]
    h_dim = lin1.shape[1]

    def nnconv(x_in, wa, ba, wb, bb, lin, bias):
        d_in = x_in.shape[1]
        hm = jax.nn.relu(edge_attr[:, None] * wa + ba)                 # (E, K)
        we = jnp.dot(hm.astype(bf), wb.astype(bf),
                     preferred_element_type=f32) + bb                  # (E, d_in*H)
        x_j = x_in.astype(bf).astype(f32)[src]                         # (E, d_in)
        msg = jnp.einsum("ed,edo->eo", x_j, we.reshape(-1, d_in, h_dim))
        msg = msg.astype(bf).astype(f32)
        num = jnp.zeros((n, h_dim), f32).at[tgt].add(msg)
        deg = jnp.zeros((n,), f32).at[tgt].add(1.0)
        agg = num / jnp.maximum(deg, 1.0)[:, None]
        root = jnp.dot(x_in.astype(bf), lin.astype(bf),
                       preferred_element_type=f32)
        return agg + root + bias

    h1 = jax.nn.relu(nnconv(x, w1a, b1a, w1b, b1b, lin1, bias1))
    h2 = jax.nn.relu(nnconv(h1, w2a, b2a, w2b, b2b, lin2, bias2))
    logits = jnp.dot(h2.astype(bf), wout.astype(bf),
                     preferred_element_type=f32) + bout
    masked = jnp.where(adjacency == 0.0, -1e30, logits)
    probs = jax.nn.softmax(masked, axis=1)
    created = x[:, -1] != -1.0
    probs = jnp.where(created[:, None], probs, 0.0)
    eye = jnp.eye(n, dtype=bool)
    probs = jnp.where(eye & (~created)[:, None], 1.0, probs)
    return probs


# --------------------------------------------------------------------------
# Demo
# --------------------------------------------------------------------------
if __name__ == "__main__":
    N = 8            # num_of_nodes
    NODE_DIM = 2     # degree + new_packet (queue row adds +N inside __init__)
    EDGE_DIM = 1
    HIDDEN = 32
    B = 32           # batched graphs/timesteps per call
    B_BLK = 16       # graphs per grid step -> (8, 128) lane-dense output block

    key = jax.random.PRNGKey(0)
    k_param, k_q, k_e, k_np = jax.random.split(key, 4)

    # Synthetic NetworkEnvironment: ring over N nodes plus two chords.
    undirected = [(i, (i + 1) % N) for i in range(N)] + [(0, 4), (1, 5)]
    adjacency = jnp.zeros((N, N), jnp.float32)
    for u, v in undirected:
        adjacency = adjacency.at[u, v].set(1.0).at[v, u].set(1.0)
    src_l, tgt_l = [], []
    for u, v in undirected:          # both directions, same attr
        src_l += [u, v]
        tgt_l += [v, u]
    src = jnp.array(src_l, jnp.int32)
    tgt = jnp.array(tgt_l, jnp.int32)
    E = int(src.shape[0])

    # Per-graph edge attributes (remaining/capacity), shared by both directions.
    ratios = jax.random.uniform(k_e, (B, len(undirected)), jnp.float32, 0.1, 1.0)
    edge_attr_b = jnp.repeat(ratios, 2, axis=1)                       # (B, E)

    # Per-graph node data (graph_to_data glue):
    # x = [degree | queues masked by adjacency | new_packet]
    queues = jax.random.uniform(k_q, (B, N, N), jnp.float32, 0.0, 5.0)
    k_np1, k_np2 = jax.random.split(k_np)
    created_mask = jax.random.uniform(k_np1, (B, N)) < 0.7
    pkt = jnp.floor(jax.random.uniform(k_np2, (B, N), minval=0.0, maxval=8.0))
    new_packets = jnp.where(created_mask, pkt, -1.0)                  # (B, N)

    deg_feat = jnp.sum(adjacency, axis=1)
    adj_b = jnp.broadcast_to(adjacency, (B, N, N))
    queue_feat = jnp.where(adj_b == 0.0, -1.0, queues)
    x_b = jnp.concatenate(
        [jnp.broadcast_to(deg_feat[None, :, None], (B, N, 1)),
         queue_feat,
         new_packets[:, :, None]], axis=2)                            # (B, N, N+2)

    params = init_params(k_param, NODE_DIM, EDGE_DIM, HIDDEN, N)
    packed = pack_params(params, NODE_DIM, EDGE_DIM, HIDDEN, N)   # once
    static = prepare_graph_static(src, tgt, N, B_BLK)             # once

    probs = gnn_policy_forward(x_b, adj_b, edge_attr_b, static, packed)
    probs = jax.block_until_ready(probs)                              # (B, N, N)

    # Correctness check against a pure-JAX reference with matching bf16
    # operand rounding (tolerance covers accumulation-order differences).
    ref = jax.vmap(
        lambda xg, eg: _reference_forward(params, xg, eg, src, tgt, adjacency)
    )(x_b, edge_attr_b)
    err = float(jnp.max(jnp.abs(probs - ref)))
    assert err < 1e-2, f"max |kernel - reference| = {err}"

    print("KERNEL_OK")
</pallas_src>

<mosaic_0001>
module attributes {stable_mosaic.version = 11 : i64} {
  func.func @kernel(%arg0: i32, %arg1: memref<10x128xf32, #tpu.memory_space<vmem>>, %arg2: memref<8x128xf32, #tpu.memory_space<vmem>>, %arg3: memref<1x384xf32, #tpu.memory_space<vmem>>, %arg4: memref<1x384xi32, #tpu.memory_space<vmem>>, %arg5: memref<384x1xi32, #tpu.memory_space<vmem>>, %arg6: memref<8x128xf32, #tpu.memory_space<vmem>>, %arg7: memref<320x320xbf16, #tpu.memory_space<vmem>>, %arg8: memref<1024x32xbf16, #tpu.memory_space<vmem>>, %arg9: memref<32x10xbf16, #tpu.memory_space<vmem>>, %arg10: memref<32x32xbf16, #tpu.memory_space<vmem>>, %arg11: memref<8x32xbf16, #tpu.memory_space<vmem>>, %arg12: memref<1024x16xf32, #tpu.memory_space<vmem>>, %arg13: memref<8x128xf32, #tpu.memory_space<vmem>>) attributes {dimension_semantics = [#tpu.dimension_semantics<parallel>], iteration_bounds = array<i64: 2>, scalar_prefetch = 0 : i64, scratch_operands = 0 : i64, tpu.core_type = #tpu.core_type<tc>, window_params = [{transform_indices = @transform_0, window_bounds = array<i64: 10, 128>}, {transform_indices = @transform_1, window_bounds = array<i64: 8, 128>}, {transform_indices = @transform_2, window_bounds = array<i64: 1, 384>}, {pipeline_mode = #tpu.pipeline_mode<synchronous>, transform_indices = @transform_3, window_bounds = array<i64: 1, 384>}, {pipeline_mode = #tpu.pipeline_mode<synchronous>, transform_indices = @transform_4, window_bounds = array<i64: 384, 1>}, {pipeline_mode = #tpu.pipeline_mode<synchronous>, transform_indices = @transform_5, window_bounds = array<i64: 8, 128>}, {pipeline_mode = #tpu.pipeline_mode<synchronous>, transform_indices = @transform_6, window_bounds = array<i64: 320, 320>}, {pipeline_mode = #tpu.pipeline_mode<synchronous>, transform_indices = @transform_7, window_bounds = array<i64: 1024, 32>}, {pipeline_mode = #tpu.pipeline_mode<synchronous>, transform_indices = @transform_8, window_bounds = array<i64: 32, 10>}, {pipeline_mode = #tpu.pipeline_mode<synchronous>, transform_indices = @transform_9, window_bounds = array<i64: 32, 32>}, {pipeline_mode = #tpu.pipeline_mode<synchronous>, transform_indices = @transform_10, window_bounds = array<i64: 8, 32>}, {pipeline_mode = #tpu.pipeline_mode<synchronous>, transform_indices = @transform_11, window_bounds = array<i64: 1024, 16>}, {transform_indices = @transform_12, window_bounds = array<i64: 8, 128>}]} {
    %c0 = arith.constant 0 : index
    %c0_0 = arith.constant 0 : index
    %0 = vector.load %arg1[%c0, %c0_0] : memref<10x128xf32, #tpu.memory_space<vmem>>, vector<10x128xf32>
    %c0_1 = arith.constant 0 : index
    %c0_2 = arith.constant 0 : index
    %1 = vector.load %arg2[%c0_1, %c0_2] : memref<8x128xf32, #tpu.memory_space<vmem>>, vector<8x128xf32>
    %c0_3 = arith.constant 0 : index
    %c0_4 = arith.constant 0 : index
    %2 = vector.load %arg3[%c0_3, %c0_4] : memref<1x384xf32, #tpu.memory_space<vmem>>, vector<1x384xf32>
    %c0_5 = arith.constant 0 : index
    %c0_6 = arith.constant 0 : index
    %3 = vector.load %arg4[%c0_5, %c0_6] : memref<1x384xi32, #tpu.memory_space<vmem>>, vector<1x384xi32>
    %c0_7 = arith.constant 0 : index
    %c0_8 = arith.constant 0 : index
    %4 = vector.load %arg5[%c0_7, %c0_8] : memref<384x1xi32, #tpu.memory_space<vmem>>, vector<384x1xi32>
    %c0_9 = arith.constant 0 : index
    %c0_10 = arith.constant 0 : index
    %5 = vector.load %arg6[%c0_9, %c0_10] : memref<8x128xf32, #tpu.memory_space<vmem>>, vector<8x128xf32>
    %6 = tpu.iota {dimensions = array<i32: 0>} : vector<128x384xi32>
    %7 = vector.broadcast %3 : vector<1x384xi32> to vector<128x384xi32>
    %8 = arith.cmpi eq, %6, %7 : vector<128x384xi32>
    %9 = arith.extui %8 : vector<128x384xi1> to vector<128x384xi32>
    %10 = arith.sitofp %9 : vector<128x384xi32> to vector<128x384xf32>
    %11 = arith.truncf %10 : vector<128x384xf32> to vector<128x384xbf16>
    %12 = tpu.iota {dimensions = array<i32: 1>} : vector<384x128xi32>
    %13 = vector.broadcast %4 : vector<384x1xi32> to vector<384x128xi32>
    %14 = arith.cmpi eq, %12, %13 : vector<384x128xi32>
    %15 = arith.extui %14 : vector<384x128xi1> to vector<384x128xi32>
    %16 = arith.sitofp %15 : vector<384x128xi32> to vector<384x128xf32>
    %cst = arith.constant dense<0.000000e+00> : vector<128xf32>
    %17 = vector.multi_reduction <add>, %16, %cst [0] : vector<384x128xf32> to vector<128xf32>
    %18 = vector.shape_cast %17 : vector<128xf32> to vector<1x128xf32>
    %19 = arith.truncf %16 : vector<384x128xf32> to vector<384x128xbf16>
    %cst_11 = arith.constant 1.000000e+00 : f32
    %20 = vector.broadcast %cst_11 : f32 to vector<1x128xf32>
    %21 = arith.maximumf %18, %20 : vector<1x128xf32>
    %22 = tpu.reciprocal %21 : vector<1x128xf32> -> vector<1x128xf32>
    %c0_12 = arith.constant 0 : index
    %c0_13 = arith.constant 0 : index
    %23 = vector.load %arg12[%c0_12, %c0_13] : memref<1024x16xf32, #tpu.memory_space<vmem>>, vector<320x1xf32>
    %c0_14 = arith.constant 0 : index
    %c1 = arith.constant 1 : index
    %24 = vector.load %arg12[%c0_14, %c1] : memref<1024x16xf32, #tpu.memory_space<vmem>>, vector<320x1xf32>
    %c0_15 = arith.constant 0 : index
    %c2 = arith.constant 2 : index
    %25 = vector.load %arg12[%c0_15, %c2] : memref<1024x16xf32, #tpu.memory_space<vmem>>, vector<320x1xf32>
    %c0_16 = arith.constant 0 : index
    %c6 = arith.constant 6 : index
    %26 = vector.load %arg12[%c0_16, %c6] : memref<1024x16xf32, #tpu.memory_space<vmem>>, vector<32x1xf32>
    %27 = vector.broadcast %23 : vector<320x1xf32> to vector<320x384xf32>
    %28 = vector.broadcast %2 : vector<1x384xf32> to vector<320x384xf32>
    %29 = arith.mulf %27, %28 : vector<320x384xf32>
    %30 = vector.broadcast %24 : vector<320x1xf32> to vector<320x384xf32>
    %31 = arith.addf %29, %30 : vector<320x384xf32>
    %cst_17 = arith.constant 0.000000e+00 : f32
    %32 = vector.broadcast %cst_17 : f32 to vector<320x384xf32>
    %33 = arith.maximumf %31, %32 : vector<320x384xf32>
    %c0_18 = arith.constant 0 : index
    %c0_19 = arith.constant 0 : index
    %34 = vector.load %arg7[%c0_18, %c0_19] : memref<320x320xbf16, #tpu.memory_space<vmem>>, vector<320x320xbf16>
    %35 = arith.truncf %33 : vector<320x384xf32> to vector<320x384xbf16>
    %cst_20 = arith.constant dense<0.000000e+00> : vector<320x384xf32>
    %36 = tpu.matmul %34, %35, %cst_20 {dimension_numbers = #tpu.dot_dimension_numbers<[1], [0], [0], [1], [0, 0, 1, 1], [], []>} : vector<320x320xbf16>, vector<320x384xbf16>, vector<320x384xf32> -> vector<320x384xf32>
    %37 = vector.broadcast %25 : vector<320x1xf32> to vector<320x384xf32>
    %38 = arith.addf %36, %37 : vector<320x384xf32>
    %39 = arith.truncf %0 : vector<10x128xf32> to vector<10x128xbf16>
    %cst_21 = arith.constant dense<0.000000e+00> : vector<10x384xf32>
    %40 = tpu.matmul %39, %11, %cst_21 {dimension_numbers = #tpu.dot_dimension_numbers<[1], [0], [0], [1], [0, 0, 1, 1], [], []>} : vector<10x128xbf16>, vector<128x384xbf16>, vector<10x384xf32> -> vector<10x384xf32>
    %41 = vector.extract_strided_slice %40 {offsets = [0, 0], sizes = [1, 384], strides = [1, 1]} : vector<10x384xf32> to vector<1x384xf32>
    %42 = vector.extract_strided_slice %38 {offsets = [0, 0], sizes = [32, 384], strides = [1, 1]} : vector<320x384xf32> to vector<32x384xf32>
    %43 = vector.broadcast %41 : vector<1x384xf32> to vector<32x384xf32>
    %44 = arith.mulf %43, %42 : vector<32x384xf32>
    %45 = vector.extract_strided_slice %40 {offsets = [1, 0], sizes = [1, 384], strides = [1, 1]} : vector<10x384xf32> to vector<1x384xf32>
    %46 = vector.extract_strided_slice %38 {offsets = [32, 0], sizes = [32, 384], strides = [1, 1]} : vector<320x384xf32> to vector<32x384xf32>
    %47 = vector.broadcast %45 : vector<1x384xf32> to vector<32x384xf32>
    %48 = arith.mulf %47, %46 : vector<32x384xf32>
    %49 = arith.addf %44, %48 : vector<32x384xf32>
    %50 = vector.extract_strided_slice %40 {offsets = [2, 0], sizes = [1, 384], strides = [1, 1]} : vector<10x384xf32> to vector<1x384xf32>
    %51 = vector.extract_strided_slice %38 {offsets = [64, 0], sizes = [32, 384], strides = [1, 1]} : vector<320x384xf32> to vector<32x384xf32>
    %52 = vector.broadcast %50 : vector<1x384xf32> to vector<32x384xf32>
    %53 = arith.mulf %52, %51 : vector<32x384xf32>
    %54 = arith.addf %49, %53 : vector<32x384xf32>
    %55 = vector.extract_strided_slice %40 {offsets = [3, 0], sizes = [1, 384], strides = [1, 1]} : vector<10x384xf32> to vector<1x384xf32>
    %56 = vector.extract_strided_slice %38 {offsets = [96, 0], sizes = [32, 384], strides = [1, 1]} : vector<320x384xf32> to vector<32x384xf32>
    %57 = vector.broadcast %55 : vector<1x384xf32> to vector<32x384xf32>
    %58 = arith.mulf %57, %56 : vector<32x384xf32>
    %59 = arith.addf %54, %58 : vector<32x384xf32>
    %60 = vector.extract_strided_slice %40 {offsets = [4, 0], sizes = [1, 384], strides = [1, 1]} : vector<10x384xf32> to vector<1x384xf32>
    %61 = vector.extract_strided_slice %38 {offsets = [128, 0], sizes = [32, 384], strides = [1, 1]} : vector<320x384xf32> to vector<32x384xf32>
    %62 = vector.broadcast %60 : vector<1x384xf32> to vector<32x384xf32>
    %63 = arith.mulf %62, %61 : vector<32x384xf32>
    %64 = arith.addf %59, %63 : vector<32x384xf32>
    %65 = vector.extract_strided_slice %40 {offsets = [5, 0], sizes = [1, 384], strides = [1, 1]} : vector<10x384xf32> to vector<1x384xf32>
    %66 = vector.extract_strided_slice %38 {offsets = [160, 0], sizes = [32, 384], strides = [1, 1]} : vector<320x384xf32> to vector<32x384xf32>
    %67 = vector.broadcast %65 : vector<1x384xf32> to vector<32x384xf32>
    %68 = arith.mulf %67, %66 : vector<32x384xf32>
    %69 = arith.addf %64, %68 : vector<32x384xf32>
    %70 = vector.extract_strided_slice %40 {offsets = [6, 0], sizes = [1, 384], strides = [1, 1]} : vector<10x384xf32> to vector<1x384xf32>
    %71 = vector.extract_strided_slice %38 {offsets = [192, 0], sizes = [32, 384], strides = [1, 1]} : vector<320x384xf32> to vector<32x384xf32>
    %72 = vector.broadcast %70 : vector<1x384xf32> to vector<32x384xf32>
    %73 = arith.mulf %72, %71 : vector<32x384xf32>
    %74 = arith.addf %69, %73 : vector<32x384xf32>
    %75 = vector.extract_strided_slice %40 {offsets = [7, 0], sizes = [1, 384], strides = [1, 1]} : vector<10x384xf32> to vector<1x384xf32>
    %76 = vector.extract_strided_slice %38 {offsets = [224, 0], sizes = [32, 384], strides = [1, 1]} : vector<320x384xf32> to vector<32x384xf32>
    %77 = vector.broadcast %75 : vector<1x384xf32> to vector<32x384xf32>
    %78 = arith.mulf %77, %76 : vector<32x384xf32>
    %79 = arith.addf %74, %78 : vector<32x384xf32>
    %80 = vector.extract_strided_slice %40 {offsets = [8, 0], sizes = [1, 384], strides = [1, 1]} : vector<10x384xf32> to vector<1x384xf32>
    %81 = vector.extract_strided_slice %38 {offsets = [256, 0], sizes = [32, 384], strides = [1, 1]} : vector<320x384xf32> to vector<32x384xf32>
    %82 = vector.broadcast %80 : vector<1x384xf32> to vector<32x384xf32>
    %83 = arith.mulf %82, %81 : vector<32x384xf32>
    %84 = arith.addf %79, %83 : vector<32x384xf32>
    %85 = vector.extract_strided_slice %40 {offsets = [9, 0], sizes = [1, 384], strides = [1, 1]} : vector<10x384xf32> to vector<1x384xf32>
    %86 = vector.extract_strided_slice %38 {offsets = [288, 0], sizes = [32, 384], strides = [1, 1]} : vector<320x384xf32> to vector<32x384xf32>
    %87 = vector.broadcast %85 : vector<1x384xf32> to vector<32x384xf32>
    %88 = arith.mulf %87, %86 : vector<32x384xf32>
    %89 = arith.addf %84, %88 : vector<32x384xf32>
    %90 = arith.truncf %89 : vector<32x384xf32> to vector<32x384xbf16>
    %cst_22 = arith.constant dense<0.000000e+00> : vector<32x128xf32>
    %91 = tpu.matmul %90, %19, %cst_22 {dimension_numbers = #tpu.dot_dimension_numbers<[1], [0], [0], [1], [0, 0, 1, 1], [], []>} : vector<32x384xbf16>, vector<384x128xbf16>, vector<32x128xf32> -> vector<32x128xf32>
    %92 = vector.broadcast %22 : vector<1x128xf32> to vector<32x128xf32>
    %93 = arith.mulf %91, %92 : vector<32x128xf32>
    %c0_23 = arith.constant 0 : index
    %c0_24 = arith.constant 0 : index
    %94 = vector.load %arg9[%c0_23, %c0_24] : memref<32x10xbf16, #tpu.memory_space<vmem>>, vector<32x10xbf16>
    %95 = arith.truncf %0 : vector<10x128xf32> to vector<10x128xbf16>
    %cst_25 = arith.constant dense<0.000000e+00> : vector<32x128xf32>
    %96 = tpu.matmul %94, %95, %cst_25 {dimension_numbers = #tpu.dot_dimension_numbers<[1], [0], [0], [1], [0, 0, 1, 1], [], []>} : vector<32x10xbf16>, vector<10x128xbf16>, vector<32x128xf32> -> vector<32x128xf32>
    %97 = arith.addf %93, %96 : vector<32x128xf32>
    %98 = vector.broadcast %26 : vector<32x1xf32> to vector<32x128xf32>
    %99 = arith.addf %97, %98 : vector<32x128xf32>
    %cst_26 = arith.constant 0.000000e+00 : f32
    %100 = vector.broadcast %cst_26 : f32 to vector<32x128xf32>
    %101 = arith.maximumf %99, %100 : vector<32x128xf32>
    %c0_27 = arith.constant 0 : index
    %c4 = arith.constant 4 : index
    %102 = vector.load %arg12[%c0_27, %c4] : memref<1024x16xf32, #tpu.memory_space<vmem>>, vector<32x1xf32>
    %c0_28 = arith.constant 0 : index
    %c5 = arith.constant 5 : index
    %103 = vector.load %arg12[%c0_28, %c5] : memref<1024x16xf32, #tpu.memory_space<vmem>>, vector<32x1xf32>
    %c0_29 = arith.constant 0 : index
    %c3 = arith.constant 3 : index
    %104 = vector.load %arg12[%c0_29, %c3] : memref<1024x16xf32, #tpu.memory_space<vmem>>, vector<1024x1xf32>
    %c0_30 = arith.constant 0 : index
    %c7 = arith.constant 7 : index
    %105 = vector.load %arg12[%c0_30, %c7] : memref<1024x16xf32, #tpu.memory_space<vmem>>, vector<32x1xf32>
    %106 = vector.broadcast %102 : vector<32x1xf32> to vector<32x384xf32>
    %107 = vector.broadcast %2 : vector<1x384xf32> to vector<32x384xf32>
    %108 = arith.mulf %106, %107 : vector<32x384xf32>
    %109 = vector.broadcast %103 : vector<32x1xf32> to vector<32x384xf32>
    %110 = arith.addf %108, %109 : vector<32x384xf32>
    %cst_31 = arith.constant 0.000000e+00 : f32
    %111 = vector.broadcast %cst_31 : f32 to vector<32x384xf32>
    %112 = arith.maximumf %110, %111 : vector<32x384xf32>
    %c0_32 = arith.constant 0 : index
    %c0_33 = arith.constant 0 : index
    %113 = vector.load %arg8[%c0_32, %c0_33] : memref<1024x32xbf16, #tpu.memory_space<vmem>>, vector<1024x32xbf16>
    %114 = arith.truncf %112 : vector<32x384xf32> to vector<32x384xbf16>
    %cst_34 = arith.constant dense<0.000000e+00> : vector<1024x384xf32>
    %115 = tpu.matmul %113, %114, %cst_34 {dimension_numbers = #tpu.dot_dimension_numbers<[1], [0], [0], [1], [0, 0, 1, 1], [], []>} : vector<1024x32xbf16>, vector<32x384xbf16>, vector<1024x384xf32> -> vector<1024x384xf32>
    %116 = vector.broadcast %104 : vector<1024x1xf32> to vector<1024x384xf32>
    %117 = arith.addf %115, %116 : vector<1024x384xf32>
    %118 = arith.truncf %101 : vector<32x128xf32> to vector<32x128xbf16>
    %cst_35 = arith.constant dense<0.000000e+00> : vector<32x384xf32>
    %119 = tpu.matmul %118, %11, %cst_35 {dimension_numbers = #tpu.dot_dimension_numbers<[1], [0], [0], [1], [0, 0, 1, 1], [], []>} : vector<32x128xbf16>, vector<128x384xbf16>, vector<32x384xf32> -> vector<32x384xf32>
    %120 = vector.extract_strided_slice %119 {offsets = [0, 0], sizes = [1, 384], strides = [1, 1]} : vector<32x384xf32> to vector<1x384xf32>
    %121 = vector.extract_strided_slice %117 {offsets = [0, 0], sizes = [32, 384], strides = [1, 1]} : vector<1024x384xf32> to vector<32x384xf32>
    %122 = vector.broadcast %120 : vector<1x384xf32> to vector<32x384xf32>
    %123 = arith.mulf %122, %121 : vector<32x384xf32>
    %124 = vector.extract_strided_slice %119 {offsets = [1, 0], sizes = [1, 384], strides = [1, 1]} : vector<32x384xf32> to vector<1x384xf32>
    %125 = vector.extract_strided_slice %117 {offsets = [32, 0], sizes = [32, 384], strides = [1, 1]} : vector<1024x384xf32> to vector<32x384xf32>
    %126 = vector.broadcast %124 : vector<1x384xf32> to vector<32x384xf32>
    %127 = arith.mulf %126, %125 : vector<32x384xf32>
    %128 = arith.addf %123, %127 : vector<32x384xf32>
    %129 = vector.extract_strided_slice %119 {offsets = [2, 0], sizes = [1, 384], strides = [1, 1]} : vector<32x384xf32> to vector<1x384xf32>
    %130 = vector.extract_strided_slice %117 {offsets = [64, 0], sizes = [32, 384], strides = [1, 1]} : vector<1024x384xf32> to vector<32x384xf32>
    %131 = vector.broadcast %129 : vector<1x384xf32> to vector<32x384xf32>
    %132 = arith.mulf %131, %130 : vector<32x384xf32>
    %133 = arith.addf %128, %132 : vector<32x384xf32>
    %134 = vector.extract_strided_slice %119 {offsets = [3, 0], sizes = [1, 384], strides = [1, 1]} : vector<32x384xf32> to vector<1x384xf32>
    %135 = vector.extract_strided_slice %117 {offsets = [96, 0], sizes = [32, 384], strides = [1, 1]} : vector<1024x384xf32> to vector<32x384xf32>
    %136 = vector.broadcast %134 : vector<1x384xf32> to vector<32x384xf32>
    %137 = arith.mulf %136, %135 : vector<32x384xf32>
    %138 = arith.addf %133, %137 : vector<32x384xf32>
    %139 = vector.extract_strided_slice %119 {offsets = [4, 0], sizes = [1, 384], strides = [1, 1]} : vector<32x384xf32> to vector<1x384xf32>
    %140 = vector.extract_strided_slice %117 {offsets = [128, 0], sizes = [32, 384], strides = [1, 1]} : vector<1024x384xf32> to vector<32x384xf32>
    %141 = vector.broadcast %139 : vector<1x384xf32> to vector<32x384xf32>
    %142 = arith.mulf %141, %140 : vector<32x384xf32>
    %143 = arith.addf %138, %142 : vector<32x384xf32>
    %144 = vector.extract_strided_slice %119 {offsets = [5, 0], sizes = [1, 384], strides = [1, 1]} : vector<32x384xf32> to vector<1x384xf32>
    %145 = vector.extract_strided_slice %117 {offsets = [160, 0], sizes = [32, 384], strides = [1, 1]} : vector<1024x384xf32> to vector<32x384xf32>
    %146 = vector.broadcast %144 : vector<1x384xf32> to vector<32x384xf32>
    %147 = arith.mulf %146, %145 : vector<32x384xf32>
    %148 = arith.addf %143, %147 : vector<32x384xf32>
    %149 = vector.extract_strided_slice %119 {offsets = [6, 0], sizes = [1, 384], strides = [1, 1]} : vector<32x384xf32> to vector<1x384xf32>
    %150 = vector.extract_strided_slice %117 {offsets = [192, 0], sizes = [32, 384], strides = [1, 1]} : vector<1024x384xf32> to vector<32x384xf32>
    %151 = vector.broadcast %149 : vector<1x384xf32> to vector<32x384xf32>
    %152 = arith.mulf %151, %150 : vector<32x384xf32>
    %153 = arith.addf %148, %152 : vector<32x384xf32>
    %154 = vector.extract_strided_slice %119 {offsets = [7, 0], sizes = [1, 384], strides = [1, 1]} : vector<32x384xf32> to vector<1x384xf32>
    %155 = vector.extract_strided_slice %117 {offsets = [224, 0], sizes = [32, 384], strides = [1, 1]} : vector<1024x384xf32> to vector<32x384xf32>
    %156 = vector.broadcast %154 : vector<1x384xf32> to vector<32x384xf32>
    %157 = arith.mulf %156, %155 : vector<32x384xf32>
    %158 = arith.addf %153, %157 : vector<32x384xf32>
    %159 = vector.extract_strided_slice %119 {offsets = [8, 0], sizes = [1, 384], strides = [1, 1]} : vector<32x384xf32> to vector<1x384xf32>
    %160 = vector.extract_strided_slice %117 {offsets = [256, 0], sizes = [32, 384], strides = [1, 1]} : vector<1024x384xf32> to vector<32x384xf32>
    %161 = vector.broadcast %159 : vector<1x384xf32> to vector<32x384xf32>
    %162 = arith.mulf %161, %160 : vector<32x384xf32>
    %163 = arith.addf %158, %162 : vector<32x384xf32>
    %164 = vector.extract_strided_slice %119 {offsets = [9, 0], sizes = [1, 384], strides = [1, 1]} : vector<32x384xf32> to vector<1x384xf32>
    %165 = vector.extract_strided_slice %117 {offsets = [288, 0], sizes = [32, 384], strides = [1, 1]} : vector<1024x384xf32> to vector<32x384xf32>
    %166 = vector.broadcast %164 : vector<1x384xf32> to vector<32x384xf32>
    %167 = arith.mulf %166, %165 : vector<32x384xf32>
    %168 = arith.addf %163, %167 : vector<32x384xf32>
    %169 = vector.extract_strided_slice %119 {offsets = [10, 0], sizes = [1, 384], strides = [1, 1]} : vector<32x384xf32> to vector<1x384xf32>
    %170 = vector.extract_strided_slice %117 {offsets = [320, 0], sizes = [32, 384], strides = [1, 1]} : vector<1024x384xf32> to vector<32x384xf32>
    %171 = vector.broadcast %169 : vector<1x384xf32> to vector<32x384xf32>
    %172 = arith.mulf %171, %170 : vector<32x384xf32>
    %173 = arith.addf %168, %172 : vector<32x384xf32>
    %174 = vector.extract_strided_slice %119 {offsets = [11, 0], sizes = [1, 384], strides = [1, 1]} : vector<32x384xf32> to vector<1x384xf32>
    %175 = vector.extract_strided_slice %117 {offsets = [352, 0], sizes = [32, 384], strides = [1, 1]} : vector<1024x384xf32> to vector<32x384xf32>
    %176 = vector.broadcast %174 : vector<1x384xf32> to vector<32x384xf32>
    %177 = arith.mulf %176, %175 : vector<32x384xf32>
    %178 = arith.addf %173, %177 : vector<32x384xf32>
    %179 = vector.extract_strided_slice %119 {offsets = [12, 0], sizes = [1, 384], strides = [1, 1]} : vector<32x384xf32> to vector<1x384xf32>
    %180 = vector.extract_strided_slice %117 {offsets = [384, 0], sizes = [32, 384], strides = [1, 1]} : vector<1024x384xf32> to vector<32x384xf32>
    %181 = vector.broadcast %179 : vector<1x384xf32> to vector<32x384xf32>
    %182 = arith.mulf %181, %180 : vector<32x384xf32>
    %183 = arith.addf %178, %182 : vector<32x384xf32>
    %184 = vector.extract_strided_slice %119 {offsets = [13, 0], sizes = [1, 384], strides = [1, 1]} : vector<32x384xf32> to vector<1x384xf32>
    %185 = vector.extract_strided_slice %117 {offsets = [416, 0], sizes = [32, 384], strides = [1, 1]} : vector<1024x384xf32> to vector<32x384xf32>
    %186 = vector.broadcast %184 : vector<1x384xf32> to vector<32x384xf32>
    %187 = arith.mulf %186, %185 : vector<32x384xf32>
    %188 = arith.addf %183, %187 : vector<32x384xf32>
    %189 = vector.extract_strided_slice %119 {offsets = [14, 0], sizes = [1, 384], strides = [1, 1]} : vector<32x384xf32> to vector<1x384xf32>
    %190 = vector.extract_strided_slice %117 {offsets = [448, 0], sizes = [32, 384], strides = [1, 1]} : vector<1024x384xf32> to vector<32x384xf32>
    %191 = vector.broadcast %189 : vector<1x384xf32> to vector<32x384xf32>
    %192 = arith.mulf %191, %190 : vector<32x384xf32>
    %193 = arith.addf %188, %192 : vector<32x384xf32>
    %194 = vector.extract_strided_slice %119 {offsets = [15, 0], sizes = [1, 384], strides = [1, 1]} : vector<32x384xf32> to vector<1x384xf32>
    %195 = vector.extract_strided_slice %117 {offsets = [480, 0], sizes = [32, 384], strides = [1, 1]} : vector<1024x384xf32> to vector<32x384xf32>
    %196 = vector.broadcast %194 : vector<1x384xf32> to vector<32x384xf32>
    %197 = arith.mulf %196, %195 : vector<32x384xf32>
    %198 = arith.addf %193, %197 : vector<32x384xf32>
    %199 = vector.extract_strided_slice %119 {offsets = [16, 0], sizes = [1, 384], strides = [1, 1]} : vector<32x384xf32> to vector<1x384xf32>
    %200 = vector.extract_strided_slice %117 {offsets = [512, 0], sizes = [32, 384], strides = [1, 1]} : vector<1024x384xf32> to vector<32x384xf32>
    %201 = vector.broadcast %199 : vector<1x384xf32> to vector<32x384xf32>
    %202 = arith.mulf %201, %200 : vector<32x384xf32>
    %203 = arith.addf %198, %202 : vector<32x384xf32>
    %204 = vector.extract_strided_slice %119 {offsets = [17, 0], sizes = [1, 384], strides = [1, 1]} : vector<32x384xf32> to vector<1x384xf32>
    %205 = vector.extract_strided_slice %117 {offsets = [544, 0], sizes = [32, 384], strides = [1, 1]} : vector<1024x384xf32> to vector<32x384xf32>
    %206 = vector.broadcast %204 : vector<1x384xf32> to vector<32x384xf32>
    %207 = arith.mulf %206, %205 : vector<32x384xf32>
    %208 = arith.addf %203, %207 : vector<32x384xf32>
    %209 = vector.extract_strided_slice %119 {offsets = [18, 0], sizes = [1, 384], strides = [1, 1]} : vector<32x384xf32> to vector<1x384xf32>
    %210 = vector.extract_strided_slice %117 {offsets = [576, 0], sizes = [32, 384], strides = [1, 1]} : vector<1024x384xf32> to vector<32x384xf32>
    %211 = vector.broadcast %209 : vector<1x384xf32> to vector<32x384xf32>
    %212 = arith.mulf %211, %210 : vector<32x384xf32>
    %213 = arith.addf %208, %212 : vector<32x384xf32>
    %214 = vector.extract_strided_slice %119 {offsets = [19, 0], sizes = [1, 384], strides = [1, 1]} : vector<32x384xf32> to vector<1x384xf32>
    %215 = vector.extract_strided_slice %117 {offsets = [608, 0], sizes = [32, 384], strides = [1, 1]} : vector<1024x384xf32> to vector<32x384xf32>
    %216 = vector.broadcast %214 : vector<1x384xf32> to vector<32x384xf32>
    %217 = arith.mulf %216, %215 : vector<32x384xf32>
    %218 = arith.addf %213, %217 : vector<32x384xf32>
    %219 = vector.extract_strided_slice %119 {offsets = [20, 0], sizes = [1, 384], strides = [1, 1]} : vector<32x384xf32> to vector<1x384xf32>
    %220 = vector.extract_strided_slice %117 {offsets = [640, 0], sizes = [32, 384], strides = [1, 1]} : vector<1024x384xf32> to vector<32x384xf32>
    %221 = vector.broadcast %219 : vector<1x384xf32> to vector<32x384xf32>
    %222 = arith.mulf %221, %220 : vector<32x384xf32>
    %223 = arith.addf %218, %222 : vector<32x384xf32>
    %224 = vector.extract_strided_slice %119 {offsets = [21, 0], sizes = [1, 384], strides = [1, 1]} : vector<32x384xf32> to vector<1x384xf32>
    %225 = vector.extract_strided_slice %117 {offsets = [672, 0], sizes = [32, 384], strides = [1, 1]} : vector<1024x384xf32> to vector<32x384xf32>
    %226 = vector.broadcast %224 : vector<1x384xf32> to vector<32x384xf32>
    %227 = arith.mulf %226, %225 : vector<32x384xf32>
    %228 = arith.addf %223, %227 : vector<32x384xf32>
    %229 = vector.extract_strided_slice %119 {offsets = [22, 0], sizes = [1, 384], strides = [1, 1]} : vector<32x384xf32> to vector<1x384xf32>
    %230 = vector.extract_strided_slice %117 {offsets = [704, 0], sizes = [32, 384], strides = [1, 1]} : vector<1024x384xf32> to vector<32x384xf32>
    %231 = vector.broadcast %229 : vector<1x384xf32> to vector<32x384xf32>
    %232 = arith.mulf %231, %230 : vector<32x384xf32>
    %233 = arith.addf %228, %232 : vector<32x384xf32>
    %234 = vector.extract_strided_slice %119 {offsets = [23, 0], sizes = [1, 384], strides = [1, 1]} : vector<32x384xf32> to vector<1x384xf32>
    %235 = vector.extract_strided_slice %117 {offsets = [736, 0], sizes = [32, 384], strides = [1, 1]} : vector<1024x384xf32> to vector<32x384xf32>
    %236 = vector.broadcast %234 : vector<1x384xf32> to vector<32x384xf32>
    %237 = arith.mulf %236, %235 : vector<32x384xf32>
    %238 = arith.addf %233, %237 : vector<32x384xf32>
    %239 = vector.extract_strided_slice %119 {offsets = [24, 0], sizes = [1, 384], strides = [1, 1]} : vector<32x384xf32> to vector<1x384xf32>
    %240 = vector.extract_strided_slice %117 {offsets = [768, 0], sizes = [32, 384], strides = [1, 1]} : vector<1024x384xf32> to vector<32x384xf32>
    %241 = vector.broadcast %239 : vector<1x384xf32> to vector<32x384xf32>
    %242 = arith.mulf %241, %240 : vector<32x384xf32>
    %243 = arith.addf %238, %242 : vector<32x384xf32>
    %244 = vector.extract_strided_slice %119 {offsets = [25, 0], sizes = [1, 384], strides = [1, 1]} : vector<32x384xf32> to vector<1x384xf32>
    %245 = vector.extract_strided_slice %117 {offsets = [800, 0], sizes = [32, 384], strides = [1, 1]} : vector<1024x384xf32> to vector<32x384xf32>
    %246 = vector.broadcast %244 : vector<1x384xf32> to vector<32x384xf32>
    %247 = arith.mulf %246, %245 : vector<32x384xf32>
    %248 = arith.addf %243, %247 : vector<32x384xf32>
    %249 = vector.extract_strided_slice %119 {offsets = [26, 0], sizes = [1, 384], strides = [1, 1]} : vector<32x384xf32> to vector<1x384xf32>
    %250 = vector.extract_strided_slice %117 {offsets = [832, 0], sizes = [32, 384], strides = [1, 1]} : vector<1024x384xf32> to vector<32x384xf32>
    %251 = vector.broadcast %249 : vector<1x384xf32> to vector<32x384xf32>
    %252 = arith.mulf %251, %250 : vector<32x384xf32>
    %253 = arith.addf %248, %252 : vector<32x384xf32>
    %254 = vector.extract_strided_slice %119 {offsets = [27, 0], sizes = [1, 384], strides = [1, 1]} : vector<32x384xf32> to vector<1x384xf32>
    %255 = vector.extract_strided_slice %117 {offsets = [864, 0], sizes = [32, 384], strides = [1, 1]} : vector<1024x384xf32> to vector<32x384xf32>
    %256 = vector.broadcast %254 : vector<1x384xf32> to vector<32x384xf32>
    %257 = arith.mulf %256, %255 : vector<32x384xf32>
    %258 = arith.addf %253, %257 : vector<32x384xf32>
    %259 = vector.extract_strided_slice %119 {offsets = [28, 0], sizes = [1, 384], strides = [1, 1]} : vector<32x384xf32> to vector<1x384xf32>
    %260 = vector.extract_strided_slice %117 {offsets = [896, 0], sizes = [32, 384], strides = [1, 1]} : vector<1024x384xf32> to vector<32x384xf32>
    %261 = vector.broadcast %259 : vector<1x384xf32> to vector<32x384xf32>
    %262 = arith.mulf %261, %260 : vector<32x384xf32>
    %263 = arith.addf %258, %262 : vector<32x384xf32>
    %264 = vector.extract_strided_slice %119 {offsets = [29, 0], sizes = [1, 384], strides = [1, 1]} : vector<32x384xf32> to vector<1x384xf32>
    %265 = vector.extract_strided_slice %117 {offsets = [928, 0], sizes = [32, 384], strides = [1, 1]} : vector<1024x384xf32> to vector<32x384xf32>
    %266 = vector.broadcast %264 : vector<1x384xf32> to vector<32x384xf32>
    %267 = arith.mulf %266, %265 : vector<32x384xf32>
    %268 = arith.addf %263, %267 : vector<32x384xf32>
    %269 = vector.extract_strided_slice %119 {offsets = [30, 0], sizes = [1, 384], strides = [1, 1]} : vector<32x384xf32> to vector<1x384xf32>
    %270 = vector.extract_strided_slice %117 {offsets = [960, 0], sizes = [32, 384], strides = [1, 1]} : vector<1024x384xf32> to vector<32x384xf32>
    %271 = vector.broadcast %269 : vector<1x384xf32> to vector<32x384xf32>
    %272 = arith.mulf %271, %270 : vector<32x384xf32>
    %273 = arith.addf %268, %272 : vector<32x384xf32>
    %274 = vector.extract_strided_slice %119 {offsets = [31, 0], sizes = [1, 384], strides = [1, 1]} : vector<32x384xf32> to vector<1x384xf32>
    %275 = vector.extract_strided_slice %117 {offsets = [992, 0], sizes = [32, 384], strides = [1, 1]} : vector<1024x384xf32> to vector<32x384xf32>
    %276 = vector.broadcast %274 : vector<1x384xf32> to vector<32x384xf32>
    %277 = arith.mulf %276, %275 : vector<32x384xf32>
    %278 = arith.addf %273, %277 : vector<32x384xf32>
    %279 = arith.truncf %278 : vector<32x384xf32> to vector<32x384xbf16>
    %cst_36 = arith.constant dense<0.000000e+00> : vector<32x128xf32>
    %280 = tpu.matmul %279, %19, %cst_36 {dimension_numbers = #tpu.dot_dimension_numbers<[1], [0], [0], [1], [0, 0, 1, 1], [], []>} : vector<32x384xbf16>, vector<384x128xbf16>, vector<32x128xf32> -> vector<32x128xf32>
    %281 = vector.broadcast %22 : vector<1x128xf32> to vector<32x128xf32>
    %282 = arith.mulf %280, %281 : vector<32x128xf32>
    %c0_37 = arith.constant 0 : index
    %c0_38 = arith.constant 0 : index
    %283 = vector.load %arg10[%c0_37, %c0_38] : memref<32x32xbf16, #tpu.memory_space<vmem>>, vector<32x32xbf16>
    %284 = arith.truncf %101 : vector<32x128xf32> to vector<32x128xbf16>
    %cst_39 = arith.constant dense<0.000000e+00> : vector<32x128xf32>
    %285 = tpu.matmul %283, %284, %cst_39 {dimension_numbers = #tpu.dot_dimension_numbers<[1], [0], [0], [1], [0, 0, 1, 1], [], []>} : vector<32x32xbf16>, vector<32x128xbf16>, vector<32x128xf32> -> vector<32x128xf32>
    %286 = arith.addf %282, %285 : vector<32x128xf32>
    %287 = vector.broadcast %105 : vector<32x1xf32> to vector<32x128xf32>
    %288 = arith.addf %286, %287 : vector<32x128xf32>
    %cst_40 = arith.constant 0.000000e+00 : f32
    %289 = vector.broadcast %cst_40 : f32 to vector<32x128xf32>
    %290 = arith.maximumf %288, %289 : vector<32x128xf32>
    %c0_41 = arith.constant 0 : index
    %c0_42 = arith.constant 0 : index
    %291 = vector.load %arg11[%c0_41, %c0_42] : memref<8x32xbf16, #tpu.memory_space<vmem>>, vector<8x32xbf16>
    %292 = arith.truncf %290 : vector<32x128xf32> to vector<32x128xbf16>
    %cst_43 = arith.constant dense<0.000000e+00> : vector<8x128xf32>
    %293 = tpu.matmul %291, %292, %cst_43 {dimension_numbers = #tpu.dot_dimension_numbers<[1], [0], [0], [1], [0, 0, 1, 1], [], []>} : vector<8x32xbf16>, vector<32x128xbf16>, vector<8x128xf32> -> vector<8x128xf32>
    %c0_44 = arith.constant 0 : index
    %c8 = arith.constant 8 : index
    %294 = vector.load %arg12[%c0_44, %c8] : memref<1024x16xf32, #tpu.memory_space<vmem>>, vector<8x1xf32>
    %295 = vector.broadcast %294 : vector<8x1xf32> to vector<8x128xf32>
    %296 = arith.addf %293, %295 : vector<8x128xf32>
    %cst_45 = arith.constant 0.000000e+00 : f32
    %297 = vector.broadcast %cst_45 : f32 to vector<8x128xf32>
    %298 = arith.cmpf oeq, %1, %297 : vector<8x128xf32>
    %cst_46 = arith.constant -1.000000e+30 : f32
    %299 = vector.broadcast %cst_46 : f32 to vector<8x128xf32>
    %300 = arith.select %298, %299, %296 : vector<8x128xi1>, vector<8x128xf32>
    %cst_47 = arith.constant dense<0xFF800000> : vector<128xf32>
    %301 = vector.multi_reduction <maximumf>, %300, %cst_47 [0] : vector<8x128xf32> to vector<128xf32>
    %302 = vector.shape_cast %301 : vector<128xf32> to vector<1x128xf32>
    %303 = vector.broadcast %302 : vector<1x128xf32> to vector<8x128xf32>
    %304 = arith.subf %300, %303 : vector<8x128xf32>
    %305 = math.exp %304 : vector<8x128xf32>
    %cst_48 = arith.constant dense<0.000000e+00> : vector<128xf32>
    %306 = vector.multi_reduction <add>, %305, %cst_48 [0] : vector<8x128xf32> to vector<128xf32>
    %307 = vector.shape_cast %306 : vector<128xf32> to vector<1x128xf32>
    %308 = tpu.reciprocal %307 : vector<1x128xf32> -> vector<1x128xf32>
    %309 = vector.broadcast %308 : vector<1x128xf32> to vector<8x128xf32>
    %310 = arith.mulf %305, %309 : vector<8x128xf32>
    %311 = vector.extract_strided_slice %0 {offsets = [9, 0], sizes = [1, 128], strides = [1, 1]} : vector<10x128xf32> to vector<1x128xf32>
    %cst_49 = arith.constant -1.000000e+00 : f32
    %312 = vector.broadcast %cst_49 : f32 to vector<1x128xf32>
    %313 = arith.cmpf one, %311, %312 : vector<1x128xf32>
    %cst_50 = arith.constant 0.000000e+00 : f32
    %314 = vector.shape_cast %313 : vector<1x128xi1> to vector<1x128xi1>
    %315 = vector.broadcast %314 : vector<1x128xi1> to vector<8x128xi1>
    %316 = vector.broadcast %cst_50 : f32 to vector<8x128xf32>
    %317 = arith.select %315, %310, %316 : vector<8x128xi1>, vector<8x128xf32>
    %cst_51 = arith.constant 0.000000e+00 : f32
    %318 = vector.broadcast %cst_51 : f32 to vector<8x128xf32>
    %319 = arith.cmpf ogt, %5, %318 : vector<8x128xf32>
    %cst_52 = arith.constant dense<true> : vector<1x128xi1>
    %320 = arith.xori %313, %cst_52 : vector<1x128xi1>
    %321 = vector.broadcast %320 : vector<1x128xi1> to vector<8x128xi1>
    %322 = arith.andi %319, %321 : vector<8x128xi1>
    %cst_53 = arith.constant 1.000000e+00 : f32
    %323 = vector.broadcast %cst_53 : f32 to vector<8x128xf32>
    %324 = arith.select %322, %323, %317 : vector<8x128xi1>, vector<8x128xf32>
    %c0_54 = arith.constant 0 : index
    %c0_55 = arith.constant 0 : index
    %325 = vector.load %arg13[%c0_54, %c0_55] : memref<8x128xf32, #tpu.memory_space<vmem>>, vector<8x128xf32>
    tpu.vector_store %arg13[%c0_54, %c0_55], %324 {strides = array<i32>} : memref<8x128xf32, #tpu.memory_space<vmem>>, vector<8x128xf32>,
    return
  }
  func.func @transform_0(%arg0: i32) -> (i32, i32) {
    %c0_i32 = arith.constant 0 : i32
    %c0_i32_0 = arith.constant 0 : i32
    return %c0_i32, %arg0 : i32, i32
  }
  func.func @transform_1(%arg0: i32) -> (i32, i32) {
    %c0_i32 = arith.constant 0 : i32
    %c0_i32_0 = arith.constant 0 : i32
    return %c0_i32, %arg0 : i32, i32
  }
  func.func @transform_2(%arg0: i32) -> (i32, i32) {
    %c0_i32 = arith.constant 0 : i32
    %c0_i32_0 = arith.constant 0 : i32
    return %c0_i32, %arg0 : i32, i32
  }
  func.func @transform_3(%arg0: i32) -> (i32, i32) {
    %c0_i32 = arith.constant 0 : i32
    %c0_i32_0 = arith.constant 0 : i32
    %c0_i32_1 = arith.constant 0 : i32
    return %c0_i32, %c0_i32_0 : i32, i32
  }
  func.func @transform_4(%arg0: i32) -> (i32, i32) {
    %c0_i32 = arith.constant 0 : i32
    %c0_i32_0 = arith.constant 0 : i32
    %c0_i32_1 = arith.constant 0 : i32
    return %c0_i32, %c0_i32_0 : i32, i32
  }
  func.func @transform_5(%arg0: i32) -> (i32, i32) {
    %c0_i32 = arith.constant 0 : i32
    %c0_i32_0 = arith.constant 0 : i32
    %c0_i32_1 = arith.constant 0 : i32
    return %c0_i32, %c0_i32_0 : i32, i32
  }
  func.func @transform_6(%arg0: i32) -> (i32, i32) {
    %c0_i32 = arith.constant 0 : i32
    %c0_i32_0 = arith.constant 0 : i32
    %c0_i32_1 = arith.constant 0 : i32
    return %c0_i32, %c0_i32_0 : i32, i32
  }
  func.func @transform_7(%arg0: i32) -> (i32, i32) {
    %c0_i32 = arith.constant 0 : i32
    %c0_i32_0 = arith.constant 0 : i32
    %c0_i32_1 = arith.constant 0 : i32
    return %c0_i32, %c0_i32_0 : i32, i32
  }
  func.func @transform_8(%arg0: i32) -> (i32, i32) {
    %c0_i32 = arith.constant 0 : i32
    %c0_i32_0 = arith.constant 0 : i32
    %c0_i32_1 = arith.constant 0 : i32
    return %c0_i32, %c0_i32_0 : i32, i32
  }
  func.func @transform_9(%arg0: i32) -> (i32, i32) {
    %c0_i32 = arith.constant 0 : i32
    %c0_i32_0 = arith.constant 0 : i32
    %c0_i32_1 = arith.constant 0 : i32
    return %c0_i32, %c0_i32_0 : i32, i32
  }
  func.func @transform_10(%arg0: i32) -> (i32, i32) {
    %c0_i32 = arith.constant 0 : i32
    %c0_i32_0 = arith.constant 0 : i32
    %c0_i32_1 = arith.constant 0 : i32
    return %c0_i32, %c0_i32_0 : i32, i32
  }
  func.func @transform_11(%arg0: i32) -> (i32, i32) {
    %c0_i32 = arith.constant 0 : i32
    %c0_i32_0 = arith.constant 0 : i32
    %c0_i32_1 = arith.constant 0 : i32
    return %c0_i32, %c0_i32_0 : i32, i32
  }
  func.func @transform_12(%arg0: i32) -> (i32, i32) {
    %c0_i32 = arith.constant 0 : i32
    %c0_i32_0 = arith.constant 0 : i32
    return %c0_i32, %arg0 : i32, i32
  }
}

</mosaic_0001>

<llo_original>
// kernel: tpu_custom_call.1
$region0: #{tpu_custom_call.1}
  #allocation0 [shape = 'u32[]', space=smem, size = 0x4, offset = 0x4, fixed_abs, tag = 'smem constant byte address 0x4 - core index']
  #allocation1 [shape = 'u32[72,128]{1,0:T(1,128)}', space=vmem, size = 0x9000, scoped, tag = 'internal scratch']
  %s0 = inlined_call_operand.vmem [shape: f32[10,256], index: 0, kind: input, shape index: {}]
  %s1 = inlined_call_operand.vmem [shape: f32[8,256], index: 1, kind: input, shape index: {}]
  %s2 = inlined_call_operand.vmem [shape: f32[1,768], index: 2, kind: input, shape index: {}]
  %s3 = inlined_call_operand.vmem [shape: s32[1,384], index: 3, kind: input, shape index: {}]
  %s4 = inlined_call_operand.vmem [shape: s32[384,1], index: 4, kind: input, shape index: {}]
  %s5 = inlined_call_operand.vmem [shape: f32[8,128], index: 5, kind: input, shape index: {}]
  %s6 = inlined_call_operand.vmem [shape: bf16[320,320], index: 6, kind: input, shape index: {}]
  %s7 = inlined_call_operand.vmem [shape: bf16[1024,32], index: 7, kind: input, shape index: {}]
  %s8 = inlined_call_operand.vmem [shape: bf16[32,10], index: 8, kind: input, shape index: {}]
  %s9 = inlined_call_operand.vmem [shape: bf16[32,32], index: 9, kind: input, shape index: {}]
  %s10 = inlined_call_operand.vmem [shape: bf16[8,32], index: 10, kind: input, shape index: {}]
  %s11 = inlined_call_operand.vmem [shape: f32[1024,16], index: 11, kind: input, shape index: {}]
  %s12 = inlined_call_operand.hbm [shape: f32[8,256], index: 12, kind: output, shape index: {}]
  %s13 = sld [smem:[#allocation0]]
  $region119: #{tpu_custom_call.1} parent=0
    _
  %s15 = ssub.s32 1, %s13
  %s16 = scalar_select 0, %s15, %s13
  $region1: #{tpu_custom_call.1} parent=0
    #allocation2 [shape = 'u8[16384]{0}', space=vmem, size = 0x4000, scoped, tag = 'input window, operand 0']
    #allocation3 [shape = 'u8[8192]{0}', space=vmem, size = 0x2000, scoped, tag = 'output window, operand 0']
    #allocation4 [shape = 's32[2]{0}', space=sflag, size = 0x8, scoped, tag = 'scoped memory for tpu_custom_call.1']
    %17 = vsyncpa [#allocation4], 0
    %s18 = scalar_lea.sflag [#allocation4], 1
    %19 = vsyncpa %s18, 0
    loop: start=0, step=1, limit=4
    $region2: #{tpu_custom_call.1} parent=1 // loop_pre_header
      _
    $region3: #{tpu_custom_call.1} parent=1 // loop_header
      %s21 = sphi 0, %s25
      %p22 = scmp.ge.s32.totalorder %s21, 4
      %s31 = sphi 0, %s33
      %s34 = sphi 0, %s31
      %s35 = sphi 0, %s34
      %s51 = sphi 0, %s35
      %s57 = sphi 0, %s59
      %s60 = sphi 0, %s57
      %s61 = sphi 0, %s60
      %s77 = sphi 0, %s61
      %s83 = sphi 0, %s85
      %s86 = sphi 0, %s83
      %s87 = sphi 0, %s86
      %s103 = sphi 0, %s87
      %s107 = sphi 0, %s107
      %s109 = sphi 0, %s107
      %s110 = sphi 0, %s109
      %s124 = sphi 0, %s110
      %s128 = sphi 0, %s128
      %s130 = sphi 0, %s128
      %s131 = sphi 0, %s130
      %s145 = sphi 0, %s131
      %s149 = sphi 0, %s149
      %s151 = sphi 0, %s149
      %s152 = sphi 0, %s151
      %s166 = sphi 0, %s152
      %s170 = sphi 0, %s170
      %s172 = sphi 0, %s170
      %s173 = sphi 0, %s172
      %s187 = sphi 0, %s173
      %s191 = sphi 0, %s191
      %s193 = sphi 0, %s191
      %s194 = sphi 0, %s193
      %s208 = sphi 0, %s194
      %s212 = sphi 0, %s212
      %s214 = sphi 0, %s212
      %s215 = sphi 0, %s214
      %s229 = sphi 0, %s215
      %s233 = sphi 0, %s233
      %s235 = sphi 0, %s233
      %s236 = sphi 0, %s235
      %s250 = sphi 0, %s236
      %s254 = sphi 0, %s254
      %s256 = sphi 0, %s254
      %s257 = sphi 0, %s256
      %s271 = sphi 0, %s257
      %s275 = sphi 0, %s275
      %s277 = sphi 0, %s275
      %s278 = sphi 0, %s277
      %s292 = sphi 0, %s278
      %s298 = sphi 0, %s300
      %s301 = sphi 0, %s298
      %s302 = sphi 0, %s301
      %s318 = sphi 0, %s302
    $region4: #{tpu_custom_call.1} parent=1 // loop_header_branch
      %24 = sbr.rel (%p22) target = $region8
    $region5: #{tpu_custom_call.1} parent=1 // loop_body
      %s26 = ssub.s32 %s21, 1
      %s27 = ssub.s32 %s21, 2
      %s28 = sadd.s32 %s21, 1
      %s29 = ssub.s32 %s21, %s28
      %p30 = scmp.eq.s32.totalorder %s29, 0
      %s32 = sadd.s32 %s31, 1
      %s33 = scalar_select %p30, %s31, %s32
      %p36 = pneg %p30
      %p37 = scmp.eq.s32.totalorder %s21, 1
      %p38 = por %p36, %p37
      %p39 = scmp.ne.s32.totalorder %s31, %s34
      %p40 = scmp.eq.s32.totalorder %s21, 0
      %p41 = por %p39, %p40
      %p42 = scmp.ne.s32.totalorder %s31, %s34
      %p43 = scmp.eq.s32.totalorder %s26, 1
      %p44 = por %p42, %p43
      %p45 = scmp.ne.s32.totalorder %s34, %s35
      %p46 = scmp.eq.s32.totalorder %s26, 0
      %p47 = por %p45, %p46
      %p48 = scmp.ne.s32.totalorder %s34, %s35
      %p49 = scmp.eq.s32.totalorder %s27, 1
      %p50 = por %p48, %p49
      %p52 = scmp.ne.s32.totalorder %s35, %s51
      %p53 = scmp.eq.s32.totalorder %s27, 0
      %p54 = por %p52, %p53
      %s55 = ssub.s32 %s21, %s28
      %p56 = scmp.eq.s32.totalorder %s55, 0
      %s58 = sadd.s32 %s57, 1
      %s59 = scalar_select %p56, %s57, %s58
      %p62 = pneg %p56
      %p63 = scmp.eq.s32.totalorder %s21, 1
      %p64 = por %p62, %p63
      %p65 = scmp.ne.s32.totalorder %s57, %s60
      %p66 = scmp.eq.s32.totalorder %s21, 0
      %p67 = por %p65, %p66
      %p68 = scmp.ne.s32.totalorder %s57, %s60
      %p69 = scmp.eq.s32.totalorder %s26, 1
      %p70 = por %p68, %p69
      %p71 = scmp.ne.s32.totalorder %s60, %s61
      %p72 = scmp.eq.s32.totalorder %s26, 0
      %p73 = por %p71, %p72
      %p74 = scmp.ne.s32.totalorder %s60, %s61
      %p75 = scmp.eq.s32.totalorder %s27, 1
      %p76 = por %p74, %p75
      %p78 = scmp.ne.s32.totalorder %s61, %s77
      %p79 = scmp.eq.s32.totalorder %s27, 0
      %p80 = por %p78, %p79
      %s81 = ssub.s32 %s21, %s28
      %p82 = scmp.eq.s32.totalorder %s81, 0
      %s84 = sadd.s32 %s83, 1
      %s85 = scalar_select %p82, %s83, %s84
      %p88 = pneg %p82
      %p89 = scmp.eq.s32.totalorder %s21, 1
      %p90 = por %p88, %p89
      %p91 = scmp.ne.s32.totalorder %s83, %s86
      %p92 = scmp.eq.s32.totalorder %s21, 0
      %p93 = por %p91, %p92
      %p94 = scmp.ne.s32.totalorder %s83, %s86
      %p95 = scmp.eq.s32.totalorder %s26, 1
      %p96 = por %p94, %p95
      %p97 = scmp.ne.s32.totalorder %s86, %s87
      %p98 = scmp.eq.s32.totalorder %s26, 0
      %p99 = por %p97, %p98
      %p100 = scmp.ne.s32.totalorder %s86, %s87
      %p101 = scmp.eq.s32.totalorder %s27, 1
      %p102 = por %p100, %p101
      %p104 = scmp.ne.s32.totalorder %s87, %s103
      %p105 = scmp.eq.s32.totalorder %s27, 0
      %p106 = por %p104, %p105
      %s108 = sadd.s32 %s107, 1
      %p111 = scmp.eq.s32.totalorder %s21, 1
      %p112 = scmp.ne.s32.totalorder %s107, %s109
      %p113 = scmp.eq.s32.totalorder %s21, 0
      %p114 = por %p112, %p113
      %p115 = scmp.ne.s32.totalorder %s107, %s109
      %p116 = scmp.eq.s32.totalorder %s26, 1
      %p117 = por %p115, %p116
      %p118 = scmp.ne.s32.totalorder %s109, %s110
      %p119 = scmp.eq.s32.totalorder %s26, 0
      %p120 = por %p118, %p119
      %p121 = scmp.ne.s32.totalorder %s109, %s110
      %p122 = scmp.eq.s32.totalorder %s27, 1
      %p123 = por %p121, %p122
      %p125 = scmp.ne.s32.totalorder %s110, %s124
      %p126 = scmp.eq.s32.totalorder %s27, 0
      %p127 = por %p125, %p126
      %s129 = sadd.s32 %s128, 1
      %p132 = scmp.eq.s32.totalorder %s21, 1
      %p133 = scmp.ne.s32.totalorder %s128, %s130
      %p134 = scmp.eq.s32.totalorder %s21, 0
      %p135 = por %p133, %p134
      %p136 = scmp.ne.s32.totalorder %s128, %s130
      %p137 = scmp.eq.s32.totalorder %s26, 1
      %p138 = por %p136, %p137
      %p139 = scmp.ne.s32.totalorder %s130, %s131
      %p140 = scmp.eq.s32.totalorder %s26, 0
      %p141 = por %p139, %p140
      %p142 = scmp.ne.s32.totalorder %s130, %s131
      %p143 = scmp.eq.s32.totalorder %s27, 1
      %p144 = por %p142, %p143
      %p146 = scmp.ne.s32.totalorder %s131, %s145
      %p147 = scmp.eq.s32.totalorder %s27, 0
      %p148 = por %p146, %p147
      %s150 = sadd.s32 %s149, 1
      %p153 = scmp.eq.s32.totalorder %s21, 1
      %p154 = scmp.ne.s32.totalorder %s149, %s151
      %p155 = scmp.eq.s32.totalorder %s21, 0
      %p156 = por %p154, %p155
      %p157 = scmp.ne.s32.totalorder %s149, %s151
      %p158 = scmp.eq.s32.totalorder %s26, 1
      %p159 = por %p157, %p158
      %p160 = scmp.ne.s32.totalorder %s151, %s152
      %p161 = scmp.eq.s32.totalorder %s26, 0
      %p162 = por %p160, %p161
      %p163 = scmp.ne.s32.totalorder %s151, %s152
      %p164 = scmp.eq.s32.totalorder %s27, 1
      %p165 = por %p163, %p164
      %p167 = scmp.ne.s32.totalorder %s152, %s166
      %p168 = scmp.eq.s32.totalorder %s27, 0
      %p169 = por %p167, %p168
      %s171 = sadd.s32 %s170, 1
      %p174 = scmp.eq.s32.totalorder %s21, 1
      %p175 = scmp.ne.s32.totalorder %s170, %s172
      %p176 = scmp.eq.s32.totalorder %s21, 0
      %p177 = por %p175, %p176
      %p178 = scmp.ne.s32.totalorder %s170, %s172
      %p179 = scmp.eq.s32.totalorder %s26, 1
      %p180 = por %p178, %p179
      %p181 = scmp.ne.s32.totalorder %s172, %s173
      %p182 = scmp.eq.s32.totalorder %s26, 0
      %p183 = por %p181, %p182
      %p184 = scmp.ne.s32.totalorder %s172, %s173
      %p185 = scmp.eq.s32.totalorder %s27, 1
      %p186 = por %p184, %p185
      %p188 = scmp.ne.s32.totalorder %s173, %s187
      %p189 = scmp.eq.s32.totalorder %s27, 0
      %p190 = por %p188, %p189
      %s192 = sadd.s32 %s191, 1
      %p195 = scmp.eq.s32.totalorder %s21, 1
      %p196 = scmp.ne.s32.totalorder %s191, %s193
      %p197 = scmp.eq.s32.totalorder %s21, 0
      %p198 = por %p196, %p197
      %p199 = scmp.ne.s32.totalorder %s191, %s193
      %p200 = scmp.eq.s32.totalorder %s26, 1
      %p201 = por %p199, %p200
      %p202 = scmp.ne.s32.totalorder %s193, %s194
      %p203 = scmp.eq.s32.totalorder %s26, 0
      %p204 = por %p202, %p203
      %p205 = scmp.ne.s32.totalorder %s193, %s194
      %p206 = scmp.eq.s32.totalorder %s27, 1
      %p207 = por %p205, %p206
      %p209 = scmp.ne.s32.totalorder %s194, %s208
      %p210 = scmp.eq.s32.totalorder %s27, 0
      %p211 = por %p209, %p210
      %s213 = sadd.s32 %s212, 1
      %p216 = scmp.eq.s32.totalorder %s21, 1
      %p217 = scmp.ne.s32.totalorder %s212, %s214
      %p218 = scmp.eq.s32.totalorder %s21, 0
      %p219 = por %p217, %p218
      %p220 = scmp.ne.s32.totalorder %s212, %s214
      %p221 = scmp.eq.s32.totalorder %s26, 1
      %p222 = por %p220, %p221
      %p223 = scmp.ne.s32.totalorder %s214, %s215
      %p224 = scmp.eq.s32.totalorder %s26, 0
      %p225 = por %p223, %p224
      %p226 = scmp.ne.s32.totalorder %s214, %s215
      %p227 = scmp.eq.s32.totalorder %s27, 1
      %p228 = por %p226, %p227
      %p230 = scmp.ne.s32.totalorder %s215, %s229
      %p231 = scmp.eq.s32.totalorder %s27, 0
      %p232 = por %p230, %p231
      %s234 = sadd.s32 %s233, 1
      %p237 = scmp.eq.s32.totalorder %s21, 1
      %p238 = scmp.ne.s32.totalorder %s233, %s235
      %p239 = scmp.eq.s32.totalorder %s21, 0
      %p240 = por %p238, %p239
      %p241 = scmp.ne.s32.totalorder %s233, %s235
      %p242 = scmp.eq.s32.totalorder %s26, 1
      %p243 = por %p241, %p242
      %p244 = scmp.ne.s32.totalorder %s235, %s236
      %p245 = scmp.eq.s32.totalorder %s26, 0
      %p246 = por %p244, %p245
      %p247 = scmp.ne.s32.totalorder %s235, %s236
      %p248 = scmp.eq.s32.totalorder %s27, 1
      %p249 = por %p247, %p248
      %p251 = scmp.ne.s32.totalorder %s236, %s250
      %p252 = scmp.eq.s32.totalorder %s27, 0
      %p253 = por %p251, %p252
      %s255 = sadd.s32 %s254, 1
      %p258 = scmp.eq.s32.totalorder %s21, 1
      %p259 = scmp.ne.s32.totalorder %s254, %s256
      %p260 = scmp.eq.s32.totalorder %s21, 0
      %p261 = por %p259, %p260
      %p262 = scmp.ne.s32.totalorder %s254, %s256
      %p263 = scmp.eq.s32.totalorder %s26, 1
      %p264 = por %p262, %p263
      %p265 = scmp.ne.s32.totalorder %s256, %s257
      %p266 = scmp.eq.s32.totalorder %s26, 0
      %p267 = por %p265, %p266
      %p268 = scmp.ne.s32.totalorder %s256, %s257
      %p269 = scmp.eq.s32.totalorder %s27, 1
      %p270 = por %p268, %p269
      %p272 = scmp.ne.s32.totalorder %s257, %s271
      %p273 = scmp.eq.s32.totalorder %s27, 0
      %p274 = por %p272, %p273
      %s276 = sadd.s32 %s275, 1
      %p279 = scmp.eq.s32.totalorder %s21, 1
      %p280 = scmp.ne.s32.totalorder %s275, %s277
      %p281 = scmp.eq.s32.totalorder %s21, 0
      %p282 = por %p280, %p281
      %p283 = scmp.ne.s32.totalorder %s275, %s277
      %p284 = scmp.eq.s32.totalorder %s26, 1
      %p285 = por %p283, %p284
      %p286 = scmp.ne.s32.totalorder %s277, %s278
      %p287 = scmp.eq.s32.totalorder %s26, 0
      %p288 = por %p286, %p287
      %p289 = scmp.ne.s32.totalorder %s277, %s278
      %p290 = scmp.eq.s32.totalorder %s27, 1
      %p291 = por %p289, %p290
      %p293 = scmp.ne.s32.totalorder %s278, %s292
      %p294 = scmp.eq.s32.totalorder %s27, 0
      %p295 = por %p293, %p294
      %s296 = ssub.s32 %s21, %s28
      %p297 = scmp.eq.s32.totalorder %s296, 0
      %s299 = sadd.s32 %s298, 1
      %s300 = scalar_select %p297, %s298, %s299
      %p303 = pneg %p297
      %p304 = scmp.eq.s32.totalorder %s21, 1
      %p305 = por %p303, %p304
      %p306 = scmp.ne.s32.totalorder %s298, %s301
      %p307 = scmp.eq.s32.totalorder %s21, 0
      %p308 = por %p306, %p307
      %p309 = scmp.ne.s32.totalorder %s298, %s301
      %p310 = scmp.eq.s32.totalorder %s26, 1
      %p311 = por %p309, %p310
      %p312 = scmp.ne.s32.totalorder %s301, %s302
      %p313 = scmp.eq.s32.totalorder %s26, 0
      %p314 = por %p312, %p313
      %p315 = scmp.ne.s32.totalorder %s301, %s302
      %p316 = scmp.eq.s32.totalorder %s27, 1
      %p317 = por %p315, %p316
      %p319 = scmp.ne.s32.totalorder %s302, %s318
      %p320 = scmp.eq.s32.totalorder %s27, 0
      %p321 = por %p319, %p320
      %p322 = scmp.le.s32.totalorder 1, %s21
      %p323 = scmp.lt.s32.totalorder %s21, 3
      %p324 = pnand %p322, %p323
      %p325 = pneg %p324
      // Predicated region
      $region9: #{tpu_custom_call.1} parent=5 // pred_check
        _
      $region10: #{tpu_custom_call.1} parent=5 // pred_check_branch
        %327 = sbr.rel (%p324) target = $region12
      $region11: #{tpu_custom_call.1} parent=5 // pred_region
        %s328 = ssub.s32 %s21, 1
        // Predicated region
        $region13: #{tpu_custom_call.1} parent=11 // pred_check
          %p329 = pneg %p120
        $region14: #{tpu_custom_call.1} parent=11 // pred_check_branch
          %331 = sbr.rel (%p329) target = $region16
        $region15: #{tpu_custom_call.1} parent=11 // pred_region
          _
        $region16: #{tpu_custom_call.1} parent=11 // pred_fallthru
          _
        // Predicated region
        $region17: #{tpu_custom_call.1} parent=11 // pred_check
          %p332 = pneg %p141
        $region18: #{tpu_custom_call.1} parent=11 // pred_check_branch
          %334 = sbr.rel (%p332) target = $region20
        $region19: #{tpu_custom_call.1} parent=11 // pred_region
          _
        $region20: #{tpu_custom_call.1} parent=11 // pred_fallthru
          _
        // Predicated region
        $region21: #{tpu_custom_call.1} parent=11 // pred_check
          %p335 = pneg %p162
        $region22: #{tpu_custom_call.1} parent=11 // pred_check_branch
          %337 = sbr.rel (%p335) target = $region24
        $region23: #{tpu_custom_call.1} parent=11 // pred_region
          _
        $region24: #{tpu_custom_call.1} parent=11 // pred_fallthru
          _
        // Predicated region
        $region25: #{tpu_custom_call.1} parent=11 // pred_check
          %p338 = pneg %p183
        $region26: #{tpu_custom_call.1} parent=11 // pred_check_branch
          %340 = sbr.rel (%p338) target = $region28
        $region27: #{tpu_custom_call.1} parent=11 // pred_region
          _
        $region28: #{tpu_custom_call.1} parent=11 // pred_fallthru
          _
        // Predicated region
        $region29: #{tpu_custom_call.1} parent=11 // pred_check
          %p341 = pneg %p204
        $region30: #{tpu_custom_call.1} parent=11 // pred_check_branch
          %343 = sbr.rel (%p341) target = $region32
        $region31: #{tpu_custom_call.1} parent=11 // pred_region
          _
        $region32: #{tpu_custom_call.1} parent=11 // pred_fallthru
          _
        // Predicated region
        $region33: #{tpu_custom_call.1} parent=11 // pred_check
          %p344 = pneg %p225
        $region34: #{tpu_custom_call.1} parent=11 // pred_check_branch
          %346 = sbr.rel (%p344) target = $region36
        $region35: #{tpu_custom_call.1} parent=11 // pred_region
          _
        $region36: #{tpu_custom_call.1} parent=11 // pred_fallthru
          _
        // Predicated region
        $region37: #{tpu_custom_call.1} parent=11 // pred_check
          %p347 = pneg %p246
        $region38: #{tpu_custom_call.1} parent=11 // pred_check_branch
          %349 = sbr.rel (%p347) target = $region40
        $region39: #{tpu_custom_call.1} parent=11 // pred_region
          _
        $region40: #{tpu_custom_call.1} parent=11 // pred_fallthru
          _
        // Predicated region
        $region41: #{tpu_custom_call.1} parent=11 // pred_check
          %p350 = pneg %p267
        $region42: #{tpu_custom_call.1} parent=11 // pred_check_branch
          %352 = sbr.rel (%p350) target = $region44
        $region43: #{tpu_custom_call.1} parent=11 // pred_region
          _
        $region44: #{tpu_custom_call.1} parent=11 // pred_fallthru
          _
        // Predicated region
        $region45: #{tpu_custom_call.1} parent=11 // pred_check
          %p353 = pneg %p288
        $region46: #{tpu_custom_call.1} parent=11 // pred_check_branch
          %355 = sbr.rel (%p353) target = $region48
        $region47: #{tpu_custom_call.1} parent=11 // pred_region
          _
        $region48: #{tpu_custom_call.1} parent=11 // pred_fallthru
          _
      $region12: #{tpu_custom_call.1} parent=5 // pred_fallthru
        _
      %p356 = scmp.lt.s32.totalorder %s21, 2
      // Predicated region
      $region49: #{tpu_custom_call.1} parent=5 // pred_check
        %p357 = pneg %p356
      $region50: #{tpu_custom_call.1} parent=5 // pred_check_branch
        %359 = sbr.rel (%p357) target = $region52
      $region51: #{tpu_custom_call.1} parent=5 // pred_region
        // Predicated region
        $region53: #{tpu_custom_call.1} parent=51 // pred_check
          %p360 = pneg %p41
        $region54: #{tpu_custom_call.1} parent=51 // pred_check_branch
          %362 = sbr.rel (%p360) target = $region56
        $region55: #{tpu_custom_call.1} parent=51 // pred_region
          %s363 = sand.u32 %s31, 1
          %s364 = sand.u32 %s31, 1
          %s365 = smul.addr %s364, 16
          %s366 = scalar_lea.vmem [#allocation2], %s365
          %s367 = smul.addr %s21, 8
          %s368 = scalar_lea.vmem %s0, %s367
          // Predicated region
          $region57: #{tpu_custom_call.1} parent=55 // pred_check
            _
          $region58: #{tpu_custom_call.1} parent=55 // pred_check_branch
            %370 = sbr.rel (0) target = $region60
          $region59: #{tpu_custom_call.1} parent=55 // pred_region
            // Predicated region
            $region61: #{tpu_custom_call.1} parent=59 // pred_check
              _
            $region62: #{tpu_custom_call.1} parent=59 // pred_check_branch
              %372 = sbr.rel (0) target = $region64
            $region63: #{tpu_custom_call.1} parent=59 // pred_region
              // Predicated region
              $region76: #{tpu_custom_call.1} parent=63 // pred_check
                _
              $region77: #{tpu_custom_call.1} parent=63 // pred_check_branch
                %390 = sbr.rel (0) target = $region79
              $region78: #{tpu_custom_call.1} parent=63 // pred_region
                loop: start=0, step=1, limit=1
                $region80: #{tpu_custom_call.1} parent=78 // loop_pre_header
                  _
                $region81: #{tpu_custom_call.1} parent=78 // loop_header
                  %s392 = sphi 0, %s396
                  %p393 = scmp.ge.s32.totalorder %s392, 1
                  %s397 = sphi %s368, %s368
                  %s398 = sphi %s366, %s366
                $region82: #{tpu_custom_call.1} parent=78 // loop_header_branch
                  %395 = sbr.rel (%p393) target = $region86
                $region83: #{tpu_custom_call.1} parent=78 // loop_body
                  %v399 = vld [vmem:[%s397] sm:$0xff]
                  %400 = vst [vmem:[%s398] sm:$0xff] %v399
                  %v401 = vld [vmem:[%s397 + $0x10] sm:$0xff]
                  %402 = vst [vmem:[%s398 + $0x8] sm:$0xff] %v401
                $region84: #{tpu_custom_call.1} parent=78 // loop_footer
                  %s396 = sadd.s32 1, %s392
                $region85: #{tpu_custom_call.1} parent=78 // loop_footer_branch
                  %391 = sbr.rel target = $region81
                $region86: #{tpu_custom_call.1} parent=78 // loop_exit
                  _
              $region79: #{tpu_custom_call.1} parent=63 // pred_fallthru
                _
              // Predicated region
              $region87: #{tpu_custom_call.1} parent=63 // pred_check
                _
              $region88: #{tpu_custom_call.1} parent=63 // pred_check_branch
                %404 = sbr.rel target = $region90
              $region89: #{tpu_custom_call.1} parent=63 // pred_region
                _
              $region90: #{tpu_custom_call.1} parent=63 // pred_fallthru
                _
            $region64: #{tpu_custom_call.1} parent=59 // pred_fallthru
              _
            // Predicated region
            $region65: #{tpu_custom_call.1} parent=59 // pred_check
              _
            $region66: #{tpu_custom_call.1} parent=59 // pred_check_branch
              %374 = sbr.rel target = $region68
            $region67: #{tpu_custom_call.1} parent=59 // pred_region
              %s376 = ssub.s32 256, 1
              loop: start=0, step=1, limit=1
              $region69: #{tpu_custom_call.1} parent=67 // loop_pre_header
                _
              $region70: #{tpu_custom_call.1} parent=67 // loop_header
                %s378 = sphi 0, %s382
                %p379 = scmp.ge.s32.totalorder %s378, 1
                %s383 = sphi %s368, %s368
                %s384 = sphi %s366, %s366
              $region71: #{tpu_custom_call.1} parent=67 // loop_header_branch
                %381 = sbr.rel (%p379) target = $region75
              $region72: #{tpu_custom_call.1} parent=67 // loop_body
                %v385 = vld [vmem:[%s383] sm:%s376]
                %386 = vst [vmem:[%s384] sm:%s376] %v385
                %v387 = vld [vmem:[%s383 + $0x10] sm:%s376]
                %388 = vst [vmem:[%s384 + $0x8] sm:%s376] %v387
              $region73: #{tpu_custom_call.1} parent=67 // loop_footer
                %s382 = sadd.s32 1, %s378
              $region74: #{tpu_custom_call.1} parent=67 // loop_footer_branch
                %377 = sbr.rel target = $region70
              $region75: #{tpu_custom_call.1} parent=67 // loop_exit
                _
            $region68: #{tpu_custom_call.1} parent=59 // pred_fallthru
              _
          $region60: #{tpu_custom_call.1} parent=55 // pred_fallthru
            _
          %405 = vnop
        $region56: #{tpu_custom_call.1} parent=51 // pred_fallthru
          _
        // Predicated region
        $region91: #{tpu_custom_call.1} parent=51 // pred_check
          %p406 = pneg %p67
        $region92: #{tpu_custom_call.1} parent=51 // pred_check_branch
          %408 = sbr.rel (%p406) target = $region94
        $region93: #{tpu_custom_call.1} parent=51 // pred_region
          %p409 = scmp.lt.s32.totalorder %s21, 1
          %s410 = scalar_select %p409, %s21, 1
          %s411 = smul.addr %s410, 8
          %s412 = scalar_lea.vmem %s1, %s411
        $region94: #{tpu_custom_call.1} parent=51 // pred_fallthru
          _
        // Predicated region
        $region95: #{tpu_custom_call.1} parent=51 // pred_check
          %p413 = pneg %p93
        $region96: #{tpu_custom_call.1} parent=51 // pred_check_branch
          %415 = sbr.rel (%p413) target = $region98
        $region97: #{tpu_custom_call.1} parent=51 // pred_region
          %s416 = smul.u32 3, %s21
          %p417 = scmp.lt.s32.totalorder %s416, 5
          %s418 = scalar_select %p417, %s416, 5
          %s419 = scalar_lea.vmem %s2, %s418
          %s420 = smul.u32 3, %s21
        $region98: #{tpu_custom_call.1} parent=51 // pred_fallthru
          _
      $region52: #{tpu_custom_call.1} parent=5 // pred_fallthru
        _
      %p421 = scmp.le.s32.totalorder 1, %s21
      %p422 = scmp.lt.s32.totalorder %s21, 3
      %p423 = pnand %p421, %p422
      %p424 = pneg %p423
      // Predicated region
      $region99: #{tpu_custom_call.1} parent=5 // pred_check
        _
      $region100: #{tpu_custom_call.1} parent=5 // pred_check_branch
        %426 = sbr.rel (%p423) target = $region102
      $region101: #{tpu_custom_call.1} parent=5 // pred_region
        %s427 = ssub.s32 %s21, 1
        %s428 = sand.u32 %s34, 1
        %s429 = sand.u32 %s34, 1
        %s430 = smul.addr %s429, 16
        %s431 = scalar_lea.vmem [#allocation2], %s430
        // Predicated region
        $region103: #{tpu_custom_call.1} parent=101 // pred_check
          %p432 = pneg %p47
        $region104: #{tpu_custom_call.1} parent=101 // pred_check_branch
          %434 = sbr.rel (%p432) target = $region106
        $region105: #{tpu_custom_call.1} parent=101 // pred_region
          _
        $region106: #{tpu_custom_call.1} parent=101 // pred_fallthru
          _
        %s435 = sand.u32 %s34, 1
        %s436 = sand.u32 %s34, 1
        %s437 = smul.addr %s436, 16
        %s438 = scalar_lea.vmem [#allocation2], %s437
        %p439 = pneg %p47
        %p440 = pneg %p44
        %p441 = scmp.lt.s32.totalorder %s26, 1
        %s442 = scalar_select %p441, %s26, 1
        %s443 = smul.addr %s442, 8
        %s444 = scalar_lea.vmem %s1, %s443
        %p445 = pneg %p73
        %p446 = pneg %p70
        %s447 = smul.u32 3, %s26
        %p448 = scmp.lt.s32.totalorder %s447, 5
        %s449 = scalar_select %p448, %s447, 5
        %s450 = scalar_lea.vmem %s2, %s449
        %p451 = pneg %p99
        %p452 = pneg %p96
        %p453 = pneg %p120
        %p454 = pneg %p117
        %p455 = pneg %p141
        %p456 = pneg %p138
        %p457 = pneg %p162
        %p458 = pneg %p159
        %p459 = pneg %p183
        %p460 = pneg %p180
        %p461 = pneg %p204
        %p462 = pneg %p201
        %p463 = pneg %p225
        %p464 = pneg %p222
        %p465 = pneg %p246
        %p466 = pneg %p243
        %p467 = pneg %p267
        %p468 = pneg %p264
        %p469 = pneg %p288
        %p470 = pneg %p285
        %p471 = pneg %p314
        %p472 = pneg %p311
        %s473 = sand.u32 %s301, 1
        %s474 = scalar_lea.sflag [#allocation4], %s473
        %s475 = sand.u32 %s301, 1
        %s476 = smul.addr %s475, 8
        %s477 = scalar_lea.vmem [#allocation3], %s476
        %p478 = scmp.lt.s32.totalorder %s26, 1
        %s479 = scalar_select %p478, %s26, 1
        %s480 = smul.addr %s479, 8
        %s481 = scalar_lea.vmem %s1, %s480
        %s482 = smul.u32 3, %s26
        %p483 = scmp.lt.s32.totalorder %s482, 5
        %s484 = scalar_select %p483, %s482, 5
        %s485 = scalar_lea.vmem %s2, %s484
        %s486 = smul.u32 3, %s26
        %v488 = vld [vmem:[%s431] sm:$0xff]
        %v489 = vld [vmem:[%s431 + $0x8] sm:$0x3]
        %v490 = vld [vmem:[%s481] sm:$0xff]
        %v491 = vld [vmem:[%s485] sm:$0x7]
        %v492 = vld [vmem:[%s3] sm:$0x7]
        %v493 = vld [vmem:[%s4] sm:$0xff]
        %v494 = vld [vmem:[%s4 + $0x8] sm:$0xff]
        %v495 = vld [vmem:[%s4 + $0x10] sm:$0xff]
        %v496 = vld [vmem:[%s4 + $0x18] sm:$0xff]
        %v497 = vld [vmem:[%s4 + $0x20] sm:$0xff]
        %v498 = vld [vmem:[%s4 + $0x28] sm:$0xff]
        %v499 = vld [vmem:[%s4 + $0x30] sm:$0xff]
        %v500 = vld [vmem:[%s4 + $0x38] sm:$0xff]
        %v501 = vld [vmem:[%s4 + $0x40] sm:$0xff]
        %v502 = vld [vmem:[%s4 + $0x48] sm:$0xff]
        %v503 = vld [vmem:[%s4 + $0x50] sm:$0xff]
        %v504 = vld [vmem:[%s4 + $0x58] sm:$0xff]
        %v505 = vld [vmem:[%s4 + $0x60] sm:$0xff]
        %v506 = vld [vmem:[%s4 + $0x68] sm:$0xff]
        %v507 = vld [vmem:[%s4 + $0x70] sm:$0xff]
        %v508 = vld [vmem:[%s4 + $0x78] sm:$0xff]
        %v509 = vld [vmem:[%s4 + $0x80] sm:$0xff]
        %v510 = vld [vmem:[%s4 + $0x88] sm:$0xff]
        %v511 = vld [vmem:[%s4 + $0x90] sm:$0xff]
        %v512 = vld [vmem:[%s4 + $0x98] sm:$0xff]
        %v513 = vld [vmem:[%s4 + $0xa0] sm:$0xff]
        %v514 = vld [vmem:[%s4 + $0xa8] sm:$0xff]
        %v515 = vld [vmem:[%s4 + $0xb0] sm:$0xff]
        %v516 = vld [vmem:[%s4 + $0xb8] sm:$0xff]
        %v517 = vld [vmem:[%s4 + $0xc0] sm:$0xff]
        %v518 = vld [vmem:[%s4 + $0xc8] sm:$0xff]
        %v519 = vld [vmem:[%s4 + $0xd0] sm:$0xff]
        %v520 = vld [vmem:[%s4 + $0xd8] sm:$0xff]
        %v521 = vld [vmem:[%s4 + $0xe0] sm:$0xff]
        %v522 = vld [vmem:[%s4 + $0xe8] sm:$0xff]
        %v523 = vld [vmem:[%s4 + $0xf0] sm:$0xff]
        %v524 = vld [vmem:[%s4 + $0xf8] sm:$0xff]
        %v525 = vld [vmem:[%s4 + $0x100] sm:$0xff]
        %v526 = vld [vmem:[%s4 + $0x108] sm:$0xff]
        %v527 = vld [vmem:[%s4 + $0x110] sm:$0xff]
        %v528 = vld [vmem:[%s4 + $0x118] sm:$0xff]
        %v529 = vld [vmem:[%s4 + $0x120] sm:$0xff]
        %v530 = vld [vmem:[%s4 + $0x128] sm:$0xff]
        %v531 = vld [vmem:[%s4 + $0x130] sm:$0xff]
        %v532 = vld [vmem:[%s4 + $0x138] sm:$0xff]
        %v533 = vld [vmem:[%s4 + $0x140] sm:$0xff]
        %v534 = vld [vmem:[%s4 + $0x148] sm:$0xff]
        %v535 = vld [vmem:[%s4 + $0x150] sm:$0xff]
        %v536 = vld [vmem:[%s4 + $0x158] sm:$0xff]
        %v537 = vld [vmem:[%s4 + $0x160] sm:$0xff]
        %v538 = vld [vmem:[%s4 + $0x168] sm:$0xff]
        %v539 = vld [vmem:[%s4 + $0x170] sm:$0xff]
        %v540 = vld [vmem:[%s4 + $0x178] sm:$0xff]
        %v541 = vld [vmem:[%s5] sm:$0xff]
        %v542 = vlaneseq
        %v543 = vshrl.u32 %v542, 7
        %v544 = vadd.s32 %v543, 8
        %v545 = vadd.s32 %v543, 16
        %v546 = vadd.s32 %v543, 24
        %v547 = vadd.s32 %v543, 32
        %v548 = vadd.s32 %v543, 40
        %v549 = vadd.s32 %v543, 48
        %v550 = vadd.s32 %v543, 56
        %v551 = vadd.s32 %v543, 64
        %v552 = vadd.s32 %v543, 72
        %v553 = vadd.s32 %v543, 80
        %v554 = vadd.s32 %v543, 88
        %v555 = vadd.s32 %v543, 96
        %v556 = vadd.s32 %v543, 104
        %v557 = vadd.s32 %v543, 112
        %v558 = vadd.s32 %v543, 120
        %v559 = vperm.slane %v492, 0
        %v560 = vperm.slane %v492, 1
        %v561 = vperm.slane %v492, 2
        %vm562 = vcmp.eq.s32.totalorder %v543, %v559
        %vm563 = vcmp.eq.s32.totalorder %v543, %v560
        %vm564 = vcmp.eq.s32.totalorder %v543, %v561
        %vm565 = vcmp.eq.s32.totalorder %v544, %v559
        %vm566 = vcmp.eq.s32.totalorder %v544, %v560
        %vm567 = vcmp.eq.s32.totalorder %v544, %v561
        %vm568 = vcmp.eq.s32.totalorder %v545, %v559
        %vm569 = vcmp.eq.s32.totalorder %v545, %v560
        %vm570 = vcmp.eq.s32.totalorder %v545, %v561
        %vm571 = vcmp.eq.s32.totalorder %v546, %v559
        %vm572 = vcmp.eq.s32.totalorder %v546, %v560
        %vm573 = vcmp.eq.s32.totalorder %v546, %v561
        %vm574 = vcmp.eq.s32.totalorder %v547, %v559
        %vm575 = vcmp.eq.s32.totalorder %v547, %v560
        %vm576 = vcmp.eq.s32.totalorder %v547, %v561
        %vm577 = vcmp.eq.s32.totalorder %v548, %v559
        %vm578 = vcmp.eq.s32.totalorder %v548, %v560
        %vm579 = vcmp.eq.s32.totalorder %v548, %v561
        %vm580 = vcmp.eq.s32.totalorder %v549, %v559
        %vm581 = vcmp.eq.s32.totalorder %v549, %v560
        %vm582 = vcmp.eq.s32.totalorder %v549, %v561
        %vm583 = vcmp.eq.s32.totalorder %v550, %v559
        %vm584 = vcmp.eq.s32.totalorder %v550, %v560
        %vm585 = vcmp.eq.s32.totalorder %v550, %v561
        %vm586 = vcmp.eq.s32.totalorder %v551, %v559
        %vm587 = vcmp.eq.s32.totalorder %v551, %v560
        %vm588 = vcmp.eq.s32.totalorder %v551, %v561
        %vm589 = vcmp.eq.s32.totalorder %v552, %v559
        %vm590 = vcmp.eq.s32.totalorder %v552, %v560
        %vm591 = vcmp.eq.s32.totalorder %v552, %v561
        %vm592 = vcmp.eq.s32.totalorder %v553, %v559
        %vm593 = vcmp.eq.s32.totalorder %v553, %v560
        %vm594 = vcmp.eq.s32.totalorder %v553, %v561
        %vm595 = vcmp.eq.s32.totalorder %v554, %v559
        %vm596 = vcmp.eq.s32.totalorder %v554, %v560
        %vm597 = vcmp.eq.s32.totalorder %v554, %v561
        %vm598 = vcmp.eq.s32.totalorder %v555, %v559
        %vm599 = vcmp.eq.s32.totalorder %v555, %v560
        %vm600 = vcmp.eq.s32.totalorder %v555, %v561
        %vm601 = vcmp.eq.s32.totalorder %v556, %v559
        %vm602 = vcmp.eq.s32.totalorder %v556, %v560
        %vm603 = vcmp.eq.s32.totalorder %v556, %v561
        %vm604 = vcmp.eq.s32.totalorder %v557, %v559
        %vm605 = vcmp.eq.s32.totalorder %v557, %v560
        %vm606 = vcmp.eq.s32.totalorder %v557, %v561
        %vm607 = vcmp.eq.s32.totalorder %v558, %v559
        %vm608 = vcmp.eq.s32.totalorder %v558, %v560
        %vm609 = vcmp.eq.s32.totalorder %v558, %v561
        %v610 = vsel %vm562, 1, 0
        %v611 = vsel %vm563, 1, 0
        %v612 = vsel %vm564, 1, 0
        %v613 = vsel %vm565, 1, 0
        %v614 = vsel %vm566, 1, 0
        %v615 = vsel %vm567, 1, 0
        %v616 = vsel %vm568, 1, 0
        %v617 = vsel %vm569, 1, 0
        %v618 = vsel %vm570, 1, 0
        %v619 = vsel %vm571, 1, 0
        %v620 = vsel %vm572, 1, 0
        %v621 = vsel %vm573, 1, 0
        %v622 = vsel %vm574, 1, 0
        %v623 = vsel %vm575, 1, 0
        %v624 = vsel %vm576, 1, 0
        %v625 = vsel %vm577, 1, 0
        %v626 = vsel %vm578, 1, 0
        %v627 = vsel %vm579, 1, 0
        %v628 = vsel %vm580, 1, 0
        %v629 = vsel %vm581, 1, 0
        %v630 = vsel %vm582, 1, 0
        %v631 = vsel %vm583, 1, 0
        %v632 = vsel %vm584, 1, 0
        %v633 = vsel %vm585, 1, 0
        %v634 = vsel %vm586, 1, 0
        %v635 = vsel %vm587, 1, 0
        %v636 = vsel %vm588, 1, 0
        %v637 = vsel %vm589, 1, 0
        %v638 = vsel %vm590, 1, 0
        %v639 = vsel %vm591, 1, 0
        %v640 = vsel %vm592, 1, 0
        %v641 = vsel %vm593, 1, 0
        %v642 = vsel %vm594, 1, 0
        %v643 = vsel %vm595, 1, 0
        %v644 = vsel %vm596, 1, 0
        %v645 = vsel %vm597, 1, 0
        %v646 = vsel %vm598, 1, 0
        %v647 = vsel %vm599, 1, 0
        %v648 = vsel %vm600, 1, 0
        %v649 = vsel %vm601, 1, 0
        %v650 = vsel %vm602, 1, 0
        %v651 = vsel %vm603, 1, 0
        %v652 = vsel %vm604, 1, 0
        %v653 = vsel %vm605, 1, 0
        %v654 = vsel %vm606, 1, 0
        %v655 = vsel %vm607, 1, 0
        %v656 = vsel %vm608, 1, 0
        %v657 = vsel %vm609, 1, 0
        %v658 = vcvt.s32.f32 %v610
        %v659 = vcvt.s32.f32 %v611
        %v660 = vcvt.s32.f32 %v612
        %v661 = vcvt.s32.f32 %v613
        %v662 = vcvt.s32.f32 %v614
        %v663 = vcvt.s32.f32 %v615
        %v664 = vcvt.s32.f32 %v616
        %v665 = vcvt.s32.f32 %v617
        %v666 = vcvt.s32.f32 %v618
        %v667 = vcvt.s32.f32 %v619
        %v668 = vcvt.s32.f32 %v620
        %v669 = vcvt.s32.f32 %v621
        %v670 = vcvt.s32.f32 %v622
        %v671 = vcvt.s32.f32 %v623
        %v672 = vcvt.s32.f32 %v624
        %v673 = vcvt.s32.f32 %v625
        %v674 = vcvt.s32.f32 %v626
        %v675 = vcvt.s32.f32 %v627
        %v676 = vcvt.s32.f32 %v628
        %v677 = vcvt.s32.f32 %v629
        %v678 = vcvt.s32.f32 %v630
        %v679 = vcvt.s32.f32 %v631
        %v680 = vcvt.s32.f32 %v632
        %v681 = vcvt.s32.f32 %v633
        %v682 = vcvt.s32.f32 %v634
        %v683 = vcvt.s32.f32 %v635
        %v684 = vcvt.s32.f32 %v636
        %v685 = vcvt.s32.f32 %v637
        %v686 = vcvt.s32.f32 %v638
        %v687 = vcvt.s32.f32 %v639
        %v688 = vcvt.s32.f32 %v640
        %v689 = vcvt.s32.f32 %v641
        %v690 = vcvt.s32.f32 %v642
        %v691 = vcvt.s32.f32 %v643
        %v692 = vcvt.s32.f32 %v644
        %v693 = vcvt.s32.f32 %v645
        %v694 = vcvt.s32.f32 %v646
        %v695 = vcvt.s32.f32 %v647
        %v696 = vcvt.s32.f32 %v648
        %v697 = vcvt.s32.f32 %v649
        %v698 = vcvt.s32.f32 %v650
        %v699 = vcvt.s32.f32 %v651
        %v700 = vcvt.s32.f32 %v652
        %v701 = vcvt.s32.f32 %v653
        %v702 = vcvt.s32.f32 %v654
        %v703 = vcvt.s32.f32 %v655
        %v704 = vcvt.s32.f32 %v656
        %v705 = vcvt.s32.f32 %v657
        %v706 = vpack.c.bf16 %v661, %v658
        %v707 = vpack.c.bf16 %v662, %v659
        %v708 = vpack.c.bf16 %v663, %v660
        %v709 = vpack.c.bf16 %v667, %v664
        %v710 = vpack.c.bf16 %v668, %v665
        %v711 = vpack.c.bf16 %v669, %v666
        %v712 = vpack.c.bf16 %v673, %v670
        %v713 = vpack.c.bf16 %v674, %v671
        %v714 = vpack.c.bf16 %v675, %v672
        %v715 = vpack.c.bf16 %v679, %v676
        %v716 = vpack.c.bf16 %v680, %v677
        %v717 = vpack.c.bf16 %v681, %v678
        %v718 = vpack.c.bf16 %v685, %v682
        %v719 = vpack.c.bf16 %v686, %v683
        %v720 = vpack.c.bf16 %v687, %v684
        %v721 = vpack.c.bf16 %v691, %v688
        %v722 = vpack.c.bf16 %v692, %v689
        %v723 = vpack.c.bf16 %v693, %v690
        %v724 = vpack.c.bf16 %v697, %v694
        %v725 = vpack.c.bf16 %v698, %v695
        %v726 = vpack.c.bf16 %v699, %v696
        %v727 = vpack.c.bf16 %v703, %v700
        %v728 = vpack.c.bf16 %v704, %v701
        %v729 = vpack.c.bf16 %v705, %v702
        %v730 = vlaneseq
        %v731 = vand.u32 %v730, 127
        %732 = vset.pattern.permute.xlu0 0
        %733 = vperm.xlu0 %732, %v493
        %v734 = vpop.permute.xlu0 %733
        %735 = vset.pattern.permute.xlu0 0
        %736 = vperm.xlu0 %735, %v494
        %v737 = vpop.permute.xlu0 %736
        %738 = vset.pattern.permute.xlu0 0
        %739 = vperm.xlu0 %738, %v495
        %v740 = vpop.permute.xlu0 %739
        %741 = vset.pattern.permute.xlu0 0
        %742 = vperm.xlu0 %741, %v496
        %v743 = vpop.permute.xlu0 %742
        %744 = vset.pattern.permute.xlu0 0
        %745 = vperm.xlu0 %744, %v497
        %v746 = vpop.permute.xlu0 %745
        %747 = vset.pattern.permute.xlu0 0
        %748 = vperm.xlu0 %747, %v498
        %v749 = vpop.permute.xlu0 %748
        %750 = vset.pattern.permute.xlu0 0
        %751 = vperm.xlu0 %750, %v499
        %v752 = vpop.permute.xlu0 %751
        %753 = vset.pattern.permute.xlu0 0
        %754 = vperm.xlu0 %753, %v500
        %v755 = vpop.permute.xlu0 %754
        %756 = vset.pattern.permute.xlu0 0
        %757 = vperm.xlu0 %756, %v501
        %v758 = vpop.permute.xlu0 %757
        %759 = vset.pattern.permute.xlu0 0
        %760 = vperm.xlu0 %759, %v502
        %v761 = vpop.permute.xlu0 %760
        %762 = vset.pattern.permute.xlu0 0
        %763 = vperm.xlu0 %762, %v503
        %v764 = vpop.permute.xlu0 %763
        %765 = vset.pattern.permute.xlu0 0
        %766 = vperm.xlu0 %765, %v504
        %v767 = vpop.permute.xlu0 %766
        %768 = vset.pattern.permute.xlu0 0
        %769 = vperm.xlu0 %768, %v505
        %v770 = vpop.permute.xlu0 %769
        %771 = vset.pattern.permute.xlu0 0
        %772 = vperm.xlu0 %771, %v506
        %v773 = vpop.permute.xlu0 %772
        %774 = vset.pattern.permute.xlu0 0
        %775 = vperm.xlu0 %774, %v507
        %v776 = vpop.permute.xlu0 %775
        %777 = vset.pattern.permute.xlu0 0
        %778 = vperm.xlu0 %777, %v508
        %v779 = vpop.permute.xlu0 %778
        %780 = vset.pattern.permute.xlu0 0
        %781 = vperm.xlu0 %780, %v509
        %v782 = vpop.permute.xlu0 %781
        %783 = vset.pattern.permute.xlu0 0
        %784 = vperm.xlu0 %783, %v510
        %v785 = vpop.permute.xlu0 %784
        %786 = vset.pattern.permute.xlu0 0
        %787 = vperm.xlu0 %786, %v511
        %v788 = vpop.permute.xlu0 %787
        %789 = vset.pattern.permute.xlu0 0
        %790 = vperm.xlu0 %789, %v512
        %v791 = vpop.permute.xlu0 %790
        %792 = vset.pattern.permute.xlu0 0
        %793 = vperm.xlu0 %792, %v513
        %v794 = vpop.permute.xlu0 %793
        %795 = vset.pattern.permute.xlu0 0
        %796 = vperm.xlu0 %795, %v514
        %v797 = vpop.permute.xlu0 %796
        %798 = vset.pattern.permute.xlu0 0
        %799 = vperm.xlu0 %798, %v515
        %v800 = vpop.permute.xlu0 %799
        %801 = vset.pattern.permute.xlu0 0
        %802 = vperm.xlu0 %801, %v516
        %v803 = vpop.permute.xlu0 %802
        %804 = vset.pattern.permute.xlu0 0
        %805 = vperm.xlu0 %804, %v517
        %v806 = vpop.permute.xlu0 %805
        %807 = vset.pattern.permute.xlu0 0
        %808 = vperm.xlu0 %807, %v518
        %v809 = vpop.permute.xlu0 %808
        %810 = vset.pattern.permute.xlu0 0
        %811 = vperm.xlu0 %810, %v519
        %v812 = vpop.permute.xlu0 %811
        %813 = vset.pattern.permute.xlu0 0
        %814 = vperm.xlu0 %813, %v520
        %v815 = vpop.permute.xlu0 %814
        %816 = vset.pattern.permute.xlu0 0
        %817 = vperm.xlu0 %816, %v521
        %v818 = vpop.permute.xlu0 %817
        %819 = vset.pattern.permute.xlu0 0
        %820 = vperm.xlu0 %819, %v522
        %v821 = vpop.permute.xlu0 %820
        %822 = vset.pattern.permute.xlu0 0
        %823 = vperm.xlu0 %822, %v523
        %v824 = vpop.permute.xlu0 %823
        %825 = vset.pattern.permute.xlu0 0
        %826 = vperm.xlu0 %825, %v524
        %v827 = vpop.permute.xlu0 %826
        %828 = vset.pattern.permute.xlu0 0
        %829 = vperm.xlu0 %828, %v525
        %v830 = vpop.permute.xlu0 %829
        %831 = vset.pattern.permute.xlu0 0
        %832 = vperm.xlu0 %831, %v526
        %v833 = vpop.permute.xlu0 %832
        %834 = vset.pattern.permute.xlu0 0
        %835 = vperm.xlu0 %834, %v527
        %v836 = vpop.permute.xlu0 %835
        %837 = vset.pattern.permute.xlu0 0
        %838 = vperm.xlu0 %837, %v528
        %v839 = vpop.permute.xlu0 %838
        %840 = vset.pattern.permute.xlu0 0
        %841 = vperm.xlu0 %840, %v529
        %v842 = vpop.permute.xlu0 %841
        %843 = vset.pattern.permute.xlu0 0
        %844 = vperm.xlu0 %843, %v530
        %v845 = vpop.permute.xlu0 %844
        %846 = vset.pattern.permute.xlu0 0
        %847 = vperm.xlu0 %846, %v531
        %v848 = vpop.permute.xlu0 %847
        %849 = vset.pattern.permute.xlu0 0
        %850 = vperm.xlu0 %849, %v532
        %v851 = vpop.permute.xlu0 %850
        %852 = vset.pattern.permute.xlu0 0
        %853 = vperm.xlu0 %852, %v533
        %v854 = vpop.permute.xlu0 %853
        %855 = vset.pattern.permute.xlu0 0
        %856 = vperm.xlu0 %855, %v534
        %v857 = vpop.permute.xlu0 %856
        %858 = vset.pattern.permute.xlu0 0
        %859 = vperm.xlu0 %858, %v535
        %v860 = vpop.permute.xlu0 %859
        %861 = vset.pattern.permute.xlu0 0
        %862 = vperm.xlu0 %861, %v536
        %v863 = vpop.permute.xlu0 %862
        %864 = vset.pattern.permute.xlu0 0
        %865 = vperm.xlu0 %864, %v537
        %v866 = vpop.permute.xlu0 %865
        %867 = vset.pattern.permute.xlu0 0
        %868 = vperm.xlu0 %867, %v538
        %v869 = vpop.permute.xlu0 %868
        %870 = vset.pattern.permute.xlu0 0
        %871 = vperm.xlu0 %870, %v539
        %v872 = vpop.permute.xlu0 %871
        %873 = vset.pattern.permute.xlu0 0
        %874 = vperm.xlu0 %873, %v540
        %v875 = vpop.permute.xlu0 %874
        %vm876 = vcmp.eq.s32.totalorder %v731, %v734
        %vm877 = vcmp.eq.s32.totalorder %v731, %v737
        %vm878 = vcmp.eq.s32.totalorder %v731, %v740
        %vm879 = vcmp.eq.s32.totalorder %v731, %v743
        %vm880 = vcmp.eq.s32.totalorder %v731, %v746
        %vm881 = vcmp.eq.s32.totalorder %v731, %v749
        %vm882 = vcmp.eq.s32.totalorder %v731, %v752
        %vm883 = vcmp.eq.s32.totalorder %v731, %v755
        %vm884 = vcmp.eq.s32.totalorder %v731, %v758
        %vm885 = vcmp.eq.s32.totalorder %v731, %v761
        %vm886 = vcmp.eq.s32.totalorder %v731, %v764
        %vm887 = vcmp.eq.s32.totalorder %v731, %v767
        %vm888 = vcmp.eq.s32.totalorder %v731, %v770
        %vm889 = vcmp.eq.s32.totalorder %v731, %v773
        %vm890 = vcmp.eq.s32.totalorder %v731, %v776
        %vm891 = vcmp.eq.s32.totalorder %v731, %v779
        %vm892 = vcmp.eq.s32.totalorder %v731, %v782
        %vm893 = vcmp.eq.s32.totalorder %v731, %v785
        %vm894 = vcmp.eq.s32.totalorder %v731, %v788
        %vm895 = vcmp.eq.s32.totalorder %v731, %v791
        %vm896 = vcmp.eq.s32.totalorder %v731, %v794
        %vm897 = vcmp.eq.s32.totalorder %v731, %v797
        %vm898 = vcmp.eq.s32.totalorder %v731, %v800
        %vm899 = vcmp.eq.s32.totalorder %v731, %v803
        %vm900 = vcmp.eq.s32.totalorder %v731, %v806
        %vm901 = vcmp.eq.s32.totalorder %v731, %v809
        %vm902 = vcmp.eq.s32.totalorder %v731, %v812
        %vm903 = vcmp.eq.s32.totalorder %v731, %v815
        %vm904 = vcmp.eq.s32.totalorder %v731, %v818
        %vm905 = vcmp.eq.s32.totalorder %v731, %v821
        %vm906 = vcmp.eq.s32.totalorder %v731, %v824
        %vm907 = vcmp.eq.s32.totalorder %v731, %v827
        %vm908 = vcmp.eq.s32.totalorder %v731, %v830
        %vm909 = vcmp.eq.s32.totalorder %v731, %v833
        %vm910 = vcmp.eq.s32.totalorder %v731, %v836
        %vm911 = vcmp.eq.s32.totalorder %v731, %v839
        %vm912 = vcmp.eq.s32.totalorder %v731, %v842
        %vm913 = vcmp.eq.s32.totalorder %v731, %v845
        %vm914 = vcmp.eq.s32.totalorder %v731, %v848
        %vm915 = vcmp.eq.s32.totalorder %v731, %v851
        %vm916 = vcmp.eq.s32.totalorder %v731, %v854
        %vm917 = vcmp.eq.s32.totalorder %v731, %v857
        %vm918 = vcmp.eq.s32.totalorder %v731, %v860
        %vm919 = vcmp.eq.s32.totalorder %v731, %v863
        %vm920 = vcmp.eq.s32.totalorder %v731, %v866
        %vm921 = vcmp.eq.s32.totalorder %v731, %v869
        %vm922 = vcmp.eq.s32.totalorder %v731, %v872
        %vm923 = vcmp.eq.s32.totalorder %v731, %v875
        %v924 = vsel %vm876, 1, 0
        %v925 = vsel %vm877, 1, 0
        %v926 = vsel %vm878, 1, 0
        %v927 = vsel %vm879, 1, 0
        %v928 = vsel %vm880, 1, 0
        %v929 = vsel %vm881, 1, 0
        %v930 = vsel %vm882, 1, 0
        %v931 = vsel %vm883, 1, 0
        %v932 = vsel %vm884, 1, 0
        %v933 = vsel %vm885, 1, 0
        %v934 = vsel %vm886, 1, 0
        %v935 = vsel %vm887, 1, 0
        %v936 = vsel %vm888, 1, 0
        %v937 = vsel %vm889, 1, 0
        %v938 = vsel %vm890, 1, 0
        %v939 = vsel %vm891, 1, 0
        %v940 = vsel %vm892, 1, 0
        %v941 = vsel %vm893, 1, 0
        %v942 = vsel %vm894, 1, 0
        %v943 = vsel %vm895, 1, 0
        %v944 = vsel %vm896, 1, 0
        %v945 = vsel %vm897, 1, 0
        %v946 = vsel %vm898, 1, 0
        %v947 = vsel %vm899, 1, 0
        %v948 = vsel %vm900, 1, 0
        %v949 = vsel %vm901, 1, 0
        %v950 = vsel %vm902, 1, 0
        %v951 = vsel %vm903, 1, 0
        %v952 = vsel %vm904, 1, 0
        %v953 = vsel %vm905, 1, 0
        %v954 = vsel %vm906, 1, 0
        %v955 = vsel %vm907, 1, 0
        %v956 = vsel %vm908, 1, 0
        %v957 = vsel %vm909, 1, 0
        %v958 = vsel %vm910, 1, 0
        %v959 = vsel %vm911, 1, 0
        %v960 = vsel %vm912, 1, 0
        %v961 = vsel %vm913, 1, 0
        %v962 = vsel %vm914, 1, 0
        %v963 = vsel %vm915, 1, 0
        %v964 = vsel %vm916, 1, 0
        %v965 = vsel %vm917, 1, 0
        %v966 = vsel %vm918, 1, 0
        %v967 = vsel %vm919, 1, 0
        %v968 = vsel %vm920, 1, 0
        %v969 = vsel %vm921, 1, 0
        %v970 = vsel %vm922, 1, 0
        %v971 = vsel %vm923, 1, 0
        %v972 = vcvt.s32.f32 %v924
        %v973 = vcvt.s32.f32 %v925
        %v974 = vcvt.s32.f32 %v926
        %v975 = vcvt.s32.f32 %v927
        %v976 = vcvt.s32.f32 %v928
        %v977 = vcvt.s32.f32 %v929
        %v978 = vcvt.s32.f32 %v930
        %v979 = vcvt.s32.f32 %v931
        %v980 = vcvt.s32.f32 %v932
        %v981 = vcvt.s32.f32 %v933
        %v982 = vcvt.s32.f32 %v934
        %v983 = vcvt.s32.f32 %v935
        %v984 = vcvt.s32.f32 %v936
        %v985 = vcvt.s32.f32 %v937
        %v986 = vcvt.s32.f32 %v938
        %v987 = vcvt.s32.f32 %v939
        %v988 = vcvt.s32.f32 %v940
        %v989 = vcvt.s32.f32 %v941
        %v990 = vcvt.s32.f32 %v942
        %v991 = vcvt.s32.f32 %v943
        %v992 = vcvt.s32.f32 %v944
        %v993 = vcvt.s32.f32 %v945
        %v994 = vcvt.s32.f32 %v946
        %v995 = vcvt.s32.f32 %v947
        %v996 = vcvt.s32.f32 %v948
        %v997 = vcvt.s32.f32 %v949
        %v998 = vcvt.s32.f32 %v950
        %v999 = vcvt.s32.f32 %v951
        %v1000 = vcvt.s32.f32 %v952
        %v1001 = vcvt.s32.f32 %v953
        %v1002 = vcvt.s32.f32 %v954
        %v1003 = vcvt.s32.f32 %v955
        %v1004 = vcvt.s32.f32 %v956
        %v1005 = vcvt.s32.f32 %v957
        %v1006 = vcvt.s32.f32 %v958
        %v1007 = vcvt.s32.f32 %v959
        %v1008 = vcvt.s32.f32 %v960
        %v1009 = vcvt.s32.f32 %v961
        %v1010 = vcvt.s32.f32 %v962
        %v1011 = vcvt.s32.f32 %v963
        %v1012 = vcvt.s32.f32 %v964
        %v1013 = vcvt.s32.f32 %v965
        %v1014 = vcvt.s32.f32 %v966
        %v1015 = vcvt.s32.f32 %v967
        %v1016 = vcvt.s32.f32 %v968
        %v1017 = vcvt.s32.f32 %v969
        %v1018 = vcvt.s32.f32 %v970
        %v1019 = vcvt.s32.f32 %v971
        %v1020 = vadd.f32 %v972, %v973
        %v1021 = vadd.f32 %v1020, %v974
        %v1022 = vadd.f32 %v1021, %v975
        %v1023 = vadd.f32 %v1022, %v976
        %v1024 = vadd.f32 %v1023, %v977
        %v1025 = vadd.f32 %v1024, %v978
        %v1026 = vadd.f32 %v1025, %v979
        %v1027 = vadd.f32 %v1026, %v980
        %v1028 = vadd.f32 %v1027, %v981
        %v1029 = vadd.f32 %v1028, %v982
        %v1030 = vadd.f32 %v1029, %v983
        %v1031 = vadd.f32 %v1030, %v984
        %v1032 = vadd.f32 %v1031, %v985
        %v1033 = vadd.f32 %v1032, %v986
        %v1034 = vadd.f32 %v1033, %v987
        %v1035 = vadd.f32 %v1034, %v988
        %v1036 = vadd.f32 %v1035, %v989
        %v1037 = vadd.f32 %v1036, %v990
        %v1038 = vadd.f32 %v1037, %v991
        %v1039 = vadd.f32 %v1038, %v992
        %v1040 = vadd.f32 %v1039, %v993
        %v1041 = vadd.f32 %v1040, %v994
        %v1042 = vadd.f32 %v1041, %v995
        %v1043 = vadd.f32 %v1042, %v996
        %v1044 = vadd.f32 %v1043, %v997
        %v1045 = vadd.f32 %v1044, %v998
        %v1046 = vadd.f32 %v1045, %v999
        %v1047 = vadd.f32 %v1046, %v1000
        %v1048 = vadd.f32 %v1047, %v1001
        %v1049 = vadd.f32 %v1048, %v1002
        %v1050 = vadd.f32 %v1049, %v1003
        %v1051 = vadd.f32 %v1050, %v1004
        %v1052 = vadd.f32 %v1051, %v1005
        %v1053 = vadd.f32 %v1052, %v1006
        %v1054 = vadd.f32 %v1053, %v1007
        %v1055 = vadd.f32 %v1054, %v1008
        %v1056 = vadd.f32 %v1055, %v1009
        %v1057 = vadd.f32 %v1056, %v1010
        %v1058 = vadd.f32 %v1057, %v1011
        %v1059 = vadd.f32 %v1058, %v1012
        %v1060 = vadd.f32 %v1059, %v1013
        %v1061 = vadd.f32 %v1060, %v1014
        %v1062 = vadd.f32 %v1061, %v1015
        %v1063 = vadd.f32 %v1062, %v1016
        %v1064 = vadd.f32 %v1063, %v1017
        %v1065 = vadd.f32 %v1064, %v1018
        %v1066 = vadd.f32 %v1065, %v1019
        %v1067 = vrot.slane %v1066, 4
        %v1068 = vadd.f32 %v1066, %v1067
        %v1069 = vrot.slane %v1068, 2
        %v1070 = vadd.f32 %v1068, %v1069
        %v1071 = vrot.slane %v1070, 1
        %v1072 = vadd.f32 %v1070, %v1071
        %v1073 = vpack.c.bf16 %v973, %v972
        %v1074 = vpack.c.bf16 %v975, %v974
        %v1075 = vpack.c.bf16 %v977, %v976
        %v1076 = vpack.c.bf16 %v979, %v978
        %v1077 = vpack.c.bf16 %v981, %v980
        %v1078 = vpack.c.bf16 %v983, %v982
        %v1079 = vpack.c.bf16 %v985, %v984
        %v1080 = vpack.c.bf16 %v987, %v986
        %v1081 = vpack.c.bf16 %v989, %v988
        %v1082 = vpack.c.bf16 %v991, %v990
        %v1083 = vpack.c.bf16 %v993, %v992
        %v1084 = vpack.c.bf16 %v995, %v994
        %v1085 = vpack.c.bf16 %v997, %v996
        %v1086 = vpack.c.bf16 %v999, %v998
        %v1087 = vpack.c.bf16 %v1001, %v1000
        %v1088 = vpack.c.bf16 %v1003, %v1002
        %v1089 = vpack.c.bf16 %v1005, %v1004
        %v1090 = vpack.c.bf16 %v1007, %v1006
        %v1091 = vpack.c.bf16 %v1009, %v1008
        %v1092 = vpack.c.bf16 %v1011, %v1010
        %v1093 = vpack.c.bf16 %v1013, %v1012
        %v1094 = vpack.c.bf16 %v1015, %v1014
        %v1095 = vpack.c.bf16 %v1017, %v1016
        %v1096 = vpack.c.bf16 %v1019, %v1018
        %v1097 = vmax.f32 %v1072, 1.0
        %v1098 = vrcp.pop %v1097
        %v1099 = vmul.f32 %v1097, %v1098
        %v1100 = vsub.f32 1.0, %v1099
        %v1101 = vmul.f32 %v1098, %v1100
        %v1102 = vadd.f32 %v1098, %v1101
        %vm1103 = vweird.f32 %v1097
        %vm1104 = vweird.f32 %v1098
        %vm1105 = vmor %vm1103, %vm1104
        %v1106 = vsel %vm1105, %v1098, %v1102
        %v1107 = vand.u32 2147483647, %v1097
        %vm1108 = vcmp.eq.f32.partialorder %v1107, 8.507059e+37
        %v1109 = vand.u32 %v1097, 2147483648
        %v1110 = vor.u32 1.1754944e-38, %v1109
        %v1111 = vsel %vm1108, %v1110, %v1106
        %v1112 = vld [vmem:[%s11] sm:$0xff]
        %v1113 = vld [vmem:[%s11 + $0x8] sm:$0xff]
        %v1114 = vld [vmem:[%s11 + $0x10] sm:$0xff]
        %v1115 = vld [vmem:[%s11 + $0x18] sm:$0xff]
        %v1116 = vld [vmem:[%s11 + $0x20] sm:$0xff]
        %v1117 = vld [vmem:[%s11 + $0x28] sm:$0xff]
        %v1118 = vld [vmem:[%s11 + $0x30] sm:$0xff]
        %v1119 = vld [vmem:[%s11 + $0x38] sm:$0xff]
        %v1120 = vld [vmem:[%s11 + $0x40] sm:$0xff]
        %v1121 = vld [vmem:[%s11 + $0x48] sm:$0xff]
        %v1122 = vld [vmem:[%s11 + $0x50] sm:$0xff]
        %v1123 = vld [vmem:[%s11 + $0x58] sm:$0xff]
        %v1124 = vld [vmem:[%s11 + $0x60] sm:$0xff]
        %v1125 = vld [vmem:[%s11 + $0x68] sm:$0xff]
        %v1126 = vld [vmem:[%s11 + $0x70] sm:$0xff]
        %v1127 = vld [vmem:[%s11 + $0x78] sm:$0xff]
        %v1128 = vld [vmem:[%s11 + $0x80] sm:$0xff]
        %v1129 = vld [vmem:[%s11 + $0x88] sm:$0xff]
        %v1130 = vld [vmem:[%s11 + $0x90] sm:$0xff]
        %v1131 = vld [vmem:[%s11 + $0x98] sm:$0xff]
        %v1132 = vld [vmem:[%s11 + $0xa0] sm:$0xff]
        %v1133 = vld [vmem:[%s11 + $0xa8] sm:$0xff]
        %v1134 = vld [vmem:[%s11 + $0xb0] sm:$0xff]
        %v1135 = vld [vmem:[%s11 + $0xb8] sm:$0xff]
        %v1136 = vld [vmem:[%s11 + $0xc0] sm:$0xff]
        %v1137 = vld [vmem:[%s11 + $0xc8] sm:$0xff]
        %v1138 = vld [vmem:[%s11 + $0xd0] sm:$0xff]
        %v1139 = vld [vmem:[%s11 + $0xd8] sm:$0xff]
        %v1140 = vld [vmem:[%s11 + $0xe0] sm:$0xff]
        %v1141 = vld [vmem:[%s11 + $0xe8] sm:$0xff]
        %v1142 = vld [vmem:[%s11 + $0xf0] sm:$0xff]
        %v1143 = vld [vmem:[%s11 + $0xf8] sm:$0xff]
        %v1144 = vld [vmem:[%s11 + $0x100] sm:$0xff]
        %v1145 = vld [vmem:[%s11 + $0x108] sm:$0xff]
        %v1146 = vld [vmem:[%s11 + $0x110] sm:$0xff]
        %v1147 = vld [vmem:[%s11 + $0x118] sm:$0xff]
        %v1148 = vld [vmem:[%s11 + $0x120] sm:$0xff]
        %v1149 = vld [vmem:[%s11 + $0x128] sm:$0xff]
        %v1150 = vld [vmem:[%s11 + $0x130] sm:$0xff]
        %v1151 = vld [vmem:[%s11 + $0x138] sm:$0xff]
        %1153 = vset.pattern.permute.xlu0 0
        %1154 = vperm.xlu0 %1153, %v1112
        %v1155 = vpop.permute.xlu0 %1154
        %1158 = vset.pattern.permute.xlu0 0
        %1159 = vperm.xlu0 %1158, %v1113
        %v1160 = vpop.permute.xlu0 %1159
        %1163 = vset.pattern.permute.xlu0 0
        %1164 = vperm.xlu0 %1163, %v1114
        %v1165 = vpop.permute.xlu0 %1164
        %1168 = vset.pattern.permute.xlu0 0
        %1169 = vperm.xlu0 %1168, %v1115
        %v1170 = vpop.permute.xlu0 %1169
        %1173 = vset.pattern.permute.xlu0 0
        %1174 = vperm.xlu0 %1173, %v1116
        %v1175 = vpop.permute.xlu0 %1174
        %1178 = vset.pattern.permute.xlu0 0
        %1179 = vperm.xlu0 %1178, %v1117
        %v1180 = vpop.permute.xlu0 %1179
        %1183 = vset.pattern.permute.xlu0 0
        %1184 = vperm.xlu0 %1183, %v1118
        %v1185 = vpop.permute.xlu0 %1184
        %1188 = vset.pattern.permute.xlu0 0
        %1189 = vperm.xlu0 %1188, %v1119
        %v1190 = vpop.permute.xlu0 %1189
        %1193 = vset.pattern.permute.xlu0 0
        %1194 = vperm.xlu0 %1193, %v1120
        %v1195 = vpop.permute.xlu0 %1194
        %1198 = vset.pattern.permute.xlu0 0
        %1199 = vperm.xlu0 %1198, %v1121
        %v1200 = vpop.permute.xlu0 %1199
        %1203 = vset.pattern.permute.xlu0 0
        %1204 = vperm.xlu0 %1203, %v1122
        %v1205 = vpop.permute.xlu0 %1204
        %1208 = vset.pattern.permute.xlu0 0
        %1209 = vperm.xlu0 %1208, %v1123
        %v1210 = vpop.permute.xlu0 %1209
        %1213 = vset.pattern.permute.xlu0 0
        %1214 = vperm.xlu0 %1213, %v1124
        %v1215 = vpop.permute.xlu0 %1214
        %1218 = vset.pattern.permute.xlu0 0
        %1219 = vperm.xlu0 %1218, %v1125
        %v1220 = vpop.permute.xlu0 %1219
        %1223 = vset.pattern.permute.xlu0 0
        %1224 = vperm.xlu0 %1223, %v1126
        %v1225 = vpop.permute.xlu0 %1224
        %1228 = vset.pattern.permute.xlu0 0
        %1229 = vperm.xlu0 %1228, %v1127
        %v1230 = vpop.permute.xlu0 %1229
        %1233 = vset.pattern.permute.xlu0 0
        %1234 = vperm.xlu0 %1233, %v1128
        %v1235 = vpop.permute.xlu0 %1234
        %1238 = vset.pattern.permute.xlu0 0
        %1239 = vperm.xlu0 %1238, %v1129
        %v1240 = vpop.permute.xlu0 %1239
        %1243 = vset.pattern.permute.xlu0 0
        %1244 = vperm.xlu0 %1243, %v1130
        %v1245 = vpop.permute.xlu0 %1244
        %1248 = vset.pattern.permute.xlu0 0
        %1249 = vperm.xlu0 %1248, %v1131
        %v1250 = vpop.permute.xlu0 %1249
        %1253 = vset.pattern.permute.xlu0 0
        %1254 = vperm.xlu0 %1253, %v1132
        %v1255 = vpop.permute.xlu0 %1254
        %1258 = vset.pattern.permute.xlu0 0
        %1259 = vperm.xlu0 %1258, %v1133
        %v1260 = vpop.permute.xlu0 %1259
        %1263 = vset.pattern.permute.xlu0 0
        %1264 = vperm.xlu0 %1263, %v1134
        %v1265 = vpop.permute.xlu0 %1264
        %1268 = vset.pattern.permute.xlu0 0
        %1269 = vperm.xlu0 %1268, %v1135
        %v1270 = vpop.permute.xlu0 %1269
        %1273 = vset.pattern.permute.xlu0 0
        %1274 = vperm.xlu0 %1273, %v1136
        %v1275 = vpop.permute.xlu0 %1274
        %1278 = vset.pattern.permute.xlu0 0
        %1279 = vperm.xlu0 %1278, %v1137
        %v1280 = vpop.permute.xlu0 %1279
        %1283 = vset.pattern.permute.xlu0 0
        %1284 = vperm.xlu0 %1283, %v1138
        %v1285 = vpop.permute.xlu0 %1284
        %1288 = vset.pattern.permute.xlu0 0
        %1289 = vperm.xlu0 %1288, %v1139
        %v1290 = vpop.permute.xlu0 %1289
        %1293 = vset.pattern.permute.xlu0 0
        %1294 = vperm.xlu0 %1293, %v1140
        %v1295 = vpop.permute.xlu0 %1294
        %1298 = vset.pattern.permute.xlu0 0
        %1299 = vperm.xlu0 %1298, %v1141
        %v1300 = vpop.permute.xlu0 %1299
        %1303 = vset.pattern.permute.xlu0 0
        %1304 = vperm.xlu0 %1303, %v1142
        %v1305 = vpop.permute.xlu0 %1304
        %1308 = vset.pattern.permute.xlu0 0
        %1309 = vperm.xlu0 %1308, %v1143
        %v1310 = vpop.permute.xlu0 %1309
        %1313 = vset.pattern.permute.xlu0 0
        %1314 = vperm.xlu0 %1313, %v1144
        %v1315 = vpop.permute.xlu0 %1314
        %1318 = vset.pattern.permute.xlu0 0
        %1319 = vperm.xlu0 %1318, %v1145
        %v1320 = vpop.permute.xlu0 %1319
        %1323 = vset.pattern.permute.xlu0 0
        %1324 = vperm.xlu0 %1323, %v1146
        %v1325 = vpop.permute.xlu0 %1324
        %1328 = vset.pattern.permute.xlu0 0
        %1329 = vperm.xlu0 %1328, %v1147
        %v1330 = vpop.permute.xlu0 %1329
        %1333 = vset.pattern.permute.xlu0 0
        %1334 = vperm.xlu0 %1333, %v1148
        %v1335 = vpop.permute.xlu0 %1334
        %1338 = vset.pattern.permute.xlu0 0
        %1339 = vperm.xlu0 %1338, %v1149
        %v1340 = vpop.permute.xlu0 %1339
        %1343 = vset.pattern.permute.xlu0 0
        %1344 = vperm.xlu0 %1343, %v1150
        %v1345 = vpop.permute.xlu0 %1344
        %1348 = vset.pattern.permute.xlu0 0
        %1349 = vperm.xlu0 %1348, %v1151
        %v1350 = vpop.permute.xlu0 %1349
        %v1353 = vperm.slane %v491, 0
        %v1354 = vperm.slane %v491, 1
        %v1355 = vperm.slane %v491, 2
        %v1359 = vmul.f32 %v1155, %v1353
        %v1360 = vmul.f32 %v1155, %v1354
        %v1361 = vmul.f32 %v1155, %v1355
        %v1362 = vmul.f32 %v1160, %v1353
        %v1363 = vmul.f32 %v1160, %v1354
        %v1364 = vmul.f32 %v1160, %v1355
        %v1365 = vmul.f32 %v1165, %v1353
        %v1366 = vmul.f32 %v1165, %v1354
        %v1367 = vmul.f32 %v1165, %v1355
        %v1368 = vmul.f32 %v1170, %v1353
        %v1369 = vmul.f32 %v1170, %v1354
        %v1370 = vmul.f32 %v1170, %v1355
        %v1371 = vmul.f32 %v1175, %v1353
        %v1372 = vmul.f32 %v1175, %v1354
        %v1373 = vmul.f32 %v1175, %v1355
        %v1374 = vmul.f32 %v1180, %v1353
        %v1375 = vmul.f32 %v1180, %v1354
        %v1376 = vmul.f32 %v1180, %v1355
        %v1377 = vmul.f32 %v1185, %v1353
        %v1378 = vmul.f32 %v1185, %v1354
        %v1379 = vmul.f32 %v1185, %v1355
        %v1380 = vmul.f32 %v1190, %v1353
        %v1381 = vmul.f32 %v1190, %v1354
        %v1382 = vmul.f32 %v1190, %v1355
        %v1383 = vmul.f32 %v1195, %v1353
        %v1384 = vmul.f32 %v1195, %v1354
        %v1385 = vmul.f32 %v1195, %v1355
        %v1386 = vmul.f32 %v1200, %v1353
        %v1387 = vmul.f32 %v1200, %v1354
        %v1388 = vmul.f32 %v1200, %v1355
        %v1389 = vmul.f32 %v1205, %v1353
        %v1390 = vmul.f32 %v1205, %v1354
        %v1391 = vmul.f32 %v1205, %v1355
        %v1392 = vmul.f32 %v1210, %v1353
        %v1393 = vmul.f32 %v1210, %v1354
        %v1394 = vmul.f32 %v1210, %v1355
        %v1395 = vmul.f32 %v1215, %v1353
        %v1396 = vmul.f32 %v1215, %v1354
        %v1397 = vmul.f32 %v1215, %v1355
        %v1398 = vmul.f32 %v1220, %v1353
        %v1399 = vmul.f32 %v1220, %v1354
        %v1400 = vmul.f32 %v1220, %v1355
        %v1401 = vmul.f32 %v1225, %v1353
        %v1402 = vmul.f32 %v1225, %v1354
        %v1403 = vmul.f32 %v1225, %v1355
        %v1404 = vmul.f32 %v1230, %v1353
        %v1405 = vmul.f32 %v1230, %v1354
        %v1406 = vmul.f32 %v1230, %v1355
        %v1407 = vmul.f32 %v1235, %v1353
        %v1408 = vmul.f32 %v1235, %v1354
        %v1409 = vmul.f32 %v1235, %v1355
        %v1410 = vmul.f32 %v1240, %v1353
        %v1411 = vmul.f32 %v1240, %v1354
        %v1412 = vmul.f32 %v1240, %v1355
        %v1413 = vmul.f32 %v1245, %v1353
        %v1414 = vmul.f32 %v1245, %v1354
        %v1415 = vmul.f32 %v1245, %v1355
        %v1416 = vmul.f32 %v1250, %v1353
        %v1417 = vmul.f32 %v1250, %v1354
        %v1418 = vmul.f32 %v1250, %v1355
        %v1419 = vmul.f32 %v1255, %v1353
        %v1420 = vmul.f32 %v1255, %v1354
        %v1421 = vmul.f32 %v1255, %v1355
        %v1422 = vmul.f32 %v1260, %v1353
        %v1423 = vmul.f32 %v1260, %v1354
        %v1424 = vmul.f32 %v1260, %v1355
        %v1425 = vmul.f32 %v1265, %v1353
        %v1426 = vmul.f32 %v1265, %v1354
        %v1427 = vmul.f32 %v1265, %v1355
        %v1428 = vmul.f32 %v1270, %v1353
        %v1429 = vmul.f32 %v1270, %v1354
        %v1430 = vmul.f32 %v1270, %v1355
        %v1431 = vmul.f32 %v1275, %v1353
        %v1432 = vmul.f32 %v1275, %v1354
        %v1433 = vmul.f32 %v1275, %v1355
        %v1434 = vmul.f32 %v1280, %v1353
        %v1435 = vmul.f32 %v1280, %v1354
        %v1436 = vmul.f32 %v1280, %v1355
        %v1437 = vmul.f32 %v1285, %v1353
        %v1438 = vmul.f32 %v1285, %v1354
        %v1439 = vmul.f32 %v1285, %v1355
        %v1440 = vmul.f32 %v1290, %v1353
        %v1441 = vmul.f32 %v1290, %v1354
        %v1442 = vmul.f32 %v1290, %v1355
        %v1443 = vmul.f32 %v1295, %v1353
        %v1444 = vmul.f32 %v1295, %v1354
        %v1445 = vmul.f32 %v1295, %v1355
        %v1446 = vmul.f32 %v1300, %v1353
        %v1447 = vmul.f32 %v1300, %v1354
        %v1448 = vmul.f32 %v1300, %v1355
        %v1449 = vmul.f32 %v1305, %v1353
        %v1450 = vmul.f32 %v1305, %v1354
        %v1451 = vmul.f32 %v1305, %v1355
        %v1452 = vmul.f32 %v1310, %v1353
        %v1453 = vmul.f32 %v1310, %v1354
        %v1454 = vmul.f32 %v1310, %v1355
        %v1455 = vmul.f32 %v1315, %v1353
        %v1456 = vmul.f32 %v1315, %v1354
        %v1457 = vmul.f32 %v1315, %v1355
        %v1458 = vmul.f32 %v1320, %v1353
        %v1459 = vmul.f32 %v1320, %v1354
        %v1460 = vmul.f32 %v1320, %v1355
        %v1461 = vmul.f32 %v1325, %v1353
        %v1462 = vmul.f32 %v1325, %v1354
        %v1463 = vmul.f32 %v1325, %v1355
        %v1464 = vmul.f32 %v1330, %v1353
        %v1465 = vmul.f32 %v1330, %v1354
        %v1466 = vmul.f32 %v1330, %v1355
        %v1467 = vmul.f32 %v1335, %v1353
        %v1468 = vmul.f32 %v1335, %v1354
        %v1469 = vmul.f32 %v1335, %v1355
        %v1470 = vmul.f32 %v1340, %v1353
        %v1471 = vmul.f32 %v1340, %v1354
        %v1472 = vmul.f32 %v1340, %v1355
        %v1473 = vmul.f32 %v1345, %v1353
        %v1474 = vmul.f32 %v1345, %v1354
        %v1475 = vmul.f32 %v1345, %v1355
        %v1476 = vmul.f32 %v1350, %v1353
        %v1477 = vmul.f32 %v1350, %v1354
        %v1478 = vmul.f32 %v1350, %v1355
        %1479 = vset.pattern.permute.xlu0 1
        %1480 = vperm.xlu0 %1479, %v1112
        %v1481 = vpop.permute.xlu0 %1480
        %1483 = vset.pattern.permute.xlu0 1
        %1484 = vperm.xlu0 %1483, %v1113
        %v1485 = vpop.permute.xlu0 %1484
        %1487 = vset.pattern.permute.xlu0 1
        %1488 = vperm.xlu0 %1487, %v1114
        %v1489 = vpop.permute.xlu0 %1488
        %1491 = vset.pattern.permute.xlu0 1
        %1492 = vperm.xlu0 %1491, %v1115
        %v1493 = vpop.permute.xlu0 %1492
        %1495 = vset.pattern.permute.xlu0 1
        %1496 = vperm.xlu0 %1495, %v1116
        %v1497 = vpop.permute.xlu0 %1496
        %1499 = vset.pattern.permute.xlu0 1
        %1500 = vperm.xlu0 %1499, %v1117
        %v1501 = vpop.permute.xlu0 %1500
        %1503 = vset.pattern.permute.xlu0 1
        %1504 = vperm.xlu0 %1503, %v1118
        %v1505 = vpop.permute.xlu0 %1504
        %1507 = vset.pattern.permute.xlu0 1
        %1508 = vperm.xlu0 %1507, %v1119
        %v1509 = vpop.permute.xlu0 %1508
        %1511 = vset.pattern.permute.xlu0 1
        %1512 = vperm.xlu0 %1511, %v1120
        %v1513 = vpop.permute.xlu0 %1512
        %1515 = vset.pattern.permute.xlu0 1
        %1516 = vperm.xlu0 %1515, %v1121
        %v1517 = vpop.permute.xlu0 %1516
        %1519 = vset.pattern.permute.xlu0 1
        %1520 = vperm.xlu0 %1519, %v1122
        %v1521 = vpop.permute.xlu0 %1520
        %1523 = vset.pattern.permute.xlu0 1
        %1524 = vperm.xlu0 %1523, %v1123
        %v1525 = vpop.permute.xlu0 %1524
        %1527 = vset.pattern.permute.xlu0 1
        %1528 = vperm.xlu0 %1527, %v1124
        %v1529 = vpop.permute.xlu0 %1528
        %1531 = vset.pattern.permute.xlu0 1
        %1532 = vperm.xlu0 %1531, %v1125
        %v1533 = vpop.permute.xlu0 %1532
        %1535 = vset.pattern.permute.xlu0 1
        %1536 = vperm.xlu0 %1535, %v1126
        %v1537 = vpop.permute.xlu0 %1536
        %1539 = vset.pattern.permute.xlu0 1
        %1540 = vperm.xlu0 %1539, %v1127
        %v1541 = vpop.permute.xlu0 %1540
        %1543 = vset.pattern.permute.xlu0 1
        %1544 = vperm.xlu0 %1543, %v1128
        %v1545 = vpop.permute.xlu0 %1544
        %1547 = vset.pattern.permute.xlu0 1
        %1548 = vperm.xlu0 %1547, %v1129
        %v1549 = vpop.permute.xlu0 %1548
        %1551 = vset.pattern.permute.xlu0 1
        %1552 = vperm.xlu0 %1551, %v1130
        %v1553 = vpop.permute.xlu0 %1552
        %1555 = vset.pattern.permute.xlu0 1
        %1556 = vperm.xlu0 %1555, %v1131
        %v1557 = vpop.permute.xlu0 %1556
        %1559 = vset.pattern.permute.xlu0 1
        %1560 = vperm.xlu0 %1559, %v1132
        %v1561 = vpop.permute.xlu0 %1560
        %1563 = vset.pattern.permute.xlu0 1
        %1564 = vperm.xlu0 %1563, %v1133
        %v1565 = vpop.permute.xlu0 %1564
        %1567 = vset.pattern.permute.xlu0 1
        %1568 = vperm.xlu0 %1567, %v1134
        %v1569 = vpop.permute.xlu0 %1568
        %1571 = vset.pattern.permute.xlu0 1
        %1572 = vperm.xlu0 %1571, %v1135
        %v1573 = vpop.permute.xlu0 %1572
        %1575 = vset.pattern.permute.xlu0 1
        %1576 = vperm.xlu0 %1575, %v1136
        %v1577 = vpop.permute.xlu0 %1576
        %1579 = vset.pattern.permute.xlu0 1
        %1580 = vperm.xlu0 %1579, %v1137
        %v1581 = vpop.permute.xlu0 %1580
        %1583 = vset.pattern.permute.xlu0 1
        %1584 = vperm.xlu0 %1583, %v1138
        %v1585 = vpop.permute.xlu0 %1584
        %1587 = vset.pattern.permute.xlu0 1
        %1588 = vperm.xlu0 %1587, %v1139
        %v1589 = vpop.permute.xlu0 %1588
        %1591 = vset.pattern.permute.xlu0 1
        %1592 = vperm.xlu0 %1591, %v1140
        %v1593 = vpop.permute.xlu0 %1592
        %1595 = vset.pattern.permute.xlu0 1
        %1596 = vperm.xlu0 %1595, %v1141
        %v1597 = vpop.permute.xlu0 %1596
        %1599 = vset.pattern.permute.xlu0 1
        %1600 = vperm.xlu0 %1599, %v1142
        %v1601 = vpop.permute.xlu0 %1600
        %1603 = vset.pattern.permute.xlu0 1
        %1604 = vperm.xlu0 %1603, %v1143
        %v1605 = vpop.permute.xlu0 %1604
        %1607 = vset.pattern.permute.xlu0 1
        %1608 = vperm.xlu0 %1607, %v1144
        %v1609 = vpop.permute.xlu0 %1608
        %1611 = vset.pattern.permute.xlu0 1
        %1612 = vperm.xlu0 %1611, %v1145
        %v1613 = vpop.permute.xlu0 %1612
        %1615 = vset.pattern.permute.xlu0 1
        %1616 = vperm.xlu0 %1615, %v1146
        %v1617 = vpop.permute.xlu0 %1616
        %1619 = vset.pattern.permute.xlu0 1
        %1620 = vperm.xlu0 %1619, %v1147
        %v1621 = vpop.permute.xlu0 %1620
        %1623 = vset.pattern.permute.xlu0 1
        %1624 = vperm.xlu0 %1623, %v1148
        %v1625 = vpop.permute.xlu0 %1624
        %1627 = vset.pattern.permute.xlu0 1
        %1628 = vperm.xlu0 %1627, %v1149
        %v1629 = vpop.permute.xlu0 %1628
        %1631 = vset.pattern.permute.xlu0 1
        %1632 = vperm.xlu0 %1631, %v1150
        %v1633 = vpop.permute.xlu0 %1632
        %1635 = vset.pattern.permute.xlu0 1
        %1636 = vperm.xlu0 %1635, %v1151
        %v1637 = vpop.permute.xlu0 %1636
        %v1639 = vadd.f32 %v1359, %v1481
        %v1640 = vadd.f32 %v1360, %v1481
        %v1641 = vadd.f32 %v1361, %v1481
        %v1642 = vadd.f32 %v1362, %v1485
        %v1643 = vadd.f32 %v1363, %v1485
        %v1644 = vadd.f32 %v1364, %v1485
        %v1645 = vadd.f32 %v1365, %v1489
        %v1646 = vadd.f32 %v1366, %v1489
        %v1647 = vadd.f32 %v1367, %v1489
        %v1648 = vadd.f32 %v1368, %v1493
        %v1649 = vadd.f32 %v1369, %v1493
        %v1650 = vadd.f32 %v1370, %v1493
        %v1651 = vadd.f32 %v1371, %v1497
        %v1652 = vadd.f32 %v1372, %v1497
        %v1653 = vadd.f32 %v1373, %v1497
        %v1654 = vadd.f32 %v1374, %v1501
        %v1655 = vadd.f32 %v1375, %v1501
        %v1656 = vadd.f32 %v1376, %v1501
        %v1657 = vadd.f32 %v1377, %v1505
        %v1658 = vadd.f32 %v1378, %v1505
        %v1659 = vadd.f32 %v1379, %v1505
        %v1660 = vadd.f32 %v1380, %v1509
        %v1661 = vadd.f32 %v1381, %v1509
        %v1662 = vadd.f32 %v1382, %v1509
        %v1663 = vadd.f32 %v1383, %v1513
        %v1664 = vadd.f32 %v1384, %v1513
        %v1665 = vadd.f32 %v1385, %v1513
        %v1666 = vadd.f32 %v1386, %v1517
        %v1667 = vadd.f32 %v1387, %v1517
        %v1668 = vadd.f32 %v1388, %v1517
        %v1669 = vadd.f32 %v1389, %v1521
        %v1670 = vadd.f32 %v1390, %v1521
        %v1671 = vadd.f32 %v1391, %v1521
        %v1672 = vadd.f32 %v1392, %v1525
        %v1673 = vadd.f32 %v1393, %v1525
        %v1674 = vadd.f32 %v1394, %v1525
        %v1675 = vadd.f32 %v1395, %v1529
        %v1676 = vadd.f32 %v1396, %v1529
        %v1677 = vadd.f32 %v1397, %v1529
        %v1678 = vadd.f32 %v1398, %v1533
        %v1679 = vadd.f32 %v1399, %v1533
        %v1680 = vadd.f32 %v1400, %v1533
        %v1681 = vadd.f32 %v1401, %v1537
        %v1682 = vadd.f32 %v1402, %v1537
        %v1683 = vadd.f32 %v1403, %v1537
        %v1684 = vadd.f32 %v1404, %v1541
        %v1685 = vadd.f32 %v1405, %v1541
        %v1686 = vadd.f32 %v1406, %v1541
        %v1687 = vadd.f32 %v1407, %v1545
        %v1688 = vadd.f32 %v1408, %v1545
        %v1689 = vadd.f32 %v1409, %v1545
        %v1690 = vadd.f32 %v1410, %v1549
        %v1691 = vadd.f32 %v1411, %v1549
        %v1692 = vadd.f32 %v1412, %v1549
        %v1693 = vadd.f32 %v1413, %v1553
        %v1694 = vadd.f32 %v1414, %v1553
        %v1695 = vadd.f32 %v1415, %v1553
        %v1696 = vadd.f32 %v1416, %v1557
        %v1697 = vadd.f32 %v1417, %v1557
        %v1698 = vadd.f32 %v1418, %v1557
        %v1699 = vadd.f32 %v1419, %v1561
        %v1700 = vadd.f32 %v1420, %v1561
        %v1701 = vadd.f32 %v1421, %v1561
        %v1702 = vadd.f32 %v1422, %v1565
        %v1703 = vadd.f32 %v1423, %v1565
        %v1704 = vadd.f32 %v1424, %v1565
        %v1705 = vadd.f32 %v1425, %v1569
        %v1706 = vadd.f32 %v1426, %v1569
        %v1707 = vadd.f32 %v1427, %v1569
        %v1708 = vadd.f32 %v1428, %v1573
        %v1709 = vadd.f32 %v1429, %v1573
        %v1710 = vadd.f32 %v1430, %v1573
        %v1711 = vadd.f32 %v1431, %v1577
        %v1712 = vadd.f32 %v1432, %v1577
        %v1713 = vadd.f32 %v1433, %v1577
        %v1714 = vadd.f32 %v1434, %v1581
        %v1715 = vadd.f32 %v1435, %v1581
        %v1716 = vadd.f32 %v1436, %v1581
        %v1717 = vadd.f32 %v1437, %v1585
        %v1718 = vadd.f32 %v1438, %v1585
        %v1719 = vadd.f32 %v1439, %v1585
        %v1720 = vadd.f32 %v1440, %v1589
        %v1721 = vadd.f32 %v1441, %v1589
        %v1722 = vadd.f32 %v1442, %v1589
        %v1723 = vadd.f32 %v1443, %v1593
        %v1724 = vadd.f32 %v1444, %v1593
        %v1725 = vadd.f32 %v1445, %v1593
        %v1726 = vadd.f32 %v1446, %v1597
        %v1727 = vadd.f32 %v1447, %v1597
        %v1728 = vadd.f32 %v1448, %v1597
        %v1729 = vadd.f32 %v1449, %v1601
        %v1730 = vadd.f32 %v1450, %v1601
        %v1731 = vadd.f32 %v1451, %v1601
        %v1732 = vadd.f32 %v1452, %v1605
        %v1733 = vadd.f32 %v1453, %v1605
        %v1734 = vadd.f32 %v1454, %v1605
        %v1735 = vadd.f32 %v1455, %v1609
        %v1736 = vadd.f32 %v1456, %v1609
        %v1737 = vadd.f32 %v1457, %v1609
        %v1738 = vadd.f32 %v1458, %v1613
        %v1739 = vadd.f32 %v1459, %v1613
        %v1740 = vadd.f32 %v1460, %v1613
        %v1741 = vadd.f32 %v1461, %v1617
        %v1742 = vadd.f32 %v1462, %v1617
        %v1743 = vadd.f32 %v1463, %v1617
        %v1744 = vadd.f32 %v1464, %v1621
        %v1745 = vadd.f32 %v1465, %v1621
        %v1746 = vadd.f32 %v1466, %v1621
        %v1747 = vadd.f32 %v1467, %v1625
        %v1748 = vadd.f32 %v1468, %v1625
        %v1749 = vadd.f32 %v1469, %v1625
        %v1750 = vadd.f32 %v1470, %v1629
        %v1751 = vadd.f32 %v1471, %v1629
        %v1752 = vadd.f32 %v1472, %v1629
        %v1753 = vadd.f32 %v1473, %v1633
        %v1754 = vadd.f32 %v1474, %v1633
        %v1755 = vadd.f32 %v1475, %v1633
        %v1756 = vadd.f32 %v1476, %v1637
        %v1757 = vadd.f32 %v1477, %v1637
        %v1758 = vadd.f32 %v1478, %v1637
        %v1759 = vmax.f32 %v1639, 0.0
        %v1760 = vmax.f32 %v1640, 0.0
        %v1761 = vmax.f32 %v1641, 0.0
        %v1762 = vmax.f32 %v1642, 0.0
        %v1763 = vmax.f32 %v1643, 0.0
        %v1764 = vmax.f32 %v1644, 0.0
        %v1765 = vmax.f32 %v1645, 0.0
        %v1766 = vmax.f32 %v1646, 0.0
        %v1767 = vmax.f32 %v1647, 0.0
        %v1768 = vmax.f32 %v1648, 0.0
        %v1769 = vmax.f32 %v1649, 0.0
        %v1770 = vmax.f32 %v1650, 0.0
        %v1771 = vmax.f32 %v1651, 0.0
        %v1772 = vmax.f32 %v1652, 0.0
        %v1773 = vmax.f32 %v1653, 0.0
        %v1774 = vmax.f32 %v1654, 0.0
        %v1775 = vmax.f32 %v1655, 0.0
        %v1776 = vmax.f32 %v1656, 0.0
        %v1777 = vmax.f32 %v1657, 0.0
        %v1778 = vmax.f32 %v1658, 0.0
        %v1779 = vmax.f32 %v1659, 0.0
        %v1780 = vmax.f32 %v1660, 0.0
        %v1781 = vmax.f32 %v1661, 0.0
        %v1782 = vmax.f32 %v1662, 0.0
        %v1783 = vmax.f32 %v1663, 0.0
        %v1784 = vmax.f32 %v1664, 0.0
        %v1785 = vmax.f32 %v1665, 0.0
        %v1786 = vmax.f32 %v1666, 0.0
        %v1787 = vmax.f32 %v1667, 0.0
        %v1788 = vmax.f32 %v1668, 0.0
        %v1789 = vmax.f32 %v1669, 0.0
        %v1790 = vmax.f32 %v1670, 0.0
        %v1791 = vmax.f32 %v1671, 0.0
        %v1792 = vmax.f32 %v1672, 0.0
        %v1793 = vmax.f32 %v1673, 0.0
        %v1794 = vmax.f32 %v1674, 0.0
        %v1795 = vmax.f32 %v1675, 0.0
        %v1796 = vmax.f32 %v1676, 0.0
        %v1797 = vmax.f32 %v1677, 0.0
        %v1798 = vmax.f32 %v1678, 0.0
        %v1799 = vmax.f32 %v1679, 0.0
        %v1800 = vmax.f32 %v1680, 0.0
        %v1801 = vmax.f32 %v1681, 0.0
        %v1802 = vmax.f32 %v1682, 0.0
        %v1803 = vmax.f32 %v1683, 0.0
        %v1804 = vmax.f32 %v1684, 0.0
        %v1805 = vmax.f32 %v1685, 0.0
        %v1806 = vmax.f32 %v1686, 0.0
        %v1807 = vmax.f32 %v1687, 0.0
        %v1808 = vmax.f32 %v1688, 0.0
        %v1809 = vmax.f32 %v1689, 0.0
        %v1810 = vmax.f32 %v1690, 0.0
        %v1811 = vmax.f32 %v1691, 0.0
        %v1812 = vmax.f32 %v1692, 0.0
        %v1813 = vmax.f32 %v1693, 0.0
        %v1814 = vmax.f32 %v1694, 0.0
        %v1815 = vmax.f32 %v1695, 0.0
        %v1816 = vmax.f32 %v1696, 0.0
        %v1817 = vmax.f32 %v1697, 0.0
        %v1818 = vmax.f32 %v1698, 0.0
        %v1819 = vmax.f32 %v1699, 0.0
        %v1820 = vmax.f32 %v1700, 0.0
        %v1821 = vmax.f32 %v1701, 0.0
        %v1822 = vmax.f32 %v1702, 0.0
        %v1823 = vmax.f32 %v1703, 0.0
        %v1824 = vmax.f32 %v1704, 0.0
        %v1825 = vmax.f32 %v1705, 0.0
        %v1826 = vmax.f32 %v1706, 0.0
        %v1827 = vmax.f32 %v1707, 0.0
        %v1828 = vmax.f32 %v1708, 0.0
        %v1829 = vmax.f32 %v1709, 0.0
        %v1830 = vmax.f32 %v1710, 0.0
        %v1831 = vmax.f32 %v1711, 0.0
        %v1832 = vmax.f32 %v1712, 0.0
        %v1833 = vmax.f32 %v1713, 0.0
        %v1834 = vmax.f32 %v1714, 0.0
        %v1835 = vmax.f32 %v1715, 0.0
        %v1836 = vmax.f32 %v1716, 0.0
        %v1837 = vmax.f32 %v1717, 0.0
        %v1838 = vmax.f32 %v1718, 0.0
        %v1839 = vmax.f32 %v1719, 0.0
        %v1840 = vmax.f32 %v1720, 0.0
        %v1841 = vmax.f32 %v1721, 0.0
        %v1842 = vmax.f32 %v1722, 0.0
        %v1843 = vmax.f32 %v1723, 0.0
        %v1844 = vmax.f32 %v1724, 0.0
        %v1845 = vmax.f32 %v1725, 0.0
        %v1846 = vmax.f32 %v1726, 0.0
        %v1847 = vmax.f32 %v1727, 0.0
        %v1848 = vmax.f32 %v1728, 0.0
        %v1849 = vmax.f32 %v1729, 0.0
        %v1850 = vmax.f32 %v1730, 0.0
        %v1851 = vmax.f32 %v1731, 0.0
        %v1852 = vmax.f32 %v1732, 0.0
        %v1853 = vmax.f32 %v1733, 0.0
        %v1854 = vmax.f32 %v1734, 0.0
        %v1855 = vmax.f32 %v1735, 0.0
        %v1856 = vmax.f32 %v1736, 0.0
        %v1857 = vmax.f32 %v1737, 0.0
        %v1858 = vmax.f32 %v1738, 0.0
        %v1859 = vmax.f32 %v1739, 0.0
        %v1860 = vmax.f32 %v1740, 0.0
        %v1861 = vmax.f32 %v1741, 0.0
        %v1862 = vmax.f32 %v1742, 0.0
        %v1863 = vmax.f32 %v1743, 0.0
        %v1864 = vmax.f32 %v1744, 0.0
        %v1865 = vmax.f32 %v1745, 0.0
        %v1866 = vmax.f32 %v1746, 0.0
        %v1867 = vmax.f32 %v1747, 0.0
        %v1868 = vmax.f32 %v1748, 0.0
        %v1869 = vmax.f32 %v1749, 0.0
        %v1870 = vmax.f32 %v1750, 0.0
        %v1871 = vmax.f32 %v1751, 0.0
        %v1872 = vmax.f32 %v1752, 0.0
        %v1873 = vmax.f32 %v1753, 0.0
        %v1874 = vmax.f32 %v1754, 0.0
        %v1875 = vmax.f32 %v1755, 0.0
        %v1876 = vmax.f32 %v1756, 0.0
        %v1877 = vmax.f32 %v1757, 0.0
        %v1878 = vmax.f32 %v1758, 0.0
        %v1879 = vld [vmem:[%s6] sm:$0xff]
        %v1880 = vld [vmem:[%s6 + $0x8] sm:$0xf]
        %v1881 = vld [vmem:[%s6 + $0xc] sm:$0xff]
        %v1882 = vld [vmem:[%s6 + $0x14] sm:$0xf]
        %v1883 = vld [vmem:[%s6 + $0x18] sm:$0xff]
        %v1884 = vld [vmem:[%s6 + $0x20] sm:$0xf]
        %v1885 = vld [vmem:[%s6 + $0x24] sm:$0xff]
        %v1886 = vld [vmem:[%s6 + $0x2c] sm:$0xf]
        %v1887 = vld [vmem:[%s6 + $0x30] sm:$0xff]
        %v1888 = vld [vmem:[%s6 + $0x38] sm:$0xf]
        %v1889 = vld [vmem:[%s6 + $0x3c] sm:$0xff]
        %v1890 = vld [vmem:[%s6 + $0x44] sm:$0xf]
        %v1891 = vld [vmem:[%s6 + $0x48] sm:$0xff]
        %v1892 = vld [vmem:[%s6 + $0x50] sm:$0xf]
        %v1893 = vld [vmem:[%s6 + $0x54] sm:$0xff]
        %v1894 = vld [vmem:[%s6 + $0x5c] sm:$0xf]
        %v1895 = vld [vmem:[%s6 + $0x60] sm:$0xff]
        %v1896 = vld [vmem:[%s6 + $0x68] sm:$0xf]
        %v1897 = vld [vmem:[%s6 + $0x6c] sm:$0xff]
        %v1898 = vld [vmem:[%s6 + $0x74] sm:$0xf]
        %v1899 = vld [vmem:[%s6 + $0x78] sm:$0xff]
        %v1900 = vld [vmem:[%s6 + $0x80] sm:$0xf]
        %v1901 = vld [vmem:[%s6 + $0x84] sm:$0xff]
        %v1902 = vld [vmem:[%s6 + $0x8c] sm:$0xf]
        %v1903 = vld [vmem:[%s6 + $0x90] sm:$0xff]
        %v1904 = vld [vmem:[%s6 + $0x98] sm:$0xf]
        %v1905 = vld [vmem:[%s6 + $0x9c] sm:$0xff]
        %v1906 = vld [vmem:[%s6 + $0xa4] sm:$0xf]
        %v1907 = vld [vmem:[%s6 + $0xa8] sm:$0xff]
        %v1908 = vld [vmem:[%s6 + $0xb0] sm:$0xf]
        %v1909 = vld [vmem:[%s6 + $0xb4] sm:$0xff]
        %v1910 = vld [vmem:[%s6 + $0xbc] sm:$0xf]
        %v1911 = vld [vmem:[%s6 + $0xc0] sm:$0xff]
        %v1912 = vld [vmem:[%s6 + $0xc8] sm:$0xf]
        %v1913 = vld [vmem:[%s6 + $0xcc] sm:$0xff]
        %v1914 = vld [vmem:[%s6 + $0xd4] sm:$0xf]
        %v1915 = vld [vmem:[%s6 + $0xd8] sm:$0xff]
        %v1916 = vld [vmem:[%s6 + $0xe0] sm:$0xf]
        %v1917 = vld [vmem:[%s6 + $0xe4] sm:$0xff]
        %v1918 = vld [vmem:[%s6 + $0xec] sm:$0xf]
        %v1919 = vld [vmem:[%s6 + $0xf0] sm:$0xff]
        %v1920 = vld [vmem:[%s6 + $0xf8] sm:$0xf]
        %v1921 = vld [vmem:[%s6 + $0xfc] sm:$0xff]
        %v1922 = vld [vmem:[%s6 + $0x104] sm:$0xf]
        %v1923 = vld [vmem:[%s6 + $0x108] sm:$0xff]
        %v1924 = vld [vmem:[%s6 + $0x110] sm:$0xf]
        %v1925 = vld [vmem:[%s6 + $0x114] sm:$0xff]
        %v1926 = vld [vmem:[%s6 + $0x11c] sm:$0xf]
        %v1927 = vld [vmem:[%s6 + $0x120] sm:$0xff]
        %v1928 = vld [vmem:[%s6 + $0x128] sm:$0xf]
        %v1929 = vld [vmem:[%s6 + $0x12c] sm:$0xff]
        %v1930 = vld [vmem:[%s6 + $0x134] sm:$0xf]
        %v1931 = vld [vmem:[%s6 + $0x138] sm:$0xff]
        %v1932 = vld [vmem:[%s6 + $0x140] sm:$0xf]
        %v1933 = vld [vmem:[%s6 + $0x144] sm:$0xff]
        %v1934 = vld [vmem:[%s6 + $0x14c] sm:$0xf]
        %v1935 = vld [vmem:[%s6 + $0x150] sm:$0xff]
        %v1936 = vld [vmem:[%s6 + $0x158] sm:$0xf]
        %v1937 = vld [vmem:[%s6 + $0x15c] sm:$0xff]
        %v1938 = vld [vmem:[%s6 + $0x164] sm:$0xf]
        %v1939 = vld [vmem:[%s6 + $0x168] sm:$0xff]
        %v1940 = vld [vmem:[%s6 + $0x170] sm:$0xf]
        %v1941 = vld [vmem:[%s6 + $0x174] sm:$0xff]
        %v1942 = vld [vmem:[%s6 + $0x17c] sm:$0xf]
        %v1943 = vld [vmem:[%s6 + $0x180] sm:$0xff]
        %v1944 = vld [vmem:[%s6 + $0x188] sm:$0xf]
        %v1945 = vld [vmem:[%s6 + $0x18c] sm:$0xff]
        %v1946 = vld [vmem:[%s6 + $0x194] sm:$0xf]
        %v1947 = vld [vmem:[%s6 + $0x198] sm:$0xff]
        %v1948 = vld [vmem:[%s6 + $0x1a0] sm:$0xf]
        %v1949 = vld [vmem:[%s6 + $0x1a4] sm:$0xff]
        %v1950 = vld [vmem:[%s6 + $0x1ac] sm:$0xf]
        %v1951 = vld [vmem:[%s6 + $0x1b0] sm:$0xff]
        %v1952 = vld [vmem:[%s6 + $0x1b8] sm:$0xf]
        %v1953 = vld [vmem:[%s6 + $0x1bc] sm:$0xff]
        %v1954 = vld [vmem:[%s6 + $0x1c4] sm:$0xf]
        %v1955 = vld [vmem:[%s6 + $0x1c8] sm:$0xff]
        %v1956 = vld [vmem:[%s6 + $0x1d0] sm:$0xf]
        %v1957 = vld [vmem:[%s6 + $0x1d4] sm:$0xff]
        %v1958 = vld [vmem:[%s6 + $0x1dc] sm:$0xf]
        %v1959 = vpack.c.bf16 %v1762, %v1759
        %v1960 = vpack.c.bf16 %v1763, %v1760
        %v1961 = vpack.c.bf16 %v1764, %v1761
        %v1962 = vpack.c.bf16 %v1768, %v1765
        %v1963 = vpack.c.bf16 %v1769, %v1766
        %v1964 = vpack.c.bf16 %v1770, %v1767
        %v1965 = vpack.c.bf16 %v1774, %v1771
        %v1966 = vpack.c.bf16 %v1775, %v1772
        %v1967 = vpack.c.bf16 %v1776, %v1773
        %v1968 = vpack.c.bf16 %v1780, %v1777
        %v1969 = vpack.c.bf16 %v1781, %v1778
        %v1970 = vpack.c.bf16 %v1782, %v1779
        %v1971 = vpack.c.bf16 %v1786, %v1783
        %v1972 = vpack.c.bf16 %v1787, %v1784
        %v1973 = vpack.c.bf16 %v1788, %v1785
        %v1974 = vpack.c.bf16 %v1792, %v1789
        %v1975 = vpack.c.bf16 %v1793, %v1790
        %v1976 = vpack.c.bf16 %v1794, %v1791
        %v1977 = vpack.c.bf16 %v1798, %v1795
        %v1978 = vpack.c.bf16 %v1799, %v1796
        %v1979 = vpack.c.bf16 %v1800, %v1797
        %v1980 = vpack.c.bf16 %v1804, %v1801
        %v1981 = vpack.c.bf16 %v1805, %v1802
        %v1982 = vpack.c.bf16 %v1806, %v1803
        %v1983 = vpack.c.bf16 %v1810, %v1807
        %v1984 = vpack.c.bf16 %v1811, %v1808
        %v1985 = vpack.c.bf16 %v1812, %v1809
        %v1986 = vpack.c.bf16 %v1816, %v1813
        %v1987 = vpack.c.bf16 %v1817, %v1814
        %v1988 = vpack.c.bf16 %v1818, %v1815
        %v1989 = vpack.c.bf16 %v1822, %v1819
        %v1990 = vpack.c.bf16 %v1823, %v1820
        %v1991 = vpack.c.bf16 %v1824, %v1821
        %v1992 = vpack.c.bf16 %v1828, %v1825
        %v1993 = vpack.c.bf16 %v1829, %v1826
        %v1994 = vpack.c.bf16 %v1830, %v1827
        %v1995 = vpack.c.bf16 %v1834, %v1831
        %v1996 = vpack.c.bf16 %v1835, %v1832
        %v1997 = vpack.c.bf16 %v1836, %v1833
        %v1998 = vpack.c.bf16 %v1840, %v1837
        %v1999 = vpack.c.bf16 %v1841, %v1838
        %v2000 = vpack.c.bf16 %v1842, %v1839
        %v2001 = vpack.c.bf16 %v1846, %v1843
        %v2002 = vpack.c.bf16 %v1847, %v1844
        %v2003 = vpack.c.bf16 %v1848, %v1845
        %v2004 = vpack.c.bf16 %v1852, %v1849
        %v2005 = vpack.c.bf16 %v1853, %v1850
        %v2006 = vpack.c.bf16 %v1854, %v1851
        %v2007 = vpack.c.bf16 %v1858, %v1855
        %v2008 = vpack.c.bf16 %v1859, %v1856
        %v2009 = vpack.c.bf16 %v1860, %v1857
        %v2010 = vpack.c.bf16 %v1864, %v1861
        %v2011 = vpack.c.bf16 %v1865, %v1862
        %v2012 = vpack.c.bf16 %v1866, %v1863
        %v2013 = vpack.c.bf16 %v1870, %v1867
        %v2014 = vpack.c.bf16 %v1871, %v1868
        %v2015 = vpack.c.bf16 %v1872, %v1869
        %v2016 = vpack.c.bf16 %v1876, %v1873
        %v2017 = vpack.c.bf16 %v1877, %v1874
        %v2018 = vpack.c.bf16 %v1878, %v1875
        %2019 = vset.pattern.permute.xlu0 2
        %2020 = vperm.xlu0 %2019, %v1112
        %v2021 = vpop.permute.xlu0 %2020
        %2023 = vset.pattern.permute.xlu0 2
        %2024 = vperm.xlu0 %2023, %v1113
        %v2025 = vpop.permute.xlu0 %2024
        %2027 = vset.pattern.permute.xlu0 2
        %2028 = vperm.xlu0 %2027, %v1114
        %v2029 = vpop.permute.xlu0 %2028
        %2031 = vset.pattern.permute.xlu0 2
        %2032 = vperm.xlu0 %2031, %v1115
        %v2033 = vpop.permute.xlu0 %2032
        %2035 = vset.pattern.permute.xlu0 2
        %2036 = vperm.xlu0 %2035, %v1116
        %v2037 = vpop.permute.xlu0 %2036
        %2039 = vset.pattern.permute.xlu0 2
        %2040 = vperm.xlu0 %2039, %v1117
        %v2041 = vpop.permute.xlu0 %2040
        %2043 = vset.pattern.permute.xlu0 2
        %2044 = vperm.xlu0 %2043, %v1118
        %v2045 = vpop.permute.xlu0 %2044
        %2047 = vset.pattern.permute.xlu0 2
        %2048 = vperm.xlu0 %2047, %v1119
        %v2049 = vpop.permute.xlu0 %2048
        %2051 = vset.pattern.permute.xlu0 2
        %2052 = vperm.xlu0 %2051, %v1120
        %v2053 = vpop.permute.xlu0 %2052
        %2055 = vset.pattern.permute.xlu0 2
        %2056 = vperm.xlu0 %2055, %v1121
        %v2057 = vpop.permute.xlu0 %2056
        %2059 = vset.pattern.permute.xlu0 2
        %2060 = vperm.xlu0 %2059, %v1122
        %v2061 = vpop.permute.xlu0 %2060
        %2063 = vset.pattern.permute.xlu0 2
        %2064 = vperm.xlu0 %2063, %v1123
        %v2065 = vpop.permute.xlu0 %2064
        %2067 = vset.pattern.permute.xlu0 2
        %2068 = vperm.xlu0 %2067, %v1124
        %v2069 = vpop.permute.xlu0 %2068
        %2071 = vset.pattern.permute.xlu0 2
        %2072 = vperm.xlu0 %2071, %v1125
        %v2073 = vpop.permute.xlu0 %2072
        %2075 = vset.pattern.permute.xlu0 2
        %2076 = vperm.xlu0 %2075, %v1126
        %v2077 = vpop.permute.xlu0 %2076
        %2079 = vset.pattern.permute.xlu0 2
        %2080 = vperm.xlu0 %2079, %v1127
        %v2081 = vpop.permute.xlu0 %2080
        %2083 = vset.pattern.permute.xlu0 2
        %2084 = vperm.xlu0 %2083, %v1128
        %v2085 = vpop.permute.xlu0 %2084
        %2087 = vset.pattern.permute.xlu0 2
        %2088 = vperm.xlu0 %2087, %v1129
        %v2089 = vpop.permute.xlu0 %2088
        %2091 = vset.pattern.permute.xlu0 2
        %2092 = vperm.xlu0 %2091, %v1130
        %v2093 = vpop.permute.xlu0 %2092
        %2095 = vset.pattern.permute.xlu0 2
        %2096 = vperm.xlu0 %2095, %v1131
        %v2097 = vpop.permute.xlu0 %2096
        %2099 = vset.pattern.permute.xlu0 2
        %2100 = vperm.xlu0 %2099, %v1132
        %v2101 = vpop.permute.xlu0 %2100
        %2103 = vset.pattern.permute.xlu0 2
        %2104 = vperm.xlu0 %2103, %v1133
        %v2105 = vpop.permute.xlu0 %2104
        %2107 = vset.pattern.permute.xlu0 2
        %2108 = vperm.xlu0 %2107, %v1134
        %v2109 = vpop.permute.xlu0 %2108
        %2111 = vset.pattern.permute.xlu0 2
        %2112 = vperm.xlu0 %2111, %v1135
        %v2113 = vpop.permute.xlu0 %2112
        %2115 = vset.pattern.permute.xlu0 2
        %2116 = vperm.xlu0 %2115, %v1136
        %v2117 = vpop.permute.xlu0 %2116
        %2119 = vset.pattern.permute.xlu0 2
        %2120 = vperm.xlu0 %2119, %v1137
        %v2121 = vpop.permute.xlu0 %2120
        %2123 = vset.pattern.permute.xlu0 2
        %2124 = vperm.xlu0 %2123, %v1138
        %v2125 = vpop.permute.xlu0 %2124
        %2127 = vset.pattern.permute.xlu0 2
        %2128 = vperm.xlu0 %2127, %v1139
        %v2129 = vpop.permute.xlu0 %2128
        %2131 = vset.pattern.permute.xlu0 2
        %2132 = vperm.xlu0 %2131, %v1140
        %v2133 = vpop.permute.xlu0 %2132
        %2135 = vset.pattern.permute.xlu0 2
        %2136 = vperm.xlu0 %2135, %v1141
        %v2137 = vpop.permute.xlu0 %2136
        %2139 = vset.pattern.permute.xlu0 2
        %2140 = vperm.xlu0 %2139, %v1142
        %v2141 = vpop.permute.xlu0 %2140
        %2143 = vset.pattern.permute.xlu0 2
        %2144 = vperm.xlu0 %2143, %v1143
        %v2145 = vpop.permute.xlu0 %2144
        %2147 = vset.pattern.permute.xlu0 2
        %2148 = vperm.xlu0 %2147, %v1144
        %v2149 = vpop.permute.xlu0 %2148
        %2151 = vset.pattern.permute.xlu0 2
        %2152 = vperm.xlu0 %2151, %v1145
        %v2153 = vpop.permute.xlu0 %2152
        %2155 = vset.pattern.permute.xlu0 2
        %2156 = vperm.xlu0 %2155, %v1146
        %v2157 = vpop.permute.xlu0 %2156
        %2159 = vset.pattern.permute.xlu0 2
        %2160 = vperm.xlu0 %2159, %v1147
        %v2161 = vpop.permute.xlu0 %2160
        %2163 = vset.pattern.permute.xlu0 2
        %2164 = vperm.xlu0 %2163, %v1148
        %v2165 = vpop.permute.xlu0 %2164
        %2167 = vset.pattern.permute.xlu0 2
        %2168 = vperm.xlu0 %2167, %v1149
        %v2169 = vpop.permute.xlu0 %2168
        %2171 = vset.pattern.permute.xlu0 2
        %2172 = vperm.xlu0 %2171, %v1150
        %v2173 = vpop.permute.xlu0 %2172
        %2175 = vset.pattern.permute.xlu0 2
        %2176 = vperm.xlu0 %2175, %v1151
        %v2177 = vpop.permute.xlu0 %2176
        %v2259 = vunpack.c.l.b16 %v1879
        %v2260 = vunpack.c.h.b16 %v1879
        %v2261 = vunpack.c.l.b16 %v1880
        %v2262 = vunpack.c.l.b16 %v1881
        %v2263 = vunpack.c.h.b16 %v1881
        %v2264 = vunpack.c.l.b16 %v1882
        %v2265 = vunpack.c.l.b16 %v1883
        %v2266 = vunpack.c.h.b16 %v1883
        %v2267 = vunpack.c.l.b16 %v1884
        %v2268 = vunpack.c.l.b16 %v1885
        %v2269 = vunpack.c.h.b16 %v1885
        %v2270 = vunpack.c.l.b16 %v1886
        %v2271 = vunpack.c.l.b16 %v1887
        %v2272 = vunpack.c.h.b16 %v1887
        %v2273 = vunpack.c.l.b16 %v1888
        %v2274 = vunpack.c.l.b16 %v1889
        %v2275 = vunpack.c.h.b16 %v1889
        %v2276 = vunpack.c.l.b16 %v1890
        %v2277 = vunpack.c.l.b16 %v1891
        %v2278 = vunpack.c.h.b16 %v1891
        %v2279 = vunpack.c.l.b16 %v1892
        %v2280 = vunpack.c.l.b16 %v1893
        %v2281 = vunpack.c.h.b16 %v1893
        %v2282 = vunpack.c.l.b16 %v1894
        %v2283 = vunpack.c.l.b16 %v1895
        %v2284 = vunpack.c.h.b16 %v1895
        %v2285 = vunpack.c.l.b16 %v1896
        %v2286 = vunpack.c.l.b16 %v1897
        %v2287 = vunpack.c.h.b16 %v1897
        %v2288 = vunpack.c.l.b16 %v1898
        %v2289 = vunpack.c.l.b16 %v1899
        %v2290 = vunpack.c.h.b16 %v1899
        %v2291 = vunpack.c.l.b16 %v1900
        %v2292 = vunpack.c.l.b16 %v1901
        %v2293 = vunpack.c.h.b16 %v1901
        %v2294 = vunpack.c.l.b16 %v1902
        %v2295 = vunpack.c.l.b16 %v1903
        %v2296 = vunpack.c.h.b16 %v1903
        %v2297 = vunpack.c.l.b16 %v1904
        %v2298 = vunpack.c.l.b16 %v1905
        %v2299 = vunpack.c.h.b16 %v1905
        %v2300 = vunpack.c.l.b16 %v1906
        %v2301 = vunpack.c.l.b16 %v1907
        %v2302 = vunpack.c.h.b16 %v1907
        %v2303 = vunpack.c.l.b16 %v1908
        %v2304 = vunpack.c.l.b16 %v1909
        %v2305 = vunpack.c.h.b16 %v1909
        %v2306 = vunpack.c.l.b16 %v1910
        %v2307 = vunpack.c.l.b16 %v1911
        %v2308 = vunpack.c.h.b16 %v1911
        %v2309 = vunpack.c.l.b16 %v1912
        %v2310 = vunpack.c.l.b16 %v1913
        %v2311 = vunpack.c.h.b16 %v1913
        %v2312 = vunpack.c.l.b16 %v1914
        %v2313 = vunpack.c.l.b16 %v1915
        %v2314 = vunpack.c.h.b16 %v1915
        %v2315 = vunpack.c.l.b16 %v1916
        %v2316 = vunpack.c.l.b16 %v1917
        %v2317 = vunpack.c.h.b16 %v1917
        %v2318 = vunpack.c.l.b16 %v1918
        %v2319 = vunpack.c.l.b16 %v1919
        %v2320 = vunpack.c.h.b16 %v1919
        %v2321 = vunpack.c.l.b16 %v1920
        %v2322 = vunpack.c.l.b16 %v1921
        %v2323 = vunpack.c.h.b16 %v1921
        %v2324 = vunpack.c.l.b16 %v1922
        %v2325 = vunpack.c.l.b16 %v1923
        %v2326 = vunpack.c.h.b16 %v1923
        %v2327 = vunpack.c.l.b16 %v1924
        %v2328 = vunpack.c.l.b16 %v1925
        %v2329 = vunpack.c.h.b16 %v1925
        %v2330 = vunpack.c.l.b16 %v1926
        %v2331 = vunpack.c.l.b16 %v1927
        %v2332 = vunpack.c.h.b16 %v1927
        %v2333 = vunpack.c.l.b16 %v1928
        %v2334 = vunpack.c.l.b16 %v1929
        %v2335 = vunpack.c.h.b16 %v1929
        %v2336 = vunpack.c.l.b16 %v1930
        %v2337 = vunpack.c.l.b16 %v1931
        %v2338 = vunpack.c.h.b16 %v1931
        %v2339 = vunpack.c.l.b16 %v1932
        %v2340 = vunpack.c.l.b16 %v1933
        %v2341 = vunpack.c.h.b16 %v1933
        %v2342 = vunpack.c.l.b16 %v1934
        %v2343 = vunpack.c.l.b16 %v1935
        %v2344 = vunpack.c.h.b16 %v1935
        %v2345 = vunpack.c.l.b16 %v1936
        %v2346 = vunpack.c.l.b16 %v1937
        %v2347 = vunpack.c.h.b16 %v1937
        %v2348 = vunpack.c.l.b16 %v1938
        %v2349 = vunpack.c.l.b16 %v1939
        %v2350 = vunpack.c.h.b16 %v1939
        %v2351 = vunpack.c.l.b16 %v1940
        %v2352 = vunpack.c.l.b16 %v1941
        %v2353 = vunpack.c.h.b16 %v1941
        %v2354 = vunpack.c.l.b16 %v1942
        %v2355 = vunpack.c.l.b16 %v1943
        %v2356 = vunpack.c.h.b16 %v1943
        %v2357 = vunpack.c.l.b16 %v1944
        %v2358 = vunpack.c.l.b16 %v1945
        %v2359 = vunpack.c.h.b16 %v1945
        %v2360 = vunpack.c.l.b16 %v1946
        %v2361 = vunpack.c.l.b16 %v1947
        %v2362 = vunpack.c.h.b16 %v1947
        %v2363 = vunpack.c.l.b16 %v1948
        %v2364 = vunpack.c.l.b16 %v1949
        %v2365 = vunpack.c.h.b16 %v1949
        %v2366 = vunpack.c.l.b16 %v1950
        %v2367 = vunpack.c.l.b16 %v1951
        %v2368 = vunpack.c.h.b16 %v1951
        %v2369 = vunpack.c.l.b16 %v1952
        %v2370 = vunpack.c.l.b16 %v1953
        %v2371 = vunpack.c.h.b16 %v1953
        %v2372 = vunpack.c.l.b16 %v1954
        %v2373 = vunpack.c.l.b16 %v1955
        %v2374 = vunpack.c.h.b16 %v1955
        %v2375 = vunpack.c.l.b16 %v1956
        %v2376 = vunpack.c.l.b16 %v1957
        %v2377 = vunpack.c.h.b16 %v1957
        %v2378 = vunpack.c.l.b16 %v1958
        %v2379 = vpack.c.b16 %v2262, %v2259
        %v2380 = vpack.c.b16 %v2263, %v2260
        %v2381 = vpack.c.b16 %v2264, %v2261
        %v2382 = vpack.c.b16 %v2268, %v2265
        %v2383 = vpack.c.b16 %v2269, %v2266
        %v2384 = vpack.c.b16 %v2270, %v2267
        %v2385 = vpack.c.b16 %v2274, %v2271
        %v2386 = vpack.c.b16 %v2275, %v2272
        %v2387 = vpack.c.b16 %v2276, %v2273
        %v2388 = vpack.c.b16 %v2280, %v2277
        %v2389 = vpack.c.b16 %v2281, %v2278
        %v2390 = vpack.c.b16 %v2282, %v2279
        %v2391 = vpack.c.b16 %v2286, %v2283
        %v2392 = vpack.c.b16 %v2287, %v2284
        %v2393 = vpack.c.b16 %v2288, %v2285
        %v2394 = vpack.c.b16 %v2292, %v2289
        %v2395 = vpack.c.b16 %v2293, %v2290
        %v2396 = vpack.c.b16 %v2294, %v2291
        %v2397 = vpack.c.b16 %v2298, %v2295
        %v2398 = vpack.c.b16 %v2299, %v2296
        %v2399 = vpack.c.b16 %v2300, %v2297
        %v2400 = vpack.c.b16 %v2304, %v2301
        %v2401 = vpack.c.b16 %v2305, %v2302
        %v2402 = vpack.c.b16 %v2306, %v2303
        %v2403 = vpack.c.b16 %v2310, %v2307
        %v2404 = vpack.c.b16 %v2311, %v2308
        %v2405 = vpack.c.b16 %v2312, %v2309
        %v2406 = vpack.c.b16 %v2316, %v2313
        %v2407 = vpack.c.b16 %v2317, %v2314
        %v2408 = vpack.c.b16 %v2318, %v2315
        %v2409 = vpack.c.b16 %v2322, %v2319
        %v2410 = vpack.c.b16 %v2323, %v2320
        %v2411 = vpack.c.b16 %v2324, %v2321
        %v2412 = vpack.c.b16 %v2328, %v2325
        %v2413 = vpack.c.b16 %v2329, %v2326
        %v2414 = vpack.c.b16 %v2330, %v2327
        %v2415 = vpack.c.b16 %v2334, %v2331
        %v2416 = vpack.c.b16 %v2335, %v2332
        %v2417 = vpack.c.b16 %v2336, %v2333
        %v2418 = vpack.c.b16 %v2340, %v2337
        %v2419 = vpack.c.b16 %v2341, %v2338
        %v2420 = vpack.c.b16 %v2342, %v2339
        %v2421 = vpack.c.b16 %v2346, %v2343
        %v2422 = vpack.c.b16 %v2347, %v2344
        %v2423 = vpack.c.b16 %v2348, %v2345
        %v2424 = vpack.c.b16 %v2352, %v2349
        %v2425 = vpack.c.b16 %v2353, %v2350
        %v2426 = vpack.c.b16 %v2354, %v2351
        %v2427 = vpack.c.b16 %v2358, %v2355
        %v2428 = vpack.c.b16 %v2359, %v2356
        %v2429 = vpack.c.b16 %v2360, %v2357
        %v2430 = vpack.c.b16 %v2364, %v2361
        %v2431 = vpack.c.b16 %v2365, %v2362
        %v2432 = vpack.c.b16 %v2366, %v2363
        %v2433 = vpack.c.b16 %v2370, %v2367
        %v2434 = vpack.c.b16 %v2371, %v2368
        %v2435 = vpack.c.b16 %v2372, %v2369
        %v2436 = vpack.c.b16 %v2376, %v2373
        %v2437 = vpack.c.b16 %v2377, %v2374
        %v2438 = vpack.c.b16 %v2378, %v2375
        %vm2479 = vcmask 523264
        %v2481 = vsel %vm2479, %v2381, 0
        %v2484 = vsel %vm2479, %v2384, 0
        %v2487 = vsel %vm2479, %v2387, 0
        %v2490 = vsel %vm2479, %v2390, 0
        %v2493 = vsel %vm2479, %v2393, 0
        %v2496 = vsel %vm2479, %v2396, 0
        %v2499 = vsel %vm2479, %v2399, 0
        %v2502 = vsel %vm2479, %v2402, 0
        %v2505 = vsel %vm2479, %v2405, 0
        %v2508 = vsel %vm2479, %v2408, 0
        %v2511 = vsel %vm2479, %v2411, 0
        %v2514 = vsel %vm2479, %v2414, 0
        %v2517 = vsel %vm2479, %v2417, 0
        %v2520 = vsel %vm2479, %v2420, 0
        %v2523 = vsel %vm2479, %v2423, 0
        %v2526 = vsel %vm2479, %v2426, 0
        %v2529 = vsel %vm2479, %v2429, 0
        %v2532 = vsel %vm2479, %v2432, 0
        %v2535 = vsel %vm2479, %v2435, 0
        %v2538 = vsel %vm2479, %v2438, 0
        %2540 = vmatpush.bf16.msra.mxu0 %v1980
        %2541 = vmatpush.bf16.msra.mxu0 %v1977
        %2542 = vmatpush.bf16.msra.mxu0 %v1974
        %2543 = vmatpush.bf16.msra.mxu0 %v1971
        %2544 = vmatpush.bf16.msra.mxu0 %v1968
        %2545 = vmatpush.bf16.msra.mxu0 %v1965
        %2546 = vmatpush.bf16.msra.mxu0 %v1962
        %2547 = vmatpush.bf16.msra.mxu0 %v1959
        %2548 = vmatmul.bf16.gmra.mxu0 %v2379
        %v2549 = vpop.f32.mrf.mxu0
        %v2550 = vadd.f32 %v2021, %v2549
        %v2551 = vpop.f32.mrf.mxu0
        %v2552 = vadd.f32 %v2025, %v2551
        %2553 = vmatmul.bf16.gmra.mxu0 %v2382
        %v2554 = vpop.f32.mrf.mxu0
        %v2555 = vadd.f32 %v2029, %v2554
        %v2556 = vpop.f32.mrf.mxu0
        %v2557 = vadd.f32 %v2033, %v2556
        %2558 = vmatmul.bf16.gmra.mxu0 %v2385
        %v2559 = vpop.f32.mrf.mxu0
        %v2560 = vadd.f32 %v2037, %v2559
        %v2561 = vpop.f32.mrf.mxu0
        %v2562 = vadd.f32 %v2041, %v2561
        %2563 = vmatmul.bf16.gmra.mxu0 %v2388
        %v2564 = vpop.f32.mrf.mxu0
        %v2565 = vadd.f32 %v2045, %v2564
        %v2566 = vpop.f32.mrf.mxu0
        %v2567 = vadd.f32 %v2049, %v2566
        %2568 = vmatmul.bf16.gmra.mxu0 %v2391
        %v2569 = vpop.f32.mrf.mxu0
        %v2570 = vadd.f32 %v2053, %v2569
        %v2571 = vpop.f32.mrf.mxu0
        %v2572 = vadd.f32 %v2057, %v2571
        %2573 = vmatmul.bf16.gmra.mxu0 %v2394
        %v2574 = vpop.f32.mrf.mxu0
        %v2575 = vadd.f32 %v2061, %v2574
        %v2576 = vpop.f32.mrf.mxu0
        %v2577 = vadd.f32 %v2065, %v2576
        %2578 = vmatmul.bf16.gmra.mxu0 %v2397
        %v2579 = vpop.f32.mrf.mxu0
        %v2580 = vadd.f32 %v2069, %v2579
        %v2581 = vpop.f32.mrf.mxu0
        %v2582 = vadd.f32 %v2073, %v2581
        %2583 = vmatmul.bf16.gmra.mxu0 %v2400
        %v2584 = vpop.f32.mrf.mxu0
        %v2585 = vadd.f32 %v2077, %v2584
        %v2586 = vpop.f32.mrf.mxu0
        %v2587 = vadd.f32 %v2081, %v2586
        %2588 = vmatmul.bf16.gmra.mxu0 %v2403
        %v2589 = vpop.f32.mrf.mxu0
        %v2590 = vadd.f32 %v2085, %v2589
        %v2591 = vpop.f32.mrf.mxu0
        %v2592 = vadd.f32 %v2089, %v2591
        %2593 = vmatmul.bf16.gmra.mxu0 %v2406
        %v2594 = vpop.f32.mrf.mxu0
        %v2595 = vadd.f32 %v2093, %v2594
        %v2596 = vpop.f32.mrf.mxu0
        %v2597 = vadd.f32 %v2097, %v2596
        %2598 = vmatmul.bf16.gmra.mxu0 %v2409
        %v2599 = vpop.f32.mrf.mxu0
        %v2600 = vadd.f32 %v2101, %v2599
        %v2601 = vpop.f32.mrf.mxu0
        %v2602 = vadd.f32 %v2105, %v2601
        %2603 = vmatmul.bf16.gmra.mxu0 %v2412
        %v2604 = vpop.f32.mrf.mxu0
        %v2605 = vadd.f32 %v2109, %v2604
        %v2606 = vpop.f32.mrf.mxu0
        %v2607 = vadd.f32 %v2113, %v2606
        %2608 = vmatmul.bf16.gmra.mxu0 %v2415
        %v2609 = vpop.f32.mrf.mxu0
        %v2610 = vadd.f32 %v2117, %v2609
        %v2611 = vpop.f32.mrf.mxu0
        %v2612 = vadd.f32 %v2121, %v2611
        %2613 = vmatmul.bf16.gmra.mxu0 %v2418
        %v2614 = vpop.f32.mrf.mxu0
        %v2615 = vadd.f32 %v2125, %v2614
        %v2616 = vpop.f32.mrf.mxu0
        %v2617 = vadd.f32 %v2129, %v2616
        %2618 = vmatmul.bf16.gmra.mxu0 %v2421
        %v2619 = vpop.f32.mrf.mxu0
        %v2620 = vadd.f32 %v2133, %v2619
        %v2621 = vpop.f32.mrf.mxu0
        %v2622 = vadd.f32 %v2137, %v2621
        %2623 = vmatmul.bf16.gmra.mxu0 %v2424
        %v2624 = vpop.f32.mrf.mxu0
        %v2625 = vadd.f32 %v2141, %v2624
        %v2626 = vpop.f32.mrf.mxu0
        %v2627 = vadd.f32 %v2145, %v2626
        %2628 = vmatmul.bf16.gmra.mxu0 %v2427
        %v2629 = vpop.f32.mrf.mxu0
        %v2630 = vadd.f32 %v2149, %v2629
        %v2631 = vpop.f32.mrf.mxu0
        %v2632 = vadd.f32 %v2153, %v2631
        %2633 = vmatmul.bf16.gmra.mxu0 %v2430
        %v2634 = vpop.f32.mrf.mxu0
        %v2635 = vadd.f32 %v2157, %v2634
        %v2636 = vpop.f32.mrf.mxu0
        %v2637 = vadd.f32 %v2161, %v2636
        %2638 = vmatmul.bf16.gmra.mxu0 %v2433
        %v2639 = vpop.f32.mrf.mxu0
        %v2640 = vadd.f32 %v2165, %v2639
        %v2641 = vpop.f32.mrf.mxu0
        %v2642 = vadd.f32 %v2169, %v2641
        %2643 = vmatmul.bf16.gmra.mxu0 %v2436
        %v2644 = vpop.f32.mrf.mxu0
        %v2645 = vadd.f32 %v2173, %v2644
        %v2646 = vpop.f32.mrf.mxu0
        %v2647 = vadd.f32 %v2177, %v2646
        %2648 = vdwg.mxu0
        %2649 = vmatpush.bf16.msra.mxu0 %v2004
        %2650 = vmatpush.bf16.msra.mxu0 %v2001
        %2651 = vmatpush.bf16.msra.mxu0 %v1998
        %2652 = vmatpush.bf16.msra.mxu0 %v1995
        %2653 = vmatpush.bf16.msra.mxu0 %v1992
        %2654 = vmatpush.bf16.msra.mxu0 %v1989
        %2655 = vmatpush.bf16.msra.mxu0 %v1986
        %2656 = vmatpush.bf16.msra.mxu0 %v1983
        %2657 = vmatmul.bf16.gmra.mxu0 %v2380
        %v2658 = vpop.f32.mrf.mxu0
        %v2659 = vadd.f32 %v2550, %v2658
        %v2660 = vpop.f32.mrf.mxu0
        %v2661 = vadd.f32 %v2552, %v2660
        %2662 = vmatmul.bf16.gmra.mxu0 %v2383
        %v2663 = vpop.f32.mrf.mxu0
        %v2664 = vadd.f32 %v2555, %v2663
        %v2665 = vpop.f32.mrf.mxu0
        %v2666 = vadd.f32 %v2557, %v2665
        %2667 = vmatmul.bf16.gmra.mxu0 %v2386
        %v2668 = vpop.f32.mrf.mxu0
        %v2669 = vadd.f32 %v2560, %v2668
        %v2670 = vpop.f32.mrf.mxu0
        %v2671 = vadd.f32 %v2562, %v2670
        %2672 = vmatmul.bf16.gmra.mxu0 %v2389
        %v2673 = vpop.f32.mrf.mxu0
        %v2674 = vadd.f32 %v2565, %v2673
        %v2675 = vpop.f32.mrf.mxu0
        %v2676 = vadd.f32 %v2567, %v2675
        %2677 = vmatmul.bf16.gmra.mxu0 %v2392
        %v2678 = vpop.f32.mrf.mxu0
        %v2679 = vadd.f32 %v2570, %v2678
        %v2680 = vpop.f32.mrf.mxu0
        %v2681 = vadd.f32 %v2572, %v2680
        %2682 = vmatmul.bf16.gmra.mxu0 %v2395
        %v2683 = vpop.f32.mrf.mxu0
        %v2684 = vadd.f32 %v2575, %v2683
        %v2685 = vpop.f32.mrf.mxu0
        %v2686 = vadd.f32 %v2577, %v2685
        %2687 = vmatmul.bf16.gmra.mxu0 %v2398
        %v2688 = vpop.f32.mrf.mxu0
        %v2689 = vadd.f32 %v2580, %v2688
        %v2690 = vpop.f32.mrf.mxu0
        %v2691 = vadd.f32 %v2582, %v2690
        %2692 = vmatmul.bf16.gmra.mxu0 %v2401
        %v2693 = vpop.f32.mrf.mxu0
        %v2694 = vadd.f32 %v2585, %v2693
        %v2695 = vpop.f32.mrf.mxu0
        %v2696 = vadd.f32 %v2587, %v2695
        %2697 = vmatmul.bf16.gmra.mxu0 %v2404
        %v2698 = vpop.f32.mrf.mxu0
        %v2699 = vadd.f32 %v2590, %v2698
        %v2700 = vpop.f32.mrf.mxu0
        %v2701 = vadd.f32 %v2592, %v2700
        %2702 = vmatmul.bf16.gmra.mxu0 %v2407
        %v2703 = vpop.f32.mrf.mxu0
        %v2704 = vadd.f32 %v2595, %v2703
        %v2705 = vpop.f32.mrf.mxu0
        %v2706 = vadd.f32 %v2597, %v2705
        %2707 = vmatmul.bf16.gmra.mxu0 %v2410
        %v2708 = vpop.f32.mrf.mxu0
        %v2709 = vadd.f32 %v2600, %v2708
        %v2710 = vpop.f32.mrf.mxu0
        %v2711 = vadd.f32 %v2602, %v2710
        %2712 = vmatmul.bf16.gmra.mxu0 %v2413
        %v2713 = vpop.f32.mrf.mxu0
        %v2714 = vadd.f32 %v2605, %v2713
        %v2715 = vpop.f32.mrf.mxu0
        %v2716 = vadd.f32 %v2607, %v2715
        %2717 = vmatmul.bf16.gmra.mxu0 %v2416
        %v2718 = vpop.f32.mrf.mxu0
        %v2719 = vadd.f32 %v2610, %v2718
        %v2720 = vpop.f32.mrf.mxu0
        %v2721 = vadd.f32 %v2612, %v2720
        %2722 = vmatmul.bf16.gmra.mxu0 %v2419
        %v2723 = vpop.f32.mrf.mxu0
        %v2724 = vadd.f32 %v2615, %v2723
        %v2725 = vpop.f32.mrf.mxu0
        %v2726 = vadd.f32 %v2617, %v2725
        %2727 = vmatmul.bf16.gmra.mxu0 %v2422
        %v2728 = vpop.f32.mrf.mxu0
        %v2729 = vadd.f32 %v2620, %v2728
        %v2730 = vpop.f32.mrf.mxu0
        %v2731 = vadd.f32 %v2622, %v2730
        %2732 = vmatmul.bf16.gmra.mxu0 %v2425
        %v2733 = vpop.f32.mrf.mxu0
        %v2734 = vadd.f32 %v2625, %v2733
        %v2735 = vpop.f32.mrf.mxu0
        %v2736 = vadd.f32 %v2627, %v2735
        %2737 = vmatmul.bf16.gmra.mxu0 %v2428
        %v2738 = vpop.f32.mrf.mxu0
        %v2739 = vadd.f32 %v2630, %v2738
        %v2740 = vpop.f32.mrf.mxu0
        %v2741 = vadd.f32 %v2632, %v2740
        %2742 = vmatmul.bf16.gmra.mxu0 %v2431
        %v2743 = vpop.f32.mrf.mxu0
        %v2744 = vadd.f32 %v2635, %v2743
        %v2745 = vpop.f32.mrf.mxu0
        %v2746 = vadd.f32 %v2637, %v2745
        %2747 = vmatmul.bf16.gmra.mxu0 %v2434
        %v2748 = vpop.f32.mrf.mxu0
        %v2749 = vadd.f32 %v2640, %v2748
        %v2750 = vpop.f32.mrf.mxu0
        %v2751 = vadd.f32 %v2642, %v2750
        %2752 = vmatmul.bf16.gmra.mxu0 %v2437
        %v2753 = vpop.f32.mrf.mxu0
        %v2754 = vadd.f32 %v2645, %v2753
        %v2755 = vpop.f32.mrf.mxu0
        %v2756 = vadd.f32 %v2647, %v2755
        %2757 = vdwg.mxu0
        %2758 = vmatpush.bf16.msra.mxu0 0
        %2759 = vmatpush.bf16.msra.mxu0 0
        %2760 = vmatpush.bf16.msra.mxu0 0
        %2761 = vmatpush.bf16.msra.mxu0 0
        %2762 = vmatpush.bf16.msra.mxu0 %v2016
        %2763 = vmatpush.bf16.msra.mxu0 %v2013
        %2764 = vmatpush.bf16.msra.mxu0 %v2010
        %2765 = vmatpush.bf16.msra.mxu0 %v2007
        %2766 = vmatmul.bf16.gmra.mxu0 %v2481
        %v2767 = vpop.f32.mrf.mxu0
        %v2768 = vadd.f32 %v2659, %v2767
        %v2769 = vpop.f32.mrf.mxu0
        %v2770 = vadd.f32 %v2661, %v2769
        %2771 = vmatmul.bf16.gmra.mxu0 %v2484
        %v2772 = vpop.f32.mrf.mxu0
        %v2773 = vadd.f32 %v2664, %v2772
        %v2774 = vpop.f32.mrf.mxu0
        %v2775 = vadd.f32 %v2666, %v2774
        %2776 = vmatmul.bf16.gmra.mxu0 %v2487
        %v2777 = vpop.f32.mrf.mxu0
        %v2778 = vadd.f32 %v2669, %v2777
        %v2779 = vpop.f32.mrf.mxu0
        %v2780 = vadd.f32 %v2671, %v2779
        %2781 = vmatmul.bf16.gmra.mxu0 %v2490
        %v2782 = vpop.f32.mrf.mxu0
        %v2783 = vadd.f32 %v2674, %v2782
        %v2784 = vpop.f32.mrf.mxu0
        %v2785 = vadd.f32 %v2676, %v2784
        %2786 = vmatmul.bf16.gmra.mxu0 %v2493
        %v2787 = vpop.f32.mrf.mxu0
        %v2788 = vadd.f32 %v2679, %v2787
        %v2789 = vpop.f32.mrf.mxu0
        %v2790 = vadd.f32 %v2681, %v2789
        %2791 = vmatmul.bf16.gmra.mxu0 %v2496
        %v2792 = vpop.f32.mrf.mxu0
        %v2793 = vadd.f32 %v2684, %v2792
        %v2794 = vpop.f32.mrf.mxu0
        %v2795 = vadd.f32 %v2686, %v2794
        %2796 = vmatmul.bf16.gmra.mxu0 %v2499
        %v2797 = vpop.f32.mrf.mxu0
        %v2798 = vadd.f32 %v2689, %v2797
        %v2799 = vpop.f32.mrf.mxu0
        %v2800 = vadd.f32 %v2691, %v2799
        %2801 = vmatmul.bf16.gmra.mxu0 %v2502
        %v2802 = vpop.f32.mrf.mxu0
        %v2803 = vadd.f32 %v2694, %v2802
        %v2804 = vpop.f32.mrf.mxu0
        %v2805 = vadd.f32 %v2696, %v2804
        %2806 = vmatmul.bf16.gmra.mxu0 %v2505
        %v2807 = vpop.f32.mrf.mxu0
        %v2808 = vadd.f32 %v2699, %v2807
        %v2809 = vpop.f32.mrf.mxu0
        %v2810 = vadd.f32 %v2701, %v2809
        %2811 = vmatmul.bf16.gmra.mxu0 %v2508
        %v2812 = vpop.f32.mrf.mxu0
        %v2813 = vadd.f32 %v2704, %v2812
        %v2814 = vpop.f32.mrf.mxu0
        %v2815 = vadd.f32 %v2706, %v2814
        %2816 = vmatmul.bf16.gmra.mxu0 %v2511
        %v2817 = vpop.f32.mrf.mxu0
        %v2818 = vadd.f32 %v2709, %v2817
        %v2819 = vpop.f32.mrf.mxu0
        %v2820 = vadd.f32 %v2711, %v2819
        %2821 = vmatmul.bf16.gmra.mxu0 %v2514
        %v2822 = vpop.f32.mrf.mxu0
        %v2823 = vadd.f32 %v2714, %v2822
        %v2824 = vpop.f32.mrf.mxu0
        %v2825 = vadd.f32 %v2716, %v2824
        %2826 = vmatmul.bf16.gmra.mxu0 %v2517
        %v2827 = vpop.f32.mrf.mxu0
        %v2828 = vadd.f32 %v2719, %v2827
        %v2829 = vpop.f32.mrf.mxu0
        %v2830 = vadd.f32 %v2721, %v2829
        %2831 = vmatmul.bf16.gmra.mxu0 %v2520
        %v2832 = vpop.f32.mrf.mxu0
        %v2833 = vadd.f32 %v2724, %v2832
        %v2834 = vpop.f32.mrf.mxu0
        %v2835 = vadd.f32 %v2726, %v2834
        %2836 = vmatmul.bf16.gmra.mxu0 %v2523
        %v2837 = vpop.f32.mrf.mxu0
        %v2838 = vadd.f32 %v2729, %v2837
        %v2839 = vpop.f32.mrf.mxu0
        %v2840 = vadd.f32 %v2731, %v2839
        %2841 = vmatmul.bf16.gmra.mxu0 %v2526
        %v2842 = vpop.f32.mrf.mxu0
        %v2843 = vadd.f32 %v2734, %v2842
        %v2844 = vpop.f32.mrf.mxu0
        %v2845 = vadd.f32 %v2736, %v2844
        %2846 = vmatmul.bf16.gmra.mxu0 %v2529
        %v2847 = vpop.f32.mrf.mxu0
        %v2848 = vadd.f32 %v2739, %v2847
        %v2849 = vpop.f32.mrf.mxu0
        %v2850 = vadd.f32 %v2741, %v2849
        %2851 = vmatmul.bf16.gmra.mxu0 %v2532
        %v2852 = vpop.f32.mrf.mxu0
        %v2853 = vadd.f32 %v2744, %v2852
        %v2854 = vpop.f32.mrf.mxu0
        %v2855 = vadd.f32 %v2746, %v2854
        %2856 = vmatmul.bf16.gmra.mxu0 %v2535
        %v2857 = vpop.f32.mrf.mxu0
        %v2858 = vadd.f32 %v2749, %v2857
        %v2859 = vpop.f32.mrf.mxu0
        %v2860 = vadd.f32 %v2751, %v2859
        %2861 = vmatmul.bf16.gmra.mxu0 %v2538
        %v2862 = vpop.f32.mrf.mxu0
        %v2863 = vadd.f32 %v2754, %v2862
        %v2864 = vpop.f32.mrf.mxu0
        %v2865 = vadd.f32 %v2756, %v2864
        %2866 = vdwg.mxu0
        %2867 = vmatpush.bf16.msra.mxu0 %v1981
        %2868 = vmatpush.bf16.msra.mxu0 %v1978
        %2869 = vmatpush.bf16.msra.mxu0 %v1975
        %2870 = vmatpush.bf16.msra.mxu0 %v1972
        %2871 = vmatpush.bf16.msra.mxu0 %v1969
        %2872 = vmatpush.bf16.msra.mxu0 %v1966
        %2873 = vmatpush.bf16.msra.mxu0 %v1963
        %2874 = vmatpush.bf16.msra.mxu0 %v1960
        %2875 = vmatmul.bf16.gmra.mxu0 %v2379
        %v2876 = vpop.f32.mrf.mxu0
        %v2877 = vadd.f32 %v2021, %v2876
        %v2878 = vpop.f32.mrf.mxu0
        %v2879 = vadd.f32 %v2025, %v2878
        %2880 = vmatmul.bf16.gmra.mxu0 %v2382
        %v2881 = vpop.f32.mrf.mxu0
        %v2882 = vadd.f32 %v2029, %v2881
        %v2883 = vpop.f32.mrf.mxu0
        %v2884 = vadd.f32 %v2033, %v2883
        %2885 = vmatmul.bf16.gmra.mxu0 %v2385
        %v2886 = vpop.f32.mrf.mxu0
        %v2887 = vadd.f32 %v2037, %v2886
        %v2888 = vpop.f32.mrf.mxu0
        %v2889 = vadd.f32 %v2041, %v2888
        %2890 = vmatmul.bf16.gmra.mxu0 %v2388
        %v2891 = vpop.f32.mrf.mxu0
        %v2892 = vadd.f32 %v2045, %v2891
        %v2893 = vpop.f32.mrf.mxu0
        %v2894 = vadd.f32 %v2049, %v2893
        %2895 = vmatmul.bf16.gmra.mxu0 %v2391
        %v2896 = vpop.f32.mrf.mxu0
        %v2897 = vadd.f32 %v2053, %v2896
        %v2898 = vpop.f32.mrf.mxu0
        %v2899 = vadd.f32 %v2057, %v2898
        %2900 = vmatmul.bf16.gmra.mxu0 %v2394
        %v2901 = vpop.f32.mrf.mxu0
        %v2902 = vadd.f32 %v2061, %v2901
        %v2903 = vpop.f32.mrf.mxu0
        %v2904 = vadd.f32 %v2065, %v2903
        %2905 = vmatmul.bf16.gmra.mxu0 %v2397
        %v2906 = vpop.f32.mrf.mxu0
        %v2907 = vadd.f32 %v2069, %v2906
        %v2908 = vpop.f32.mrf.mxu0
        %v2909 = vadd.f32 %v2073, %v2908
        %2910 = vmatmul.bf16.gmra.mxu0 %v2400
        %v2911 = vpop.f32.mrf.mxu0
        %v2912 = vadd.f32 %v2077, %v2911
        %v2913 = vpop.f32.mrf.mxu0
        %v2914 = vadd.f32 %v2081, %v2913
        %2915 = vmatmul.bf16.gmra.mxu0 %v2403
        %v2916 = vpop.f32.mrf.mxu0
        %v2917 = vadd.f32 %v2085, %v2916
        %v2918 = vpop.f32.mrf.mxu0
        %v2919 = vadd.f32 %v2089, %v2918
        %2920 = vmatmul.bf16.gmra.mxu0 %v2406
        %v2921 = vpop.f32.mrf.mxu0
        %v2922 = vadd.f32 %v2093, %v2921
        %v2923 = vpop.f32.mrf.mxu0
        %v2924 = vadd.f32 %v2097, %v2923
        %2925 = vmatmul.bf16.gmra.mxu0 %v2409
        %v2926 = vpop.f32.mrf.mxu0
        %v2927 = vadd.f32 %v2101, %v2926
        %v2928 = vpop.f32.mrf.mxu0
        %v2929 = vadd.f32 %v2105, %v2928
        %2930 = vmatmul.bf16.gmra.mxu0 %v2412
        %v2931 = vpop.f32.mrf.mxu0
        %v2932 = vadd.f32 %v2109, %v2931
        %v2933 = vpop.f32.mrf.mxu0
        %v2934 = vadd.f32 %v2113, %v2933
        %2935 = vmatmul.bf16.gmra.mxu0 %v2415
        %v2936 = vpop.f32.mrf.mxu0
        %v2937 = vadd.f32 %v2117, %v2936
        %v2938 = vpop.f32.mrf.mxu0
        %v2939 = vadd.f32 %v2121, %v2938
        %2940 = vmatmul.bf16.gmra.mxu0 %v2418
        %v2941 = vpop.f32.mrf.mxu0
        %v2942 = vadd.f32 %v2125, %v2941
        %v2943 = vpop.f32.mrf.mxu0
        %v2944 = vadd.f32 %v2129, %v2943
        %2945 = vmatmul.bf16.gmra.mxu0 %v2421
        %v2946 = vpop.f32.mrf.mxu0
        %v2947 = vadd.f32 %v2133, %v2946
        %v2948 = vpop.f32.mrf.mxu0
        %v2949 = vadd.f32 %v2137, %v2948
        %2950 = vmatmul.bf16.gmra.mxu0 %v2424
        %v2951 = vpop.f32.mrf.mxu0
        %v2952 = vadd.f32 %v2141, %v2951
        %v2953 = vpop.f32.mrf.mxu0
        %v2954 = vadd.f32 %v2145, %v2953
        %2955 = vmatmul.bf16.gmra.mxu0 %v2427
        %v2956 = vpop.f32.mrf.mxu0
        %v2957 = vadd.f32 %v2149, %v2956
        %v2958 = vpop.f32.mrf.mxu0
        %v2959 = vadd.f32 %v2153, %v2958
        %2960 = vmatmul.bf16.gmra.mxu0 %v2430
        %v2961 = vpop.f32.mrf.mxu0
        %v2962 = vadd.f32 %v2157, %v2961
        %v2963 = vpop.f32.mrf.mxu0
        %v2964 = vadd.f32 %v2161, %v2963
        %2965 = vmatmul.bf16.gmra.mxu0 %v2433
        %v2966 = vpop.f32.mrf.mxu0
        %v2967 = vadd.f32 %v2165, %v2966
        %v2968 = vpop.f32.mrf.mxu0
        %v2969 = vadd.f32 %v2169, %v2968
        %2970 = vmatmul.bf16.gmra.mxu0 %v2436
        %v2971 = vpop.f32.mrf.mxu0
        %v2972 = vadd.f32 %v2173, %v2971
        %v2973 = vpop.f32.mrf.mxu0
        %v2974 = vadd.f32 %v2177, %v2973
        %2975 = vdwg.mxu0
        %2976 = vmatpush.bf16.msra.mxu0 %v2005
        %2977 = vmatpush.bf16.msra.mxu0 %v2002
        %2978 = vmatpush.bf16.msra.mxu0 %v1999
        %2979 = vmatpush.bf16.msra.mxu0 %v1996
        %2980 = vmatpush.bf16.msra.mxu0 %v1993
        %2981 = vmatpush.bf16.msra.mxu0 %v1990
        %2982 = vmatpush.bf16.msra.mxu0 %v1987
        %2983 = vmatpush.bf16.msra.mxu0 %v1984
        %2984 = vmatmul.bf16.gmra.mxu0 %v2380
        %v2985 = vpop.f32.mrf.mxu0
        %v2986 = vadd.f32 %v2877, %v2985
        %v2987 = vpop.f32.mrf.mxu0
        %v2988 = vadd.f32 %v2879, %v2987
        %2989 = vmatmul.bf16.gmra.mxu0 %v2383
        %v2990 = vpop.f32.mrf.mxu0
        %v2991 = vadd.f32 %v2882, %v2990
        %v2992 = vpop.f32.mrf.mxu0
        %v2993 = vadd.f32 %v2884, %v2992
        %2994 = vmatmul.bf16.gmra.mxu0 %v2386
        %v2995 = vpop.f32.mrf.mxu0
        %v2996 = vadd.f32 %v2887, %v2995
        %v2997 = vpop.f32.mrf.mxu0
        %v2998 = vadd.f32 %v2889, %v2997
        %2999 = vmatmul.bf16.gmra.mxu0 %v2389
        %v3000 = vpop.f32.mrf.mxu0
        %v3001 = vadd.f32 %v2892, %v3000
        %v3002 = vpop.f32.mrf.mxu0
        %v3003 = vadd.f32 %v2894, %v3002
        %3004 = vmatmul.bf16.gmra.mxu0 %v2392
        %v3005 = vpop.f32.mrf.mxu0
        %v3006 = vadd.f32 %v2897, %v3005
        %v3007 = vpop.f32.mrf.mxu0
        %v3008 = vadd.f32 %v2899, %v3007
        %3009 = vmatmul.bf16.gmra.mxu0 %v2395
        %v3010 = vpop.f32.mrf.mxu0
        %v3011 = vadd.f32 %v2902, %v3010
        %v3012 = vpop.f32.mrf.mxu0
        %v3013 = vadd.f32 %v2904, %v3012
        %3014 = vmatmul.bf16.gmra.mxu0 %v2398
        %v3015 = vpop.f32.mrf.mxu0
        %v3016 = vadd.f32 %v2907, %v3015
        %v3017 = vpop.f32.mrf.mxu0
        %v3018 = vadd.f32 %v2909, %v3017
        %3019 = vmatmul.bf16.gmra.mxu0 %v2401
        %v3020 = vpop.f32.mrf.mxu0
        %v3021 = vadd.f32 %v2912, %v3020
        %v3022 = vpop.f32.mrf.mxu0
        %v3023 = vadd.f32 %v2914, %v3022
        %3024 = vmatmul.bf16.gmra.mxu0 %v2404
        %v3025 = vpop.f32.mrf.mxu0
        %v3026 = vadd.f32 %v2917, %v3025
        %v3027 = vpop.f32.mrf.mxu0
        %v3028 = vadd.f32 %v2919, %v3027
        %3029 = vmatmul.bf16.gmra.mxu0 %v2407
        %v3030 = vpop.f32.mrf.mxu0
        %v3031 = vadd.f32 %v2922, %v3030
        %v3032 = vpop.f32.mrf.mxu0
        %v3033 = vadd.f32 %v2924, %v3032
        %3034 = vmatmul.bf16.gmra.mxu0 %v2410
        %v3035 = vpop.f32.mrf.mxu0
        %v3036 = vadd.f32 %v2927, %v3035
        %v3037 = vpop.f32.mrf.mxu0
        %v3038 = vadd.f32 %v2929, %v3037
        %3039 = vmatmul.bf16.gmra.mxu0 %v2413
        %v3040 = vpop.f32.mrf.mxu0
        %v3041 = vadd.f32 %v2932, %v3040
        %v3042 = vpop.f32.mrf.mxu0
        %v3043 = vadd.f32 %v2934, %v3042
        %3044 = vmatmul.bf16.gmra.mxu0 %v2416
        %v3045 = vpop.f32.mrf.mxu0
        %v3046 = vadd.f32 %v2937, %v3045
        %v3047 = vpop.f32.mrf.mxu0
        %v3048 = vadd.f32 %v2939, %v3047
        %3049 = vmatmul.bf16.gmra.mxu0 %v2419
        %v3050 = vpop.f32.mrf.mxu0
        %v3051 = vadd.f32 %v2942, %v3050
        %v3052 = vpop.f32.mrf.mxu0
        %v3053 = vadd.f32 %v2944, %v3052
        %3054 = vmatmul.bf16.gmra.mxu0 %v2422
        %v3055 = vpop.f32.mrf.mxu0
        %v3056 = vadd.f32 %v2947, %v3055
        %v3057 = vpop.f32.mrf.mxu0
        %v3058 = vadd.f32 %v2949, %v3057
        %3059 = vmatmul.bf16.gmra.mxu0 %v2425
        %v3060 = vpop.f32.mrf.mxu0
        %v3061 = vadd.f32 %v2952, %v3060
        %v3062 = vpop.f32.mrf.mxu0
        %v3063 = vadd.f32 %v2954, %v3062
        %3064 = vmatmul.bf16.gmra.mxu0 %v2428
        %v3065 = vpop.f32.mrf.mxu0
        %v3066 = vadd.f32 %v2957, %v3065
        %v3067 = vpop.f32.mrf.mxu0
        %v3068 = vadd.f32 %v2959, %v3067
        %3069 = vmatmul.bf16.gmra.mxu0 %v2431
        %v3070 = vpop.f32.mrf.mxu0
        %v3071 = vadd.f32 %v2962, %v3070
        %v3072 = vpop.f32.mrf.mxu0
        %v3073 = vadd.f32 %v2964, %v3072
        %3074 = vmatmul.bf16.gmra.mxu0 %v2434
        %v3075 = vpop.f32.mrf.mxu0
        %v3076 = vadd.f32 %v2967, %v3075
        %v3077 = vpop.f32.mrf.mxu0
        %v3078 = vadd.f32 %v2969, %v3077
        %3079 = vmatmul.bf16.gmra.mxu0 %v2437
        %v3080 = vpop.f32.mrf.mxu0
        %v3081 = vadd.f32 %v2972, %v3080
        %v3082 = vpop.f32.mrf.mxu0
        %v3083 = vadd.f32 %v2974, %v3082
        %3084 = vdwg.mxu0
        %3085 = vmatpush.bf16.msra.mxu0 0
        %3086 = vmatpush.bf16.msra.mxu0 0
        %3087 = vmatpush.bf16.msra.mxu0 0
        %3088 = vmatpush.bf16.msra.mxu0 0
        %3089 = vmatpush.bf16.msra.mxu0 %v2017
        %3090 = vmatpush.bf16.msra.mxu0 %v2014
        %3091 = vmatpush.bf16.msra.mxu0 %v2011
        %3092 = vmatpush.bf16.msra.mxu0 %v2008
        %3093 = vmatmul.bf16.gmra.mxu0 %v2481
        %v3094 = vpop.f32.mrf.mxu0
        %v3095 = vadd.f32 %v2986, %v3094
        %v3096 = vpop.f32.mrf.mxu0
        %v3097 = vadd.f32 %v2988, %v3096
        %3098 = vmatmul.bf16.gmra.mxu0 %v2484
        %v3099 = vpop.f32.mrf.mxu0
        %v3100 = vadd.f32 %v2991, %v3099
        %v3101 = vpop.f32.mrf.mxu0
        %v3102 = vadd.f32 %v2993, %v3101
        %3103 = vmatmul.bf16.gmra.mxu0 %v2487
        %v3104 = vpop.f32.mrf.mxu0
        %v3105 = vadd.f32 %v2996, %v3104
        %v3106 = vpop.f32.mrf.mxu0
        %v3107 = vadd.f32 %v2998, %v3106
        %3108 = vmatmul.bf16.gmra.mxu0 %v2490
        %v3109 = vpop.f32.mrf.mxu0
        %v3110 = vadd.f32 %v3001, %v3109
        %v3111 = vpop.f32.mrf.mxu0
        %v3112 = vadd.f32 %v3003, %v3111
        %3113 = vmatmul.bf16.gmra.mxu0 %v2493
        %v3114 = vpop.f32.mrf.mxu0
        %v3115 = vadd.f32 %v3006, %v3114
        %v3116 = vpop.f32.mrf.mxu0
        %v3117 = vadd.f32 %v3008, %v3116
        %3118 = vmatmul.bf16.gmra.mxu0 %v2496
        %v3119 = vpop.f32.mrf.mxu0
        %v3120 = vadd.f32 %v3011, %v3119
        %v3121 = vpop.f32.mrf.mxu0
        %v3122 = vadd.f32 %v3013, %v3121
        %3123 = vmatmul.bf16.gmra.mxu0 %v2499
        %v3124 = vpop.f32.mrf.mxu0
        %v3125 = vadd.f32 %v3016, %v3124
        %v3126 = vpop.f32.mrf.mxu0
        %v3127 = vadd.f32 %v3018, %v3126
        %3128 = vmatmul.bf16.gmra.mxu0 %v2502
        %v3129 = vpop.f32.mrf.mxu0
        %v3130 = vadd.f32 %v3021, %v3129
        %v3131 = vpop.f32.mrf.mxu0
        %v3132 = vadd.f32 %v3023, %v3131
        %3133 = vmatmul.bf16.gmra.mxu0 %v2505
        %v3134 = vpop.f32.mrf.mxu0
        %v3135 = vadd.f32 %v3026, %v3134
        %v3136 = vpop.f32.mrf.mxu0
        %v3137 = vadd.f32 %v3028, %v3136
        %3138 = vmatmul.bf16.gmra.mxu0 %v2508
        %v3139 = vpop.f32.mrf.mxu0
        %v3140 = vadd.f32 %v3031, %v3139
        %v3141 = vpop.f32.mrf.mxu0
        %v3142 = vadd.f32 %v3033, %v3141
        %3143 = vmatmul.bf16.gmra.mxu0 %v2511
        %v3144 = vpop.f32.mrf.mxu0
        %v3145 = vadd.f32 %v3036, %v3144
        %v3146 = vpop.f32.mrf.mxu0
        %v3147 = vadd.f32 %v3038, %v3146
        %3148 = vmatmul.bf16.gmra.mxu0 %v2514
        %v3149 = vpop.f32.mrf.mxu0
        %v3150 = vadd.f32 %v3041, %v3149
        %v3151 = vpop.f32.mrf.mxu0
        %v3152 = vadd.f32 %v3043, %v3151
        %3153 = vmatmul.bf16.gmra.mxu0 %v2517
        %v3154 = vpop.f32.mrf.mxu0
        %v3155 = vadd.f32 %v3046, %v3154
        %v3156 = vpop.f32.mrf.mxu0
        %v3157 = vadd.f32 %v3048, %v3156
        %3158 = vmatmul.bf16.gmra.mxu0 %v2520
        %v3159 = vpop.f32.mrf.mxu0
        %v3160 = vadd.f32 %v3051, %v3159
        %v3161 = vpop.f32.mrf.mxu0
        %v3162 = vadd.f32 %v3053, %v3161
        %3163 = vmatmul.bf16.gmra.mxu0 %v2523
        %v3164 = vpop.f32.mrf.mxu0
        %v3165 = vadd.f32 %v3056, %v3164
        %v3166 = vpop.f32.mrf.mxu0
        %v3167 = vadd.f32 %v3058, %v3166
        %3168 = vmatmul.bf16.gmra.mxu0 %v2526
        %v3169 = vpop.f32.mrf.mxu0
        %v3170 = vadd.f32 %v3061, %v3169
        %v3171 = vpop.f32.mrf.mxu0
        %v3172 = vadd.f32 %v3063, %v3171
        %3173 = vmatmul.bf16.gmra.mxu0 %v2529
        %v3174 = vpop.f32.mrf.mxu0
        %v3175 = vadd.f32 %v3066, %v3174
        %v3176 = vpop.f32.mrf.mxu0
        %v3177 = vadd.f32 %v3068, %v3176
        %3178 = vmatmul.bf16.gmra.mxu0 %v2532
        %v3179 = vpop.f32.mrf.mxu0
        %v3180 = vadd.f32 %v3071, %v3179
        %v3181 = vpop.f32.mrf.mxu0
        %v3182 = vadd.f32 %v3073, %v3181
        %3183 = vmatmul.bf16.gmra.mxu0 %v2535
        %v3184 = vpop.f32.mrf.mxu0
        %v3185 = vadd.f32 %v3076, %v3184
        %v3186 = vpop.f32.mrf.mxu0
        %v3187 = vadd.f32 %v3078, %v3186
        %3188 = vmatmul.bf16.gmra.mxu0 %v2538
        %v3189 = vpop.f32.mrf.mxu0
        %v3190 = vadd.f32 %v3081, %v3189
        %v3191 = vpop.f32.mrf.mxu0
        %v3192 = vadd.f32 %v3083, %v3191
        %3193 = vdwg.mxu0
        %3194 = vmatpush.bf16.msra.mxu0 %v1982
        %3195 = vmatpush.bf16.msra.mxu0 %v1979
        %3196 = vmatpush.bf16.msra.mxu0 %v1976
        %3197 = vmatpush.bf16.msra.mxu0 %v1973
        %3198 = vmatpush.bf16.msra.mxu0 %v1970
        %3199 = vmatpush.bf16.msra.mxu0 %v1967
        %3200 = vmatpush.bf16.msra.mxu0 %v1964
        %3201 = vmatpush.bf16.msra.mxu0 %v1961
        %3202 = vmatmul.bf16.gmra.mxu0 %v2379
        %v3203 = vpop.f32.mrf.mxu0
        %v3204 = vadd.f32 %v2021, %v3203
        %v3205 = vpop.f32.mrf.mxu0
        %v3206 = vadd.f32 %v2025, %v3205
        %3207 = vmatmul.bf16.gmra.mxu0 %v2382
        %v3208 = vpop.f32.mrf.mxu0
        %v3209 = vadd.f32 %v2029, %v3208
        %v3210 = vpop.f32.mrf.mxu0
        %v3211 = vadd.f32 %v2033, %v3210
        %3212 = vmatmul.bf16.gmra.mxu0 %v2385
        %v3213 = vpop.f32.mrf.mxu0
        %v3214 = vadd.f32 %v2037, %v3213
        %v3215 = vpop.f32.mrf.mxu0
        %v3216 = vadd.f32 %v2041, %v3215
        %3217 = vmatmul.bf16.gmra.mxu0 %v2388
        %v3218 = vpop.f32.mrf.mxu0
        %v3219 = vadd.f32 %v2045, %v3218
        %v3220 = vpop.f32.mrf.mxu0
        %v3221 = vadd.f32 %v2049, %v3220
        %3222 = vmatmul.bf16.gmra.mxu0 %v2391
        %v3223 = vpop.f32.mrf.mxu0
        %v3224 = vadd.f32 %v2053, %v3223
        %v3225 = vpop.f32.mrf.mxu0
        %v3226 = vadd.f32 %v2057, %v3225
        %3227 = vmatmul.bf16.gmra.mxu0 %v2394
        %v3228 = vpop.f32.mrf.mxu0
        %v3229 = vadd.f32 %v2061, %v3228
        %v3230 = vpop.f32.mrf.mxu0
        %v3231 = vadd.f32 %v2065, %v3230
        %3232 = vmatmul.bf16.gmra.mxu0 %v2397
        %v3233 = vpop.f32.mrf.mxu0
        %v3234 = vadd.f32 %v2069, %v3233
        %v3235 = vpop.f32.mrf.mxu0
        %v3236 = vadd.f32 %v2073, %v3235
        %3237 = vmatmul.bf16.gmra.mxu0 %v2400
        %v3238 = vpop.f32.mrf.mxu0
        %v3239 = vadd.f32 %v2077, %v3238
        %v3240 = vpop.f32.mrf.mxu0
        %v3241 = vadd.f32 %v2081, %v3240
        %3242 = vmatmul.bf16.gmra.mxu0 %v2403
        %v3243 = vpop.f32.mrf.mxu0
        %v3244 = vadd.f32 %v2085, %v3243
        %v3245 = vpop.f32.mrf.mxu0
        %v3246 = vadd.f32 %v2089, %v3245
        %3247 = vmatmul.bf16.gmra.mxu0 %v2406
        %v3248 = vpop.f32.mrf.mxu0
        %v3249 = vadd.f32 %v2093, %v3248
        %v3250 = vpop.f32.mrf.mxu0
        %v3251 = vadd.f32 %v2097, %v3250
        %3252 = vmatmul.bf16.gmra.mxu0 %v2409
        %v3253 = vpop.f32.mrf.mxu0
        %v3254 = vadd.f32 %v2101, %v3253
        %v3255 = vpop.f32.mrf.mxu0
        %v3256 = vadd.f32 %v2105, %v3255
        %3257 = vmatmul.bf16.gmra.mxu0 %v2412
        %v3258 = vpop.f32.mrf.mxu0
        %v3259 = vadd.f32 %v2109, %v3258
        %v3260 = vpop.f32.mrf.mxu0
        %v3261 = vadd.f32 %v2113, %v3260
        %3262 = vmatmul.bf16.gmra.mxu0 %v2415
        %v3263 = vpop.f32.mrf.mxu0
        %v3264 = vadd.f32 %v2117, %v3263
        %v3265 = vpop.f32.mrf.mxu0
        %v3266 = vadd.f32 %v2121, %v3265
        %3267 = vmatmul.bf16.gmra.mxu0 %v2418
        %v3268 = vpop.f32.mrf.mxu0
        %v3269 = vadd.f32 %v2125, %v3268
        %v3270 = vpop.f32.mrf.mxu0
        %v3271 = vadd.f32 %v2129, %v3270
        %3272 = vmatmul.bf16.gmra.mxu0 %v2421
        %v3273 = vpop.f32.mrf.mxu0
        %v3274 = vadd.f32 %v2133, %v3273
        %v3275 = vpop.f32.mrf.mxu0
        %v3276 = vadd.f32 %v2137, %v3275
        %3277 = vmatmul.bf16.gmra.mxu0 %v2424
        %v3278 = vpop.f32.mrf.mxu0
        %v3279 = vadd.f32 %v2141, %v3278
        %v3280 = vpop.f32.mrf.mxu0
        %v3281 = vadd.f32 %v2145, %v3280
        %3282 = vmatmul.bf16.gmra.mxu0 %v2427
        %v3283 = vpop.f32.mrf.mxu0
        %v3284 = vadd.f32 %v2149, %v3283
        %v3285 = vpop.f32.mrf.mxu0
        %v3286 = vadd.f32 %v2153, %v3285
        %3287 = vmatmul.bf16.gmra.mxu0 %v2430
        %v3288 = vpop.f32.mrf.mxu0
        %v3289 = vadd.f32 %v2157, %v3288
        %v3290 = vpop.f32.mrf.mxu0
        %v3291 = vadd.f32 %v2161, %v3290
        %3292 = vmatmul.bf16.gmra.mxu0 %v2433
        %v3293 = vpop.f32.mrf.mxu0
        %v3294 = vadd.f32 %v2165, %v3293
        %v3295 = vpop.f32.mrf.mxu0
        %v3296 = vadd.f32 %v2169, %v3295
        %3297 = vmatmul.bf16.gmra.mxu0 %v2436
        %v3298 = vpop.f32.mrf.mxu0
        %v3299 = vadd.f32 %v2173, %v3298
        %v3300 = vpop.f32.mrf.mxu0
        %v3301 = vadd.f32 %v2177, %v3300
        %3302 = vdwg.mxu0
        %3303 = vmatpush.bf16.msra.mxu0 %v2006
        %3304 = vmatpush.bf16.msra.mxu0 %v2003
        %3305 = vmatpush.bf16.msra.mxu0 %v2000
        %3306 = vmatpush.bf16.msra.mxu0 %v1997
        %3307 = vmatpush.bf16.msra.mxu0 %v1994
        %3308 = vmatpush.bf16.msra.mxu0 %v1991
        %3309 = vmatpush.bf16.msra.mxu0 %v1988
        %3310 = vmatpush.bf16.msra.mxu0 %v1985
        %3311 = vmatmul.bf16.gmra.mxu0 %v2380
        %v3312 = vpop.f32.mrf.mxu0
        %v3313 = vadd.f32 %v3204, %v3312
        %v3314 = vpop.f32.mrf.mxu0
        %v3315 = vadd.f32 %v3206, %v3314
        %3316 = vmatmul.bf16.gmra.mxu0 %v2383
        %v3317 = vpop.f32.mrf.mxu0
        %v3318 = vadd.f32 %v3209, %v3317
        %v3319 = vpop.f32.mrf.mxu0
        %v3320 = vadd.f32 %v3211, %v3319
        %3321 = vmatmul.bf16.gmra.mxu0 %v2386
        %v3322 = vpop.f32.mrf.mxu0
        %v3323 = vadd.f32 %v3214, %v3322
        %v3324 = vpop.f32.mrf.mxu0
        %v3325 = vadd.f32 %v3216, %v3324
        %3326 = vmatmul.bf16.gmra.mxu0 %v2389
        %v3327 = vpop.f32.mrf.mxu0
        %v3328 = vadd.f32 %v3219, %v3327
        %v3329 = vpop.f32.mrf.mxu0
        %v3330 = vadd.f32 %v3221, %v3329
        %3331 = vmatmul.bf16.gmra.mxu0 %v2392
        %v3332 = vpop.f32.mrf.mxu0
        %v3333 = vadd.f32 %v3224, %v3332
        %v3334 = vpop.f32.mrf.mxu0
        %v3335 = vadd.f32 %v3226, %v3334
        %3336 = vmatmul.bf16.gmra.mxu0 %v2395
        %v3337 = vpop.f32.mrf.mxu0
        %v3338 = vadd.f32 %v3229, %v3337
        %v3339 = vpop.f32.mrf.mxu0
        %v3340 = vadd.f32 %v3231, %v3339
        %3341 = vmatmul.bf16.gmra.mxu0 %v2398
        %v3342 = vpop.f32.mrf.mxu0
        %v3343 = vadd.f32 %v3234, %v3342
        %v3344 = vpop.f32.mrf.mxu0
        %v3345 = vadd.f32 %v3236, %v3344
        %3346 = vmatmul.bf16.gmra.mxu0 %v2401
        %v3347 = vpop.f32.mrf.mxu0
        %v3348 = vadd.f32 %v3239, %v3347
        %v3349 = vpop.f32.mrf.mxu0
        %v3350 = vadd.f32 %v3241, %v3349
        %3351 = vmatmul.bf16.gmra.mxu0 %v2404
        %v3352 = vpop.f32.mrf.mxu0
        %v3353 = vadd.f32 %v3244, %v3352
        %v3354 = vpop.f32.mrf.mxu0
        %v3355 = vadd.f32 %v3246, %v3354
        %3356 = vmatmul.bf16.gmra.mxu0 %v2407
        %v3357 = vpop.f32.mrf.mxu0
        %v3358 = vadd.f32 %v3249, %v3357
        %v3359 = vpop.f32.mrf.mxu0
        %v3360 = vadd.f32 %v3251, %v3359
        %3361 = vmatmul.bf16.gmra.mxu0 %v2410
        %v3362 = vpop.f32.mrf.mxu0
        %v3363 = vadd.f32 %v3254, %v3362
        %v3364 = vpop.f32.mrf.mxu0
        %v3365 = vadd.f32 %v3256, %v3364
        %3366 = vmatmul.bf16.gmra.mxu0 %v2413
        %v3367 = vpop.f32.mrf.mxu0
        %v3368 = vadd.f32 %v3259, %v3367
        %v3369 = vpop.f32.mrf.mxu0
        %v3370 = vadd.f32 %v3261, %v3369
        %3371 = vmatmul.bf16.gmra.mxu0 %v2416
        %v3372 = vpop.f32.mrf.mxu0
        %v3373 = vadd.f32 %v3264, %v3372
        %v3374 = vpop.f32.mrf.mxu0
        %v3375 = vadd.f32 %v3266, %v3374
        %3376 = vmatmul.bf16.gmra.mxu0 %v2419
        %v3377 = vpop.f32.mrf.mxu0
        %v3378 = vadd.f32 %v3269, %v3377
        %v3379 = vpop.f32.mrf.mxu0
        %v3380 = vadd.f32 %v3271, %v3379
        %3381 = vmatmul.bf16.gmra.mxu0 %v2422
        %v3382 = vpop.f32.mrf.mxu0
        %v3383 = vadd.f32 %v3274, %v3382
        %v3384 = vpop.f32.mrf.mxu0
        %v3385 = vadd.f32 %v3276, %v3384
        %3386 = vmatmul.bf16.gmra.mxu0 %v2425
        %v3387 = vpop.f32.mrf.mxu0
        %v3388 = vadd.f32 %v3279, %v3387
        %v3389 = vpop.f32.mrf.mxu0
        %v3390 = vadd.f32 %v3281, %v3389
        %3391 = vmatmul.bf16.gmra.mxu0 %v2428
        %v3392 = vpop.f32.mrf.mxu0
        %v3393 = vadd.f32 %v3284, %v3392
        %v3394 = vpop.f32.mrf.mxu0
        %v3395 = vadd.f32 %v3286, %v3394
        %3396 = vmatmul.bf16.gmra.mxu0 %v2431
        %v3397 = vpop.f32.mrf.mxu0
        %v3398 = vadd.f32 %v3289, %v3397
        %v3399 = vpop.f32.mrf.mxu0
        %v3400 = vadd.f32 %v3291, %v3399
        %3401 = vmatmul.bf16.gmra.mxu0 %v2434
        %v3402 = vpop.f32.mrf.mxu0
        %v3403 = vadd.f32 %v3294, %v3402
        %v3404 = vpop.f32.mrf.mxu0
        %v3405 = vadd.f32 %v3296, %v3404
        %3406 = vmatmul.bf16.gmra.mxu0 %v2437
        %v3407 = vpop.f32.mrf.mxu0
        %v3408 = vadd.f32 %v3299, %v3407
        %v3409 = vpop.f32.mrf.mxu0
        %v3410 = vadd.f32 %v3301, %v3409
        %3411 = vdwg.mxu0
        %3412 = vmatpush.bf16.msra.mxu0 0
        %3413 = vmatpush.bf16.msra.mxu0 0
        %3414 = vmatpush.bf16.msra.mxu0 0
        %3415 = vmatpush.bf16.msra.mxu0 0
        %3416 = vmatpush.bf16.msra.mxu0 %v2018
        %3417 = vmatpush.bf16.msra.mxu0 %v2015
        %3418 = vmatpush.bf16.msra.mxu0 %v2012
        %3419 = vmatpush.bf16.msra.mxu0 %v2009
        %3420 = vmatmul.bf16.gmra.mxu0 %v2481
        %v3421 = vpop.f32.mrf.mxu0
        %v3422 = vadd.f32 %v3313, %v3421
        %v3423 = vpop.f32.mrf.mxu0
        %v3424 = vadd.f32 %v3315, %v3423
        %3425 = vmatmul.bf16.gmra.mxu0 %v2484
        %v3426 = vpop.f32.mrf.mxu0
        %v3427 = vadd.f32 %v3318, %v3426
        %v3428 = vpop.f32.mrf.mxu0
        %v3429 = vadd.f32 %v3320, %v3428
        %3430 = vmatmul.bf16.gmra.mxu0 %v2487
        %v3431 = vpop.f32.mrf.mxu0
        %v3432 = vadd.f32 %v3323, %v3431
        %v3433 = vpop.f32.mrf.mxu0
        %v3434 = vadd.f32 %v3325, %v3433
        %3435 = vmatmul.bf16.gmra.mxu0 %v2490
        %v3436 = vpop.f32.mrf.mxu0
        %v3437 = vadd.f32 %v3328, %v3436
        %v3438 = vpop.f32.mrf.mxu0
        %v3439 = vadd.f32 %v3330, %v3438
        %3440 = vmatmul.bf16.gmra.mxu0 %v2493
        %v3441 = vpop.f32.mrf.mxu0
        %v3442 = vadd.f32 %v3333, %v3441
        %v3443 = vpop.f32.mrf.mxu0
        %v3444 = vadd.f32 %v3335, %v3443
        %3445 = vmatmul.bf16.gmra.mxu0 %v2496
        %v3446 = vpop.f32.mrf.mxu0
        %v3447 = vadd.f32 %v3338, %v3446
        %v3448 = vpop.f32.mrf.mxu0
        %v3449 = vadd.f32 %v3340, %v3448
        %3450 = vmatmul.bf16.gmra.mxu0 %v2499
        %v3451 = vpop.f32.mrf.mxu0
        %v3452 = vadd.f32 %v3343, %v3451
        %v3453 = vpop.f32.mrf.mxu0
        %v3454 = vadd.f32 %v3345, %v3453
        %3455 = vmatmul.bf16.gmra.mxu0 %v2502
        %v3456 = vpop.f32.mrf.mxu0
        %v3457 = vadd.f32 %v3348, %v3456
        %v3458 = vpop.f32.mrf.mxu0
        %v3459 = vadd.f32 %v3350, %v3458
        %3460 = vmatmul.bf16.gmra.mxu0 %v2505
        %v3461 = vpop.f32.mrf.mxu0
        %v3462 = vadd.f32 %v3353, %v3461
        %v3463 = vpop.f32.mrf.mxu0
        %v3464 = vadd.f32 %v3355, %v3463
        %3465 = vmatmul.bf16.gmra.mxu0 %v2508
        %v3466 = vpop.f32.mrf.mxu0
        %v3467 = vadd.f32 %v3358, %v3466
        %v3468 = vpop.f32.mrf.mxu0
        %v3469 = vadd.f32 %v3360, %v3468
        %3470 = vmatmul.bf16.gmra.mxu0 %v2511
        %v3471 = vpop.f32.mrf.mxu0
        %v3472 = vadd.f32 %v3363, %v3471
        %v3473 = vpop.f32.mrf.mxu0
        %v3474 = vadd.f32 %v3365, %v3473
        %3475 = vmatmul.bf16.gmra.mxu0 %v2514
        %v3476 = vpop.f32.mrf.mxu0
        %v3477 = vadd.f32 %v3368, %v3476
        %v3478 = vpop.f32.mrf.mxu0
        %v3479 = vadd.f32 %v3370, %v3478
        %3480 = vmatmul.bf16.gmra.mxu0 %v2517
        %v3481 = vpop.f32.mrf.mxu0
        %v3482 = vadd.f32 %v3373, %v3481
        %v3483 = vpop.f32.mrf.mxu0
        %v3484 = vadd.f32 %v3375, %v3483
        %3485 = vmatmul.bf16.gmra.mxu0 %v2520
        %v3486 = vpop.f32.mrf.mxu0
        %v3487 = vadd.f32 %v3378, %v3486
        %v3488 = vpop.f32.mrf.mxu0
        %v3489 = vadd.f32 %v3380, %v3488
        %3490 = vmatmul.bf16.gmra.mxu0 %v2523
        %v3491 = vpop.f32.mrf.mxu0
        %v3492 = vadd.f32 %v3383, %v3491
        %v3493 = vpop.f32.mrf.mxu0
        %v3494 = vadd.f32 %v3385, %v3493
        %3495 = vmatmul.bf16.gmra.mxu0 %v2526
        %v3496 = vpop.f32.mrf.mxu0
        %v3497 = vadd.f32 %v3388, %v3496
        %v3498 = vpop.f32.mrf.mxu0
        %v3499 = vadd.f32 %v3390, %v3498
        %3500 = vmatmul.bf16.gmra.mxu0 %v2529
        %v3501 = vpop.f32.mrf.mxu0
        %v3502 = vadd.f32 %v3393, %v3501
        %v3503 = vpop.f32.mrf.mxu0
        %v3504 = vadd.f32 %v3395, %v3503
        %3505 = vmatmul.bf16.gmra.mxu0 %v2532
        %v3506 = vpop.f32.mrf.mxu0
        %v3507 = vadd.f32 %v3398, %v3506
        %v3508 = vpop.f32.mrf.mxu0
        %v3509 = vadd.f32 %v3400, %v3508
        %3510 = vmatmul.bf16.gmra.mxu0 %v2535
        %v3511 = vpop.f32.mrf.mxu0
        %v3512 = vadd.f32 %v3403, %v3511
        %v3513 = vpop.f32.mrf.mxu0
        %v3514 = vadd.f32 %v3405, %v3513
        %3515 = vmatmul.bf16.gmra.mxu0 %v2538
        %v3516 = vpop.f32.mrf.mxu0
        %v3517 = vadd.f32 %v3408, %v3516
        %v3518 = vpop.f32.mrf.mxu0
        %v3519 = vadd.f32 %v3410, %v3518
        %3520 = vdwg.mxu0
        %v3521 = vpack.c.bf16 %v489, %v488
        %3522 = vmatpush.bf16.msra.mxu0 %v727
        %3523 = vmatpush.bf16.msra.mxu0 %v724
        %3524 = vmatpush.bf16.msra.mxu0 %v721
        %3525 = vmatpush.bf16.msra.mxu0 %v718
        %3526 = vmatpush.bf16.msra.mxu0 %v715
        %3527 = vmatpush.bf16.msra.mxu0 %v712
        %3528 = vmatpush.bf16.msra.mxu0 %v709
        %3529 = vmatpush.bf16.msra.mxu0 %v706
        %3530 = vmatmul.bf16.gmra.mxu0 %v3521
        %v3531 = vpop.f32.mrf.mxu0
        %v3532 = vadd.f32 0.0, %v3531
        %v3533 = vpop.f32.mrf.mxu0
        %v3534 = vadd.f32 0.0, %v3533
        %3535 = vdwg.mxu0
        %3536 = vmatpush.bf16.msra.mxu0 %v728
        %3537 = vmatpush.bf16.msra.mxu0 %v725
        %3538 = vmatpush.bf16.msra.mxu0 %v722
        %3539 = vmatpush.bf16.msra.mxu0 %v719
        %3540 = vmatpush.bf16.msra.mxu0 %v716
        %3541 = vmatpush.bf16.msra.mxu0 %v713
        %3542 = vmatpush.bf16.msra.mxu0 %v710
        %3543 = vmatpush.bf16.msra.mxu0 %v707
        %3544 = vmatmul.bf16.gmra.mxu0 %v3521
        %v3545 = vpop.f32.mrf.mxu0
        %v3546 = vadd.f32 0.0, %v3545
        %v3547 = vpop.f32.mrf.mxu0
        %v3548 = vadd.f32 0.0, %v3547
        %3549 = vdwg.mxu0
        %3550 = vmatpush.bf16.msra.mxu0 %v729
        %3551 = vmatpush.bf16.msra.mxu0 %v726
        %3552 = vmatpush.bf16.msra.mxu0 %v723
        %3553 = vmatpush.bf16.msra.mxu0 %v720
        %3554 = vmatpush.bf16.msra.mxu0 %v717
        %3555 = vmatpush.bf16.msra.mxu0 %v714
        %3556 = vmatpush.bf16.msra.mxu0 %v711
        %3557 = vmatpush.bf16.msra.mxu0 %v708
        %3558 = vmatmul.bf16.gmra.mxu0 %v3521
        %v3559 = vpop.f32.mrf.mxu0
        %v3560 = vadd.f32 0.0, %v3559
        %v3561 = vpop.f32.mrf.mxu0
        %v3562 = vadd.f32 0.0, %v3561
        %3563 = vdwg.mxu0
        %v3564 = vperm.slane %v3532, 0
        %v3565 = vperm.slane %v3546, 0
        %v3566 = vperm.slane %v3560, 0
        %v3567 = vmul.f32 %v3564, %v2768
        %v3568 = vmul.f32 %v3565, %v3095
        %v3569 = vmul.f32 %v3566, %v3422
        %v3570 = vmul.f32 %v3564, %v2770
        %v3571 = vmul.f32 %v3565, %v3097
        %v3572 = vmul.f32 %v3566, %v3424
        %v3573 = vmul.f32 %v3564, %v2773
        %v3574 = vmul.f32 %v3565, %v3100
        %v3575 = vmul.f32 %v3566, %v3427
        %v3576 = vmul.f32 %v3564, %v2775
        %v3577 = vmul.f32 %v3565, %v3102
        %v3578 = vmul.f32 %v3566, %v3429
        %v3579 = vperm.slane %v3532, 1
        %v3580 = vperm.slane %v3546, 1
        %v3581 = vperm.slane %v3560, 1
        %v3582 = vmul.f32 %v3579, %v2778
        %v3583 = vmul.f32 %v3580, %v3105
        %v3584 = vmul.f32 %v3581, %v3432
        %v3585 = vmul.f32 %v3579, %v2780
        %v3586 = vmul.f32 %v3580, %v3107
        %v3587 = vmul.f32 %v3581, %v3434
        %v3588 = vmul.f32 %v3579, %v2783
        %v3589 = vmul.f32 %v3580, %v3110
        %v3590 = vmul.f32 %v3581, %v3437
        %v3591 = vmul.f32 %v3579, %v2785
        %v3592 = vmul.f32 %v3580, %v3112
        %v3593 = vmul.f32 %v3581, %v3439
        %v3594 = vadd.f32 %v3567, %v3582
        %v3595 = vadd.f32 %v3568, %v3583
        %v3596 = vadd.f32 %v3569, %v3584
        %v3597 = vadd.f32 %v3570, %v3585
        %v3598 = vadd.f32 %v3571, %v3586
        %v3599 = vadd.f32 %v3572, %v3587
        %v3600 = vadd.f32 %v3573, %v3588
        %v3601 = vadd.f32 %v3574, %v3589
        %v3602 = vadd.f32 %v3575, %v3590
        %v3603 = vadd.f32 %v3576, %v3591
        %v3604 = vadd.f32 %v3577, %v3592
        %v3605 = vadd.f32 %v3578, %v3593
        %v3606 = vperm.slane %v3532, 2
        %v3607 = vperm.slane %v3546, 2
        %v3608 = vperm.slane %v3560, 2
        %v3609 = vmul.f32 %v3606, %v2788
        %v3610 = vmul.f32 %v3607, %v3115
        %v3611 = vmul.f32 %v3608, %v3442
        %v3612 = vmul.f32 %v3606, %v2790
        %v3613 = vmul.f32 %v3607, %v3117
        %v3614 = vmul.f32 %v3608, %v3444
        %v3615 = vmul.f32 %v3606, %v2793
        %v3616 = vmul.f32 %v3607, %v3120
        %v3617 = vmul.f32 %v3608, %v3447
        %v3618 = vmul.f32 %v3606, %v2795
        %v3619 = vmul.f32 %v3607, %v3122
        %v3620 = vmul.f32 %v3608, %v3449
        %v3621 = vadd.f32 %v3594, %v3609
        %v3622 = vadd.f32 %v3595, %v3610
        %v3623 = vadd.f32 %v3596, %v3611
        %v3624 = vadd.f32 %v3597, %v3612
        %v3625 = vadd.f32 %v3598, %v3613
        %v3626 = vadd.f32 %v3599, %v3614
        %v3627 = vadd.f32 %v3600, %v3615
        %v3628 = vadd.f32 %v3601, %v3616
        %v3629 = vadd.f32 %v3602, %v3617
        %v3630 = vadd.f32 %v3603, %v3618
        %v3631 = vadd.f32 %v3604, %v3619
        %v3632 = vadd.f32 %v3605, %v3620
        %v3633 = vperm.slane %v3532, 3
        %v3634 = vperm.slane %v3546, 3
        %v3635 = vperm.slane %v3560, 3
        %v3636 = vmul.f32 %v3633, %v2798
        %v3637 = vmul.f32 %v3634, %v3125
        %v3638 = vmul.f32 %v3635, %v3452
        %v3639 = vmul.f32 %v3633, %v2800
        %v3640 = vmul.f32 %v3634, %v3127
        %v3641 = vmul.f32 %v3635, %v3454
        %v3642 = vmul.f32 %v3633, %v2803
        %v3643 = vmul.f32 %v3634, %v3130
        %v3644 = vmul.f32 %v3635, %v3457
        %v3645 = vmul.f32 %v3633, %v2805
        %v3646 = vmul.f32 %v3634, %v3132
        %v3647 = vmul.f32 %v3635, %v3459
        %v3648 = vadd.f32 %v3621, %v3636
        %v3649 = vadd.f32 %v3622, %v3637
        %v3650 = vadd.f32 %v3623, %v3638
        %v3651 = vadd.f32 %v3624, %v3639
        %v3652 = vadd.f32 %v3625, %v3640
        %v3653 = vadd.f32 %v3626, %v3641
        %v3654 = vadd.f32 %v3627, %v3642
        %v3655 = vadd.f32 %v3628, %v3643
        %v3656 = vadd.f32 %v3629, %v3644
        %v3657 = vadd.f32 %v3630, %v3645
        %v3658 = vadd.f32 %v3631, %v3646
        %v3659 = vadd.f32 %v3632, %v3647
        %v3660 = vperm.slane %v3532, 4
        %v3661 = vperm.slane %v3546, 4
        %v3662 = vperm.slane %v3560, 4
        %v3663 = vmul.f32 %v3660, %v2808
        %v3664 = vmul.f32 %v3661, %v3135
        %v3665 = vmul.f32 %v3662, %v3462
        %v3666 = vmul.f32 %v3660, %v2810
        %v3667 = vmul.f32 %v3661, %v3137
        %v3668 = vmul.f32 %v3662, %v3464
        %v3669 = vmul.f32 %v3660, %v2813
        %v3670 = vmul.f32 %v3661, %v3140
        %v3671 = vmul.f32 %v3662, %v3467
        %v3672 = vmul.f32 %v3660, %v2815
        %v3673 = vmul.f32 %v3661, %v3142
        %v3674 = vmul.f32 %v3662, %v3469
        %v3675 = vadd.f32 %v3648, %v3663
        %v3676 = vadd.f32 %v3649, %v3664
        %v3677 = vadd.f32 %v3650, %v3665
        %v3678 = vadd.f32 %v3651, %v3666
        %v3679 = vadd.f32 %v3652, %v3667
        %v3680 = vadd.f32 %v3653, %v3668
        %v3681 = vadd.f32 %v3654, %v3669
        %v3682 = vadd.f32 %v3655, %v3670
        %v3683 = vadd.f32 %v3656, %v3671
        %v3684 = vadd.f32 %v3657, %v3672
        %v3685 = vadd.f32 %v3658, %v3673
        %v3686 = vadd.f32 %v3659, %v3674
        %v3687 = vperm.slane %v3532, 5
        %v3688 = vperm.slane %v3546, 5
        %v3689 = vperm.slane %v3560, 5
        %v3690 = vmul.f32 %v3687, %v2818
        %v3691 = vmul.f32 %v3688, %v3145
        %v3692 = vmul.f32 %v3689, %v3472
        %v3693 = vmul.f32 %v3687, %v2820
        %v3694 = vmul.f32 %v3688, %v3147
        %v3695 = vmul.f32 %v3689, %v3474
        %v3696 = vmul.f32 %v3687, %v2823
        %v3697 = vmul.f32 %v3688, %v3150
        %v3698 = vmul.f32 %v3689, %v3477
        %v3699 = vmul.f32 %v3687, %v2825
        %v3700 = vmul.f32 %v3688, %v3152
        %v3701 = vmul.f32 %v3689, %v3479
        %v3702 = vadd.f32 %v3675, %v3690
        %v3703 = vadd.f32 %v3676, %v3691
        %v3704 = vadd.f32 %v3677, %v3692
        %v3705 = vadd.f32 %v3678, %v3693
        %v3706 = vadd.f32 %v3679, %v3694
        %v3707 = vadd.f32 %v3680, %v3695
        %v3708 = vadd.f32 %v3681, %v3696
        %v3709 = vadd.f32 %v3682, %v3697
        %v3710 = vadd.f32 %v3683, %v3698
        %v3711 = vadd.f32 %v3684, %v3699
        %v3712 = vadd.f32 %v3685, %v3700
        %v3713 = vadd.f32 %v3686, %v3701
        %v3714 = vperm.slane %v3532, 6
        %v3715 = vperm.slane %v3546, 6
        %v3716 = vperm.slane %v3560, 6
        %v3717 = vmul.f32 %v3714, %v2828
        %v3718 = vmul.f32 %v3715, %v3155
        %v3719 = vmul.f32 %v3716, %v3482
        %v3720 = vmul.f32 %v3714, %v2830
        %v3721 = vmul.f32 %v3715, %v3157
        %v3722 = vmul.f32 %v3716, %v3484
        %v3723 = vmul.f32 %v3714, %v2833
        %v3724 = vmul.f32 %v3715, %v3160
        %v3725 = vmul.f32 %v3716, %v3487
        %v3726 = vmul.f32 %v3714, %v2835
        %v3727 = vmul.f32 %v3715, %v3162
        %v3728 = vmul.f32 %v3716, %v3489
        %v3729 = vadd.f32 %v3702, %v3717
        %v3730 = vadd.f32 %v3703, %v3718
        %v3731 = vadd.f32 %v3704, %v3719
        %v3732 = vadd.f32 %v3705, %v3720
        %v3733 = vadd.f32 %v3706, %v3721
        %v3734 = vadd.f32 %v3707, %v3722
        %v3735 = vadd.f32 %v3708, %v3723
        %v3736 = vadd.f32 %v3709, %v3724
        %v3737 = vadd.f32 %v3710, %v3725
        %v3738 = vadd.f32 %v3711, %v3726
        %v3739 = vadd.f32 %v3712, %v3727
        %v3740 = vadd.f32 %v3713, %v3728
        %v3741 = vperm.slane %v3532, 7
        %v3742 = vperm.slane %v3546, 7
        %v3743 = vperm.slane %v3560, 7
        %v3744 = vmul.f32 %v3741, %v2838
        %v3745 = vmul.f32 %v3742, %v3165
        %v3746 = vmul.f32 %v3743, %v3492
        %v3747 = vmul.f32 %v3741, %v2840
        %v3748 = vmul.f32 %v3742, %v3167
        %v3749 = vmul.f32 %v3743, %v3494
        %v3750 = vmul.f32 %v3741, %v2843
        %v3751 = vmul.f32 %v3742, %v3170
        %v3752 = vmul.f32 %v3743, %v3497
        %v3753 = vmul.f32 %v3741, %v2845
        %v3754 = vmul.f32 %v3742, %v3172
        %v3755 = vmul.f32 %v3743, %v3499
        %v3756 = vadd.f32 %v3729, %v3744
        %v3757 = vadd.f32 %v3730, %v3745
        %v3758 = vadd.f32 %v3731, %v3746
        %v3759 = vadd.f32 %v3732, %v3747
        %v3760 = vadd.f32 %v3733, %v3748
        %v3761 = vadd.f32 %v3734, %v3749
        %v3762 = vadd.f32 %v3735, %v3750
        %v3763 = vadd.f32 %v3736, %v3751
        %v3764 = vadd.f32 %v3737, %v3752
        %v3765 = vadd.f32 %v3738, %v3753
        %v3766 = vadd.f32 %v3739, %v3754
        %v3767 = vadd.f32 %v3740, %v3755
        %v3768 = vperm.slane %v3534, 0
        %v3769 = vperm.slane %v3548, 0
        %v3770 = vperm.slane %v3562, 0
        %v3771 = vmul.f32 %v3768, %v2848
        %v3772 = vmul.f32 %v3769, %v3175
        %v3773 = vmul.f32 %v3770, %v3502
        %v3774 = vmul.f32 %v3768, %v2850
        %v3775 = vmul.f32 %v3769, %v3177
        %v3776 = vmul.f32 %v3770, %v3504
        %v3777 = vmul.f32 %v3768, %v2853
        %v3778 = vmul.f32 %v3769, %v3180
        %v3779 = vmul.f32 %v3770, %v3507
        %v3780 = vmul.f32 %v3768, %v2855
        %v3781 = vmul.f32 %v3769, %v3182
        %v3782 = vmul.f32 %v3770, %v3509
        %v3783 = vadd.f32 %v3756, %v3771
        %v3784 = vadd.f32 %v3757, %v3772
        %v3785 = vadd.f32 %v3758, %v3773
        %v3786 = vadd.f32 %v3759, %v3774
        %v3787 = vadd.f32 %v3760, %v3775
        %v3788 = vadd.f32 %v3761, %v3776
        %v3789 = vadd.f32 %v3762, %v3777
        %v3790 = vadd.f32 %v3763, %v3778
        %v3791 = vadd.f32 %v3764, %v3779
        %v3792 = vadd.f32 %v3765, %v3780
        %v3793 = vadd.f32 %v3766, %v3781
        %v3794 = vadd.f32 %v3767, %v3782
        %v3795 = vperm.slane %v3534, 1
        %v3796 = vperm.slane %v3548, 1
        %v3797 = vperm.slane %v3562, 1
        %v3798 = vmul.f32 %v3795, %v2858
        %v3799 = vmul.f32 %v3796, %v3185
        %v3800 = vmul.f32 %v3797, %v3512
        %v3801 = vmul.f32 %v3795, %v2860
        %v3802 = vmul.f32 %v3796, %v3187
        %v3803 = vmul.f32 %v3797, %v3514
        %v3804 = vmul.f32 %v3795, %v2863
        %v3805 = vmul.f32 %v3796, %v3190
        %v3806 = vmul.f32 %v3797, %v3517
        %v3807 = vmul.f32 %v3795, %v2865
        %v3808 = vmul.f32 %v3796, %v3192
        %v3809 = vmul.f32 %v3797, %v3519
        %v3810 = vadd.f32 %v3783, %v3798
        %v3811 = vadd.f32 %v3784, %v3799
        %v3812 = vadd.f32 %v3785, %v3800
        %v3813 = vadd.f32 %v3786, %v3801
        %v3814 = vadd.f32 %v3787, %v3802
        %v3815 = vadd.f32 %v3788, %v3803
        %v3816 = vadd.f32 %v3789, %v3804
        %v3817 = vadd.f32 %v3790, %v3805
        %v3818 = vadd.f32 %v3791, %v3806
        %v3819 = vadd.f32 %v3792, %v3807
        %v3820 = vadd.f32 %v3793, %v3808
        %v3821 = vadd.f32 %v3794, %v3809
        %v3822 = vpack.c.bf16 %v3813, %v3810
        %v3823 = vpack.c.bf16 %v3814, %v3811
        %v3824 = vpack.c.bf16 %v3815, %v3812
        %v3825 = vpack.c.bf16 %v3819, %v3816
        %v3826 = vpack.c.bf16 %v3820, %v3817
        %v3827 = vpack.c.bf16 %v3821, %v3818
        %3828 = vmatpush.bf16.msra.mxu0 %v1080
        %3829 = vmatpush.bf16.msra.mxu0 %v1079
        %3830 = vmatpush.bf16.msra.mxu0 %v1078
        %3831 = vmatpush.bf16.msra.mxu0 %v1077
        %3832 = vmatpush.bf16.msra.mxu0 %v1076
        %3833 = vmatpush.bf16.msra.mxu0 %v1075
        %3834 = vmatpush.bf16.msra.mxu0 %v1074
        %3835 = vmatpush.bf16.msra.mxu0 %v1073
        %3836 = vmatmul.bf16.gmra.mxu0 %v3822
        %v3837 = vpop.f32.mrf.mxu0
        %v3838 = vadd.f32 0.0, %v3837
        %v3839 = vpop.f32.mrf.mxu0
        %v3840 = vadd.f32 0.0, %v3839
        %3841 = vmatmul.bf16.gmra.mxu0 %v3825
        %v3842 = vpop.f32.mrf.mxu0
        %v3843 = vadd.f32 0.0, %v3842
        %v3844 = vpop.f32.mrf.mxu0
        %v3845 = vadd.f32 0.0, %v3844
        %3846 = vdwg.mxu0
        %3847 = vmatpush.bf16.msra.mxu0 %v1088
        %3848 = vmatpush.bf16.msra.mxu0 %v1087
        %3849 = vmatpush.bf16.msra.mxu0 %v1086
        %3850 = vmatpush.bf16.msra.mxu0 %v1085
        %3851 = vmatpush.bf16.msra.mxu0 %v1084
        %3852 = vmatpush.bf16.msra.mxu0 %v1083
        %3853 = vmatpush.bf16.msra.mxu0 %v1082
        %3854 = vmatpush.bf16.msra.mxu0 %v1081
        %3855 = vmatmul.bf16.gmra.mxu0 %v3823
        %v3856 = vpop.f32.mrf.mxu0
        %v3857 = vadd.f32 %v3838, %v3856
        %v3858 = vpop.f32.mrf.mxu0
        %v3859 = vadd.f32 %v3840, %v3858
        %3860 = vmatmul.bf16.gmra.mxu0 %v3826
        %v3861 = vpop.f32.mrf.mxu0
        %v3862 = vadd.f32 %v3843, %v3861
        %v3863 = vpop.f32.mrf.mxu0
        %v3864 = vadd.f32 %v3845, %v3863
        %3865 = vdwg.mxu0
        %3866 = vmatpush.bf16.msra.mxu0 %v1096
        %3867 = vmatpush.bf16.msra.mxu0 %v1095
        %3868 = vmatpush.bf16.msra.mxu0 %v1094
        %3869 = vmatpush.bf16.msra.mxu0 %v1093
        %3870 = vmatpush.bf16.msra.mxu0 %v1092
        %3871 = vmatpush.bf16.msra.mxu0 %v1091
        %3872 = vmatpush.bf16.msra.mxu0 %v1090
        %3873 = vmatpush.bf16.msra.mxu0 %v1089
        %3874 = vmatmul.bf16.gmra.mxu0 %v3824
        %v3875 = vpop.f32.mrf.mxu0
        %v3876 = vadd.f32 %v3857, %v3875
        %v3877 = vpop.f32.mrf.mxu0
        %v3878 = vadd.f32 %v3859, %v3877
        %3879 = vmatmul.bf16.gmra.mxu0 %v3827
        %v3880 = vpop.f32.mrf.mxu0
        %v3881 = vadd.f32 %v3862, %v3880
        %v3882 = vpop.f32.mrf.mxu0
        %v3883 = vadd.f32 %v3864, %v3882
        %3884 = vdwg.mxu0
        %v3885 = vmul.f32 %v3876, %v1111
        %v3886 = vmul.f32 %v3878, %v1111
        %v3887 = vmul.f32 %v3881, %v1111
        %v3888 = vmul.f32 %v3883, %v1111
        %v3889 = vld [vmem:[%s8] sm:$0xf]
        %v3890 = vld [vmem:[%s8 + $0x4] sm:$0xf]
        %v3891 = vld [vmem:[%s8 + $0x8] sm:$0xf]
        %v3892 = vld [vmem:[%s8 + $0xc] sm:$0xf]
        %v3897 = vunpack.c.l.b16 %v3889
        %v3898 = vunpack.c.l.b16 %v3890
        %v3899 = vunpack.c.l.b16 %v3891
        %v3900 = vunpack.c.l.b16 %v3892
        %v3901 = vpack.c.b16 %v3898, %v3897
        %v3902 = vpack.c.b16 %v3900, %v3899
        %vm3903 = vcmask 80896
        %v3905 = vsel %vm3903, %v3901, 0
        %v3908 = vsel %vm3903, %v3902, 0
        %vm3910 = vcmask 1044480
        %v3912 = vsel %vm3910, %v3521, 0
        %3914 = vmatpush.bf16.msra.mxu0 0
        %3915 = vmatpush.bf16.msra.mxu0 0
        %3916 = vmatpush.bf16.msra.mxu0 0
        %3917 = vmatpush.bf16.msra.mxu0 0
        %3918 = vmatpush.bf16.msra.mxu0 0
        %3919 = vmatpush.bf16.msra.mxu0 0
        %3920 = vmatpush.bf16.msra.mxu0 0
        %3921 = vmatpush.bf16.msra.mxu0 %v3912
        %3922 = vmatmul.bf16.gmra.mxu0 %v3905
        %v3923 = vpop.f32.mrf.mxu0
        %v3924 = vadd.f32 0.0, %v3923
        %v3925 = vpop.f32.mrf.mxu0
        %v3926 = vadd.f32 0.0, %v3925
        %3927 = vmatmul.bf16.gmra.mxu0 %v3908
        %v3928 = vpop.f32.mrf.mxu0
        %v3929 = vadd.f32 0.0, %v3928
        %v3930 = vpop.f32.mrf.mxu0
        %v3931 = vadd.f32 0.0, %v3930
        %3932 = vdwg.mxu0
        %v3933 = vadd.f32 %v3885, %v3924
        %v3934 = vadd.f32 %v3886, %v3926
        %v3935 = vadd.f32 %v3887, %v3929
        %v3936 = vadd.f32 %v3888, %v3931
        %3937 = vset.pattern.permute.xlu0 6
        %3938 = vperm.xlu0 %3937, %v1112
        %v3939 = vpop.permute.xlu0 %3938
        %3941 = vset.pattern.permute.xlu0 6
        %3942 = vperm.xlu0 %3941, %v1113
        %v3943 = vpop.permute.xlu0 %3942
        %3945 = vset.pattern.permute.xlu0 6
        %3946 = vperm.xlu0 %3945, %v1114
        %v3947 = vpop.permute.xlu0 %3946
        %3949 = vset.pattern.permute.xlu0 6
        %3950 = vperm.xlu0 %3949, %v1115
        %v3951 = vpop.permute.xlu0 %3950
        %v3953 = vadd.f32 %v3933, %v3939
        %v3954 = vadd.f32 %v3934, %v3943
        %v3955 = vadd.f32 %v3935, %v3947
        %v3956 = vadd.f32 %v3936, %v3951
        %v3957 = vmax.f32 %v3953, 0.0
        %v3958 = vmax.f32 %v3954, 0.0
        %v3959 = vmax.f32 %v3955, 0.0
        %v3960 = vmax.f32 %v3956, 0.0
        %v3961 = vld [vmem:[%s11] sm:$0xff]
        %v3962 = vld [vmem:[%s11 + $0x8] sm:$0xff]
        %v3963 = vld [vmem:[%s11 + $0x10] sm:$0xff]
        %v3964 = vld [vmem:[%s11 + $0x18] sm:$0xff]
        %v3965 = vld [vmem:[%s11 + $0x20] sm:$0xff]
        %v3966 = vld [vmem:[%s11 + $0x28] sm:$0xff]
        %v3967 = vld [vmem:[%s11 + $0x30] sm:$0xff]
        %v3968 = vld [vmem:[%s11 + $0x38] sm:$0xff]
        %v3969 = vld [vmem:[%s11 + $0x40] sm:$0xff]
        %v3970 = vld [vmem:[%s11 + $0x48] sm:$0xff]
        %v3971 = vld [vmem:[%s11 + $0x50] sm:$0xff]
        %v3972 = vld [vmem:[%s11 + $0x58] sm:$0xff]
        %v3973 = vld [vmem:[%s11 + $0x60] sm:$0xff]
        %v3974 = vld [vmem:[%s11 + $0x68] sm:$0xff]
        %v3975 = vld [vmem:[%s11 + $0x70] sm:$0xff]
        %v3976 = vld [vmem:[%s11 + $0x78] sm:$0xff]
        %v3977 = vld [vmem:[%s11 + $0x80] sm:$0xff]
        %v3978 = vld [vmem:[%s11 + $0x88] sm:$0xff]
        %v3979 = vld [vmem:[%s11 + $0x90] sm:$0xff]
        %v3980 = vld [vmem:[%s11 + $0x98] sm:$0xff]
        %v3981 = vld [vmem:[%s11 + $0xa0] sm:$0xff]
        %v3982 = vld [vmem:[%s11 + $0xa8] sm:$0xff]
        %v3983 = vld [vmem:[%s11 + $0xb0] sm:$0xff]
        %v3984 = vld [vmem:[%s11 + $0xb8] sm:$0xff]
        %v3985 = vld [vmem:[%s11 + $0xc0] sm:$0xff]
        %v3986 = vld [vmem:[%s11 + $0xc8] sm:$0xff]
        %v3987 = vld [vmem:[%s11 + $0xd0] sm:$0xff]
        %v3988 = vld [vmem:[%s11 + $0xd8] sm:$0xff]
        %v3989 = vld [vmem:[%s11 + $0xe0] sm:$0xff]
        %v3990 = vld [vmem:[%s11 + $0xe8] sm:$0xff]
        %v3991 = vld [vmem:[%s11 + $0xf0] sm:$0xff]
        %v3992 = vld [vmem:[%s11 + $0xf8] sm:$0xff]
        %v3993 = vld [vmem:[%s11 + $0x100] sm:$0xff]
        %v3994 = vld [vmem:[%s11 + $0x108] sm:$0xff]
        %v3995 = vld [vmem:[%s11 + $0x110] sm:$0xff]
        %v3996 = vld [vmem:[%s11 + $0x118] sm:$0xff]
        %v3997 = vld [vmem:[%s11 + $0x120] sm:$0xff]
        %v3998 = vld [vmem:[%s11 + $0x128] sm:$0xff]
        %v3999 = vld [vmem:[%s11 + $0x130] sm:$0xff]
        %v4000 = vld [vmem:[%s11 + $0x138] sm:$0xff]
        %v4001 = vld [vmem:[%s11 + $0x140] sm:$0xff]
        %v4002 = vld [vmem:[%s11 + $0x148] sm:$0xff]
        %v4003 = vld [vmem:[%s11 + $0x150] sm:$0xff]
        %v4004 = vld [vmem:[%s11 + $0x158] sm:$0xff]
        %v4005 = vld [vmem:[%s11 + $0x160] sm:$0xff]
        %v4006 = vld [vmem:[%s11 + $0x168] sm:$0xff]
        %v4007 = vld [vmem:[%s11 + $0x170] sm:$0xff]
        %v4008 = vld [vmem:[%s11 + $0x178] sm:$0xff]
        %v4009 = vld [vmem:[%s11 + $0x180] sm:$0xff]
        %v4010 = vld [vmem:[%s11 + $0x188] sm:$0xff]
        %v4011 = vld [vmem:[%s11 + $0x190] sm:$0xff]
        %v4012 = vld [vmem:[%s11 + $0x198] sm:$0xff]
        %v4013 = vld [vmem:[%s11 + $0x1a0] sm:$0xff]
        %v4014 = vld [vmem:[%s11 + $0x1a8] sm:$0xff]
        %v4015 = vld [vmem:[%s11 + $0x1b0] sm:$0xff]
        %v4016 = vld [vmem:[%s11 + $0x1b8] sm:$0xff]
        %v4017 = vld [vmem:[%s11 + $0x1c0] sm:$0xff]
        %v4018 = vld [vmem:[%s11 + $0x1c8] sm:$0xff]
        %v4019 = vld [vmem:[%s11 + $0x1d0] sm:$0xff]
        %v4020 = vld [vmem:[%s11 + $0x1d8] sm:$0xff]
        %v4021 = vld [vmem:[%s11 + $0x1e0] sm:$0xff]
        %v4022 = vld [vmem:[%s11 + $0x1e8] sm:$0xff]
        %v4023 = vld [vmem:[%s11 + $0x1f0] sm:$0xff]
        %v4024 = vld [vmem:[%s11 + $0x1f8] sm:$0xff]
        %v4025 = vld [vmem:[%s11 + $0x200] sm:$0xff]
        %v4026 = vld [vmem:[%s11 + $0x208] sm:$0xff]
        %v4027 = vld [vmem:[%s11 + $0x210] sm:$0xff]
        %v4028 = vld [vmem:[%s11 + $0x218] sm:$0xff]
        %v4029 = vld [vmem:[%s11 + $0x220] sm:$0xff]
        %v4030 = vld [vmem:[%s11 + $0x228] sm:$0xff]
        %v4031 = vld [vmem:[%s11 + $0x230] sm:$0xff]
        %v4032 = vld [vmem:[%s11 + $0x238] sm:$0xff]
        %v4033 = vld [vmem:[%s11 + $0x240] sm:$0xff]
        %v4034 = vld [vmem:[%s11 + $0x248] sm:$0xff]
        %v4035 = vld [vmem:[%s11 + $0x250] sm:$0xff]
        %v4036 = vld [vmem:[%s11 + $0x258] sm:$0xff]
        %v4037 = vld [vmem:[%s11 + $0x260] sm:$0xff]
        %v4038 = vld [vmem:[%s11 + $0x268] sm:$0xff]
        %v4039 = vld [vmem:[%s11 + $0x270] sm:$0xff]
        %v4040 = vld [vmem:[%s11 + $0x278] sm:$0xff]
        %v4041 = vld [vmem:[%s11 + $0x280] sm:$0xff]
        %v4042 = vld [vmem:[%s11 + $0x288] sm:$0xff]
        %v4043 = vld [vmem:[%s11 + $0x290] sm:$0xff]
        %v4044 = vld [vmem:[%s11 + $0x298] sm:$0xff]
        %v4045 = vld [vmem:[%s11 + $0x2a0] sm:$0xff]
        %v4046 = vld [vmem:[%s11 + $0x2a8] sm:$0xff]
        %v4047 = vld [vmem:[%s11 + $0x2b0] sm:$0xff]
        %v4048 = vld [vmem:[%s11 + $0x2b8] sm:$0xff]
        %v4049 = vld [vmem:[%s11 + $0x2c0] sm:$0xff]
        %v4050 = vld [vmem:[%s11 + $0x2c8] sm:$0xff]
        %v4051 = vld [vmem:[%s11 + $0x2d0] sm:$0xff]
        %v4052 = vld [vmem:[%s11 + $0x2d8] sm:$0xff]
        %v4053 = vld [vmem:[%s11 + $0x2e0] sm:$0xff]
        %v4054 = vld [vmem:[%s11 + $0x2e8] sm:$0xff]
        %v4055 = vld [vmem:[%s11 + $0x2f0] sm:$0xff]
        %v4056 = vld [vmem:[%s11 + $0x2f8] sm:$0xff]
        %v4057 = vld [vmem:[%s11 + $0x300] sm:$0xff]
        %v4058 = vld [vmem:[%s11 + $0x308] sm:$0xff]
        %v4059 = vld [vmem:[%s11 + $0x310] sm:$0xff]
        %v4060 = vld [vmem:[%s11 + $0x318] sm:$0xff]
        %v4061 = vld [vmem:[%s11 + $0x320] sm:$0xff]
        %v4062 = vld [vmem:[%s11 + $0x328] sm:$0xff]
        %v4063 = vld [vmem:[%s11 + $0x330] sm:$0xff]
        %v4064 = vld [vmem:[%s11 + $0x338] sm:$0xff]
        %v4065 = vld [vmem:[%s11 + $0x340] sm:$0xff]
        %v4066 = vld [vmem:[%s11 + $0x348] sm:$0xff]
        %v4067 = vld [vmem:[%s11 + $0x350] sm:$0xff]
        %v4068 = vld [vmem:[%s11 + $0x358] sm:$0xff]
        %v4069 = vld [vmem:[%s11 + $0x360] sm:$0xff]
        %v4070 = vld [vmem:[%s11 + $0x368] sm:$0xff]
        %v4071 = vld [vmem:[%s11 + $0x370] sm:$0xff]
        %v4072 = vld [vmem:[%s11 + $0x378] sm:$0xff]
        %v4073 = vld [vmem:[%s11 + $0x380] sm:$0xff]
        %v4074 = vld [vmem:[%s11 + $0x388] sm:$0xff]
        %v4075 = vld [vmem:[%s11 + $0x390] sm:$0xff]
        %v4076 = vld [vmem:[%s11 + $0x398] sm:$0xff]
        %v4077 = vld [vmem:[%s11 + $0x3a0] sm:$0xff]
        %v4078 = vld [vmem:[%s11 + $0x3a8] sm:$0xff]
        %v4079 = vld [vmem:[%s11 + $0x3b0] sm:$0xff]
        %v4080 = vld [vmem:[%s11 + $0x3b8] sm:$0xff]
        %v4081 = vld [vmem:[%s11 + $0x3c0] sm:$0xff]
        %v4082 = vld [vmem:[%s11 + $0x3c8] sm:$0xff]
        %v4083 = vld [vmem:[%s11 + $0x3d0] sm:$0xff]
        %v4084 = vld [vmem:[%s11 + $0x3d8] sm:$0xff]
        %v4085 = vld [vmem:[%s11 + $0x3e0] sm:$0xff]
        %v4086 = vld [vmem:[%s11 + $0x3e8] sm:$0xff]
        %v4087 = vld [vmem:[%s11 + $0x3f0] sm:$0xff]
        %v4088 = vld [vmem:[%s11 + $0x3f8] sm:$0xff]
        %4089 = vset.pattern.permute.xlu0 4
        %4090 = vperm.xlu0 %4089, %v1112
        %v4091 = vpop.permute.xlu0 %4090
        %4093 = vset.pattern.permute.xlu0 4
        %4094 = vperm.xlu0 %4093, %v1113
        %v4095 = vpop.permute.xlu0 %4094
        %4097 = vset.pattern.permute.xlu0 4
        %4098 = vperm.xlu0 %4097, %v1114
        %v4099 = vpop.permute.xlu0 %4098
        %4101 = vset.pattern.permute.xlu0 4
        %4102 = vperm.xlu0 %4101, %v1115
        %v4103 = vpop.permute.xlu0 %4102
        %v4105 = vmul.f32 %v4091, %v1353
        %v4106 = vmul.f32 %v4091, %v1354
        %v4107 = vmul.f32 %v4091, %v1355
        %v4108 = vmul.f32 %v4095, %v1353
        %v4109 = vmul.f32 %v4095, %v1354
        %v4110 = vmul.f32 %v4095, %v1355
        %v4111 = vmul.f32 %v4099, %v1353
        %v4112 = vmul.f32 %v4099, %v1354
        %v4113 = vmul.f32 %v4099, %v1355
        %v4114 = vmul.f32 %v4103, %v1353
        %v4115 = vmul.f32 %v4103, %v1354
        %v4116 = vmul.f32 %v4103, %v1355
        %4117 = vset.pattern.permute.xlu0 5
        %4118 = vperm.xlu0 %4117, %v1112
        %v4119 = vpop.permute.xlu0 %4118
        %4121 = vset.pattern.permute.xlu0 5
        %4122 = vperm.xlu0 %4121, %v1113
        %v4123 = vpop.permute.xlu0 %4122
        %4125 = vset.pattern.permute.xlu0 5
        %4126 = vperm.xlu0 %4125, %v1114
        %v4127 = vpop.permute.xlu0 %4126
        %4129 = vset.pattern.permute.xlu0 5
        %4130 = vperm.xlu0 %4129, %v1115
        %v4131 = vpop.permute.xlu0 %4130
        %v4133 = vadd.f32 %v4105, %v4119
        %v4134 = vadd.f32 %v4106, %v4119
        %v4135 = vadd.f32 %v4107, %v4119
        %v4136 = vadd.f32 %v4108, %v4123
        %v4137 = vadd.f32 %v4109, %v4123
        %v4138 = vadd.f32 %v4110, %v4123
        %v4139 = vadd.f32 %v4111, %v4127
        %v4140 = vadd.f32 %v4112, %v4127
        %v4141 = vadd.f32 %v4113, %v4127
        %v4142 = vadd.f32 %v4114, %v4131
        %v4143 = vadd.f32 %v4115, %v4131
        %v4144 = vadd.f32 %v4116, %v4131
        %v4145 = vmax.f32 %v4133, 0.0
        %v4146 = vmax.f32 %v4134, 0.0
        %v4147 = vmax.f32 %v4135, 0.0
        %v4148 = vmax.f32 %v4136, 0.0
        %v4149 = vmax.f32 %v4137, 0.0
        %v4150 = vmax.f32 %v4138, 0.0
        %v4151 = vmax.f32 %v4139, 0.0
        %v4152 = vmax.f32 %v4140, 0.0
        %v4153 = vmax.f32 %v4141, 0.0
        %v4154 = vmax.f32 %v4142, 0.0
        %v4155 = vmax.f32 %v4143, 0.0
        %v4156 = vmax.f32 %v4144, 0.0
        %v4157 = vld [vmem:[%s7] sm:$0xf]
        %v4158 = vld [vmem:[%s7 + $0x4] sm:$0xf]
        %v4159 = vld [vmem:[%s7 + $0x8] sm:$0xf]
        %v4160 = vld [vmem:[%s7 + $0xc] sm:$0xf]
        %v4161 = vld [vmem:[%s7 + $0x10] sm:$0xf]
        %v4162 = vld [vmem:[%s7 + $0x14] sm:$0xf]
        %v4163 = vld [vmem:[%s7 + $0x18] sm:$0xf]
        %v4164 = vld [vmem:[%s7 + $0x1c] sm:$0xf]
        %v4165 = vld [vmem:[%s7 + $0x20] sm:$0xf]
        %v4166 = vld [vmem:[%s7 + $0x24] sm:$0xf]
        %v4167 = vld [vmem:[%s7 + $0x28] sm:$0xf]
        %v4168 = vld [vmem:[%s7 + $0x2c] sm:$0xf]
        %v4169 = vld [vmem:[%s7 + $0x30] sm:$0xf]
        %v4170 = vld [vmem:[%s7 + $0x34] sm:$0xf]
        %v4171 = vld [vmem:[%s7 + $0x38] sm:$0xf]
        %v4172 = vld [vmem:[%s7 + $0x3c] sm:$0xf]
        %v4173 = vld [vmem:[%s7 + $0x40] sm:$0xf]
        %v4174 = vld [vmem:[%s7 + $0x44] sm:$0xf]
        %v4175 = vld [vmem:[%s7 + $0x48] sm:$0xf]
        %v4176 = vld [vmem:[%s7 + $0x4c] sm:$0xf]
        %v4177 = vld [vmem:[%s7 + $0x50] sm:$0xf]
        %v4178 = vld [vmem:[%s7 + $0x54] sm:$0xf]
        %v4179 = vld [vmem:[%s7 + $0x58] sm:$0xf]
        %v4180 = vld [vmem:[%s7 + $0x5c] sm:$0xf]
        %v4181 = vld [vmem:[%s7 + $0x60] sm:$0xf]
        %v4182 = vld [vmem:[%s7 + $0x64] sm:$0xf]
        %v4183 = vld [vmem:[%s7 + $0x68] sm:$0xf]
        %v4184 = vld [vmem:[%s7 + $0x6c] sm:$0xf]
        %v4185 = vld [vmem:[%s7 + $0x70] sm:$0xf]
        %v4186 = vld [vmem:[%s7 + $0x74] sm:$0xf]
        %v4187 = vld [vmem:[%s7 + $0x78] sm:$0xf]
        %v4188 = vld [vmem:[%s7 + $0x7c] sm:$0xf]
        %v4189 = vld [vmem:[%s7 + $0x80] sm:$0xf]
        %v4190 = vld [vmem:[%s7 + $0x84] sm:$0xf]
        %v4191 = vld [vmem:[%s7 + $0x88] sm:$0xf]
        %v4192 = vld [vmem:[%s7 + $0x8c] sm:$0xf]
        %v4193 = vld [vmem:[%s7 + $0x90] sm:$0xf]
        %v4194 = vld [vmem:[%s7 + $0x94] sm:$0xf]
        %v4195 = vld [vmem:[%s7 + $0x98] sm:$0xf]
        %v4196 = vld [vmem:[%s7 + $0x9c] sm:$0xf]
        %v4197 = vld [vmem:[%s7 + $0xa0] sm:$0xf]
        %v4198 = vld [vmem:[%s7 + $0xa4] sm:$0xf]
        %v4199 = vld [vmem:[%s7 + $0xa8] sm:$0xf]
        %v4200 = vld [vmem:[%s7 + $0xac] sm:$0xf]
        %v4201 = vld [vmem:[%s7 + $0xb0] sm:$0xf]
        %v4202 = vld [vmem:[%s7 + $0xb4] sm:$0xf]
        %v4203 = vld [vmem:[%s7 + $0xb8] sm:$0xf]
        %v4204 = vld [vmem:[%s7 + $0xbc] sm:$0xf]
        %v4205 = vld [vmem:[%s7 + $0xc0] sm:$0xf]
        %v4206 = vld [vmem:[%s7 + $0xc4] sm:$0xf]
        %v4207 = vld [vmem:[%s7 + $0xc8] sm:$0xf]
        %v4208 = vld [vmem:[%s7 + $0xcc] sm:$0xf]
        %v4209 = vld [vmem:[%s7 + $0xd0] sm:$0xf]
        %v4210 = vld [vmem:[%s7 + $0xd4] sm:$0xf]
        %v4211 = vld [vmem:[%s7 + $0xd8] sm:$0xf]
        %v4212 = vld [vmem:[%s7 + $0xdc] sm:$0xf]
        %v4213 = vld [vmem:[%s7 + $0xe0] sm:$0xf]
        %v4214 = vld [vmem:[%s7 + $0xe4] sm:$0xf]
        %v4215 = vld [vmem:[%s7 + $0xe8] sm:$0xf]
        %v4216 = vld [vmem:[%s7 + $0xec] sm:$0xf]
        %v4217 = vld [vmem:[%s7 + $0xf0] sm:$0xf]
        %v4218 = vld [vmem:[%s7 + $0xf4] sm:$0xf]
        %v4219 = vld [vmem:[%s7 + $0xf8] sm:$0xf]
        %v4220 = vld [vmem:[%s7 + $0xfc] sm:$0xf]
        %v4221 = vld [vmem:[%s7 + $0x100] sm:$0xf]
        %v4222 = vld [vmem:[%s7 + $0x104] sm:$0xf]
        %v4223 = vld [vmem:[%s7 + $0x108] sm:$0xf]
        %v4224 = vld [vmem:[%s7 + $0x10c] sm:$0xf]
        %v4225 = vld [vmem:[%s7 + $0x110] sm:$0xf]
        %v4226 = vld [vmem:[%s7 + $0x114] sm:$0xf]
        %v4227 = vld [vmem:[%s7 + $0x118] sm:$0xf]
        %v4228 = vld [vmem:[%s7 + $0x11c] sm:$0xf]
        %v4229 = vld [vmem:[%s7 + $0x120] sm:$0xf]
        %v4230 = vld [vmem:[%s7 + $0x124] sm:$0xf]
        %v4231 = vld [vmem:[%s7 + $0x128] sm:$0xf]
        %v4232 = vld [vmem:[%s7 + $0x12c] sm:$0xf]
        %v4233 = vld [vmem:[%s7 + $0x130] sm:$0xf]
        %v4234 = vld [vmem:[%s7 + $0x134] sm:$0xf]
        %v4235 = vld [vmem:[%s7 + $0x138] sm:$0xf]
        %v4236 = vld [vmem:[%s7 + $0x13c] sm:$0xf]
        %v4237 = vld [vmem:[%s7 + $0x140] sm:$0xf]
        %v4238 = vld [vmem:[%s7 + $0x144] sm:$0xf]
        %v4239 = vld [vmem:[%s7 + $0x148] sm:$0xf]
        %v4240 = vld [vmem:[%s7 + $0x14c] sm:$0xf]
        %v4241 = vld [vmem:[%s7 + $0x150] sm:$0xf]
        %v4242 = vld [vmem:[%s7 + $0x154] sm:$0xf]
        %v4243 = vld [vmem:[%s7 + $0x158] sm:$0xf]
        %v4244 = vld [vmem:[%s7 + $0x15c] sm:$0xf]
        %v4245 = vld [vmem:[%s7 + $0x160] sm:$0xf]
        %v4246 = vld [vmem:[%s7 + $0x164] sm:$0xf]
        %v4247 = vld [vmem:[%s7 + $0x168] sm:$0xf]
        %v4248 = vld [vmem:[%s7 + $0x16c] sm:$0xf]
        %v4249 = vld [vmem:[%s7 + $0x170] sm:$0xf]
        %v4250 = vld [vmem:[%s7 + $0x174] sm:$0xf]
        %v4251 = vld [vmem:[%s7 + $0x178] sm:$0xf]
        %v4252 = vld [vmem:[%s7 + $0x17c] sm:$0xf]
        %v4253 = vld [vmem:[%s7 + $0x180] sm:$0xf]
        %v4254 = vld [vmem:[%s7 + $0x184] sm:$0xf]
        %v4255 = vld [vmem:[%s7 + $0x188] sm:$0xf]
        %v4256 = vld [vmem:[%s7 + $0x18c] sm:$0xf]
        %v4257 = vld [vmem:[%s7 + $0x190] sm:$0xf]
        %v4258 = vld [vmem:[%s7 + $0x194] sm:$0xf]
        %v4259 = vld [vmem:[%s7 + $0x198] sm:$0xf]
        %v4260 = vld [vmem:[%s7 + $0x19c] sm:$0xf]
        %v4261 = vld [vmem:[%s7 + $0x1a0] sm:$0xf]
        %v4262 = vld [vmem:[%s7 + $0x1a4] sm:$0xf]
        %v4263 = vld [vmem:[%s7 + $0x1a8] sm:$0xf]
        %v4264 = vld [vmem:[%s7 + $0x1ac] sm:$0xf]
        %v4265 = vld [vmem:[%s7 + $0x1b0] sm:$0xf]
        %v4266 = vld [vmem:[%s7 + $0x1b4] sm:$0xf]
        %v4267 = vld [vmem:[%s7 + $0x1b8] sm:$0xf]
        %v4268 = vld [vmem:[%s7 + $0x1bc] sm:$0xf]
        %v4269 = vld [vmem:[%s7 + $0x1c0] sm:$0xf]
        %v4270 = vld [vmem:[%s7 + $0x1c4] sm:$0xf]
        %v4271 = vld [vmem:[%s7 + $0x1c8] sm:$0xf]
        %v4272 = vld [vmem:[%s7 + $0x1cc] sm:$0xf]
        %v4273 = vld [vmem:[%s7 + $0x1d0] sm:$0xf]
        %v4274 = vld [vmem:[%s7 + $0x1d4] sm:$0xf]
        %v4275 = vld [vmem:[%s7 + $0x1d8] sm:$0xf]
        %v4276 = vld [vmem:[%s7 + $0x1dc] sm:$0xf]
        %v4277 = vld [vmem:[%s7 + $0x1e0] sm:$0xf]
        %v4278 = vld [vmem:[%s7 + $0x1e4] sm:$0xf]
        %v4279 = vld [vmem:[%s7 + $0x1e8] sm:$0xf]
        %v4280 = vld [vmem:[%s7 + $0x1ec] sm:$0xf]
        %v4281 = vld [vmem:[%s7 + $0x1f0] sm:$0xf]
        %v4282 = vld [vmem:[%s7 + $0x1f4] sm:$0xf]
        %v4283 = vld [vmem:[%s7 + $0x1f8] sm:$0xf]
        %v4284 = vld [vmem:[%s7 + $0x1fc] sm:$0xf]
        %v4285 = vpack.c.bf16 %v4148, %v4145
        %v4286 = vpack.c.bf16 %v4149, %v4146
        %v4287 = vpack.c.bf16 %v4150, %v4147
        %v4288 = vpack.c.bf16 %v4154, %v4151
        %v4289 = vpack.c.bf16 %v4155, %v4152
        %v4290 = vpack.c.bf16 %v4156, %v4153
        %4292 = vset.pattern.permute.xlu0 3
        %4293 = vperm.xlu0 %4292, %v3961
        %v4294 = vpop.permute.xlu0 %4293
        %4297 = vset.pattern.permute.xlu0 3
        %4298 = vperm.xlu0 %4297, %v3962
        %v4299 = vpop.permute.xlu0 %4298
        %4302 = vset.pattern.permute.xlu0 3
        %4303 = vperm.xlu0 %4302, %v3963
        %v4304 = vpop.permute.xlu0 %4303
        %4307 = vset.pattern.permute.xlu0 3
        %4308 = vperm.xlu0 %4307, %v3964
        %v4309 = vpop.permute.xlu0 %4308
        %4312 = vset.pattern.permute.xlu0 3
        %4313 = vperm.xlu0 %4312, %v3965
        %v4314 = vpop.permute.xlu0 %4313
        %4317 = vset.pattern.permute.xlu0 3
        %4318 = vperm.xlu0 %4317, %v3966
        %v4319 = vpop.permute.xlu0 %4318
        %4322 = vset.pattern.permute.xlu0 3
        %4323 = vperm.xlu0 %4322, %v3967
        %v4324 = vpop.permute.xlu0 %4323
        %4327 = vset.pattern.permute.xlu0 3
        %4328 = vperm.xlu0 %4327, %v3968
        %v4329 = vpop.permute.xlu0 %4328
        %4332 = vset.pattern.permute.xlu0 3
        %4333 = vperm.xlu0 %4332, %v3969
        %v4334 = vpop.permute.xlu0 %4333
        %4337 = vset.pattern.permute.xlu0 3
        %4338 = vperm.xlu0 %4337, %v3970
        %v4339 = vpop.permute.xlu0 %4338
        %4342 = vset.pattern.permute.xlu0 3
        %4343 = vperm.xlu0 %4342, %v3971
        %v4344 = vpop.permute.xlu0 %4343
        %4347 = vset.pattern.permute.xlu0 3
        %4348 = vperm.xlu0 %4347, %v3972
        %v4349 = vpop.permute.xlu0 %4348
        %4352 = vset.pattern.permute.xlu0 3
        %4353 = vperm.xlu0 %4352, %v3973
        %v4354 = vpop.permute.xlu0 %4353
        %4357 = vset.pattern.permute.xlu0 3
        %4358 = vperm.xlu0 %4357, %v3974
        %v4359 = vpop.permute.xlu0 %4358
        %4362 = vset.pattern.permute.xlu0 3
        %4363 = vperm.xlu0 %4362, %v3975
        %v4364 = vpop.permute.xlu0 %4363
        %4367 = vset.pattern.permute.xlu0 3
        %4368 = vperm.xlu0 %4367, %v3976
        %v4369 = vpop.permute.xlu0 %4368
        %4372 = vset.pattern.permute.xlu0 3
        %4373 = vperm.xlu0 %4372, %v3977
        %v4374 = vpop.permute.xlu0 %4373
        %4377 = vset.pattern.permute.xlu0 3
        %4378 = vperm.xlu0 %4377, %v3978
        %v4379 = vpop.permute.xlu0 %4378
        %4382 = vset.pattern.permute.xlu0 3
        %4383 = vperm.xlu0 %4382, %v3979
        %v4384 = vpop.permute.xlu0 %4383
        %4387 = vset.pattern.permute.xlu0 3
        %4388 = vperm.xlu0 %4387, %v3980
        %v4389 = vpop.permute.xlu0 %4388
        %4392 = vset.pattern.permute.xlu0 3
        %4393 = vperm.xlu0 %4392, %v3981
        %v4394 = vpop.permute.xlu0 %4393
        %4397 = vset.pattern.permute.xlu0 3
        %4398 = vperm.xlu0 %4397, %v3982
        %v4399 = vpop.permute.xlu0 %4398
        %4402 = vset.pattern.permute.xlu0 3
        %4403 = vperm.xlu0 %4402, %v3983
        %v4404 = vpop.permute.xlu0 %4403
        %4407 = vset.pattern.permute.xlu0 3
        %4408 = vperm.xlu0 %4407, %v3984
        %v4409 = vpop.permute.xlu0 %4408
        %4412 = vset.pattern.permute.xlu0 3
        %4413 = vperm.xlu0 %4412, %v3985
        %v4414 = vpop.permute.xlu0 %4413
        %4417 = vset.pattern.permute.xlu0 3
        %4418 = vperm.xlu0 %4417, %v3986
        %v4419 = vpop.permute.xlu0 %4418
        %4422 = vset.pattern.permute.xlu0 3
        %4423 = vperm.xlu0 %4422, %v3987
        %v4424 = vpop.permute.xlu0 %4423
        %4427 = vset.pattern.permute.xlu0 3
        %4428 = vperm.xlu0 %4427, %v3988
        %v4429 = vpop.permute.xlu0 %4428
        %4432 = vset.pattern.permute.xlu0 3
        %4433 = vperm.xlu0 %4432, %v3989
        %v4434 = vpop.permute.xlu0 %4433
        %4437 = vset.pattern.permute.xlu0 3
        %4438 = vperm.xlu0 %4437, %v3990
        %v4439 = vpop.permute.xlu0 %4438
        %4442 = vset.pattern.permute.xlu0 3
        %4443 = vperm.xlu0 %4442, %v3991
        %v4444 = vpop.permute.xlu0 %4443
        %4447 = vset.pattern.permute.xlu0 3
        %4448 = vperm.xlu0 %4447, %v3992
        %v4449 = vpop.permute.xlu0 %4448
        %4452 = vset.pattern.permute.xlu0 3
        %4453 = vperm.xlu0 %4452, %v3993
        %v4454 = vpop.permute.xlu0 %4453
        %4457 = vset.pattern.permute.xlu0 3
        %4458 = vperm.xlu0 %4457, %v3994
        %v4459 = vpop.permute.xlu0 %4458
        %4462 = vset.pattern.permute.xlu0 3
        %4463 = vperm.xlu0 %4462, %v3995
        %v4464 = vpop.permute.xlu0 %4463
        %4467 = vset.pattern.permute.xlu0 3
        %4468 = vperm.xlu0 %4467, %v3996
        %v4469 = vpop.permute.xlu0 %4468
        %4472 = vset.pattern.permute.xlu0 3
        %4473 = vperm.xlu0 %4472, %v3997
        %v4474 = vpop.permute.xlu0 %4473
        %4477 = vset.pattern.permute.xlu0 3
        %4478 = vperm.xlu0 %4477, %v3998
        %v4479 = vpop.permute.xlu0 %4478
        %4482 = vset.pattern.permute.xlu0 3
        %4483 = vperm.xlu0 %4482, %v3999
        %v4484 = vpop.permute.xlu0 %4483
        %4487 = vset.pattern.permute.xlu0 3
        %4488 = vperm.xlu0 %4487, %v4000
        %v4489 = vpop.permute.xlu0 %4488
        %4492 = vset.pattern.permute.xlu0 3
        %4493 = vperm.xlu0 %4492, %v4001
        %v4494 = vpop.permute.xlu0 %4493
        %4497 = vset.pattern.permute.xlu0 3
        %4498 = vperm.xlu0 %4497, %v4002
        %v4499 = vpop.permute.xlu0 %4498
        %4502 = vset.pattern.permute.xlu0 3
        %4503 = vperm.xlu0 %4502, %v4003
        %v4504 = vpop.permute.xlu0 %4503
        %4507 = vset.pattern.permute.xlu0 3
        %4508 = vperm.xlu0 %4507, %v4004
        %v4509 = vpop.permute.xlu0 %4508
        %4512 = vset.pattern.permute.xlu0 3
        %4513 = vperm.xlu0 %4512, %v4005
        %v4514 = vpop.permute.xlu0 %4513
        %4517 = vset.pattern.permute.xlu0 3
        %4518 = vperm.xlu0 %4517, %v4006
        %v4519 = vpop.permute.xlu0 %4518
        %4522 = vset.pattern.permute.xlu0 3
        %4523 = vperm.xlu0 %4522, %v4007
        %v4524 = vpop.permute.xlu0 %4523
        %4527 = vset.pattern.permute.xlu0 3
        %4528 = vperm.xlu0 %4527, %v4008
        %v4529 = vpop.permute.xlu0 %4528
        %4532 = vset.pattern.permute.xlu0 3
        %4533 = vperm.xlu0 %4532, %v4009
        %v4534 = vpop.permute.xlu0 %4533
        %4537 = vset.pattern.permute.xlu0 3
        %4538 = vperm.xlu0 %4537, %v4010
        %v4539 = vpop.permute.xlu0 %4538
        %4542 = vset.pattern.permute.xlu0 3
        %4543 = vperm.xlu0 %4542, %v4011
        %v4544 = vpop.permute.xlu0 %4543
        %4547 = vset.pattern.permute.xlu0 3
        %4548 = vperm.xlu0 %4547, %v4012
        %v4549 = vpop.permute.xlu0 %4548
        %4552 = vset.pattern.permute.xlu0 3
        %4553 = vperm.xlu0 %4552, %v4013
        %v4554 = vpop.permute.xlu0 %4553
        %4557 = vset.pattern.permute.xlu0 3
        %4558 = vperm.xlu0 %4557, %v4014
        %v4559 = vpop.permute.xlu0 %4558
        %4562 = vset.pattern.permute.xlu0 3
        %4563 = vperm.xlu0 %4562, %v4015
        %v4564 = vpop.permute.xlu0 %4563
        %4567 = vset.pattern.permute.xlu0 3
        %4568 = vperm.xlu0 %4567, %v4016
        %v4569 = vpop.permute.xlu0 %4568
        %4572 = vset.pattern.permute.xlu0 3
        %4573 = vperm.xlu0 %4572, %v4017
        %v4574 = vpop.permute.xlu0 %4573
        %4577 = vset.pattern.permute.xlu0 3
        %4578 = vperm.xlu0 %4577, %v4018
        %v4579 = vpop.permute.xlu0 %4578
        %4582 = vset.pattern.permute.xlu0 3
        %4583 = vperm.xlu0 %4582, %v4019
        %v4584 = vpop.permute.xlu0 %4583
        %4587 = vset.pattern.permute.xlu0 3
        %4588 = vperm.xlu0 %4587, %v4020
        %v4589 = vpop.permute.xlu0 %4588
        %4592 = vset.pattern.permute.xlu0 3
        %4593 = vperm.xlu0 %4592, %v4021
        %v4594 = vpop.permute.xlu0 %4593
        %4597 = vset.pattern.permute.xlu0 3
        %4598 = vperm.xlu0 %4597, %v4022
        %v4599 = vpop.permute.xlu0 %4598
        %4602 = vset.pattern.permute.xlu0 3
        %4603 = vperm.xlu0 %4602, %v4023
        %v4604 = vpop.permute.xlu0 %4603
        %4607 = vset.pattern.permute.xlu0 3
        %4608 = vperm.xlu0 %4607, %v4024
        %v4609 = vpop.permute.xlu0 %4608
        %4612 = vset.pattern.permute.xlu0 3
        %4613 = vperm.xlu0 %4612, %v4025
        %v4614 = vpop.permute.xlu0 %4613
        %4617 = vset.pattern.permute.xlu0 3
        %4618 = vperm.xlu0 %4617, %v4026
        %v4619 = vpop.permute.xlu0 %4618
        %4622 = vset.pattern.permute.xlu0 3
        %4623 = vperm.xlu0 %4622, %v4027
        %v4624 = vpop.permute.xlu0 %4623
        %4627 = vset.pattern.permute.xlu0 3
        %4628 = vperm.xlu0 %4627, %v4028
        %v4629 = vpop.permute.xlu0 %4628
        %4632 = vset.pattern.permute.xlu0 3
        %4633 = vperm.xlu0 %4632, %v4029
        %v4634 = vpop.permute.xlu0 %4633
        %4637 = vset.pattern.permute.xlu0 3
        %4638 = vperm.xlu0 %4637, %v4030
        %v4639 = vpop.permute.xlu0 %4638
        %4642 = vset.pattern.permute.xlu0 3
        %4643 = vperm.xlu0 %4642, %v4031
        %v4644 = vpop.permute.xlu0 %4643
        %4647 = vset.pattern.permute.xlu0 3
        %4648 = vperm.xlu0 %4647, %v4032
        %v4649 = vpop.permute.xlu0 %4648
        %4652 = vset.pattern.permute.xlu0 3
        %4653 = vperm.xlu0 %4652, %v4033
        %v4654 = vpop.permute.xlu0 %4653
        %4657 = vset.pattern.permute.xlu0 3
        %4658 = vperm.xlu0 %4657, %v4034
        %v4659 = vpop.permute.xlu0 %4658
        %4662 = vset.pattern.permute.xlu0 3
        %4663 = vperm.xlu0 %4662, %v4035
        %v4664 = vpop.permute.xlu0 %4663
        %4667 = vset.pattern.permute.xlu0 3
        %4668 = vperm.xlu0 %4667, %v4036
        %v4669 = vpop.permute.xlu0 %4668
        %4672 = vset.pattern.permute.xlu0 3
        %4673 = vperm.xlu0 %4672, %v4037
        %v4674 = vpop.permute.xlu0 %4673
        %4677 = vset.pattern.permute.xlu0 3
        %4678 = vperm.xlu0 %4677, %v4038
        %v4679 = vpop.permute.xlu0 %4678
        %4682 = vset.pattern.permute.xlu0 3
        %4683 = vperm.xlu0 %4682, %v4039
        %v4684 = vpop.permute.xlu0 %4683
        %4687 = vset.pattern.permute.xlu0 3
        %4688 = vperm.xlu0 %4687, %v4040
        %v4689 = vpop.permute.xlu0 %4688
        %4692 = vset.pattern.permute.xlu0 3
        %4693 = vperm.xlu0 %4692, %v4041
        %v4694 = vpop.permute.xlu0 %4693
        %4697 = vset.pattern.permute.xlu0 3
        %4698 = vperm.xlu0 %4697, %v4042
        %v4699 = vpop.permute.xlu0 %4698
        %4702 = vset.pattern.permute.xlu0 3
        %4703 = vperm.xlu0 %4702, %v4043
        %v4704 = vpop.permute.xlu0 %4703
        %4707 = vset.pattern.permute.xlu0 3
        %4708 = vperm.xlu0 %4707, %v4044
        %v4709 = vpop.permute.xlu0 %4708
        %4712 = vset.pattern.permute.xlu0 3
        %4713 = vperm.xlu0 %4712, %v4045
        %v4714 = vpop.permute.xlu0 %4713
        %4717 = vset.pattern.permute.xlu0 3
        %4718 = vperm.xlu0 %4717, %v4046
        %v4719 = vpop.permute.xlu0 %4718
        %4722 = vset.pattern.permute.xlu0 3
        %4723 = vperm.xlu0 %4722, %v4047
        %v4724 = vpop.permute.xlu0 %4723
        %4727 = vset.pattern.permute.xlu0 3
        %4728 = vperm.xlu0 %4727, %v4048
        %v4729 = vpop.permute.xlu0 %4728
        %4732 = vset.pattern.permute.xlu0 3
        %4733 = vperm.xlu0 %4732, %v4049
        %v4734 = vpop.permute.xlu0 %4733
        %4737 = vset.pattern.permute.xlu0 3
        %4738 = vperm.xlu0 %4737, %v4050
        %v4739 = vpop.permute.xlu0 %4738
        %4742 = vset.pattern.permute.xlu0 3
        %4743 = vperm.xlu0 %4742, %v4051
        %v4744 = vpop.permute.xlu0 %4743
        %4747 = vset.pattern.permute.xlu0 3
        %4748 = vperm.xlu0 %4747, %v4052
        %v4749 = vpop.permute.xlu0 %4748
        %4752 = vset.pattern.permute.xlu0 3
        %4753 = vperm.xlu0 %4752, %v4053
        %v4754 = vpop.permute.xlu0 %4753
        %4757 = vset.pattern.permute.xlu0 3
        %4758 = vperm.xlu0 %4757, %v4054
        %v4759 = vpop.permute.xlu0 %4758
        %4762 = vset.pattern.permute.xlu0 3
        %4763 = vperm.xlu0 %4762, %v4055
        %v4764 = vpop.permute.xlu0 %4763
        %4767 = vset.pattern.permute.xlu0 3
        %4768 = vperm.xlu0 %4767, %v4056
        %v4769 = vpop.permute.xlu0 %4768
        %4772 = vset.pattern.permute.xlu0 3
        %4773 = vperm.xlu0 %4772, %v4057
        %v4774 = vpop.permute.xlu0 %4773
        %4777 = vset.pattern.permute.xlu0 3
        %4778 = vperm.xlu0 %4777, %v4058
        %v4779 = vpop.permute.xlu0 %4778
        %4782 = vset.pattern.permute.xlu0 3
        %4783 = vperm.xlu0 %4782, %v4059
        %v4784 = vpop.permute.xlu0 %4783
        %4787 = vset.pattern.permute.xlu0 3
        %4788 = vperm.xlu0 %4787, %v4060
        %v4789 = vpop.permute.xlu0 %4788
        %4792 = vset.pattern.permute.xlu0 3
        %4793 = vperm.xlu0 %4792, %v4061
        %v4794 = vpop.permute.xlu0 %4793
        %4797 = vset.pattern.permute.xlu0 3
        %4798 = vperm.xlu0 %4797, %v4062
        %v4799 = vpop.permute.xlu0 %4798
        %4802 = vset.pattern.permute.xlu0 3
        %4803 = vperm.xlu0 %4802, %v4063
        %v4804 = vpop.permute.xlu0 %4803
        %4807 = vset.pattern.permute.xlu0 3
        %4808 = vperm.xlu0 %4807, %v4064
        %v4809 = vpop.permute.xlu0 %4808
        %4812 = vset.pattern.permute.xlu0 3
        %4813 = vperm.xlu0 %4812, %v4065
        %v4814 = vpop.permute.xlu0 %4813
        %4817 = vset.pattern.permute.xlu0 3
        %4818 = vperm.xlu0 %4817, %v4066
        %v4819 = vpop.permute.xlu0 %4818
        %4822 = vset.pattern.permute.xlu0 3
        %4823 = vperm.xlu0 %4822, %v4067
        %v4824 = vpop.permute.xlu0 %4823
        %4827 = vset.pattern.permute.xlu0 3
        %4828 = vperm.xlu0 %4827, %v4068
        %v4829 = vpop.permute.xlu0 %4828
        %4832 = vset.pattern.permute.xlu0 3
        %4833 = vperm.xlu0 %4832, %v4069
        %v4834 = vpop.permute.xlu0 %4833
        %4837 = vset.pattern.permute.xlu0 3
        %4838 = vperm.xlu0 %4837, %v4070
        %v4839 = vpop.permute.xlu0 %4838
        %4842 = vset.pattern.permute.xlu0 3
        %4843 = vperm.xlu0 %4842, %v4071
        %v4844 = vpop.permute.xlu0 %4843
        %4847 = vset.pattern.permute.xlu0 3
        %4848 = vperm.xlu0 %4847, %v4072
        %v4849 = vpop.permute.xlu0 %4848
        %4852 = vset.pattern.permute.xlu0 3
        %4853 = vperm.xlu0 %4852, %v4073
        %v4854 = vpop.permute.xlu0 %4853
        %4857 = vset.pattern.permute.xlu0 3
        %4858 = vperm.xlu0 %4857, %v4074
        %v4859 = vpop.permute.xlu0 %4858
        %4862 = vset.pattern.permute.xlu0 3
        %4863 = vperm.xlu0 %4862, %v4075
        %v4864 = vpop.permute.xlu0 %4863
        %4867 = vset.pattern.permute.xlu0 3
        %4868 = vperm.xlu0 %4867, %v4076
        %v4869 = vpop.permute.xlu0 %4868
        %4872 = vset.pattern.permute.xlu0 3
        %4873 = vperm.xlu0 %4872, %v4077
        %v4874 = vpop.permute.xlu0 %4873
        %4877 = vset.pattern.permute.xlu0 3
        %4878 = vperm.xlu0 %4877, %v4078
        %v4879 = vpop.permute.xlu0 %4878
        %4882 = vset.pattern.permute.xlu0 3
        %4883 = vperm.xlu0 %4882, %v4079
        %v4884 = vpop.permute.xlu0 %4883
        %4887 = vset.pattern.permute.xlu0 3
        %4888 = vperm.xlu0 %4887, %v4080
        %v4889 = vpop.permute.xlu0 %4888
        %4892 = vset.pattern.permute.xlu0 3
        %4893 = vperm.xlu0 %4892, %v4081
        %v4894 = vpop.permute.xlu0 %4893
        %4897 = vset.pattern.permute.xlu0 3
        %4898 = vperm.xlu0 %4897, %v4082
        %v4899 = vpop.permute.xlu0 %4898
        %4902 = vset.pattern.permute.xlu0 3
        %4903 = vperm.xlu0 %4902, %v4083
        %v4904 = vpop.permute.xlu0 %4903
        %4907 = vset.pattern.permute.xlu0 3
        %4908 = vperm.xlu0 %4907, %v4084
        %v4909 = vpop.permute.xlu0 %4908
        %4912 = vset.pattern.permute.xlu0 3
        %4913 = vperm.xlu0 %4912, %v4085
        %v4914 = vpop.permute.xlu0 %4913
        %4917 = vset.pattern.permute.xlu0 3
        %4918 = vperm.xlu0 %4917, %v4086
        %v4919 = vpop.permute.xlu0 %4918
        %4922 = vset.pattern.permute.xlu0 3
        %4923 = vperm.xlu0 %4922, %v4087
        %v4924 = vpop.permute.xlu0 %4923
        %4927 = vset.pattern.permute.xlu0 3
        %4928 = vperm.xlu0 %4927, %v4088
        %v4929 = vpop.permute.xlu0 %4928
        %v5059 = vunpack.c.l.b16 %v4157
        %v5060 = vunpack.c.l.b16 %v4158
        %v5061 = vunpack.c.l.b16 %v4159
        %v5062 = vunpack.c.l.b16 %v4160
        %v5063 = vunpack.c.l.b16 %v4161
        %v5064 = vunpack.c.l.b16 %v4162
        %v5065 = vunpack.c.l.b16 %v4163
        %v5066 = vunpack.c.l.b16 %v4164
        %v5067 = vunpack.c.l.b16 %v4165
        %v5068 = vunpack.c.l.b16 %v4166
        %v5069 = vunpack.c.l.b16 %v4167
        %v5070 = vunpack.c.l.b16 %v4168
        %v5071 = vunpack.c.l.b16 %v4169
        %v5072 = vunpack.c.l.b16 %v4170
        %v5073 = vunpack.c.l.b16 %v4171
        %v5074 = vunpack.c.l.b16 %v4172
        %v5075 = vunpack.c.l.b16 %v4173
        %v5076 = vunpack.c.l.b16 %v4174
        %v5077 = vunpack.c.l.b16 %v4175
        %v5078 = vunpack.c.l.b16 %v4176
        %v5079 = vunpack.c.l.b16 %v4177
        %v5080 = vunpack.c.l.b16 %v4178
        %v5081 = vunpack.c.l.b16 %v4179
        %v5082 = vunpack.c.l.b16 %v4180
        %v5083 = vunpack.c.l.b16 %v4181
        %v5084 = vunpack.c.l.b16 %v4182
        %v5085 = vunpack.c.l.b16 %v4183
        %v5086 = vunpack.c.l.b16 %v4184
        %v5087 = vunpack.c.l.b16 %v4185
        %v5088 = vunpack.c.l.b16 %v4186
        %v5089 = vunpack.c.l.b16 %v4187
        %v5090 = vunpack.c.l.b16 %v4188
        %v5091 = vunpack.c.l.b16 %v4189
        %v5092 = vunpack.c.l.b16 %v4190
        %v5093 = vunpack.c.l.b16 %v4191
        %v5094 = vunpack.c.l.b16 %v4192
        %v5095 = vunpack.c.l.b16 %v4193
        %v5096 = vunpack.c.l.b16 %v4194
        %v5097 = vunpack.c.l.b16 %v4195
        %v5098 = vunpack.c.l.b16 %v4196
        %v5099 = vunpack.c.l.b16 %v4197
        %v5100 = vunpack.c.l.b16 %v4198
        %v5101 = vunpack.c.l.b16 %v4199
        %v5102 = vunpack.c.l.b16 %v4200
        %v5103 = vunpack.c.l.b16 %v4201
        %v5104 = vunpack.c.l.b16 %v4202
        %v5105 = vunpack.c.l.b16 %v4203
        %v5106 = vunpack.c.l.b16 %v4204
        %v5107 = vunpack.c.l.b16 %v4205
        %v5108 = vunpack.c.l.b16 %v4206
        %v5109 = vunpack.c.l.b16 %v4207
        %v5110 = vunpack.c.l.b16 %v4208
        %v5111 = vunpack.c.l.b16 %v4209
        %v5112 = vunpack.c.l.b16 %v4210
        %v5113 = vunpack.c.l.b16 %v4211
        %v5114 = vunpack.c.l.b16 %v4212
        %v5115 = vunpack.c.l.b16 %v4213
        %v5116 = vunpack.c.l.b16 %v4214
        %v5117 = vunpack.c.l.b16 %v4215
        %v5118 = vunpack.c.l.b16 %v4216
        %v5119 = vunpack.c.l.b16 %v4217
        %v5120 = vunpack.c.l.b16 %v4218
        %v5121 = vunpack.c.l.b16 %v4219
        %v5122 = vunpack.c.l.b16 %v4220
        %v5123 = vunpack.c.l.b16 %v4221
        %v5124 = vunpack.c.l.b16 %v4222
        %v5125 = vunpack.c.l.b16 %v4223
        %v5126 = vunpack.c.l.b16 %v4224
        %v5127 = vunpack.c.l.b16 %v4225
        %v5128 = vunpack.c.l.b16 %v4226
        %v5129 = vunpack.c.l.b16 %v4227
        %v5130 = vunpack.c.l.b16 %v4228
        %v5131 = vunpack.c.l.b16 %v4229
        %v5132 = vunpack.c.l.b16 %v4230
        %v5133 = vunpack.c.l.b16 %v4231
        %v5134 = vunpack.c.l.b16 %v4232
        %v5135 = vunpack.c.l.b16 %v4233
        %v5136 = vunpack.c.l.b16 %v4234
        %v5137 = vunpack.c.l.b16 %v4235
        %v5138 = vunpack.c.l.b16 %v4236
        %v5139 = vunpack.c.l.b16 %v4237
        %v5140 = vunpack.c.l.b16 %v4238
        %v5141 = vunpack.c.l.b16 %v4239
        %v5142 = vunpack.c.l.b16 %v4240
        %v5143 = vunpack.c.l.b16 %v4241
        %v5144 = vunpack.c.l.b16 %v4242
        %v5145 = vunpack.c.l.b16 %v4243
        %v5146 = vunpack.c.l.b16 %v4244
        %v5147 = vunpack.c.l.b16 %v4245
        %v5148 = vunpack.c.l.b16 %v4246
        %v5149 = vunpack.c.l.b16 %v4247
        %v5150 = vunpack.c.l.b16 %v4248
        %v5151 = vunpack.c.l.b16 %v4249
        %v5152 = vunpack.c.l.b16 %v4250
        %v5153 = vunpack.c.l.b16 %v4251
        %v5154 = vunpack.c.l.b16 %v4252
        %v5155 = vunpack.c.l.b16 %v4253
        %v5156 = vunpack.c.l.b16 %v4254
        %v5157 = vunpack.c.l.b16 %v4255
        %v5158 = vunpack.c.l.b16 %v4256
        %v5159 = vunpack.c.l.b16 %v4257
        %v5160 = vunpack.c.l.b16 %v4258
        %v5161 = vunpack.c.l.b16 %v4259
        %v5162 = vunpack.c.l.b16 %v4260
        %v5163 = vunpack.c.l.b16 %v4261
        %v5164 = vunpack.c.l.b16 %v4262
        %v5165 = vunpack.c.l.b16 %v4263
        %v5166 = vunpack.c.l.b16 %v4264
        %v5167 = vunpack.c.l.b16 %v4265
        %v5168 = vunpack.c.l.b16 %v4266
        %v5169 = vunpack.c.l.b16 %v4267
        %v5170 = vunpack.c.l.b16 %v4268
        %v5171 = vunpack.c.l.b16 %v4269
        %v5172 = vunpack.c.l.b16 %v4270
        %v5173 = vunpack.c.l.b16 %v4271
        %v5174 = vunpack.c.l.b16 %v4272
        %v5175 = vunpack.c.l.b16 %v4273
        %v5176 = vunpack.c.l.b16 %v4274
        %v5177 = vunpack.c.l.b16 %v4275
        %v5178 = vunpack.c.l.b16 %v4276
        %v5179 = vunpack.c.l.b16 %v4277
        %v5180 = vunpack.c.l.b16 %v4278
        %v5181 = vunpack.c.l.b16 %v4279
        %v5182 = vunpack.c.l.b16 %v4280
        %v5183 = vunpack.c.l.b16 %v4281
        %v5184 = vunpack.c.l.b16 %v4282
        %v5185 = vunpack.c.l.b16 %v4283
        %v5186 = vunpack.c.l.b16 %v4284
        %v5187 = vpack.c.b16 %v5060, %v5059
        %v5188 = vpack.c.b16 %v5062, %v5061
        %v5189 = vpack.c.b16 %v5064, %v5063
        %v5190 = vpack.c.b16 %v5066, %v5065
        %v5191 = vpack.c.b16 %v5068, %v5067
        %v5192 = vpack.c.b16 %v5070, %v5069
        %v5193 = vpack.c.b16 %v5072, %v5071
        %v5194 = vpack.c.b16 %v5074, %v5073
        %v5195 = vpack.c.b16 %v5076, %v5075
        %v5196 = vpack.c.b16 %v5078, %v5077
        %v5197 = vpack.c.b16 %v5080, %v5079
        %v5198 = vpack.c.b16 %v5082, %v5081
        %v5199 = vpack.c.b16 %v5084, %v5083
        %v5200 = vpack.c.b16 %v5086, %v5085
        %v5201 = vpack.c.b16 %v5088, %v5087
        %v5202 = vpack.c.b16 %v5090, %v5089
        %v5203 = vpack.c.b16 %v5092, %v5091
        %v5204 = vpack.c.b16 %v5094, %v5093
        %v5205 = vpack.c.b16 %v5096, %v5095
        %v5206 = vpack.c.b16 %v5098, %v5097
        %v5207 = vpack.c.b16 %v5100, %v5099
        %v5208 = vpack.c.b16 %v5102, %v5101
        %v5209 = vpack.c.b16 %v5104, %v5103
        %v5210 = vpack.c.b16 %v5106, %v5105
        %v5211 = vpack.c.b16 %v5108, %v5107
        %v5212 = vpack.c.b16 %v5110, %v5109
        %v5213 = vpack.c.b16 %v5112, %v5111
        %v5214 = vpack.c.b16 %v5114, %v5113
        %v5215 = vpack.c.b16 %v5116, %v5115
        %v5216 = vpack.c.b16 %v5118, %v5117
        %v5217 = vpack.c.b16 %v5120, %v5119
        %v5218 = vpack.c.b16 %v5122, %v5121
        %v5219 = vpack.c.b16 %v5124, %v5123
        %v5220 = vpack.c.b16 %v5126, %v5125
        %v5221 = vpack.c.b16 %v5128, %v5127
        %v5222 = vpack.c.b16 %v5130, %v5129
        %v5223 = vpack.c.b16 %v5132, %v5131
        %v5224 = vpack.c.b16 %v5134, %v5133
        %v5225 = vpack.c.b16 %v5136, %v5135
        %v5226 = vpack.c.b16 %v5138, %v5137
        %v5227 = vpack.c.b16 %v5140, %v5139
        %v5228 = vpack.c.b16 %v5142, %v5141
        %v5229 = vpack.c.b16 %v5144, %v5143
        %v5230 = vpack.c.b16 %v5146, %v5145
        %v5231 = vpack.c.b16 %v5148, %v5147
        %v5232 = vpack.c.b16 %v5150, %v5149
        %v5233 = vpack.c.b16 %v5152, %v5151
        %v5234 = vpack.c.b16 %v5154, %v5153
        %v5235 = vpack.c.b16 %v5156, %v5155
        %v5236 = vpack.c.b16 %v5158, %v5157
        %v5237 = vpack.c.b16 %v5160, %v5159
        %v5238 = vpack.c.b16 %v5162, %v5161
        %v5239 = vpack.c.b16 %v5164, %v5163
        %v5240 = vpack.c.b16 %v5166, %v5165
        %v5241 = vpack.c.b16 %v5168, %v5167
        %v5242 = vpack.c.b16 %v5170, %v5169
        %v5243 = vpack.c.b16 %v5172, %v5171
        %v5244 = vpack.c.b16 %v5174, %v5173
        %v5245 = vpack.c.b16 %v5176, %v5175
        %v5246 = vpack.c.b16 %v5178, %v5177
        %v5247 = vpack.c.b16 %v5180, %v5179
        %v5248 = vpack.c.b16 %v5182, %v5181
        %v5249 = vpack.c.b16 %v5184, %v5183
        %v5250 = vpack.c.b16 %v5186, %v5185
        %vm5251 = vcmask 261120
        %v5253 = vsel %vm5251, %v5187, 0
        %v5256 = vsel %vm5251, %v5188, 0
        %v5259 = vsel %vm5251, %v5189, 0
        %v5262 = vsel %vm5251, %v5190, 0
        %v5265 = vsel %vm5251, %v5191, 0
        %v5268 = vsel %vm5251, %v5192, 0
        %v5271 = vsel %vm5251, %v5193, 0
        %v5274 = vsel %vm5251, %v5194, 0
        %v5277 = vsel %vm5251, %v5195, 0
        %v5280 = vsel %vm5251, %v5196, 0
        %v5283 = vsel %vm5251, %v5197, 0
        %v5286 = vsel %vm5251, %v5198, 0
        %v5289 = vsel %vm5251, %v5199, 0
        %v5292 = vsel %vm5251, %v5200, 0
        %v5295 = vsel %vm5251, %v5201, 0
        %v5298 = vsel %vm5251, %v5202, 0
        %v5301 = vsel %vm5251, %v5203, 0
        %v5304 = vsel %vm5251, %v5204, 0
        %v5307 = vsel %vm5251, %v5205, 0
        %v5310 = vsel %vm5251, %v5206, 0
        %v5313 = vsel %vm5251, %v5207, 0
        %v5316 = vsel %vm5251, %v5208, 0
        %v5319 = vsel %vm5251, %v5209, 0
        %v5322 = vsel %vm5251, %v5210, 0
        %v5325 = vsel %vm5251, %v5211, 0
        %v5328 = vsel %vm5251, %v5212, 0
        %v5331 = vsel %vm5251, %v5213, 0
        %v5334 = vsel %vm5251, %v5214, 0
        %v5337 = vsel %vm5251, %v5215, 0
        %v5340 = vsel %vm5251, %v5216, 0
        %v5343 = vsel %vm5251, %v5217, 0
        %v5346 = vsel %vm5251, %v5218, 0
        %v5349 = vsel %vm5251, %v5219, 0
        %v5352 = vsel %vm5251, %v5220, 0
        %v5355 = vsel %vm5251, %v5221, 0
        %v5358 = vsel %vm5251, %v5222, 0
        %v5361 = vsel %vm5251, %v5223, 0
        %v5364 = vsel %vm5251, %v5224, 0
        %v5367 = vsel %vm5251, %v5225, 0
        %v5370 = vsel %vm5251, %v5226, 0
        %v5373 = vsel %vm5251, %v5227, 0
        %v5376 = vsel %vm5251, %v5228, 0
        %v5379 = vsel %vm5251, %v5229, 0
        %v5382 = vsel %vm5251, %v5230, 0
        %v5385 = vsel %vm5251, %v5231, 0
        %v5388 = vsel %vm5251, %v5232, 0
        %v5391 = vsel %vm5251, %v5233, 0
        %v5394 = vsel %vm5251, %v5234, 0
        %v5397 = vsel %vm5251, %v5235, 0
        %v5400 = vsel %vm5251, %v5236, 0
        %v5403 = vsel %vm5251, %v5237, 0
        %v5406 = vsel %vm5251, %v5238, 0
        %v5409 = vsel %vm5251, %v5239, 0
        %v5412 = vsel %vm5251, %v5240, 0
        %v5415 = vsel %vm5251, %v5241, 0
        %v5418 = vsel %vm5251, %v5242, 0
        %v5421 = vsel %vm5251, %v5243, 0
        %v5424 = vsel %vm5251, %v5244, 0
        %v5427 = vsel %vm5251, %v5245, 0
        %v5430 = vsel %vm5251, %v5246, 0
        %v5433 = vsel %vm5251, %v5247, 0
        %v5436 = vsel %vm5251, %v5248, 0
        %v5439 = vsel %vm5251, %v5249, 0
        %v5442 = vsel %vm5251, %v5250, 0
        %5444 = vmatpush.bf16.msra.mxu0 0
        %5445 = vmatpush.bf16.msra.mxu0 0
        %5446 = vmatpush.bf16.msra.mxu0 0
        %5447 = vmatpush.bf16.msra.mxu0 0
        %5448 = vmatpush.bf16.msra.mxu0 0
        %5449 = vmatpush.bf16.msra.mxu0 0
        %5450 = vmatpush.bf16.msra.mxu0 %v4288
        %5451 = vmatpush.bf16.msra.mxu0 %v4285
        %5452 = vmatmul.bf16.gmra.mxu0 %v5253
        %v5453 = vpop.f32.mrf.mxu0
        %v5454 = vadd.f32 %v4294, %v5453
        %v5455 = vpop.f32.mrf.mxu0
        %v5456 = vadd.f32 %v4299, %v5455
        %5457 = vmatmul.bf16.gmra.mxu0 %v5256
        %v5458 = vpop.f32.mrf.mxu0
        %v5459 = vadd.f32 %v4304, %v5458
        %v5460 = vpop.f32.mrf.mxu0
        %v5461 = vadd.f32 %v4309, %v5460
        %5462 = vmatmul.bf16.gmra.mxu0 %v5259
        %v5463 = vpop.f32.mrf.mxu0
        %v5464 = vadd.f32 %v4314, %v5463
        %v5465 = vpop.f32.mrf.mxu0
        %v5466 = vadd.f32 %v4319, %v5465
        %5467 = vmatmul.bf16.gmra.mxu0 %v5262
        %v5468 = vpop.f32.mrf.mxu0
        %v5469 = vadd.f32 %v4324, %v5468
        %v5470 = vpop.f32.mrf.mxu0
        %v5471 = vadd.f32 %v4329, %v5470
        %5472 = vmatmul.bf16.gmra.mxu0 %v5265
        %v5473 = vpop.f32.mrf.mxu0
        %v5474 = vadd.f32 %v4334, %v5473
        %v5475 = vpop.f32.mrf.mxu0
        %v5476 = vadd.f32 %v4339, %v5475
        %5477 = vmatmul.bf16.gmra.mxu0 %v5268
        %v5478 = vpop.f32.mrf.mxu0
        %v5479 = vadd.f32 %v4344, %v5478
        %v5480 = vpop.f32.mrf.mxu0
        %v5481 = vadd.f32 %v4349, %v5480
        %5482 = vmatmul.bf16.gmra.mxu0 %v5271
        %v5483 = vpop.f32.mrf.mxu0
        %v5484 = vadd.f32 %v4354, %v5483
        %v5485 = vpop.f32.mrf.mxu0
        %v5486 = vadd.f32 %v4359, %v5485
        %5487 = vmatmul.bf16.gmra.mxu0 %v5274
        %v5488 = vpop.f32.mrf.mxu0
        %v5489 = vadd.f32 %v4364, %v5488
        %v5490 = vpop.f32.mrf.mxu0
        %v5491 = vadd.f32 %v4369, %v5490
        %5492 = vmatmul.bf16.gmra.mxu0 %v5277
        %v5493 = vpop.f32.mrf.mxu0
        %v5494 = vadd.f32 %v4374, %v5493
        %v5495 = vpop.f32.mrf.mxu0
        %v5496 = vadd.f32 %v4379, %v5495
        %5497 = vmatmul.bf16.gmra.mxu0 %v5280
        %v5498 = vpop.f32.mrf.mxu0
        %v5499 = vadd.f32 %v4384, %v5498
        %v5500 = vpop.f32.mrf.mxu0
        %v5501 = vadd.f32 %v4389, %v5500
        %5502 = vmatmul.bf16.gmra.mxu0 %v5283
        %v5503 = vpop.f32.mrf.mxu0
        %v5504 = vadd.f32 %v4394, %v5503
        %v5505 = vpop.f32.mrf.mxu0
        %v5506 = vadd.f32 %v4399, %v5505
        %5507 = vmatmul.bf16.gmra.mxu0 %v5286
        %v5508 = vpop.f32.mrf.mxu0
        %v5509 = vadd.f32 %v4404, %v5508
        %v5510 = vpop.f32.mrf.mxu0
        %v5511 = vadd.f32 %v4409, %v5510
        %5512 = vmatmul.bf16.gmra.mxu0 %v5289
        %v5513 = vpop.f32.mrf.mxu0
        %v5514 = vadd.f32 %v4414, %v5513
        %v5515 = vpop.f32.mrf.mxu0
        %v5516 = vadd.f32 %v4419, %v5515
        %5517 = vmatmul.bf16.gmra.mxu0 %v5292
        %v5518 = vpop.f32.mrf.mxu0
        %v5519 = vadd.f32 %v4424, %v5518
        %v5520 = vpop.f32.mrf.mxu0
        %v5521 = vadd.f32 %v4429, %v5520
        %5522 = vmatmul.bf16.gmra.mxu0 %v5295
        %v5523 = vpop.f32.mrf.mxu0
        %v5524 = vadd.f32 %v4434, %v5523
        %v5525 = vpop.f32.mrf.mxu0
        %v5526 = vadd.f32 %v4439, %v5525
        %5527 = vmatmul.bf16.gmra.mxu0 %v5298
        %v5528 = vpop.f32.mrf.mxu0
        %v5529 = vadd.f32 %v4444, %v5528
        %v5530 = vpop.f32.mrf.mxu0
        %v5531 = vadd.f32 %v4449, %v5530
        %5532 = vmatmul.bf16.gmra.mxu0 %v5301
        %v5533 = vpop.f32.mrf.mxu0
        %v5534 = vadd.f32 %v4454, %v5533
        %v5535 = vpop.f32.mrf.mxu0
        %v5536 = vadd.f32 %v4459, %v5535
        %5537 = vmatmul.bf16.gmra.mxu0 %v5304
        %v5538 = vpop.f32.mrf.mxu0
        %v5539 = vadd.f32 %v4464, %v5538
        %v5540 = vpop.f32.mrf.mxu0
        %v5541 = vadd.f32 %v4469, %v5540
        %5542 = vmatmul.bf16.gmra.mxu0 %v5307
        %v5543 = vpop.f32.mrf.mxu0
        %v5544 = vadd.f32 %v4474, %v5543
        %v5545 = vpop.f32.mrf.mxu0
        %v5546 = vadd.f32 %v4479, %v5545
        %5547 = vmatmul.bf16.gmra.mxu0 %v5310
        %v5548 = vpop.f32.mrf.mxu0
        %v5549 = vadd.f32 %v4484, %v5548
        %v5550 = vpop.f32.mrf.mxu0
        %v5551 = vadd.f32 %v4489, %v5550
        %5552 = vmatmul.bf16.gmra.mxu0 %v5313
        %v5553 = vpop.f32.mrf.mxu0
        %v5554 = vadd.f32 %v4494, %v5553
        %v5555 = vpop.f32.mrf.mxu0
        %v5556 = vadd.f32 %v4499, %v5555
        %5557 = vmatmul.bf16.gmra.mxu0 %v5316
        %v5558 = vpop.f32.mrf.mxu0
        %v5559 = vadd.f32 %v4504, %v5558
        %v5560 = vpop.f32.mrf.mxu0
        %v5561 = vadd.f32 %v4509, %v5560
        %5562 = vmatmul.bf16.gmra.mxu0 %v5319
        %v5563 = vpop.f32.mrf.mxu0
        %v5564 = vadd.f32 %v4514, %v5563
        %v5565 = vpop.f32.mrf.mxu0
        %v5566 = vadd.f32 %v4519, %v5565
        %5567 = vmatmul.bf16.gmra.mxu0 %v5322
        %v5568 = vpop.f32.mrf.mxu0
        %v5569 = vadd.f32 %v4524, %v5568
        %v5570 = vpop.f32.mrf.mxu0
        %v5571 = vadd.f32 %v4529, %v5570
        %5572 = vmatmul.bf16.gmra.mxu0 %v5325
        %v5573 = vpop.f32.mrf.mxu0
        %v5574 = vadd.f32 %v4534, %v5573
        %v5575 = vpop.f32.mrf.mxu0
        %v5576 = vadd.f32 %v4539, %v5575
        %5577 = vmatmul.bf16.gmra.mxu0 %v5328
        %v5578 = vpop.f32.mrf.mxu0
        %v5579 = vadd.f32 %v4544, %v5578
        %v5580 = vpop.f32.mrf.mxu0
        %v5581 = vadd.f32 %v4549, %v5580
        %5582 = vmatmul.bf16.gmra.mxu0 %v5331
        %v5583 = vpop.f32.mrf.mxu0
        %v5584 = vadd.f32 %v4554, %v5583
        %v5585 = vpop.f32.mrf.mxu0
        %v5586 = vadd.f32 %v4559, %v5585
        %5587 = vmatmul.bf16.gmra.mxu0 %v5334
        %v5588 = vpop.f32.mrf.mxu0
        %v5589 = vadd.f32 %v4564, %v5588
        %v5590 = vpop.f32.mrf.mxu0
        %v5591 = vadd.f32 %v4569, %v5590
        %5592 = vmatmul.bf16.gmra.mxu0 %v5337
        %v5593 = vpop.f32.mrf.mxu0
        %v5594 = vadd.f32 %v4574, %v5593
        %v5595 = vpop.f32.mrf.mxu0
        %v5596 = vadd.f32 %v4579, %v5595
        %5597 = vmatmul.bf16.gmra.mxu0 %v5340
        %v5598 = vpop.f32.mrf.mxu0
        %v5599 = vadd.f32 %v4584, %v5598
        %v5600 = vpop.f32.mrf.mxu0
        %v5601 = vadd.f32 %v4589, %v5600
        %5602 = vmatmul.bf16.gmra.mxu0 %v5343
        %v5603 = vpop.f32.mrf.mxu0
        %v5604 = vadd.f32 %v4594, %v5603
        %v5605 = vpop.f32.mrf.mxu0
        %v5606 = vadd.f32 %v4599, %v5605
        %5607 = vmatmul.bf16.gmra.mxu0 %v5346
        %v5608 = vpop.f32.mrf.mxu0
        %v5609 = vadd.f32 %v4604, %v5608
        %v5610 = vpop.f32.mrf.mxu0
        %v5611 = vadd.f32 %v4609, %v5610
        %5612 = vmatmul.bf16.gmra.mxu0 %v5349
        %v5613 = vpop.f32.mrf.mxu0
        %v5614 = vadd.f32 %v4614, %v5613
        %v5615 = vpop.f32.mrf.mxu0
        %v5616 = vadd.f32 %v4619, %v5615
        %5617 = vmatmul.bf16.gmra.mxu0 %v5352
        %v5618 = vpop.f32.mrf.mxu0
        %v5619 = vadd.f32 %v4624, %v5618
        %v5620 = vpop.f32.mrf.mxu0
        %v5621 = vadd.f32 %v4629, %v5620
        %5622 = vmatmul.bf16.gmra.mxu0 %v5355
        %v5623 = vpop.f32.mrf.mxu0
        %v5624 = vadd.f32 %v4634, %v5623
        %v5625 = vpop.f32.mrf.mxu0
        %v5626 = vadd.f32 %v4639, %v5625
        %5627 = vmatmul.bf16.gmra.mxu0 %v5358
        %v5628 = vpop.f32.mrf.mxu0
        %v5629 = vadd.f32 %v4644, %v5628
        %v5630 = vpop.f32.mrf.mxu0
        %v5631 = vadd.f32 %v4649, %v5630
        %5632 = vmatmul.bf16.gmra.mxu0 %v5361
        %v5633 = vpop.f32.mrf.mxu0
        %v5634 = vadd.f32 %v4654, %v5633
        %v5635 = vpop.f32.mrf.mxu0
        %v5636 = vadd.f32 %v4659, %v5635
        %5637 = vmatmul.bf16.gmra.mxu0 %v5364
        %v5638 = vpop.f32.mrf.mxu0
        %v5639 = vadd.f32 %v4664, %v5638
        %v5640 = vpop.f32.mrf.mxu0
        %v5641 = vadd.f32 %v4669, %v5640
        %5642 = vmatmul.bf16.gmra.mxu0 %v5367
        %v5643 = vpop.f32.mrf.mxu0
        %v5644 = vadd.f32 %v4674, %v5643
        %v5645 = vpop.f32.mrf.mxu0
        %v5646 = vadd.f32 %v4679, %v5645
        %5647 = vmatmul.bf16.gmra.mxu0 %v5370
        %v5648 = vpop.f32.mrf.mxu0
        %v5649 = vadd.f32 %v4684, %v5648
        %v5650 = vpop.f32.mrf.mxu0
        %v5651 = vadd.f32 %v4689, %v5650
        %5652 = vmatmul.bf16.gmra.mxu0 %v5373
        %v5653 = vpop.f32.mrf.mxu0
        %v5654 = vadd.f32 %v4694, %v5653
        %v5655 = vpop.f32.mrf.mxu0
        %v5656 = vadd.f32 %v4699, %v5655
        %5657 = vmatmul.bf16.gmra.mxu0 %v5376
        %v5658 = vpop.f32.mrf.mxu0
        %v5659 = vadd.f32 %v4704, %v5658
        %v5660 = vpop.f32.mrf.mxu0
        %v5661 = vadd.f32 %v4709, %v5660
        %5662 = vmatmul.bf16.gmra.mxu0 %v5379
        %v5663 = vpop.f32.mrf.mxu0
        %v5664 = vadd.f32 %v4714, %v5663
        %v5665 = vpop.f32.mrf.mxu0
        %v5666 = vadd.f32 %v4719, %v5665
        %5667 = vmatmul.bf16.gmra.mxu0 %v5382
        %v5668 = vpop.f32.mrf.mxu0
        %v5669 = vadd.f32 %v4724, %v5668
        %v5670 = vpop.f32.mrf.mxu0
        %v5671 = vadd.f32 %v4729, %v5670
        %5672 = vmatmul.bf16.gmra.mxu0 %v5385
        %v5673 = vpop.f32.mrf.mxu0
        %v5674 = vadd.f32 %v4734, %v5673
        %v5675 = vpop.f32.mrf.mxu0
        %v5676 = vadd.f32 %v4739, %v5675
        %5677 = vmatmul.bf16.gmra.mxu0 %v5388
        %v5678 = vpop.f32.mrf.mxu0
        %v5679 = vadd.f32 %v4744, %v5678
        %v5680 = vpop.f32.mrf.mxu0
        %v5681 = vadd.f32 %v4749, %v5680
        %5682 = vmatmul.bf16.gmra.mxu0 %v5391
        %v5683 = vpop.f32.mrf.mxu0
        %v5684 = vadd.f32 %v4754, %v5683
        %v5685 = vpop.f32.mrf.mxu0
        %v5686 = vadd.f32 %v4759, %v5685
        %5687 = vmatmul.bf16.gmra.mxu0 %v5394
        %v5688 = vpop.f32.mrf.mxu0
        %v5689 = vadd.f32 %v4764, %v5688
        %v5690 = vpop.f32.mrf.mxu0
        %v5691 = vadd.f32 %v4769, %v5690
        %5692 = vmatmul.bf16.gmra.mxu0 %v5397
        %v5693 = vpop.f32.mrf.mxu0
        %v5694 = vadd.f32 %v4774, %v5693
        %v5695 = vpop.f32.mrf.mxu0
        %v5696 = vadd.f32 %v4779, %v5695
        %5697 = vmatmul.bf16.gmra.mxu0 %v5400
        %v5698 = vpop.f32.mrf.mxu0
        %v5699 = vadd.f32 %v4784, %v5698
        %v5700 = vpop.f32.mrf.mxu0
        %v5701 = vadd.f32 %v4789, %v5700
        %5702 = vmatmul.bf16.gmra.mxu0 %v5403
        %v5703 = vpop.f32.mrf.mxu0
        %v5704 = vadd.f32 %v4794, %v5703
        %v5705 = vpop.f32.mrf.mxu0
        %v5706 = vadd.f32 %v4799, %v5705
        %5707 = vmatmul.bf16.gmra.mxu0 %v5406
        %v5708 = vpop.f32.mrf.mxu0
        %v5709 = vadd.f32 %v4804, %v5708
        %v5710 = vpop.f32.mrf.mxu0
        %v5711 = vadd.f32 %v4809, %v5710
        %5712 = vmatmul.bf16.gmra.mxu0 %v5409
        %v5713 = vpop.f32.mrf.mxu0
        %v5714 = vadd.f32 %v4814, %v5713
        %v5715 = vpop.f32.mrf.mxu0
        %v5716 = vadd.f32 %v4819, %v5715
        %5717 = vmatmul.bf16.gmra.mxu0 %v5412
        %v5718 = vpop.f32.mrf.mxu0
        %v5719 = vadd.f32 %v4824, %v5718
        %v5720 = vpop.f32.mrf.mxu0
        %v5721 = vadd.f32 %v4829, %v5720
        %5722 = vmatmul.bf16.gmra.mxu0 %v5415
        %v5723 = vpop.f32.mrf.mxu0
        %v5724 = vadd.f32 %v4834, %v5723
        %v5725 = vpop.f32.mrf.mxu0
        %v5726 = vadd.f32 %v4839, %v5725
        %5727 = vmatmul.bf16.gmra.mxu0 %v5418
        %v5728 = vpop.f32.mrf.mxu0
        %v5729 = vadd.f32 %v4844, %v5728
        %v5730 = vpop.f32.mrf.mxu0
        %v5731 = vadd.f32 %v4849, %v5730
        %5732 = vmatmul.bf16.gmra.mxu0 %v5421
        %v5733 = vpop.f32.mrf.mxu0
        %v5734 = vadd.f32 %v4854, %v5733
        %v5735 = vpop.f32.mrf.mxu0
        %v5736 = vadd.f32 %v4859, %v5735
        %5737 = vmatmul.bf16.gmra.mxu0 %v5424
        %v5738 = vpop.f32.mrf.mxu0
        %v5739 = vadd.f32 %v4864, %v5738
        %v5740 = vpop.f32.mrf.mxu0
        %v5741 = vadd.f32 %v4869, %v5740
        %5742 = vmatmul.bf16.gmra.mxu0 %v5427
        %v5743 = vpop.f32.mrf.mxu0
        %v5744 = vadd.f32 %v4874, %v5743
        %v5745 = vpop.f32.mrf.mxu0
        %v5746 = vadd.f32 %v4879, %v5745
        %5747 = vmatmul.bf16.gmra.mxu0 %v5430
        %v5748 = vpop.f32.mrf.mxu0
        %v5749 = vadd.f32 %v4884, %v5748
        %v5750 = vpop.f32.mrf.mxu0
        %v5751 = vadd.f32 %v4889, %v5750
        %5752 = vmatmul.bf16.gmra.mxu0 %v5433
        %v5753 = vpop.f32.mrf.mxu0
        %v5754 = vadd.f32 %v4894, %v5753
        %v5755 = vpop.f32.mrf.mxu0
        %v5756 = vadd.f32 %v4899, %v5755
        %5757 = vmatmul.bf16.gmra.mxu0 %v5436
        %v5758 = vpop.f32.mrf.mxu0
        %v5759 = vadd.f32 %v4904, %v5758
        %v5760 = vpop.f32.mrf.mxu0
        %v5761 = vadd.f32 %v4909, %v5760
        %5762 = vmatmul.bf16.gmra.mxu0 %v5439
        %v5763 = vpop.f32.mrf.mxu0
        %v5764 = vadd.f32 %v4914, %v5763
        %v5765 = vpop.f32.mrf.mxu0
        %v5766 = vadd.f32 %v4919, %v5765
        %5767 = vmatmul.bf16.gmra.mxu0 %v5442
        %v5768 = vpop.f32.mrf.mxu0
        %v5769 = vadd.f32 %v4924, %v5768
        %v5770 = vpop.f32.mrf.mxu0
        %v5771 = vadd.f32 %v4929, %v5770
        %5772 = vdwg.mxu0
        %5773 = vmatpush.bf16.msra.mxu0 0
        %5774 = vmatpush.bf16.msra.mxu0 0
        %5775 = vmatpush.bf16.msra.mxu0 0
        %5776 = vmatpush.bf16.msra.mxu0 0
        %5777 = vmatpush.bf16.msra.mxu0 0
        %5778 = vmatpush.bf16.msra.mxu0 0
        %5779 = vmatpush.bf16.msra.mxu0 %v4289
        %5780 = vmatpush.bf16.msra.mxu0 %v4286
        %5781 = vmatmul.bf16.gmra.mxu0 %v5253
        %v5782 = vpop.f32.mrf.mxu0
        %v5783 = vadd.f32 %v4294, %v5782
        %v5784 = vpop.f32.mrf.mxu0
        %v5785 = vadd.f32 %v4299, %v5784
        %5786 = vmatmul.bf16.gmra.mxu0 %v5256
        %v5787 = vpop.f32.mrf.mxu0
        %v5788 = vadd.f32 %v4304, %v5787
        %v5789 = vpop.f32.mrf.mxu0
        %v5790 = vadd.f32 %v4309, %v5789
        %5791 = vmatmul.bf16.gmra.mxu0 %v5259
        %v5792 = vpop.f32.mrf.mxu0
        %v5793 = vadd.f32 %v4314, %v5792
        %v5794 = vpop.f32.mrf.mxu0
        %v5795 = vadd.f32 %v4319, %v5794
        %5796 = vmatmul.bf16.gmra.mxu0 %v5262
        %v5797 = vpop.f32.mrf.mxu0
        %v5798 = vadd.f32 %v4324, %v5797
        %v5799 = vpop.f32.mrf.mxu0
        %v5800 = vadd.f32 %v4329, %v5799
        %5801 = vmatmul.bf16.gmra.mxu0 %v5265
        %v5802 = vpop.f32.mrf.mxu0
        %v5803 = vadd.f32 %v4334, %v5802
        %v5804 = vpop.f32.mrf.mxu0
        %v5805 = vadd.f32 %v4339, %v5804
        %5806 = vmatmul.bf16.gmra.mxu0 %v5268
        %v5807 = vpop.f32.mrf.mxu0
        %v5808 = vadd.f32 %v4344, %v5807
        %v5809 = vpop.f32.mrf.mxu0
        %v5810 = vadd.f32 %v4349, %v5809
        %5811 = vmatmul.bf16.gmra.mxu0 %v5271
        %v5812 = vpop.f32.mrf.mxu0
        %v5813 = vadd.f32 %v4354, %v5812
        %v5814 = vpop.f32.mrf.mxu0
        %v5815 = vadd.f32 %v4359, %v5814
        %5816 = vmatmul.bf16.gmra.mxu0 %v5274
        %v5817 = vpop.f32.mrf.mxu0
        %v5818 = vadd.f32 %v4364, %v5817
        %v5819 = vpop.f32.mrf.mxu0
        %v5820 = vadd.f32 %v4369, %v5819
        %5821 = vmatmul.bf16.gmra.mxu0 %v5277
        %v5822 = vpop.f32.mrf.mxu0
        %v5823 = vadd.f32 %v4374, %v5822
        %v5824 = vpop.f32.mrf.mxu0
        %v5825 = vadd.f32 %v4379, %v5824
        %5826 = vmatmul.bf16.gmra.mxu0 %v5280
        %v5827 = vpop.f32.mrf.mxu0
        %v5828 = vadd.f32 %v4384, %v5827
        %v5829 = vpop.f32.mrf.mxu0
        %v5830 = vadd.f32 %v4389, %v5829
        %5831 = vmatmul.bf16.gmra.mxu0 %v5283
        %v5832 = vpop.f32.mrf.mxu0
        %v5833 = vadd.f32 %v4394, %v5832
        %v5834 = vpop.f32.mrf.mxu0
        %v5835 = vadd.f32 %v4399, %v5834
        %5836 = vmatmul.bf16.gmra.mxu0 %v5286
        %v5837 = vpop.f32.mrf.mxu0
        %v5838 = vadd.f32 %v4404, %v5837
        %v5839 = vpop.f32.mrf.mxu0
        %v5840 = vadd.f32 %v4409, %v5839
        %5841 = vmatmul.bf16.gmra.mxu0 %v5289
        %v5842 = vpop.f32.mrf.mxu0
        %v5843 = vadd.f32 %v4414, %v5842
        %v5844 = vpop.f32.mrf.mxu0
        %v5845 = vadd.f32 %v4419, %v5844
        %5846 = vmatmul.bf16.gmra.mxu0 %v5292
        %v5847 = vpop.f32.mrf.mxu0
        %v5848 = vadd.f32 %v4424, %v5847
        %v5849 = vpop.f32.mrf.mxu0
        %v5850 = vadd.f32 %v4429, %v5849
        %5851 = vmatmul.bf16.gmra.mxu0 %v5295
        %v5852 = vpop.f32.mrf.mxu0
        %v5853 = vadd.f32 %v4434, %v5852
        %v5854 = vpop.f32.mrf.mxu0
        %v5855 = vadd.f32 %v4439, %v5854
        %5856 = vmatmul.bf16.gmra.mxu0 %v5298
        %v5857 = vpop.f32.mrf.mxu0
        %v5858 = vadd.f32 %v4444, %v5857
        %v5859 = vpop.f32.mrf.mxu0
        %v5860 = vadd.f32 %v4449, %v5859
        %5861 = vmatmul.bf16.gmra.mxu0 %v5301
        %v5862 = vpop.f32.mrf.mxu0
        %v5863 = vadd.f32 %v4454, %v5862
        %v5864 = vpop.f32.mrf.mxu0
        %v5865 = vadd.f32 %v4459, %v5864
        %5866 = vmatmul.bf16.gmra.mxu0 %v5304
        %v5867 = vpop.f32.mrf.mxu0
        %v5868 = vadd.f32 %v4464, %v5867
        %v5869 = vpop.f32.mrf.mxu0
        %v5870 = vadd.f32 %v4469, %v5869
        %5871 = vmatmul.bf16.gmra.mxu0 %v5307
        %v5872 = vpop.f32.mrf.mxu0
        %v5873 = vadd.f32 %v4474, %v5872
        %v5874 = vpop.f32.mrf.mxu0
        %v5875 = vadd.f32 %v4479, %v5874
        %5876 = vmatmul.bf16.gmra.mxu0 %v5310
        %v5877 = vpop.f32.mrf.mxu0
        %v5878 = vadd.f32 %v4484, %v5877
        %v5879 = vpop.f32.mrf.mxu0
        %v5880 = vadd.f32 %v4489, %v5879
        %5881 = vmatmul.bf16.gmra.mxu0 %v5313
        %v5882 = vpop.f32.mrf.mxu0
        %v5883 = vadd.f32 %v4494, %v5882
        %v5884 = vpop.f32.mrf.mxu0
        %v5885 = vadd.f32 %v4499, %v5884
        %5886 = vmatmul.bf16.gmra.mxu0 %v5316
        %v5887 = vpop.f32.mrf.mxu0
        %v5888 = vadd.f32 %v4504, %v5887
        %v5889 = vpop.f32.mrf.mxu0
        %v5890 = vadd.f32 %v4509, %v5889
        %5891 = vmatmul.bf16.gmra.mxu0 %v5319
        %v5892 = vpop.f32.mrf.mxu0
        %v5893 = vadd.f32 %v4514, %v5892
        %v5894 = vpop.f32.mrf.mxu0
        %v5895 = vadd.f32 %v4519, %v5894
        %5896 = vmatmul.bf16.gmra.mxu0 %v5322
        %v5897 = vpop.f32.mrf.mxu0
        %v5898 = vadd.f32 %v4524, %v5897
        %v5899 = vpop.f32.mrf.mxu0
        %v5900 = vadd.f32 %v4529, %v5899
        %5901 = vmatmul.bf16.gmra.mxu0 %v5325
        %v5902 = vpop.f32.mrf.mxu0
        %v5903 = vadd.f32 %v4534, %v5902
        %v5904 = vpop.f32.mrf.mxu0
        %v5905 = vadd.f32 %v4539, %v5904
        %5906 = vmatmul.bf16.gmra.mxu0 %v5328
        %v5907 = vpop.f32.mrf.mxu0
        %v5908 = vadd.f32 %v4544, %v5907
        %v5909 = vpop.f32.mrf.mxu0
        %v5910 = vadd.f32 %v4549, %v5909
        %5911 = vmatmul.bf16.gmra.mxu0 %v5331
        %v5912 = vpop.f32.mrf.mxu0
        %v5913 = vadd.f32 %v4554, %v5912
        %v5914 = vpop.f32.mrf.mxu0
        %v5915 = vadd.f32 %v4559, %v5914
        %5916 = vmatmul.bf16.gmra.mxu0 %v5334
        %v5917 = vpop.f32.mrf.mxu0
        %v5918 = vadd.f32 %v4564, %v5917
        %v5919 = vpop.f32.mrf.mxu0
        %v5920 = vadd.f32 %v4569, %v5919
        %5921 = vmatmul.bf16.gmra.mxu0 %v5337
        %v5922 = vpop.f32.mrf.mxu0
        %v5923 = vadd.f32 %v4574, %v5922
        %v5924 = vpop.f32.mrf.mxu0
        %v5925 = vadd.f32 %v4579, %v5924
        %5926 = vmatmul.bf16.gmra.mxu0 %v5340
        %v5927 = vpop.f32.mrf.mxu0
        %v5928 = vadd.f32 %v4584, %v5927
        %v5929 = vpop.f32.mrf.mxu0
        %v5930 = vadd.f32 %v4589, %v5929
        %5931 = vmatmul.bf16.gmra.mxu0 %v5343
        %v5932 = vpop.f32.mrf.mxu0
        %v5933 = vadd.f32 %v4594, %v5932
        %v5934 = vpop.f32.mrf.mxu0
        %v5935 = vadd.f32 %v4599, %v5934
        %5936 = vmatmul.bf16.gmra.mxu0 %v5346
        %v5937 = vpop.f32.mrf.mxu0
        %v5938 = vadd.f32 %v4604, %v5937
        %v5939 = vpop.f32.mrf.mxu0
        %v5940 = vadd.f32 %v4609, %v5939
        %5941 = vmatmul.bf16.gmra.mxu0 %v5349
        %v5942 = vpop.f32.mrf.mxu0
        %v5943 = vadd.f32 %v4614, %v5942
        %v5944 = vpop.f32.mrf.mxu0
        %v5945 = vadd.f32 %v4619, %v5944
        %5946 = vmatmul.bf16.gmra.mxu0 %v5352
        %v5947 = vpop.f32.mrf.mxu0
        %v5948 = vadd.f32 %v4624, %v5947
        %v5949 = vpop.f32.mrf.mxu0
        %v5950 = vadd.f32 %v4629, %v5949
        %5951 = vmatmul.bf16.gmra.mxu0 %v5355
        %v5952 = vpop.f32.mrf.mxu0
        %v5953 = vadd.f32 %v4634, %v5952
        %v5954 = vpop.f32.mrf.mxu0
        %v5955 = vadd.f32 %v4639, %v5954
        %5956 = vmatmul.bf16.gmra.mxu0 %v5358
        %v5957 = vpop.f32.mrf.mxu0
        %v5958 = vadd.f32 %v4644, %v5957
        %v5959 = vpop.f32.mrf.mxu0
        %v5960 = vadd.f32 %v4649, %v5959
        %5961 = vmatmul.bf16.gmra.mxu0 %v5361
        %v5962 = vpop.f32.mrf.mxu0
        %v5963 = vadd.f32 %v4654, %v5962
        %v5964 = vpop.f32.mrf.mxu0
        %v5965 = vadd.f32 %v4659, %v5964
        %5966 = vmatmul.bf16.gmra.mxu0 %v5364
        %v5967 = vpop.f32.mrf.mxu0
        %v5968 = vadd.f32 %v4664, %v5967
        %v5969 = vpop.f32.mrf.mxu0
        %v5970 = vadd.f32 %v4669, %v5969
        %5971 = vmatmul.bf16.gmra.mxu0 %v5367
        %v5972 = vpop.f32.mrf.mxu0
        %v5973 = vadd.f32 %v4674, %v5972
        %v5974 = vpop.f32.mrf.mxu0
        %v5975 = vadd.f32 %v4679, %v5974
        %5976 = vmatmul.bf16.gmra.mxu0 %v5370
        %v5977 = vpop.f32.mrf.mxu0
        %v5978 = vadd.f32 %v4684, %v5977
        %v5979 = vpop.f32.mrf.mxu0
        %v5980 = vadd.f32 %v4689, %v5979
        %5981 = vmatmul.bf16.gmra.mxu0 %v5373
        %v5982 = vpop.f32.mrf.mxu0
        %v5983 = vadd.f32 %v4694, %v5982
        %v5984 = vpop.f32.mrf.mxu0
        %v5985 = vadd.f32 %v4699, %v5984
        %5986 = vmatmul.bf16.gmra.mxu0 %v5376
        %v5987 = vpop.f32.mrf.mxu0
        %v5988 = vadd.f32 %v4704, %v5987
        %v5989 = vpop.f32.mrf.mxu0
        %v5990 = vadd.f32 %v4709, %v5989
        %5991 = vmatmul.bf16.gmra.mxu0 %v5379
        %v5992 = vpop.f32.mrf.mxu0
        %v5993 = vadd.f32 %v4714, %v5992
        %v5994 = vpop.f32.mrf.mxu0
        %v5995 = vadd.f32 %v4719, %v5994
        %5996 = vmatmul.bf16.gmra.mxu0 %v5382
        %v5997 = vpop.f32.mrf.mxu0
        %v5998 = vadd.f32 %v4724, %v5997
        %v5999 = vpop.f32.mrf.mxu0
        %v6000 = vadd.f32 %v4729, %v5999
        %6001 = vmatmul.bf16.gmra.mxu0 %v5385
        %v6002 = vpop.f32.mrf.mxu0
        %v6003 = vadd.f32 %v4734, %v6002
        %v6004 = vpop.f32.mrf.mxu0
        %v6005 = vadd.f32 %v4739, %v6004
        %6006 = vmatmul.bf16.gmra.mxu0 %v5388
        %v6007 = vpop.f32.mrf.mxu0
        %v6008 = vadd.f32 %v4744, %v6007
        %v6009 = vpop.f32.mrf.mxu0
        %v6010 = vadd.f32 %v4749, %v6009
        %6011 = vmatmul.bf16.gmra.mxu0 %v5391
        %v6012 = vpop.f32.mrf.mxu0
        %v6013 = vadd.f32 %v4754, %v6012
        %v6014 = vpop.f32.mrf.mxu0
        %v6015 = vadd.f32 %v4759, %v6014
        %6016 = vmatmul.bf16.gmra.mxu0 %v5394
        %v6017 = vpop.f32.mrf.mxu0
        %v6018 = vadd.f32 %v4764, %v6017
        %v6019 = vpop.f32.mrf.mxu0
        %v6020 = vadd.f32 %v4769, %v6019
        %6021 = vmatmul.bf16.gmra.mxu0 %v5397
        %v6022 = vpop.f32.mrf.mxu0
        %v6023 = vadd.f32 %v4774, %v6022
        %v6024 = vpop.f32.mrf.mxu0
        %v6025 = vadd.f32 %v4779, %v6024
        %6026 = vmatmul.bf16.gmra.mxu0 %v5400
        %v6027 = vpop.f32.mrf.mxu0
        %v6028 = vadd.f32 %v4784, %v6027
        %v6029 = vpop.f32.mrf.mxu0
        %v6030 = vadd.f32 %v4789, %v6029
        %6031 = vmatmul.bf16.gmra.mxu0 %v5403
        %v6032 = vpop.f32.mrf.mxu0
        %v6033 = vadd.f32 %v4794, %v6032
        %v6034 = vpop.f32.mrf.mxu0
        %v6035 = vadd.f32 %v4799, %v6034
        %6036 = vmatmul.bf16.gmra.mxu0 %v5406
        %v6037 = vpop.f32.mrf.mxu0
        %v6038 = vadd.f32 %v4804, %v6037
        %v6039 = vpop.f32.mrf.mxu0
        %v6040 = vadd.f32 %v4809, %v6039
        %6041 = vmatmul.bf16.gmra.mxu0 %v5409
        %v6042 = vpop.f32.mrf.mxu0
        %v6043 = vadd.f32 %v4814, %v6042
        %v6044 = vpop.f32.mrf.mxu0
        %v6045 = vadd.f32 %v4819, %v6044
        %6046 = vmatmul.bf16.gmra.mxu0 %v5412
        %v6047 = vpop.f32.mrf.mxu0
        %v6048 = vadd.f32 %v4824, %v6047
        %v6049 = vpop.f32.mrf.mxu0
        %v6050 = vadd.f32 %v4829, %v6049
        %6051 = vmatmul.bf16.gmra.mxu0 %v5415
        %v6052 = vpop.f32.mrf.mxu0
        %v6053 = vadd.f32 %v4834, %v6052
        %v6054 = vpop.f32.mrf.mxu0
        %v6055 = vadd.f32 %v4839, %v6054
        %6056 = vmatmul.bf16.gmra.mxu0 %v5418
        %v6057 = vpop.f32.mrf.mxu0
        %v6058 = vadd.f32 %v4844, %v6057
        %v6059 = vpop.f32.mrf.mxu0
        %v6060 = vadd.f32 %v4849, %v6059
        %6061 = vmatmul.bf16.gmra.mxu0 %v5421
        %v6062 = vpop.f32.mrf.mxu0
        %v6063 = vadd.f32 %v4854, %v6062
        %v6064 = vpop.f32.mrf.mxu0
        %v6065 = vadd.f32 %v4859, %v6064
        %6066 = vmatmul.bf16.gmra.mxu0 %v5424
        %v6067 = vpop.f32.mrf.mxu0
        %v6068 = vadd.f32 %v4864, %v6067
        %v6069 = vpop.f32.mrf.mxu0
        %v6070 = vadd.f32 %v4869, %v6069
        %6071 = vmatmul.bf16.gmra.mxu0 %v5427
        %v6072 = vpop.f32.mrf.mxu0
        %v6073 = vadd.f32 %v4874, %v6072
        %v6074 = vpop.f32.mrf.mxu0
        %v6075 = vadd.f32 %v4879, %v6074
        %6076 = vmatmul.bf16.gmra.mxu0 %v5430
        %v6077 = vpop.f32.mrf.mxu0
        %v6078 = vadd.f32 %v4884, %v6077
        %v6079 = vpop.f32.mrf.mxu0
        %v6080 = vadd.f32 %v4889, %v6079
        %6081 = vmatmul.bf16.gmra.mxu0 %v5433
        %v6082 = vpop.f32.mrf.mxu0
        %v6083 = vadd.f32 %v4894, %v6082
        %v6084 = vpop.f32.mrf.mxu0
        %v6085 = vadd.f32 %v4899, %v6084
        %6086 = vmatmul.bf16.gmra.mxu0 %v5436
        %v6087 = vpop.f32.mrf.mxu0
        %v6088 = vadd.f32 %v4904, %v6087
        %v6089 = vpop.f32.mrf.mxu0
        %v6090 = vadd.f32 %v4909, %v6089
        %6091 = vmatmul.bf16.gmra.mxu0 %v5439
        %v6092 = vpop.f32.mrf.mxu0
        %v6093 = vadd.f32 %v4914, %v6092
        %v6094 = vpop.f32.mrf.mxu0
        %v6095 = vadd.f32 %v4919, %v6094
        %6096 = vmatmul.bf16.gmra.mxu0 %v5442
        %v6097 = vpop.f32.mrf.mxu0
        %v6098 = vadd.f32 %v4924, %v6097
        %v6099 = vpop.f32.mrf.mxu0
        %v6100 = vadd.f32 %v4929, %v6099
        %6101 = vdwg.mxu0
        %6102 = vmatpush.bf16.msra.mxu0 0
        %6103 = vmatpush.bf16.msra.mxu0 0
        %6104 = vmatpush.bf16.msra.mxu0 0
        %6105 = vmatpush.bf16.msra.mxu0 0
        %6106 = vmatpush.bf16.msra.mxu0 0
        %6107 = vmatpush.bf16.msra.mxu0 0
        %6108 = vmatpush.bf16.msra.mxu0 %v4290
        %6109 = vmatpush.bf16.msra.mxu0 %v4287
        %6110 = vmatmul.bf16.gmra.mxu0 %v5253
        %v6111 = vpop.f32.mrf.mxu0
        %v6112 = vadd.f32 %v4294, %v6111
        %v6113 = vpop.f32.mrf.mxu0
        %v6114 = vadd.f32 %v4299, %v6113
        %6115 = vmatmul.bf16.gmra.mxu0 %v5256
        %v6116 = vpop.f32.mrf.mxu0
        %v6117 = vadd.f32 %v4304, %v6116
        %v6118 = vpop.f32.mrf.mxu0
        %v6119 = vadd.f32 %v4309, %v6118
        %6120 = vmatmul.bf16.gmra.mxu0 %v5259
        %v6121 = vpop.f32.mrf.mxu0
        %v6122 = vadd.f32 %v4314, %v6121
        %v6123 = vpop.f32.mrf.mxu0
        %v6124 = vadd.f32 %v4319, %v6123
        %6125 = vmatmul.bf16.gmra.mxu0 %v5262
        %v6126 = vpop.f32.mrf.mxu0
        %v6127 = vadd.f32 %v4324, %v6126
        %v6128 = vpop.f32.mrf.mxu0
        %v6129 = vadd.f32 %v4329, %v6128
        %6130 = vmatmul.bf16.gmra.mxu0 %v5265
        %v6131 = vpop.f32.mrf.mxu0
        %v6132 = vadd.f32 %v4334, %v6131
        %v6133 = vpop.f32.mrf.mxu0
        %v6134 = vadd.f32 %v4339, %v6133
        %6135 = vmatmul.bf16.gmra.mxu0 %v5268
        %v6136 = vpop.f32.mrf.mxu0
        %v6137 = vadd.f32 %v4344, %v6136
        %v6138 = vpop.f32.mrf.mxu0
        %v6139 = vadd.f32 %v4349, %v6138
        %6140 = vmatmul.bf16.gmra.mxu0 %v5271
        %v6141 = vpop.f32.mrf.mxu0
        %v6142 = vadd.f32 %v4354, %v6141
        %v6143 = vpop.f32.mrf.mxu0
        %v6144 = vadd.f32 %v4359, %v6143
        %6145 = vmatmul.bf16.gmra.mxu0 %v5274
        %v6146 = vpop.f32.mrf.mxu0
        %v6147 = vadd.f32 %v4364, %v6146
        %v6148 = vpop.f32.mrf.mxu0
        %v6149 = vadd.f32 %v4369, %v6148
        %6150 = vmatmul.bf16.gmra.mxu0 %v5277
        %v6151 = vpop.f32.mrf.mxu0
        %v6152 = vadd.f32 %v4374, %v6151
        %v6153 = vpop.f32.mrf.mxu0
        %v6154 = vadd.f32 %v4379, %v6153
        %6155 = vmatmul.bf16.gmra.mxu0 %v5280
        %v6156 = vpop.f32.mrf.mxu0
        %v6157 = vadd.f32 %v4384, %v6156
        %v6158 = vpop.f32.mrf.mxu0
        %v6159 = vadd.f32 %v4389, %v6158
        %6160 = vmatmul.bf16.gmra.mxu0 %v5283
        %v6161 = vpop.f32.mrf.mxu0
        %v6162 = vadd.f32 %v4394, %v6161
        %v6163 = vpop.f32.mrf.mxu0
        %v6164 = vadd.f32 %v4399, %v6163
        %6165 = vmatmul.bf16.gmra.mxu0 %v5286
        %v6166 = vpop.f32.mrf.mxu0
        %v6167 = vadd.f32 %v4404, %v6166
        %v6168 = vpop.f32.mrf.mxu0
        %v6169 = vadd.f32 %v4409, %v6168
        %6170 = vmatmul.bf16.gmra.mxu0 %v5289
        %v6171 = vpop.f32.mrf.mxu0
        %v6172 = vadd.f32 %v4414, %v6171
        %v6173 = vpop.f32.mrf.mxu0
        %v6174 = vadd.f32 %v4419, %v6173
        %6175 = vmatmul.bf16.gmra.mxu0 %v5292
        %v6176 = vpop.f32.mrf.mxu0
        %v6177 = vadd.f32 %v4424, %v6176
        %v6178 = vpop.f32.mrf.mxu0
        %v6179 = vadd.f32 %v4429, %v6178
        %6180 = vmatmul.bf16.gmra.mxu0 %v5295
        %v6181 = vpop.f32.mrf.mxu0
        %v6182 = vadd.f32 %v4434, %v6181
        %v6183 = vpop.f32.mrf.mxu0
        %v6184 = vadd.f32 %v4439, %v6183
        %6185 = vmatmul.bf16.gmra.mxu0 %v5298
        %v6186 = vpop.f32.mrf.mxu0
        %v6187 = vadd.f32 %v4444, %v6186
        %v6188 = vpop.f32.mrf.mxu0
        %v6189 = vadd.f32 %v4449, %v6188
        %6190 = vmatmul.bf16.gmra.mxu0 %v5301
        %v6191 = vpop.f32.mrf.mxu0
        %v6192 = vadd.f32 %v4454, %v6191
        %v6193 = vpop.f32.mrf.mxu0
        %v6194 = vadd.f32 %v4459, %v6193
        %6195 = vmatmul.bf16.gmra.mxu0 %v5304
        %v6196 = vpop.f32.mrf.mxu0
        %v6197 = vadd.f32 %v4464, %v6196
        %v6198 = vpop.f32.mrf.mxu0
        %v6199 = vadd.f32 %v4469, %v6198
        %6200 = vmatmul.bf16.gmra.mxu0 %v5307
        %v6201 = vpop.f32.mrf.mxu0
        %v6202 = vadd.f32 %v4474, %v6201
        %v6203 = vpop.f32.mrf.mxu0
        %v6204 = vadd.f32 %v4479, %v6203
        %6205 = vmatmul.bf16.gmra.mxu0 %v5310
        %v6206 = vpop.f32.mrf.mxu0
        %v6207 = vadd.f32 %v4484, %v6206
        %v6208 = vpop.f32.mrf.mxu0
        %v6209 = vadd.f32 %v4489, %v6208
        %6210 = vmatmul.bf16.gmra.mxu0 %v5313
        %v6211 = vpop.f32.mrf.mxu0
        %v6212 = vadd.f32 %v4494, %v6211
        %v6213 = vpop.f32.mrf.mxu0
        %v6214 = vadd.f32 %v4499, %v6213
        %6215 = vmatmul.bf16.gmra.mxu0 %v5316
        %v6216 = vpop.f32.mrf.mxu0
        %v6217 = vadd.f32 %v4504, %v6216
        %v6218 = vpop.f32.mrf.mxu0
        %v6219 = vadd.f32 %v4509, %v6218
        %6220 = vmatmul.bf16.gmra.mxu0 %v5319
        %v6221 = vpop.f32.mrf.mxu0
        %v6222 = vadd.f32 %v4514, %v6221
        %v6223 = vpop.f32.mrf.mxu0
        %v6224 = vadd.f32 %v4519, %v6223
        %6225 = vmatmul.bf16.gmra.mxu0 %v5322
        %v6226 = vpop.f32.mrf.mxu0
        %v6227 = vadd.f32 %v4524, %v6226
        %v6228 = vpop.f32.mrf.mxu0
        %v6229 = vadd.f32 %v4529, %v6228
        %6230 = vmatmul.bf16.gmra.mxu0 %v5325
        %v6231 = vpop.f32.mrf.mxu0
        %v6232 = vadd.f32 %v4534, %v6231
        %v6233 = vpop.f32.mrf.mxu0
        %v6234 = vadd.f32 %v4539, %v6233
        %6235 = vmatmul.bf16.gmra.mxu0 %v5328
        %v6236 = vpop.f32.mrf.mxu0
        %v6237 = vadd.f32 %v4544, %v6236
        %v6238 = vpop.f32.mrf.mxu0
        %v6239 = vadd.f32 %v4549, %v6238
        %6240 = vmatmul.bf16.gmra.mxu0 %v5331
        %v6241 = vpop.f32.mrf.mxu0
        %v6242 = vadd.f32 %v4554, %v6241
        %v6243 = vpop.f32.mrf.mxu0
        %v6244 = vadd.f32 %v4559, %v6243
        %6245 = vmatmul.bf16.gmra.mxu0 %v5334
        %v6246 = vpop.f32.mrf.mxu0
        %v6247 = vadd.f32 %v4564, %v6246
        %v6248 = vpop.f32.mrf.mxu0
        %v6249 = vadd.f32 %v4569, %v6248
        %6250 = vmatmul.bf16.gmra.mxu0 %v5337
        %v6251 = vpop.f32.mrf.mxu0
        %v6252 = vadd.f32 %v4574, %v6251
        %v6253 = vpop.f32.mrf.mxu0
        %v6254 = vadd.f32 %v4579, %v6253
        %6255 = vmatmul.bf16.gmra.mxu0 %v5340
        %v6256 = vpop.f32.mrf.mxu0
        %v6257 = vadd.f32 %v4584, %v6256
        %v6258 = vpop.f32.mrf.mxu0
        %v6259 = vadd.f32 %v4589, %v6258
        %6260 = vmatmul.bf16.gmra.mxu0 %v5343
        %v6261 = vpop.f32.mrf.mxu0
        %v6262 = vadd.f32 %v4594, %v6261
        %v6263 = vpop.f32.mrf.mxu0
        %v6264 = vadd.f32 %v4599, %v6263
        %6265 = vmatmul.bf16.gmra.mxu0 %v5346
        %v6266 = vpop.f32.mrf.mxu0
        %v6267 = vadd.f32 %v4604, %v6266
        %v6268 = vpop.f32.mrf.mxu0
        %v6269 = vadd.f32 %v4609, %v6268
        %6270 = vmatmul.bf16.gmra.mxu0 %v5349
        %v6271 = vpop.f32.mrf.mxu0
        %v6272 = vadd.f32 %v4614, %v6271
        %v6273 = vpop.f32.mrf.mxu0
        %v6274 = vadd.f32 %v4619, %v6273
        %6275 = vmatmul.bf16.gmra.mxu0 %v5352
        %v6276 = vpop.f32.mrf.mxu0
        %v6277 = vadd.f32 %v4624, %v6276
        %v6278 = vpop.f32.mrf.mxu0
        %v6279 = vadd.f32 %v4629, %v6278
        %6280 = vmatmul.bf16.gmra.mxu0 %v5355
        %v6281 = vpop.f32.mrf.mxu0
        %v6282 = vadd.f32 %v4634, %v6281
        %v6283 = vpop.f32.mrf.mxu0
        %v6284 = vadd.f32 %v4639, %v6283
        %6285 = vmatmul.bf16.gmra.mxu0 %v5358
        %v6286 = vpop.f32.mrf.mxu0
        %v6287 = vadd.f32 %v4644, %v6286
        %v6288 = vpop.f32.mrf.mxu0
        %v6289 = vadd.f32 %v4649, %v6288
        %6290 = vmatmul.bf16.gmra.mxu0 %v5361
        %v6291 = vpop.f32.mrf.mxu0
        %v6292 = vadd.f32 %v4654, %v6291
        %v6293 = vpop.f32.mrf.mxu0
        %v6294 = vadd.f32 %v4659, %v6293
        %6295 = vmatmul.bf16.gmra.mxu0 %v5364
        %v6296 = vpop.f32.mrf.mxu0
        %v6297 = vadd.f32 %v4664, %v6296
        %v6298 = vpop.f32.mrf.mxu0
        %v6299 = vadd.f32 %v4669, %v6298
        %6300 = vmatmul.bf16.gmra.mxu0 %v5367
        %v6301 = vpop.f32.mrf.mxu0
        %v6302 = vadd.f32 %v4674, %v6301
        %v6303 = vpop.f32.mrf.mxu0
        %v6304 = vadd.f32 %v4679, %v6303
        %6305 = vmatmul.bf16.gmra.mxu0 %v5370
        %v6306 = vpop.f32.mrf.mxu0
        %v6307 = vadd.f32 %v4684, %v6306
        %v6308 = vpop.f32.mrf.mxu0
        %v6309 = vadd.f32 %v4689, %v6308
        %6310 = vmatmul.bf16.gmra.mxu0 %v5373
        %v6311 = vpop.f32.mrf.mxu0
        %v6312 = vadd.f32 %v4694, %v6311
        %v6313 = vpop.f32.mrf.mxu0
        %v6314 = vadd.f32 %v4699, %v6313
        %6315 = vmatmul.bf16.gmra.mxu0 %v5376
        %v6316 = vpop.f32.mrf.mxu0
        %v6317 = vadd.f32 %v4704, %v6316
        %v6318 = vpop.f32.mrf.mxu0
        %v6319 = vadd.f32 %v4709, %v6318
        %6320 = vmatmul.bf16.gmra.mxu0 %v5379
        %v6321 = vpop.f32.mrf.mxu0
        %v6322 = vadd.f32 %v4714, %v6321
        %v6323 = vpop.f32.mrf.mxu0
        %v6324 = vadd.f32 %v4719, %v6323
        %6325 = vmatmul.bf16.gmra.mxu0 %v5382
        %v6326 = vpop.f32.mrf.mxu0
        %v6327 = vadd.f32 %v4724, %v6326
        %v6328 = vpop.f32.mrf.mxu0
        %v6329 = vadd.f32 %v4729, %v6328
        %6330 = vmatmul.bf16.gmra.mxu0 %v5385
        %v6331 = vpop.f32.mrf.mxu0
        %v6332 = vadd.f32 %v4734, %v6331
        %v6333 = vpop.f32.mrf.mxu0
        %v6334 = vadd.f32 %v4739, %v6333
        %6335 = vmatmul.bf16.gmra.mxu0 %v5388
        %v6336 = vpop.f32.mrf.mxu0
        %v6337 = vadd.f32 %v4744, %v6336
        %v6338 = vpop.f32.mrf.mxu0
        %v6339 = vadd.f32 %v4749, %v6338
        %6340 = vmatmul.bf16.gmra.mxu0 %v5391
        %v6341 = vpop.f32.mrf.mxu0
        %v6342 = vadd.f32 %v4754, %v6341
        %v6343 = vpop.f32.mrf.mxu0
        %v6344 = vadd.f32 %v4759, %v6343
        %6345 = vmatmul.bf16.gmra.mxu0 %v5394
        %v6346 = vpop.f32.mrf.mxu0
        %v6347 = vadd.f32 %v4764, %v6346
        %v6348 = vpop.f32.mrf.mxu0
        %v6349 = vadd.f32 %v4769, %v6348
        %6350 = vmatmul.bf16.gmra.mxu0 %v5397
        %v6351 = vpop.f32.mrf.mxu0
        %v6352 = vadd.f32 %v4774, %v6351
        %v6353 = vpop.f32.mrf.mxu0
        %v6354 = vadd.f32 %v4779, %v6353
        %6355 = vmatmul.bf16.gmra.mxu0 %v5400
        %v6356 = vpop.f32.mrf.mxu0
        %v6357 = vadd.f32 %v4784, %v6356
        %v6358 = vpop.f32.mrf.mxu0
        %v6359 = vadd.f32 %v4789, %v6358
        %6360 = vmatmul.bf16.gmra.mxu0 %v5403
        %v6361 = vpop.f32.mrf.mxu0
        %v6362 = vadd.f32 %v4794, %v6361
        %v6363 = vpop.f32.mrf.mxu0
        %v6364 = vadd.f32 %v4799, %v6363
        %6365 = vmatmul.bf16.gmra.mxu0 %v5406
        %v6366 = vpop.f32.mrf.mxu0
        %v6367 = vadd.f32 %v4804, %v6366
        %v6368 = vpop.f32.mrf.mxu0
        %v6369 = vadd.f32 %v4809, %v6368
        %6370 = vmatmul.bf16.gmra.mxu0 %v5409
        %v6371 = vpop.f32.mrf.mxu0
        %v6372 = vadd.f32 %v4814, %v6371
        %v6373 = vpop.f32.mrf.mxu0
        %v6374 = vadd.f32 %v4819, %v6373
        %6375 = vmatmul.bf16.gmra.mxu0 %v5412
        %v6376 = vpop.f32.mrf.mxu0
        %v6377 = vadd.f32 %v4824, %v6376
        %v6378 = vpop.f32.mrf.mxu0
        %v6379 = vadd.f32 %v4829, %v6378
        %6380 = vmatmul.bf16.gmra.mxu0 %v5415
        %v6381 = vpop.f32.mrf.mxu0
        %v6382 = vadd.f32 %v4834, %v6381
        %v6383 = vpop.f32.mrf.mxu0
        %v6384 = vadd.f32 %v4839, %v6383
        %6385 = vmatmul.bf16.gmra.mxu0 %v5418
        %v6386 = vpop.f32.mrf.mxu0
        %v6387 = vadd.f32 %v4844, %v6386
        %v6388 = vpop.f32.mrf.mxu0
        %v6389 = vadd.f32 %v4849, %v6388
        %6390 = vmatmul.bf16.gmra.mxu0 %v5421
        %v6391 = vpop.f32.mrf.mxu0
        %v6392 = vadd.f32 %v4854, %v6391
        %v6393 = vpop.f32.mrf.mxu0
        %v6394 = vadd.f32 %v4859, %v6393
        %6395 = vmatmul.bf16.gmra.mxu0 %v5424
        %v6396 = vpop.f32.mrf.mxu0
        %v6397 = vadd.f32 %v4864, %v6396
        %v6398 = vpop.f32.mrf.mxu0
        %v6399 = vadd.f32 %v4869, %v6398
        %6400 = vmatmul.bf16.gmra.mxu0 %v5427
        %v6401 = vpop.f32.mrf.mxu0
        %v6402 = vadd.f32 %v4874, %v6401
        %v6403 = vpop.f32.mrf.mxu0
        %v6404 = vadd.f32 %v4879, %v6403
        %6405 = vmatmul.bf16.gmra.mxu0 %v5430
        %v6406 = vpop.f32.mrf.mxu0
        %v6407 = vadd.f32 %v4884, %v6406
        %v6408 = vpop.f32.mrf.mxu0
        %v6409 = vadd.f32 %v4889, %v6408
        %6410 = vmatmul.bf16.gmra.mxu0 %v5433
        %v6411 = vpop.f32.mrf.mxu0
        %v6412 = vadd.f32 %v4894, %v6411
        %v6413 = vpop.f32.mrf.mxu0
        %v6414 = vadd.f32 %v4899, %v6413
        %6415 = vmatmul.bf16.gmra.mxu0 %v5436
        %v6416 = vpop.f32.mrf.mxu0
        %v6417 = vadd.f32 %v4904, %v6416
        %v6418 = vpop.f32.mrf.mxu0
        %v6419 = vadd.f32 %v4909, %v6418
        %6420 = vmatmul.bf16.gmra.mxu0 %v5439
        %v6421 = vpop.f32.mrf.mxu0
        %v6422 = vadd.f32 %v4914, %v6421
        %v6423 = vpop.f32.mrf.mxu0
        %v6424 = vadd.f32 %v4919, %v6423
        %6425 = vmatmul.bf16.gmra.mxu0 %v5442
        %v6426 = vpop.f32.mrf.mxu0
        %v6427 = vadd.f32 %v4924, %v6426
        %v6428 = vpop.f32.mrf.mxu0
        %v6429 = vadd.f32 %v4929, %v6428
        %6430 = vdwg.mxu0
        %v6431 = vpack.c.bf16 %v3958, %v3957
        %v6432 = vpack.c.bf16 %v3960, %v3959
        %6433 = vmatpush.bf16.msra.mxu0 %v727
        %6434 = vmatpush.bf16.msra.mxu0 %v724
        %6435 = vmatpush.bf16.msra.mxu0 %v721
        %6436 = vmatpush.bf16.msra.mxu0 %v718
        %6437 = vmatpush.bf16.msra.mxu0 %v715
        %6438 = vmatpush.bf16.msra.mxu0 %v712
        %6439 = vmatpush.bf16.msra.mxu0 %v709
        %6440 = vmatpush.bf16.msra.mxu0 %v706
        %6441 = vmatmul.bf16.gmra.mxu0 %v6431
        %v6442 = vpop.f32.mrf.mxu0
        %v6443 = vadd.f32 0.0, %v6442
        %v6444 = vpop.f32.mrf.mxu0
        %v6445 = vadd.f32 0.0, %v6444
        %6446 = vmatmul.bf16.gmra.mxu0 %v6432
        %v6447 = vpop.f32.mrf.mxu0
        %v6448 = vadd.f32 0.0, %v6447
        %v6449 = vpop.f32.mrf.mxu0
        %v6450 = vadd.f32 0.0, %v6449
        %6451 = vdwg.mxu0
        %6452 = vmatpush.bf16.msra.mxu0 %v728
        %6453 = vmatpush.bf16.msra.mxu0 %v725
        %6454 = vmatpush.bf16.msra.mxu0 %v722
        %6455 = vmatpush.bf16.msra.mxu0 %v719
        %6456 = vmatpush.bf16.msra.mxu0 %v716
        %6457 = vmatpush.bf16.msra.mxu0 %v713
        %6458 = vmatpush.bf16.msra.mxu0 %v710
        %6459 = vmatpush.bf16.msra.mxu0 %v707
        %6460 = vmatmul.bf16.gmra.mxu0 %v6431
        %v6461 = vpop.f32.mrf.mxu0
        %v6462 = vadd.f32 0.0, %v6461
        %v6463 = vpop.f32.mrf.mxu0
        %v6464 = vadd.f32 0.0, %v6463
        %6465 = vmatmul.bf16.gmra.mxu0 %v6432
        %v6466 = vpop.f32.mrf.mxu0
        %v6467 = vadd.f32 0.0, %v6466
        %v6468 = vpop.f32.mrf.mxu0
        %v6469 = vadd.f32 0.0, %v6468
        %6470 = vdwg.mxu0
        %6471 = vmatpush.bf16.msra.mxu0 %v729
        %6472 = vmatpush.bf16.msra.mxu0 %v726
        %6473 = vmatpush.bf16.msra.mxu0 %v723
        %6474 = vmatpush.bf16.msra.mxu0 %v720
        %6475 = vmatpush.bf16.msra.mxu0 %v717
        %6476 = vmatpush.bf16.msra.mxu0 %v714
        %6477 = vmatpush.bf16.msra.mxu0 %v711
        %6478 = vmatpush.bf16.msra.mxu0 %v708
        %6479 = vmatmul.bf16.gmra.mxu0 %v6431
        %v6480 = vpop.f32.mrf.mxu0
        %v6481 = vadd.f32 0.0, %v6480
        %v6482 = vpop.f32.mrf.mxu0
        %v6483 = vadd.f32 0.0, %v6482
        %6484 = vmatmul.bf16.gmra.mxu0 %v6432
        %v6485 = vpop.f32.mrf.mxu0
        %v6486 = vadd.f32 0.0, %v6485
        %v6487 = vpop.f32.mrf.mxu0
        %v6488 = vadd.f32 0.0, %v6487
        %6489 = vdwg.mxu0
        %v6490 = vperm.slane %v6443, 0
        %v6491 = vperm.slane %v6462, 0
        %v6492 = vperm.slane %v6481, 0
        %v6493 = vmul.f32 %v6490, %v5454
        %v6494 = vmul.f32 %v6491, %v5783
        %v6495 = vmul.f32 %v6492, %v6112
        %v6496 = vmul.f32 %v6490, %v5456
        %v6497 = vmul.f32 %v6491, %v5785
        %v6498 = vmul.f32 %v6492, %v6114
        %v6499 = vmul.f32 %v6490, %v5459
        %v6500 = vmul.f32 %v6491, %v5788
        %v6501 = vmul.f32 %v6492, %v6117
        %v6502 = vmul.f32 %v6490, %v5461
        %v6503 = vmul.f32 %v6491, %v5790
        %v6504 = vmul.f32 %v6492, %v6119
        %v6505 = vperm.slane %v6443, 1
        %v6506 = vperm.slane %v6462, 1
        %v6507 = vperm.slane %v6481, 1
        %v6508 = vmul.f32 %v6505, %v5464
        %v6509 = vmul.f32 %v6506, %v5793
        %v6510 = vmul.f32 %v6507, %v6122
        %v6511 = vmul.f32 %v6505, %v5466
        %v6512 = vmul.f32 %v6506, %v5795
        %v6513 = vmul.f32 %v6507, %v6124
        %v6514 = vmul.f32 %v6505, %v5469
        %v6515 = vmul.f32 %v6506, %v5798
        %v6516 = vmul.f32 %v6507, %v6127
        %v6517 = vmul.f32 %v6505, %v5471
        %v6518 = vmul.f32 %v6506, %v5800
        %v6519 = vmul.f32 %v6507, %v6129
        %v6520 = vadd.f32 %v6493, %v6508
        %v6521 = vadd.f32 %v6494, %v6509
        %v6522 = vadd.f32 %v6495, %v6510
        %v6523 = vadd.f32 %v6496, %v6511
        %v6524 = vadd.f32 %v6497, %v6512
        %v6525 = vadd.f32 %v6498, %v6513
        %v6526 = vadd.f32 %v6499, %v6514
        %v6527 = vadd.f32 %v6500, %v6515
        %v6528 = vadd.f32 %v6501, %v6516
        %v6529 = vadd.f32 %v6502, %v6517
        %v6530 = vadd.f32 %v6503, %v6518
        %v6531 = vadd.f32 %v6504, %v6519
        %v6532 = vperm.slane %v6443, 2
        %v6533 = vperm.slane %v6462, 2
        %v6534 = vperm.slane %v6481, 2
        %v6535 = vmul.f32 %v6532, %v5474
        %v6536 = vmul.f32 %v6533, %v5803
        %v6537 = vmul.f32 %v6534, %v6132
        %v6538 = vmul.f32 %v6532, %v5476
        %v6539 = vmul.f32 %v6533, %v5805
        %v6540 = vmul.f32 %v6534, %v6134
        %v6541 = vmul.f32 %v6532, %v5479
        %v6542 = vmul.f32 %v6533, %v5808
        %v6543 = vmul.f32 %v6534, %v6137
        %v6544 = vmul.f32 %v6532, %v5481
        %v6545 = vmul.f32 %v6533, %v5810
        %v6546 = vmul.f32 %v6534, %v6139
        %v6547 = vadd.f32 %v6520, %v6535
        %v6548 = vadd.f32 %v6521, %v6536
        %v6549 = vadd.f32 %v6522, %v6537
        %v6550 = vadd.f32 %v6523, %v6538
        %v6551 = vadd.f32 %v6524, %v6539
        %v6552 = vadd.f32 %v6525, %v6540
        %v6553 = vadd.f32 %v6526, %v6541
        %v6554 = vadd.f32 %v6527, %v6542
        %v6555 = vadd.f32 %v6528, %v6543
        %v6556 = vadd.f32 %v6529, %v6544
        %v6557 = vadd.f32 %v6530, %v6545
        %v6558 = vadd.f32 %v6531, %v6546
        %v6559 = vperm.slane %v6443, 3
        %v6560 = vperm.slane %v6462, 3
        %v6561 = vperm.slane %v6481, 3
        %v6562 = vmul.f32 %v6559, %v5484
        %v6563 = vmul.f32 %v6560, %v5813
        %v6564 = vmul.f32 %v6561, %v6142
        %v6565 = vmul.f32 %v6559, %v5486
        %v6566 = vmul.f32 %v6560, %v5815
        %v6567 = vmul.f32 %v6561, %v6144
        %v6568 = vmul.f32 %v6559, %v5489
        %v6569 = vmul.f32 %v6560, %v5818
        %v6570 = vmul.f32 %v6561, %v6147
        %v6571 = vmul.f32 %v6559, %v5491
        %v6572 = vmul.f32 %v6560, %v5820
        %v6573 = vmul.f32 %v6561, %v6149
        %v6574 = vadd.f32 %v6547, %v6562
        %v6575 = vadd.f32 %v6548, %v6563
        %v6576 = vadd.f32 %v6549, %v6564
        %v6577 = vadd.f32 %v6550, %v6565
        %v6578 = vadd.f32 %v6551, %v6566
        %v6579 = vadd.f32 %v6552, %v6567
        %v6580 = vadd.f32 %v6553, %v6568
        %v6581 = vadd.f32 %v6554, %v6569
        %v6582 = vadd.f32 %v6555, %v6570
        %v6583 = vadd.f32 %v6556, %v6571
        %v6584 = vadd.f32 %v6557, %v6572
        %v6585 = vadd.f32 %v6558, %v6573
        %v6586 = vperm.slane %v6443, 4
        %v6587 = vperm.slane %v6462, 4
        %v6588 = vperm.slane %v6481, 4
        %v6589 = vmul.f32 %v6586, %v5494
        %v6590 = vmul.f32 %v6587, %v5823
        %v6591 = vmul.f32 %v6588, %v6152
        %v6592 = vmul.f32 %v6586, %v5496
        %v6593 = vmul.f32 %v6587, %v5825
        %v6594 = vmul.f32 %v6588, %v6154
        %v6595 = vmul.f32 %v6586, %v5499
        %v6596 = vmul.f32 %v6587, %v5828
        %v6597 = vmul.f32 %v6588, %v6157
        %v6598 = vmul.f32 %v6586, %v5501
        %v6599 = vmul.f32 %v6587, %v5830
        %v6600 = vmul.f32 %v6588, %v6159
        %v6601 = vadd.f32 %v6574, %v6589
        %v6602 = vadd.f32 %v6575, %v6590
        %v6603 = vadd.f32 %v6576, %v6591
        %v6604 = vadd.f32 %v6577, %v6592
        %v6605 = vadd.f32 %v6578, %v6593
        %v6606 = vadd.f32 %v6579, %v6594
        %v6607 = vadd.f32 %v6580, %v6595
        %v6608 = vadd.f32 %v6581, %v6596
        %v6609 = vadd.f32 %v6582, %v6597
        %v6610 = vadd.f32 %v6583, %v6598
        %v6611 = vadd.f32 %v6584, %v6599
        %v6612 = vadd.f32 %v6585, %v6600
        %v6613 = vperm.slane %v6443, 5
        %v6614 = vperm.slane %v6462, 5
        %v6615 = vperm.slane %v6481, 5
        %v6616 = vmul.f32 %v6613, %v5504
        %v6617 = vmul.f32 %v6614, %v5833
        %v6618 = vmul.f32 %v6615, %v6162
        %v6619 = vmul.f32 %v6613, %v5506
        %v6620 = vmul.f32 %v6614, %v5835
        %v6621 = vmul.f32 %v6615, %v6164
        %v6622 = vmul.f32 %v6613, %v5509
        %v6623 = vmul.f32 %v6614, %v5838
        %v6624 = vmul.f32 %v6615, %v6167
        %v6625 = vmul.f32 %v6613, %v5511
        %v6626 = vmul.f32 %v6614, %v5840
        %v6627 = vmul.f32 %v6615, %v6169
        %v6628 = vadd.f32 %v6601, %v6616
        %v6629 = vadd.f32 %v6602, %v6617
        %v6630 = vadd.f32 %v6603, %v6618
        %v6631 = vadd.f32 %v6604, %v6619
        %v6632 = vadd.f32 %v6605, %v6620
        %v6633 = vadd.f32 %v6606, %v6621
        %v6634 = vadd.f32 %v6607, %v6622
        %v6635 = vadd.f32 %v6608, %v6623
        %v6636 = vadd.f32 %v6609, %v6624
        %v6637 = vadd.f32 %v6610, %v6625
        %v6638 = vadd.f32 %v6611, %v6626
        %v6639 = vadd.f32 %v6612, %v6627
        %v6640 = vperm.slane %v6443, 6
        %v6641 = vperm.slane %v6462, 6
        %v6642 = vperm.slane %v6481, 6
        %v6643 = vmul.f32 %v6640, %v5514
        %v6644 = vmul.f32 %v6641, %v5843
        %v6645 = vmul.f32 %v6642, %v6172
        %v6646 = vmul.f32 %v6640, %v5516
        %v6647 = vmul.f32 %v6641, %v5845
        %v6648 = vmul.f32 %v6642, %v6174
        %v6649 = vmul.f32 %v6640, %v5519
        %v6650 = vmul.f32 %v6641, %v5848
        %v6651 = vmul.f32 %v6642, %v6177
        %v6652 = vmul.f32 %v6640, %v5521
        %v6653 = vmul.f32 %v6641, %v5850
        %v6654 = vmul.f32 %v6642, %v6179
        %v6655 = vadd.f32 %v6628, %v6643
        %v6656 = vadd.f32 %v6629, %v6644
        %v6657 = vadd.f32 %v6630, %v6645
        %v6658 = vadd.f32 %v6631, %v6646
        %v6659 = vadd.f32 %v6632, %v6647
        %v6660 = vadd.f32 %v6633, %v6648
        %v6661 = vadd.f32 %v6634, %v6649
        %v6662 = vadd.f32 %v6635, %v6650
        %v6663 = vadd.f32 %v6636, %v6651
        %v6664 = vadd.f32 %v6637, %v6652
        %v6665 = vadd.f32 %v6638, %v6653
        %v6666 = vadd.f32 %v6639, %v6654
        %v6667 = vperm.slane %v6443, 7
        %v6668 = vperm.slane %v6462, 7
        %v6669 = vperm.slane %v6481, 7
        %v6670 = vmul.f32 %v6667, %v5524
        %v6671 = vmul.f32 %v6668, %v5853
        %v6672 = vmul.f32 %v6669, %v6182
        %v6673 = vmul.f32 %v6667, %v5526
        %v6674 = vmul.f32 %v6668, %v5855
        %v6675 = vmul.f32 %v6669, %v6184
        %v6676 = vmul.f32 %v6667, %v5529
        %v6677 = vmul.f32 %v6668, %v5858
        %v6678 = vmul.f32 %v6669, %v6187
        %v6679 = vmul.f32 %v6667, %v5531
        %v6680 = vmul.f32 %v6668, %v5860
        %v6681 = vmul.f32 %v6669, %v6189
        %v6682 = vadd.f32 %v6655, %v6670
        %v6683 = vadd.f32 %v6656, %v6671
        %v6684 = vadd.f32 %v6657, %v6672
        %v6685 = vadd.f32 %v6658, %v6673
        %v6686 = vadd.f32 %v6659, %v6674
        %v6687 = vadd.f32 %v6660, %v6675
        %v6688 = vadd.f32 %v6661, %v6676
        %v6689 = vadd.f32 %v6662, %v6677
        %v6690 = vadd.f32 %v6663, %v6678
        %v6691 = vadd.f32 %v6664, %v6679
        %v6692 = vadd.f32 %v6665, %v6680
        %v6693 = vadd.f32 %v6666, %v6681
        %v6694 = vperm.slane %v6445, 0
        %v6695 = vperm.slane %v6464, 0
        %v6696 = vperm.slane %v6483, 0
        %v6697 = vmul.f32 %v6694, %v5534
        %v6698 = vmul.f32 %v6695, %v5863
        %v6699 = vmul.f32 %v6696, %v6192
        %v6700 = vmul.f32 %v6694, %v5536
        %v6701 = vmul.f32 %v6695, %v5865
        %v6702 = vmul.f32 %v6696, %v6194
        %v6703 = vmul.f32 %v6694, %v5539
        %v6704 = vmul.f32 %v6695, %v5868
        %v6705 = vmul.f32 %v6696, %v6197
        %v6706 = vmul.f32 %v6694, %v5541
        %v6707 = vmul.f32 %v6695, %v5870
        %v6708 = vmul.f32 %v6696, %v6199
        %v6709 = vadd.f32 %v6682, %v6697
        %v6710 = vadd.f32 %v6683, %v6698
        %v6711 = vadd.f32 %v6684, %v6699
        %v6712 = vadd.f32 %v6685, %v6700
        %v6713 = vadd.f32 %v6686, %v6701
        %v6714 = vadd.f32 %v6687, %v6702
        %v6715 = vadd.f32 %v6688, %v6703
        %v6716 = vadd.f32 %v6689, %v6704
        %v6717 = vadd.f32 %v6690, %v6705
        %v6718 = vadd.f32 %v6691, %v6706
        %v6719 = vadd.f32 %v6692, %v6707
        %v6720 = vadd.f32 %v6693, %v6708
        %v6721 = vperm.slane %v6445, 1
        %v6722 = vperm.slane %v6464, 1
        %v6723 = vperm.slane %v6483, 1
        %v6724 = vmul.f32 %v6721, %v5544
        %v6725 = vmul.f32 %v6722, %v5873
        %v6726 = vmul.f32 %v6723, %v6202
        %v6727 = vmul.f32 %v6721, %v5546
        %v6728 = vmul.f32 %v6722, %v5875
        %v6729 = vmul.f32 %v6723, %v6204
        %v6730 = vmul.f32 %v6721, %v5549
        %v6731 = vmul.f32 %v6722, %v5878
        %v6732 = vmul.f32 %v6723, %v6207
        %v6733 = vmul.f32 %v6721, %v5551
        %v6734 = vmul.f32 %v6722, %v5880
        %v6735 = vmul.f32 %v6723, %v6209
        %v6736 = vadd.f32 %v6709, %v6724
        %v6737 = vadd.f32 %v6710, %v6725
        %v6738 = vadd.f32 %v6711, %v6726
        %v6739 = vadd.f32 %v6712, %v6727
        %v6740 = vadd.f32 %v6713, %v6728
        %v6741 = vadd.f32 %v6714, %v6729
        %v6742 = vadd.f32 %v6715, %v6730
        %v6743 = vadd.f32 %v6716, %v6731
        %v6744 = vadd.f32 %v6717, %v6732
        %v6745 = vadd.f32 %v6718, %v6733
        %v6746 = vadd.f32 %v6719, %v6734
        %v6747 = vadd.f32 %v6720, %v6735
        %v6748 = vperm.slane %v6445, 2
        %v6749 = vperm.slane %v6464, 2
        %v6750 = vperm.slane %v6483, 2
        %v6751 = vmul.f32 %v6748, %v5554
        %v6752 = vmul.f32 %v6749, %v5883
        %v6753 = vmul.f32 %v6750, %v6212
        %v6754 = vmul.f32 %v6748, %v5556
        %v6755 = vmul.f32 %v6749, %v5885
        %v6756 = vmul.f32 %v6750, %v6214
        %v6757 = vmul.f32 %v6748, %v5559
        %v6758 = vmul.f32 %v6749, %v5888
        %v6759 = vmul.f32 %v6750, %v6217
        %v6760 = vmul.f32 %v6748, %v5561
        %v6761 = vmul.f32 %v6749, %v5890
        %v6762 = vmul.f32 %v6750, %v6219
        %v6763 = vadd.f32 %v6736, %v6751
        %v6764 = vadd.f32 %v6737, %v6752
        %v6765 = vadd.f32 %v6738, %v6753
        %v6766 = vadd.f32 %v6739, %v6754
        %v6767 = vadd.f32 %v6740, %v6755
        %v6768 = vadd.f32 %v6741, %v6756
        %v6769 = vadd.f32 %v6742, %v6757
        %v6770 = vadd.f32 %v6743, %v6758
        %v6771 = vadd.f32 %v6744, %v6759
        %v6772 = vadd.f32 %v6745, %v6760
        %v6773 = vadd.f32 %v6746, %v6761
        %v6774 = vadd.f32 %v6747, %v6762
        %v6775 = vperm.slane %v6445, 3
        %v6776 = vperm.slane %v6464, 3
        %v6777 = vperm.slane %v6483, 3
        %v6778 = vmul.f32 %v6775, %v5564
        %v6779 = vmul.f32 %v6776, %v5893
        %v6780 = vmul.f32 %v6777, %v6222
        %v6781 = vmul.f32 %v6775, %v5566
        %v6782 = vmul.f32 %v6776, %v5895
        %v6783 = vmul.f32 %v6777, %v6224
        %v6784 = vmul.f32 %v6775, %v5569
        %v6785 = vmul.f32 %v6776, %v5898
        %v6786 = vmul.f32 %v6777, %v6227
        %v6787 = vmul.f32 %v6775, %v5571
        %v6788 = vmul.f32 %v6776, %v5900
        %v6789 = vmul.f32 %v6777, %v6229
        %v6790 = vadd.f32 %v6763, %v6778
        %v6791 = vadd.f32 %v6764, %v6779
        %v6792 = vadd.f32 %v6765, %v6780
        %v6793 = vadd.f32 %v6766, %v6781
        %v6794 = vadd.f32 %v6767, %v6782
        %v6795 = vadd.f32 %v6768, %v6783
        %v6796 = vadd.f32 %v6769, %v6784
        %v6797 = vadd.f32 %v6770, %v6785
        %v6798 = vadd.f32 %v6771, %v6786
        %v6799 = vadd.f32 %v6772, %v6787
        %v6800 = vadd.f32 %v6773, %v6788
        %v6801 = vadd.f32 %v6774, %v6789
        %v6802 = vperm.slane %v6445, 4
        %v6803 = vperm.slane %v6464, 4
        %v6804 = vperm.slane %v6483, 4
        %v6805 = vmul.f32 %v6802, %v5574
        %v6806 = vmul.f32 %v6803, %v5903
        %v6807 = vmul.f32 %v6804, %v6232
        %v6808 = vmul.f32 %v6802, %v5576
        %v6809 = vmul.f32 %v6803, %v5905
        %v6810 = vmul.f32 %v6804, %v6234
        %v6811 = vmul.f32 %v6802, %v5579
        %v6812 = vmul.f32 %v6803, %v5908
        %v6813 = vmul.f32 %v6804, %v6237
        %v6814 = vmul.f32 %v6802, %v5581
        %v6815 = vmul.f32 %v6803, %v5910
        %v6816 = vmul.f32 %v6804, %v6239
        %v6817 = vadd.f32 %v6790, %v6805
        %v6818 = vadd.f32 %v6791, %v6806
        %v6819 = vadd.f32 %v6792, %v6807
        %v6820 = vadd.f32 %v6793, %v6808
        %v6821 = vadd.f32 %v6794, %v6809
        %v6822 = vadd.f32 %v6795, %v6810
        %v6823 = vadd.f32 %v6796, %v6811
        %v6824 = vadd.f32 %v6797, %v6812
        %v6825 = vadd.f32 %v6798, %v6813
        %v6826 = vadd.f32 %v6799, %v6814
        %v6827 = vadd.f32 %v6800, %v6815
        %v6828 = vadd.f32 %v6801, %v6816
        %v6829 = vperm.slane %v6445, 5
        %v6830 = vperm.slane %v6464, 5
        %v6831 = vperm.slane %v6483, 5
        %v6832 = vmul.f32 %v6829, %v5584
        %v6833 = vmul.f32 %v6830, %v5913
        %v6834 = vmul.f32 %v6831, %v6242
        %v6835 = vmul.f32 %v6829, %v5586
        %v6836 = vmul.f32 %v6830, %v5915
        %v6837 = vmul.f32 %v6831, %v6244
        %v6838 = vmul.f32 %v6829, %v5589
        %v6839 = vmul.f32 %v6830, %v5918
        %v6840 = vmul.f32 %v6831, %v6247
        %v6841 = vmul.f32 %v6829, %v5591
        %v6842 = vmul.f32 %v6830, %v5920
        %v6843 = vmul.f32 %v6831, %v6249
        %v6844 = vadd.f32 %v6817, %v6832
        %v6845 = vadd.f32 %v6818, %v6833
        %v6846 = vadd.f32 %v6819, %v6834
        %v6847 = vadd.f32 %v6820, %v6835
        %v6848 = vadd.f32 %v6821, %v6836
        %v6849 = vadd.f32 %v6822, %v6837
        %v6850 = vadd.f32 %v6823, %v6838
        %v6851 = vadd.f32 %v6824, %v6839
        %v6852 = vadd.f32 %v6825, %v6840
        %v6853 = vadd.f32 %v6826, %v6841
        %v6854 = vadd.f32 %v6827, %v6842
        %v6855 = vadd.f32 %v6828, %v6843
        %v6856 = vperm.slane %v6445, 6
        %v6857 = vperm.slane %v6464, 6
        %v6858 = vperm.slane %v6483, 6
        %v6859 = vmul.f32 %v6856, %v5594
        %v6860 = vmul.f32 %v6857, %v5923
        %v6861 = vmul.f32 %v6858, %v6252
        %v6862 = vmul.f32 %v6856, %v5596
        %v6863 = vmul.f32 %v6857, %v5925
        %v6864 = vmul.f32 %v6858, %v6254
        %v6865 = vmul.f32 %v6856, %v5599
        %v6866 = vmul.f32 %v6857, %v5928
        %v6867 = vmul.f32 %v6858, %v6257
        %v6868 = vmul.f32 %v6856, %v5601
        %v6869 = vmul.f32 %v6857, %v5930
        %v6870 = vmul.f32 %v6858, %v6259
        %v6871 = vadd.f32 %v6844, %v6859
        %v6872 = vadd.f32 %v6845, %v6860
        %v6873 = vadd.f32 %v6846, %v6861
        %v6874 = vadd.f32 %v6847, %v6862
        %v6875 = vadd.f32 %v6848, %v6863
        %v6876 = vadd.f32 %v6849, %v6864
        %v6877 = vadd.f32 %v6850, %v6865
        %v6878 = vadd.f32 %v6851, %v6866
        %v6879 = vadd.f32 %v6852, %v6867
        %v6880 = vadd.f32 %v6853, %v6868
        %v6881 = vadd.f32 %v6854, %v6869
        %v6882 = vadd.f32 %v6855, %v6870
        %v6883 = vperm.slane %v6445, 7
        %v6884 = vperm.slane %v6464, 7
        %v6885 = vperm.slane %v6483, 7
        %v6886 = vmul.f32 %v6883, %v5604
        %v6887 = vmul.f32 %v6884, %v5933
        %v6888 = vmul.f32 %v6885, %v6262
        %v6889 = vmul.f32 %v6883, %v5606
        %v6890 = vmul.f32 %v6884, %v5935
        %v6891 = vmul.f32 %v6885, %v6264
        %v6892 = vmul.f32 %v6883, %v5609
        %v6893 = vmul.f32 %v6884, %v5938
        %v6894 = vmul.f32 %v6885, %v6267
        %v6895 = vmul.f32 %v6883, %v5611
        %v6896 = vmul.f32 %v6884, %v5940
        %v6897 = vmul.f32 %v6885, %v6269
        %v6898 = vadd.f32 %v6871, %v6886
        %v6899 = vadd.f32 %v6872, %v6887
        %v6900 = vadd.f32 %v6873, %v6888
        %v6901 = vadd.f32 %v6874, %v6889
        %v6902 = vadd.f32 %v6875, %v6890
        %v6903 = vadd.f32 %v6876, %v6891
        %v6904 = vadd.f32 %v6877, %v6892
        %v6905 = vadd.f32 %v6878, %v6893
        %v6906 = vadd.f32 %v6879, %v6894
        %v6907 = vadd.f32 %v6880, %v6895
        %v6908 = vadd.f32 %v6881, %v6896
        %v6909 = vadd.f32 %v6882, %v6897
        %v6910 = vperm.slane %v6448, 0
        %v6911 = vperm.slane %v6467, 0
        %v6912 = vperm.slane %v6486, 0
        %v6913 = vmul.f32 %v6910, %v5614
        %v6914 = vmul.f32 %v6911, %v5943
        %v6915 = vmul.f32 %v6912, %v6272
        %v6916 = vmul.f32 %v6910, %v5616
        %v6917 = vmul.f32 %v6911, %v5945
        %v6918 = vmul.f32 %v6912, %v6274
        %v6919 = vmul.f32 %v6910, %v5619
        %v6920 = vmul.f32 %v6911, %v5948
        %v6921 = vmul.f32 %v6912, %v6277
        %v6922 = vmul.f32 %v6910, %v5621
        %v6923 = vmul.f32 %v6911, %v5950
        %v6924 = vmul.f32 %v6912, %v6279
        %v6925 = vadd.f32 %v6898, %v6913
        %v6926 = vadd.f32 %v6899, %v6914
        %v6927 = vadd.f32 %v6900, %v6915
        %v6928 = vadd.f32 %v6901, %v6916
        %v6929 = vadd.f32 %v6902, %v6917
        %v6930 = vadd.f32 %v6903, %v6918
        %v6931 = vadd.f32 %v6904, %v6919
        %v6932 = vadd.f32 %v6905, %v6920
        %v6933 = vadd.f32 %v6906, %v6921
        %v6934 = vadd.f32 %v6907, %v6922
        %v6935 = vadd.f32 %v6908, %v6923
        %v6936 = vadd.f32 %v6909, %v6924
        %v6937 = vperm.slane %v6448, 1
        %v6938 = vperm.slane %v6467, 1
        %v6939 = vperm.slane %v6486, 1
        %v6940 = vmul.f32 %v6937, %v5624
        %v6941 = vmul.f32 %v6938, %v5953
        %v6942 = vmul.f32 %v6939, %v6282
        %v6943 = vmul.f32 %v6937, %v5626
        %v6944 = vmul.f32 %v6938, %v5955
        %v6945 = vmul.f32 %v6939, %v6284
        %v6946 = vmul.f32 %v6937, %v5629
        %v6947 = vmul.f32 %v6938, %v5958
        %v6948 = vmul.f32 %v6939, %v6287
        %v6949 = vmul.f32 %v6937, %v5631
        %v6950 = vmul.f32 %v6938, %v5960
        %v6951 = vmul.f32 %v6939, %v6289
        %v6952 = vadd.f32 %v6925, %v6940
        %v6953 = vadd.f32 %v6926, %v6941
        %v6954 = vadd.f32 %v6927, %v6942
        %v6955 = vadd.f32 %v6928, %v6943
        %v6956 = vadd.f32 %v6929, %v6944
        %v6957 = vadd.f32 %v6930, %v6945
        %v6958 = vadd.f32 %v6931, %v6946
        %v6959 = vadd.f32 %v6932, %v6947
        %v6960 = vadd.f32 %v6933, %v6948
        %v6961 = vadd.f32 %v6934, %v6949
        %v6962 = vadd.f32 %v6935, %v6950
        %v6963 = vadd.f32 %v6936, %v6951
        %v6964 = vperm.slane %v6448, 2
        %v6965 = vperm.slane %v6467, 2
        %v6966 = vperm.slane %v6486, 2
        %v6967 = vmul.f32 %v6964, %v5634
        %v6968 = vmul.f32 %v6965, %v5963
        %v6969 = vmul.f32 %v6966, %v6292
        %v6970 = vmul.f32 %v6964, %v5636
        %v6971 = vmul.f32 %v6965, %v5965
        %v6972 = vmul.f32 %v6966, %v6294
        %v6973 = vmul.f32 %v6964, %v5639
        %v6974 = vmul.f32 %v6965, %v5968
        %v6975 = vmul.f32 %v6966, %v6297
        %v6976 = vmul.f32 %v6964, %v5641
        %v6977 = vmul.f32 %v6965, %v5970
        %v6978 = vmul.f32 %v6966, %v6299
        %v6979 = vadd.f32 %v6952, %v6967
        %v6980 = vadd.f32 %v6953, %v6968
        %v6981 = vadd.f32 %v6954, %v6969
        %v6982 = vadd.f32 %v6955, %v6970
        %v6983 = vadd.f32 %v6956, %v6971
        %v6984 = vadd.f32 %v6957, %v6972
        %v6985 = vadd.f32 %v6958, %v6973
        %v6986 = vadd.f32 %v6959, %v6974
        %v6987 = vadd.f32 %v6960, %v6975
        %v6988 = vadd.f32 %v6961, %v6976
        %v6989 = vadd.f32 %v6962, %v6977
        %v6990 = vadd.f32 %v6963, %v6978
        %v6991 = vperm.slane %v6448, 3
        %v6992 = vperm.slane %v6467, 3
        %v6993 = vperm.slane %v6486, 3
        %v6994 = vmul.f32 %v6991, %v5644
        %v6995 = vmul.f32 %v6992, %v5973
        %v6996 = vmul.f32 %v6993, %v6302
        %v6997 = vmul.f32 %v6991, %v5646
        %v6998 = vmul.f32 %v6992, %v5975
        %v6999 = vmul.f32 %v6993, %v6304
        %v7000 = vmul.f32 %v6991, %v5649
        %v7001 = vmul.f32 %v6992, %v5978
        %v7002 = vmul.f32 %v6993, %v6307
        %v7003 = vmul.f32 %v6991, %v5651
        %v7004 = vmul.f32 %v6992, %v5980
        %v7005 = vmul.f32 %v6993, %v6309
        %v7006 = vadd.f32 %v6979, %v6994
        %v7007 = vadd.f32 %v6980, %v6995
        %v7008 = vadd.f32 %v6981, %v6996
        %v7009 = vadd.f32 %v6982, %v6997
        %v7010 = vadd.f32 %v6983, %v6998
        %v7011 = vadd.f32 %v6984, %v6999
        %v7012 = vadd.f32 %v6985, %v7000
        %v7013 = vadd.f32 %v6986, %v7001
        %v7014 = vadd.f32 %v6987, %v7002
        %v7015 = vadd.f32 %v6988, %v7003
        %v7016 = vadd.f32 %v6989, %v7004
        %v7017 = vadd.f32 %v6990, %v7005
        %v7018 = vperm.slane %v6448, 4
        %v7019 = vperm.slane %v6467, 4
        %v7020 = vperm.slane %v6486, 4
        %v7021 = vmul.f32 %v7018, %v5654
        %v7022 = vmul.f32 %v7019, %v5983
        %v7023 = vmul.f32 %v7020, %v6312
        %v7024 = vmul.f32 %v7018, %v5656
        %v7025 = vmul.f32 %v7019, %v5985
        %v7026 = vmul.f32 %v7020, %v6314
        %v7027 = vmul.f32 %v7018, %v5659
        %v7028 = vmul.f32 %v7019, %v5988
        %v7029 = vmul.f32 %v7020, %v6317
        %v7030 = vmul.f32 %v7018, %v5661
        %v7031 = vmul.f32 %v7019, %v5990
        %v7032 = vmul.f32 %v7020, %v6319
        %v7033 = vadd.f32 %v7006, %v7021
        %v7034 = vadd.f32 %v7007, %v7022
        %v7035 = vadd.f32 %v7008, %v7023
        %v7036 = vadd.f32 %v7009, %v7024
        %v7037 = vadd.f32 %v7010, %v7025
        %v7038 = vadd.f32 %v7011, %v7026
        %v7039 = vadd.f32 %v7012, %v7027
        %v7040 = vadd.f32 %v7013, %v7028
        %v7041 = vadd.f32 %v7014, %v7029
        %v7042 = vadd.f32 %v7015, %v7030
        %v7043 = vadd.f32 %v7016, %v7031
        %v7044 = vadd.f32 %v7017, %v7032
        %v7045 = vperm.slane %v6448, 5
        %v7046 = vperm.slane %v6467, 5
        %v7047 = vperm.slane %v6486, 5
        %v7048 = vmul.f32 %v7045, %v5664
        %v7049 = vmul.f32 %v7046, %v5993
        %v7050 = vmul.f32 %v7047, %v6322
        %v7051 = vmul.f32 %v7045, %v5666
        %v7052 = vmul.f32 %v7046, %v5995
        %v7053 = vmul.f32 %v7047, %v6324
        %v7054 = vmul.f32 %v7045, %v5669
        %v7055 = vmul.f32 %v7046, %v5998
        %v7056 = vmul.f32 %v7047, %v6327
        %v7057 = vmul.f32 %v7045, %v5671
        %v7058 = vmul.f32 %v7046, %v6000
        %v7059 = vmul.f32 %v7047, %v6329
        %v7060 = vadd.f32 %v7033, %v7048
        %v7061 = vadd.f32 %v7034, %v7049
        %v7062 = vadd.f32 %v7035, %v7050
        %v7063 = vadd.f32 %v7036, %v7051
        %v7064 = vadd.f32 %v7037, %v7052
        %v7065 = vadd.f32 %v7038, %v7053
        %v7066 = vadd.f32 %v7039, %v7054
        %v7067 = vadd.f32 %v7040, %v7055
        %v7068 = vadd.f32 %v7041, %v7056
        %v7069 = vadd.f32 %v7042, %v7057
        %v7070 = vadd.f32 %v7043, %v7058
        %v7071 = vadd.f32 %v7044, %v7059
        %v7072 = vperm.slane %v6448, 6
        %v7073 = vperm.slane %v6467, 6
        %v7074 = vperm.slane %v6486, 6
        %v7075 = vmul.f32 %v7072, %v5674
        %v7076 = vmul.f32 %v7073, %v6003
        %v7077 = vmul.f32 %v7074, %v6332
        %v7078 = vmul.f32 %v7072, %v5676
        %v7079 = vmul.f32 %v7073, %v6005
        %v7080 = vmul.f32 %v7074, %v6334
        %v7081 = vmul.f32 %v7072, %v5679
        %v7082 = vmul.f32 %v7073, %v6008
        %v7083 = vmul.f32 %v7074, %v6337
        %v7084 = vmul.f32 %v7072, %v5681
        %v7085 = vmul.f32 %v7073, %v6010
        %v7086 = vmul.f32 %v7074, %v6339
        %v7087 = vadd.f32 %v7060, %v7075
        %v7088 = vadd.f32 %v7061, %v7076
        %v7089 = vadd.f32 %v7062, %v7077
        %v7090 = vadd.f32 %v7063, %v7078
        %v7091 = vadd.f32 %v7064, %v7079
        %v7092 = vadd.f32 %v7065, %v7080
        %v7093 = vadd.f32 %v7066, %v7081
        %v7094 = vadd.f32 %v7067, %v7082
        %v7095 = vadd.f32 %v7068, %v7083
        %v7096 = vadd.f32 %v7069, %v7084
        %v7097 = vadd.f32 %v7070, %v7085
        %v7098 = vadd.f32 %v7071, %v7086
        %v7099 = vperm.slane %v6448, 7
        %v7100 = vperm.slane %v6467, 7
        %v7101 = vperm.slane %v6486, 7
        %v7102 = vmul.f32 %v7099, %v5684
        %v7103 = vmul.f32 %v7100, %v6013
        %v7104 = vmul.f32 %v7101, %v6342
        %v7105 = vmul.f32 %v7099, %v5686
        %v7106 = vmul.f32 %v7100, %v6015
        %v7107 = vmul.f32 %v7101, %v6344
        %v7108 = vmul.f32 %v7099, %v5689
        %v7109 = vmul.f32 %v7100, %v6018
        %v7110 = vmul.f32 %v7101, %v6347
        %v7111 = vmul.f32 %v7099, %v5691
        %v7112 = vmul.f32 %v7100, %v6020
        %v7113 = vmul.f32 %v7101, %v6349
        %v7114 = vadd.f32 %v7087, %v7102
        %v7115 = vadd.f32 %v7088, %v7103
        %v7116 = vadd.f32 %v7089, %v7104
        %v7117 = vadd.f32 %v7090, %v7105
        %v7118 = vadd.f32 %v7091, %v7106
        %v7119 = vadd.f32 %v7092, %v7107
        %v7120 = vadd.f32 %v7093, %v7108
        %v7121 = vadd.f32 %v7094, %v7109
        %v7122 = vadd.f32 %v7095, %v7110
        %v7123 = vadd.f32 %v7096, %v7111
        %v7124 = vadd.f32 %v7097, %v7112
        %v7125 = vadd.f32 %v7098, %v7113
        %v7126 = vperm.slane %v6450, 0
        %v7127 = vperm.slane %v6469, 0
        %v7128 = vperm.slane %v6488, 0
        %v7129 = vmul.f32 %v7126, %v5694
        %v7130 = vmul.f32 %v7127, %v6023
        %v7131 = vmul.f32 %v7128, %v6352
        %v7132 = vmul.f32 %v7126, %v5696
        %v7133 = vmul.f32 %v7127, %v6025
        %v7134 = vmul.f32 %v7128, %v6354
        %v7135 = vmul.f32 %v7126, %v5699
        %v7136 = vmul.f32 %v7127, %v6028
        %v7137 = vmul.f32 %v7128, %v6357
        %v7138 = vmul.f32 %v7126, %v5701
        %v7139 = vmul.f32 %v7127, %v6030
        %v7140 = vmul.f32 %v7128, %v6359
        %v7141 = vadd.f32 %v7114, %v7129
        %v7142 = vadd.f32 %v7115, %v7130
        %v7143 = vadd.f32 %v7116, %v7131
        %v7144 = vadd.f32 %v7117, %v7132
        %v7145 = vadd.f32 %v7118, %v7133
        %v7146 = vadd.f32 %v7119, %v7134
        %v7147 = vadd.f32 %v7120, %v7135
        %v7148 = vadd.f32 %v7121, %v7136
        %v7149 = vadd.f32 %v7122, %v7137
        %v7150 = vadd.f32 %v7123, %v7138
        %v7151 = vadd.f32 %v7124, %v7139
        %v7152 = vadd.f32 %v7125, %v7140
        %v7153 = vperm.slane %v6450, 1
        %v7154 = vperm.slane %v6469, 1
        %v7155 = vperm.slane %v6488, 1
        %v7156 = vmul.f32 %v7153, %v5704
        %v7157 = vmul.f32 %v7154, %v6033
        %v7158 = vmul.f32 %v7155, %v6362
        %v7159 = vmul.f32 %v7153, %v5706
        %v7160 = vmul.f32 %v7154, %v6035
        %v7161 = vmul.f32 %v7155, %v6364
        %v7162 = vmul.f32 %v7153, %v5709
        %v7163 = vmul.f32 %v7154, %v6038
        %v7164 = vmul.f32 %v7155, %v6367
        %v7165 = vmul.f32 %v7153, %v5711
        %v7166 = vmul.f32 %v7154, %v6040
        %v7167 = vmul.f32 %v7155, %v6369
        %v7168 = vadd.f32 %v7141, %v7156
        %v7169 = vadd.f32 %v7142, %v7157
        %v7170 = vadd.f32 %v7143, %v7158
        %v7171 = vadd.f32 %v7144, %v7159
        %v7172 = vadd.f32 %v7145, %v7160
        %v7173 = vadd.f32 %v7146, %v7161
        %v7174 = vadd.f32 %v7147, %v7162
        %v7175 = vadd.f32 %v7148, %v7163
        %v7176 = vadd.f32 %v7149, %v7164
        %v7177 = vadd.f32 %v7150, %v7165
        %v7178 = vadd.f32 %v7151, %v7166
        %v7179 = vadd.f32 %v7152, %v7167
        %v7180 = vperm.slane %v6450, 2
        %v7181 = vperm.slane %v6469, 2
        %v7182 = vperm.slane %v6488, 2
        %v7183 = vmul.f32 %v7180, %v5714
        %v7184 = vmul.f32 %v7181, %v6043
        %v7185 = vmul.f32 %v7182, %v6372
        %v7186 = vmul.f32 %v7180, %v5716
        %v7187 = vmul.f32 %v7181, %v6045
        %v7188 = vmul.f32 %v7182, %v6374
        %v7189 = vmul.f32 %v7180, %v5719
        %v7190 = vmul.f32 %v7181, %v6048
        %v7191 = vmul.f32 %v7182, %v6377
        %v7192 = vmul.f32 %v7180, %v5721
        %v7193 = vmul.f32 %v7181, %v6050
        %v7194 = vmul.f32 %v7182, %v6379
        %v7195 = vadd.f32 %v7168, %v7183
        %v7196 = vadd.f32 %v7169, %v7184
        %v7197 = vadd.f32 %v7170, %v7185
        %v7198 = vadd.f32 %v7171, %v7186
        %v7199 = vadd.f32 %v7172, %v7187
        %v7200 = vadd.f32 %v7173, %v7188
        %v7201 = vadd.f32 %v7174, %v7189
        %v7202 = vadd.f32 %v7175, %v7190
        %v7203 = vadd.f32 %v7176, %v7191
        %v7204 = vadd.f32 %v7177, %v7192
        %v7205 = vadd.f32 %v7178, %v7193
        %v7206 = vadd.f32 %v7179, %v7194
        %v7207 = vperm.slane %v6450, 3
        %v7208 = vperm.slane %v6469, 3
        %v7209 = vperm.slane %v6488, 3
        %v7210 = vmul.f32 %v7207, %v5724
        %v7211 = vmul.f32 %v7208, %v6053
        %v7212 = vmul.f32 %v7209, %v6382
        %v7213 = vmul.f32 %v7207, %v5726
        %v7214 = vmul.f32 %v7208, %v6055
        %v7215 = vmul.f32 %v7209, %v6384
        %v7216 = vmul.f32 %v7207, %v5729
        %v7217 = vmul.f32 %v7208, %v6058
        %v7218 = vmul.f32 %v7209, %v6387
        %v7219 = vmul.f32 %v7207, %v5731
        %v7220 = vmul.f32 %v7208, %v6060
        %v7221 = vmul.f32 %v7209, %v6389
        %v7222 = vadd.f32 %v7195, %v7210
        %v7223 = vadd.f32 %v7196, %v7211
        %v7224 = vadd.f32 %v7197, %v7212
        %v7225 = vadd.f32 %v7198, %v7213
        %v7226 = vadd.f32 %v7199, %v7214
        %v7227 = vadd.f32 %v7200, %v7215
        %v7228 = vadd.f32 %v7201, %v7216
        %v7229 = vadd.f32 %v7202, %v7217
        %v7230 = vadd.f32 %v7203, %v7218
        %v7231 = vadd.f32 %v7204, %v7219
        %v7232 = vadd.f32 %v7205, %v7220
        %v7233 = vadd.f32 %v7206, %v7221
        %v7234 = vperm.slane %v6450, 4
        %v7235 = vperm.slane %v6469, 4
        %v7236 = vperm.slane %v6488, 4
        %v7237 = vmul.f32 %v7234, %v5734
        %v7238 = vmul.f32 %v7235, %v6063
        %v7239 = vmul.f32 %v7236, %v6392
        %v7240 = vmul.f32 %v7234, %v5736
        %v7241 = vmul.f32 %v7235, %v6065
        %v7242 = vmul.f32 %v7236, %v6394
        %v7243 = vmul.f32 %v7234, %v5739
        %v7244 = vmul.f32 %v7235, %v6068
        %v7245 = vmul.f32 %v7236, %v6397
        %v7246 = vmul.f32 %v7234, %v5741
        %v7247 = vmul.f32 %v7235, %v6070
        %v7248 = vmul.f32 %v7236, %v6399
        %v7249 = vadd.f32 %v7222, %v7237
        %v7250 = vadd.f32 %v7223, %v7238
        %v7251 = vadd.f32 %v7224, %v7239
        %v7252 = vadd.f32 %v7225, %v7240
        %v7253 = vadd.f32 %v7226, %v7241
        %v7254 = vadd.f32 %v7227, %v7242
        %v7255 = vadd.f32 %v7228, %v7243
        %v7256 = vadd.f32 %v7229, %v7244
        %v7257 = vadd.f32 %v7230, %v7245
        %v7258 = vadd.f32 %v7231, %v7246
        %v7259 = vadd.f32 %v7232, %v7247
        %v7260 = vadd.f32 %v7233, %v7248
        %v7261 = vperm.slane %v6450, 5
        %v7262 = vperm.slane %v6469, 5
        %v7263 = vperm.slane %v6488, 5
        %v7264 = vmul.f32 %v7261, %v5744
        %v7265 = vmul.f32 %v7262, %v6073
        %v7266 = vmul.f32 %v7263, %v6402
        %v7267 = vmul.f32 %v7261, %v5746
        %v7268 = vmul.f32 %v7262, %v6075
        %v7269 = vmul.f32 %v7263, %v6404
        %v7270 = vmul.f32 %v7261, %v5749
        %v7271 = vmul.f32 %v7262, %v6078
        %v7272 = vmul.f32 %v7263, %v6407
        %v7273 = vmul.f32 %v7261, %v5751
        %v7274 = vmul.f32 %v7262, %v6080
        %v7275 = vmul.f32 %v7263, %v6409
        %v7276 = vadd.f32 %v7249, %v7264
        %v7277 = vadd.f32 %v7250, %v7265
        %v7278 = vadd.f32 %v7251, %v7266
        %v7279 = vadd.f32 %v7252, %v7267
        %v7280 = vadd.f32 %v7253, %v7268
        %v7281 = vadd.f32 %v7254, %v7269
        %v7282 = vadd.f32 %v7255, %v7270
        %v7283 = vadd.f32 %v7256, %v7271
        %v7284 = vadd.f32 %v7257, %v7272
        %v7285 = vadd.f32 %v7258, %v7273
        %v7286 = vadd.f32 %v7259, %v7274
        %v7287 = vadd.f32 %v7260, %v7275
        %v7288 = vperm.slane %v6450, 6
        %v7289 = vperm.slane %v6469, 6
        %v7290 = vperm.slane %v6488, 6
        %v7291 = vmul.f32 %v7288, %v5754
        %v7292 = vmul.f32 %v7289, %v6083
        %v7293 = vmul.f32 %v7290, %v6412
        %v7294 = vmul.f32 %v7288, %v5756
        %v7295 = vmul.f32 %v7289, %v6085
        %v7296 = vmul.f32 %v7290, %v6414
        %v7297 = vmul.f32 %v7288, %v5759
        %v7298 = vmul.f32 %v7289, %v6088
        %v7299 = vmul.f32 %v7290, %v6417
        %v7300 = vmul.f32 %v7288, %v5761
        %v7301 = vmul.f32 %v7289, %v6090
        %v7302 = vmul.f32 %v7290, %v6419
        %v7303 = vadd.f32 %v7276, %v7291
        %v7304 = vadd.f32 %v7277, %v7292
        %v7305 = vadd.f32 %v7278, %v7293
        %v7306 = vadd.f32 %v7279, %v7294
        %v7307 = vadd.f32 %v7280, %v7295
        %v7308 = vadd.f32 %v7281, %v7296
        %v7309 = vadd.f32 %v7282, %v7297
        %v7310 = vadd.f32 %v7283, %v7298
        %v7311 = vadd.f32 %v7284, %v7299
        %v7312 = vadd.f32 %v7285, %v7300
        %v7313 = vadd.f32 %v7286, %v7301
        %v7314 = vadd.f32 %v7287, %v7302
        %v7315 = vperm.slane %v6450, 7
        %v7316 = vperm.slane %v6469, 7
        %v7317 = vperm.slane %v6488, 7
        %v7318 = vmul.f32 %v7315, %v5764
        %v7319 = vmul.f32 %v7316, %v6093
        %v7320 = vmul.f32 %v7317, %v6422
        %v7321 = vmul.f32 %v7315, %v5766
        %v7322 = vmul.f32 %v7316, %v6095
        %v7323 = vmul.f32 %v7317, %v6424
        %v7324 = vmul.f32 %v7315, %v5769
        %v7325 = vmul.f32 %v7316, %v6098
        %v7326 = vmul.f32 %v7317, %v6427
        %v7327 = vmul.f32 %v7315, %v5771
        %v7328 = vmul.f32 %v7316, %v6100
        %v7329 = vmul.f32 %v7317, %v6429
        %v7330 = vadd.f32 %v7303, %v7318
        %v7331 = vadd.f32 %v7304, %v7319
        %v7332 = vadd.f32 %v7305, %v7320
        %v7333 = vadd.f32 %v7306, %v7321
        %v7334 = vadd.f32 %v7307, %v7322
        %v7335 = vadd.f32 %v7308, %v7323
        %v7336 = vadd.f32 %v7309, %v7324
        %v7337 = vadd.f32 %v7310, %v7325
        %v7338 = vadd.f32 %v7311, %v7326
        %v7339 = vadd.f32 %v7312, %v7327
        %v7340 = vadd.f32 %v7313, %v7328
        %v7341 = vadd.f32 %v7314, %v7329
        %v7342 = vpack.c.bf16 %v7333, %v7330
        %v7343 = vpack.c.bf16 %v7334, %v7331
        %v7344 = vpack.c.bf16 %v7335, %v7332
        %v7345 = vpack.c.bf16 %v7339, %v7336
        %v7346 = vpack.c.bf16 %v7340, %v7337
        %v7347 = vpack.c.bf16 %v7341, %v7338
        %7348 = vmatpush.bf16.msra.mxu0 %v1080
        %7349 = vmatpush.bf16.msra.mxu0 %v1079
        %7350 = vmatpush.bf16.msra.mxu0 %v1078
        %7351 = vmatpush.bf16.msra.mxu0 %v1077
        %7352 = vmatpush.bf16.msra.mxu0 %v1076
        %7353 = vmatpush.bf16.msra.mxu0 %v1075
        %7354 = vmatpush.bf16.msra.mxu0 %v1074
        %7355 = vmatpush.bf16.msra.mxu0 %v1073
        %7356 = vmatmul.bf16.gmra.mxu0 %v7342
        %v7357 = vpop.f32.mrf.mxu0
        %v7358 = vadd.f32 0.0, %v7357
        %v7359 = vpop.f32.mrf.mxu0
        %v7360 = vadd.f32 0.0, %v7359
        %7361 = vmatmul.bf16.gmra.mxu0 %v7345
        %v7362 = vpop.f32.mrf.mxu0
        %v7363 = vadd.f32 0.0, %v7362
        %v7364 = vpop.f32.mrf.mxu0
        %v7365 = vadd.f32 0.0, %v7364
        %7366 = vdwg.mxu0
        %7367 = vmatpush.bf16.msra.mxu0 %v1088
        %7368 = vmatpush.bf16.msra.mxu0 %v1087
        %7369 = vmatpush.bf16.msra.mxu0 %v1086
        %7370 = vmatpush.bf16.msra.mxu0 %v1085
        %7371 = vmatpush.bf16.msra.mxu0 %v1084
        %7372 = vmatpush.bf16.msra.mxu0 %v1083
        %7373 = vmatpush.bf16.msra.mxu0 %v1082
        %7374 = vmatpush.bf16.msra.mxu0 %v1081
        %7375 = vmatmul.bf16.gmra.mxu0 %v7343
        %v7376 = vpop.f32.mrf.mxu0
        %v7377 = vadd.f32 %v7358, %v7376
        %v7378 = vpop.f32.mrf.mxu0
        %v7379 = vadd.f32 %v7360, %v7378
        %7380 = vmatmul.bf16.gmra.mxu0 %v7346
        %v7381 = vpop.f32.mrf.mxu0
        %v7382 = vadd.f32 %v7363, %v7381
        %v7383 = vpop.f32.mrf.mxu0
        %v7384 = vadd.f32 %v7365, %v7383
        %7385 = vdwg.mxu0
        %7386 = vmatpush.bf16.msra.mxu0 %v1096
        %7387 = vmatpush.bf16.msra.mxu0 %v1095
        %7388 = vmatpush.bf16.msra.mxu0 %v1094
        %7389 = vmatpush.bf16.msra.mxu0 %v1093
        %7390 = vmatpush.bf16.msra.mxu0 %v1092
        %7391 = vmatpush.bf16.msra.mxu0 %v1091
        %7392 = vmatpush.bf16.msra.mxu0 %v1090
        %7393 = vmatpush.bf16.msra.mxu0 %v1089
        %7394 = vmatmul.bf16.gmra.mxu0 %v7344
        %v7395 = vpop.f32.mrf.mxu0
        %v7396 = vadd.f32 %v7377, %v7395
        %v7397 = vpop.f32.mrf.mxu0
        %v7398 = vadd.f32 %v7379, %v7397
        %7399 = vmatmul.bf16.gmra.mxu0 %v7347
        %v7400 = vpop.f32.mrf.mxu0
        %v7401 = vadd.f32 %v7382, %v7400
        %v7402 = vpop.f32.mrf.mxu0
        %v7403 = vadd.f32 %v7384, %v7402
        %7404 = vdwg.mxu0
        %v7405 = vmul.f32 %v7396, %v1111
        %v7406 = vmul.f32 %v7398, %v1111
        %v7407 = vmul.f32 %v7401, %v1111
        %v7408 = vmul.f32 %v7403, %v1111
        %v7409 = vld [vmem:[%s9] sm:$0xf]
        %v7410 = vld [vmem:[%s9 + $0x4] sm:$0xf]
        %v7411 = vld [vmem:[%s9 + $0x8] sm:$0xf]
        %v7412 = vld [vmem:[%s9 + $0xc] sm:$0xf]
        %v7417 = vunpack.c.l.b16 %v7409
        %v7418 = vunpack.c.l.b16 %v7410
        %v7419 = vunpack.c.l.b16 %v7411
        %v7420 = vunpack.c.l.b16 %v7412
        %v7421 = vpack.c.b16 %v7418, %v7417
        %v7422 = vpack.c.b16 %v7420, %v7419
        %v7424 = vsel %vm5251, %v7421, 0
        %v7427 = vsel %vm5251, %v7422, 0
        %7429 = vmatpush.bf16.msra.mxu0 0
        %7430 = vmatpush.bf16.msra.mxu0 0
        %7431 = vmatpush.bf16.msra.mxu0 0
        %7432 = vmatpush.bf16.msra.mxu0 0
        %7433 = vmatpush.bf16.msra.mxu0 0
        %7434 = vmatpush.bf16.msra.mxu0 0
        %7435 = vmatpush.bf16.msra.mxu0 %v6432
        %7436 = vmatpush.bf16.msra.mxu0 %v6431
        %7437 = vmatmul.bf16.gmra.mxu0 %v7424
        %v7438 = vpop.f32.mrf.mxu0
        %v7439 = vadd.f32 0.0, %v7438
        %v7440 = vpop.f32.mrf.mxu0
        %v7441 = vadd.f32 0.0, %v7440
        %7442 = vmatmul.bf16.gmra.mxu0 %v7427
        %v7443 = vpop.f32.mrf.mxu0
        %v7444 = vadd.f32 0.0, %v7443
        %v7445 = vpop.f32.mrf.mxu0
        %v7446 = vadd.f32 0.0, %v7445
        %7447 = vdwg.mxu0
        %v7448 = vadd.f32 %v7405, %v7439
        %v7449 = vadd.f32 %v7406, %v7441
        %v7450 = vadd.f32 %v7407, %v7444
        %v7451 = vadd.f32 %v7408, %v7446
        %7452 = vset.pattern.permute.xlu0 7
        %7453 = vperm.xlu0 %7452, %v1112
        %v7454 = vpop.permute.xlu0 %7453
        %7456 = vset.pattern.permute.xlu0 7
        %7457 = vperm.xlu0 %7456, %v1113
        %v7458 = vpop.permute.xlu0 %7457
        %7460 = vset.pattern.permute.xlu0 7
        %7461 = vperm.xlu0 %7460, %v1114
        %v7462 = vpop.permute.xlu0 %7461
        %7464 = vset.pattern.permute.xlu0 7
        %7465 = vperm.xlu0 %7464, %v1115
        %v7466 = vpop.permute.xlu0 %7465
        %v7468 = vadd.f32 %v7448, %v7454
        %v7469 = vadd.f32 %v7449, %v7458
        %v7470 = vadd.f32 %v7450, %v7462
        %v7471 = vadd.f32 %v7451, %v7466
        %v7472 = vmax.f32 %v7468, 0.0
        %v7473 = vmax.f32 %v7469, 0.0
        %v7474 = vmax.f32 %v7470, 0.0
        %v7475 = vmax.f32 %v7471, 0.0
        %v7476 = vld [vmem:[%s10] sm:$0xf]
        %v7477 = vpack.c.bf16 %v7473, %v7472
        %v7478 = vpack.c.bf16 %v7475, %v7474
        %v7479 = vld [vmem:[%s11] sm:$0xff]
        %7481 = vset.pattern.permute.xlu0 8
        %7482 = vperm.xlu0 %7481, %v7479
        %v7483 = vpop.permute.xlu0 %7482
        %v7486 = vsel %vm5251, %v7476, 0
        %7488 = vmatpush.bf16.msra.mxu0 0
        %7489 = vmatpush.bf16.msra.mxu0 0
        %7490 = vmatpush.bf16.msra.mxu0 0
        %7491 = vmatpush.bf16.msra.mxu0 0
        %7492 = vmatpush.bf16.msra.mxu0 0
        %7493 = vmatpush.bf16.msra.mxu0 0
        %7494 = vmatpush.bf16.msra.mxu0 %v7478
        %7495 = vmatpush.bf16.msra.mxu0 %v7477
        %7496 = vmatmul.bf16.gmra.mxu0 %v7486
        %v7497 = vpop.f32.mrf.mxu0
        %v7498 = vadd.f32 %v7483, %v7497
        %v7499 = vpop.f32.mrf.mxu0
        %7500 = vdwg.mxu0
        %vm7501 = vcmp.eq.f32.partialorder %v490, 0.0
        %v7502 = vsel %vm7501, -1e+30, %v7498
        %v7503 = vrot.slane %v7502, 4
        %v7504 = vmax.f32 %v7502, %v7503
        %v7505 = vrot.slane %v7504, 2
        %v7506 = vmax.f32 %v7504, %v7505
        %v7507 = vrot.slane %v7506, 1
        %v7508 = vmax.f32 %v7506, %v7507
        %v7509 = vsub.f32 %v7502, %v7508
        %v7510 = vmul.f32 %v7509, 1.442695
        %v7511 = vpow.pop %v7510
        %v7512 = vrot.slane %v7511, 4
        %v7513 = vadd.f32 %v7511, %v7512
        %v7514 = vrot.slane %v7513, 2
        %v7515 = vadd.f32 %v7513, %v7514
        %v7516 = vrot.slane %v7515, 1
        %v7517 = vadd.f32 %v7515, %v7516
        %v7518 = vrcp.pop %v7517
        %v7519 = vmul.f32 %v7517, %v7518
        %v7520 = vsub.f32 1.0, %v7519
        %v7521 = vmul.f32 %v7518, %v7520
        %v7522 = vadd.f32 %v7518, %v7521
        %vm7523 = vweird.f32 %v7517
        %vm7524 = vweird.f32 %v7518
        %vm7525 = vmor %vm7523, %vm7524
        %v7526 = vsel %vm7525, %v7518, %v7522
        %v7527 = vand.u32 2147483647, %v7517
        %vm7528 = vcmp.eq.f32.partialorder %v7527, 8.507059e+37
        %v7529 = vand.u32 %v7517, 2147483648
        %v7530 = vor.u32 1.1754944e-38, %v7529
        %v7531 = vsel %vm7528, %v7530, %v7526
        %v7532 = vmul.f32 %v7511, %v7531
        %vm7533 = vcmp.ne.f32.partialorder %v489, -1.0
        %v7534 = vsel %vm7533, 1, 0
        %v7535 = vperm.slane %v7534, 1
        %vm7536 = vcmp.eq.s32.totalorder %v7535, 1
        %v7537 = vsel %vm7536, %v7532, 0.0
        %vm7538 = vcmp.gt.f32.partialorder %v541, 0.0
        %vm7539 = vmxor %vm7533, 1
        %v7540 = vsel %vm7539, 1, 0
        %v7541 = vperm.slane %v7540, 1
        %vm7542 = vcmp.eq.s32.totalorder %v7541, 1
        %vm7543 = vmand %vm7538, %vm7542
        %v7544 = vsel %vm7543, 1.0, %v7537
        %7545 = vst [vmem:[%s477] sm:$0xff] %v7544
        %s7546 = sand.u32 %s301, 1
        %s7547 = scalar_lea.sflag [#allocation4], %s7546
        %s7548 = sand.u32 %s301, 1
        %s7549 = smul.addr %s7548, 8
        %s7550 = scalar_lea.vmem [#allocation3], %s7549
        // Predicated region
        $region107: #{tpu_custom_call.1} parent=101 // pred_check
          %p7551 = pneg %p311
        $region108: #{tpu_custom_call.1} parent=101 // pred_check_branch
          %7553 = sbr.rel (%p7551) target = $region110
        $region109: #{tpu_custom_call.1} parent=101 // pred_region
          %7555 = vsyncadd %s7547, 0
          %s7556 = smul.addr %s26, 8
          %s7557 = scalar_lea.hbm %s12, %s7556
          %s7559 = sshll.u32 %s7550, 4
          %s7560 = int_to_ptr.vmem [resolvable:$true] %s7559
          %s7561 = sshll.u32 %s7557, 4
          %s7562 = int_to_ptr.hbm [resolvable:$true] %s7561
          %7564 = dma.vmem_to_hbm [thread:$0]  %s7560, 128, %s7562, %s7547
        $region110: #{tpu_custom_call.1} parent=101 // pred_fallthru
          _
      $region102: #{tpu_custom_call.1} parent=5 // pred_fallthru
        _
      %p7565 = scmp.le.s32.totalorder 2, %s21
      // Predicated region
      $region111: #{tpu_custom_call.1} parent=5 // pred_check
        %p7566 = pneg %p7565
      $region112: #{tpu_custom_call.1} parent=5 // pred_check_branch
        %7568 = sbr.rel (%p7566) target = $region114
      $region113: #{tpu_custom_call.1} parent=5 // pred_region
        %s7569 = ssub.s32 %s21, 2
        // Predicated region
        $region115: #{tpu_custom_call.1} parent=113 // pred_check
          %p7570 = pneg %p317
        $region116: #{tpu_custom_call.1} parent=113 // pred_check_branch
          %7572 = sbr.rel (%p7570) target = $region118
        $region117: #{tpu_custom_call.1} parent=113 // pred_region
          %s7573 = sand.u32 %s302, 1
          %s7574 = scalar_lea.sflag [#allocation4], %s7573
          %s7575 = sand.u32 %s302, 1
          %s7576 = smul.addr %s7575, 8
          %s7577 = scalar_lea.vmem [#allocation3], %s7576
          %7579 = dma.done %s7574, 128
        $region118: #{tpu_custom_call.1} parent=113 // pred_fallthru
          _
      $region114: #{tpu_custom_call.1} parent=5 // pred_fallthru
        _
    $region6: #{tpu_custom_call.1} parent=1 // loop_footer
      %s25 = sadd.s32 1, %s21
    $region7: #{tpu_custom_call.1} parent=1 // loop_footer_branch
      %20 = sbr.rel target = $region3
    $region8: #{tpu_custom_call.1} parent=1 // loop_exit
      _
    %7580 = vsyncpa [#allocation4], 1
    %s7581 = scalar_lea.sflag [#allocation4], 1
    %7582 = vsyncpa %s7581, 1

</llo_original>
